<compile_context>
chip_gen: v7x
topology: tpu7x:2x2x1
jax: 0.10.0
libtpu: 0.0.40
codegen_flags: <defaults>
</compile_context>

<pallas_src>
import functools

import jax
import jax.numpy as jnp
from jax.experimental import pallas as pl
from jax.experimental.pallas import tpu as pltpu


def _fused_mlp_kernel(x_ref, w1_ref, b1_ref, w2_ref, b2_ref, w3_ref, b3_ref,
                      w4_ref, b4_ref, o_ref):
    """All four Linear(+ReLU) layers for one batch tile, activations in VMEM."""
    x = x_ref[...].astype(jnp.bfloat16)  # in-kernel f32 -> bf16 cast (saves an HBM pass)
    h1 = jnp.maximum(
        jnp.dot(x, w1_ref[...], preferred_element_type=jnp.float32)
        + b1_ref[...], 0.0)
    # dropout -> identity (eval)
    h2 = jnp.maximum(
        jnp.dot(h1.astype(jnp.bfloat16), w2_ref[...],
                preferred_element_type=jnp.float32) + b2_ref[...], 0.0)
    # dropout -> identity (eval)
    h3 = jnp.maximum(
        jnp.dot(h2.astype(jnp.bfloat16), w3_ref[...],
                preferred_element_type=jnp.float32) + b3_ref[...], 0.0)
    # dropout -> identity (eval)
    logits = jnp.dot(h3.astype(jnp.bfloat16), w4_ref[...],
                     preferred_element_type=jnp.float32) + b4_ref[...]
    o_ref[...] = logits.astype(o_ref.dtype)


def _round_up(v, m):
    return ((v + m - 1) // m) * m


def prepare_params(params, num_classes=10):
    """One-time parameter prep (outside jit): bf16 weights, (1,H) f32 biases,
    fc4 padded to a full 128-lane block so output stores are lane-dense."""
    (w1, b1), (w2, b2), (w3, b3), (w4, b4) = params
    H3, NC = w4.shape
    assert NC == num_classes
    NCp = _round_up(NC, 128)
    w4p = jnp.zeros((H3, NCp), w4.dtype).at[:, :NC].set(w4)
    b4p = jnp.zeros((NCp,), b4.dtype).at[:NC].set(b4)
    return (
        w1.astype(jnp.bfloat16), b1.reshape(1, -1).astype(jnp.float32),
        w2.astype(jnp.bfloat16), b2.reshape(1, -1).astype(jnp.float32),
        w3.astype(jnp.bfloat16), b3.reshape(1, -1).astype(jnp.float32),
        w4p.astype(jnp.bfloat16), b4p.reshape(1, -1).astype(jnp.float32),
    )


def deep_fc_net_pallas(x_flat, prep, num_classes):
    """x_flat: (B, 3072) float32. prep: prepared (bf16 W, f32 b) tuple."""
    w1, b1, w2, b2, w3, b3, w4, b4 = prep
    B, K = x_flat.shape
    H1, H2, H3, NCp = w1.shape[1], w2.shape[1], w3.shape[1], w4.shape[1]
    assert w1.shape[0] == K and w2.shape[0] == H1
    assert w3.shape[0] == H2 and w4.shape[0] == H3

    # Batch tiling: tm=256 for large batches (full MXU height on v6e/v7x);
    # small batches padded up to a multiple of 16 (bf16 sublane packing).
    LARGE_TM = 256
    if B <= LARGE_TM:
        Bp = _round_up(max(B, 16), 16)
        tm = Bp
    else:
        tm = LARGE_TM
        Bp = _round_up(B, tm)

    # Only materialize a padded copy when strictly necessary.
    if Bp != B:
        x_in = jnp.zeros((Bp, K), x_flat.dtype).at[:B, :].set(x_flat)
    else:
        x_in = x_flat

    grid = (Bp // tm,)

    flops = 2 * Bp * (K * H1 + H1 * H2 + H2 * H3 + H3 * NCp)
    bytes_accessed = (
        Bp * K * 4                                              # x (f32)
        + (K * H1 + H1 * H2 + H2 * H3 + H3 * NCp) * 2           # bf16 weights
        + (H1 + H2 + H3 + NCp) * 4                              # f32 biases
        + Bp * NCp * 4                                          # f32 logits
    )

    out = pl.pallas_call(
        _fused_mlp_kernel,
        out_shape=jax.ShapeDtypeStruct((Bp, NCp), jnp.float32),
        grid=grid,
        in_specs=[
            pl.BlockSpec((tm, K), lambda i: (i, 0)),     # x tile (f32, cast in kernel)
            pl.BlockSpec((K, H1), lambda i: (0, 0)),     # fc1 W, VMEM-resident
            pl.BlockSpec((1, H1), lambda i: (0, 0)),     # fc1 b
            pl.BlockSpec((H1, H2), lambda i: (0, 0)),    # fc2 W, resident
            pl.BlockSpec((1, H2), lambda i: (0, 0)),     # fc2 b
            pl.BlockSpec((H2, H3), lambda i: (0, 0)),    # fc3 W, resident
            pl.BlockSpec((1, H3), lambda i: (0, 0)),     # fc3 b
            pl.BlockSpec((H3, NCp), lambda i: (0, 0)),   # fc4 W (lane-padded)
            pl.BlockSpec((1, NCp), lambda i: (0, 0)),    # fc4 b (lane-padded)
        ],
        out_specs=pl.BlockSpec((tm, NCp), lambda i: (i, 0)),
        compiler_params=pltpu.CompilerParams(
            dimension_semantics=("parallel",),
            vmem_limit_bytes=40 * 1024 * 1024,
        ),
        cost_estimate=pl.CostEstimate(
            flops=flops, transcendentals=0, bytes_accessed=bytes_accessed),
    )(x_in, w1, b1, w2, b2, w3, b3, w4, b4)

    return out[:B, :num_classes]


def init_params(key, input_size=3 * 32 * 32, num_classes=10):
    """Deterministic synthetic parameters (stored as (in, out) for x @ W)."""
    dims = [input_size, 1024, 512, 256, num_classes]
    params = []
    for i in range(4):
        key, kw, kb = jax.random.split(key, 3)
        bound = 1.0 / jnp.sqrt(dims[i])
        w = jax.random.uniform(
            kw, (dims[i], dims[i + 1]), jnp.float32, -bound, bound)
        b = jax.random.uniform(kb, (dims[i + 1],), jnp.float32, -bound, bound)
        params.append((w, b))
    return params


@functools.partial(jax.jit, static_argnames=("num_classes",))
def deep_fc_net_forward(x_nchw, prep, *, num_classes=10):
    """x_nchw: (B, 3, 32, 32) float32 -> logits (B, num_classes)."""
    B = x_nchw.shape[0]
    x = x_nchw.reshape(B, -1)  # == x.view(B, -1) for NCHW / C-order
    return deep_fc_net_pallas(x, prep, num_classes)


if __name__ == "__main__":
    key = jax.random.PRNGKey(0)
    k_x, k_p = jax.random.split(key)

    # Small batch, full CIFAR-like input (the fc1 weight shape fixes K=3072).
    x = jax.random.normal(k_x, (2, 3, 32, 32), dtype=jnp.float32)
    params = init_params(k_p)
    prep = prepare_params(params)

    out = deep_fc_net_forward(x, prep, num_classes=10)
    out = jax.block_until_ready(out)

    # Plain-JAX reference with matching bf16 matmul inputs / f32 accumulation.
    h = x.reshape(2, -1)
    for i, (w, b) in enumerate(params):
        h = jnp.dot(h.astype(jnp.bfloat16), w.astype(jnp.bfloat16),
                    preferred_element_type=jnp.float32) + b
        if i < 3:
            h = jnp.maximum(h, 0.0)

    assert out.shape == (2, 10)
    err = float(jnp.max(jnp.abs(out - h)))
    assert jnp.allclose(out, h, atol=5e-2, rtol=5e-2), err

    print("KERNEL_OK")
</pallas_src>

<mosaic_0001>
module attributes {stable_mosaic.version = 11 : i64} {
  func.func @_fused_mlp_kernel(%arg0: i32, %arg1: memref<16x3072xf32, #tpu.memory_space<vmem>>, %arg2: memref<3072x1024xbf16, #tpu.memory_space<vmem>>, %arg3: memref<1x1024xf32, #tpu.memory_space<vmem>>, %arg4: memref<1024x512xbf16, #tpu.memory_space<vmem>>, %arg5: memref<1x512xf32, #tpu.memory_space<vmem>>, %arg6: memref<512x256xbf16, #tpu.memory_space<vmem>>, %arg7: memref<1x256xf32, #tpu.memory_space<vmem>>, %arg8: memref<256x128xbf16, #tpu.memory_space<vmem>>, %arg9: memref<1x128xf32, #tpu.memory_space<vmem>>, %arg10: memref<16x128xf32, #tpu.memory_space<vmem>>) attributes {dimension_semantics = [#tpu.dimension_semantics<parallel>], iteration_bounds = array<i64: 1>, scalar_prefetch = 0 : i64, scratch_operands = 0 : i64, tpu.core_type = #tpu.core_type<tc>, window_params = [{transform_indices = @transform_0, window_bounds = array<i64: 16, 3072>}, {pipeline_mode = #tpu.pipeline_mode<synchronous>, transform_indices = @transform_1, window_bounds = array<i64: 3072, 1024>}, {pipeline_mode = #tpu.pipeline_mode<synchronous>, transform_indices = @transform_2, window_bounds = array<i64: 1, 1024>}, {pipeline_mode = #tpu.pipeline_mode<synchronous>, transform_indices = @transform_3, window_bounds = array<i64: 1024, 512>}, {pipeline_mode = #tpu.pipeline_mode<synchronous>, transform_indices = @transform_4, window_bounds = array<i64: 1, 512>}, {pipeline_mode = #tpu.pipeline_mode<synchronous>, transform_indices = @transform_5, window_bounds = array<i64: 512, 256>}, {pipeline_mode = #tpu.pipeline_mode<synchronous>, transform_indices = @transform_6, window_bounds = array<i64: 1, 256>}, {pipeline_mode = #tpu.pipeline_mode<synchronous>, transform_indices = @transform_7, window_bounds = array<i64: 256, 128>}, {pipeline_mode = #tpu.pipeline_mode<synchronous>, transform_indices = @transform_8, window_bounds = array<i64: 1, 128>}, {transform_indices = @transform_9, window_bounds = array<i64: 16, 128>}]} {
    %c0 = arith.constant 0 : index
    %c0_0 = arith.constant 0 : index
    %0 = vector.load %arg1[%c0, %c0_0] : memref<16x3072xf32, #tpu.memory_space<vmem>>, vector<16x3072xf32>
    %1 = arith.truncf %0 : vector<16x3072xf32> to vector<16x3072xbf16>
    %c0_1 = arith.constant 0 : index
    %c0_2 = arith.constant 0 : index
    %2 = vector.load %arg2[%c0_1, %c0_2] : memref<3072x1024xbf16, #tpu.memory_space<vmem>>, vector<3072x1024xbf16>
    %cst = arith.constant dense<0.000000e+00> : vector<16x1024xf32>
    %3 = tpu.matmul %1, %2, %cst {dimension_numbers = #tpu.dot_dimension_numbers<[1], [0], [0], [1], [0, 0, 1, 1], [], []>} : vector<16x3072xbf16>, vector<3072x1024xbf16>, vector<16x1024xf32> -> vector<16x1024xf32>
    %c0_3 = arith.constant 0 : index
    %c0_4 = arith.constant 0 : index
    %4 = vector.load %arg3[%c0_3, %c0_4] : memref<1x1024xf32, #tpu.memory_space<vmem>>, vector<1x1024xf32>
    %5 = vector.broadcast %4 : vector<1x1024xf32> to vector<16x1024xf32>
    %6 = arith.addf %3, %5 : vector<16x1024xf32>
    %cst_5 = arith.constant 0.000000e+00 : f32
    %7 = vector.broadcast %cst_5 : f32 to vector<16x1024xf32>
    %8 = arith.maximumf %6, %7 : vector<16x1024xf32>
    %9 = arith.truncf %8 : vector<16x1024xf32> to vector<16x1024xbf16>
    %c0_6 = arith.constant 0 : index
    %c0_7 = arith.constant 0 : index
    %10 = vector.load %arg4[%c0_6, %c0_7] : memref<1024x512xbf16, #tpu.memory_space<vmem>>, vector<1024x512xbf16>
    %cst_8 = arith.constant dense<0.000000e+00> : vector<16x512xf32>
    %11 = tpu.matmul %9, %10, %cst_8 {dimension_numbers = #tpu.dot_dimension_numbers<[1], [0], [0], [1], [0, 0, 1, 1], [], []>} : vector<16x1024xbf16>, vector<1024x512xbf16>, vector<16x512xf32> -> vector<16x512xf32>
    %c0_9 = arith.constant 0 : index
    %c0_10 = arith.constant 0 : index
    %12 = vector.load %arg5[%c0_9, %c0_10] : memref<1x512xf32, #tpu.memory_space<vmem>>, vector<1x512xf32>
    %13 = vector.broadcast %12 : vector<1x512xf32> to vector<16x512xf32>
    %14 = arith.addf %11, %13 : vector<16x512xf32>
    %cst_11 = arith.constant 0.000000e+00 : f32
    %15 = vector.broadcast %cst_11 : f32 to vector<16x512xf32>
    %16 = arith.maximumf %14, %15 : vector<16x512xf32>
    %17 = arith.truncf %16 : vector<16x512xf32> to vector<16x512xbf16>
    %c0_12 = arith.constant 0 : index
    %c0_13 = arith.constant 0 : index
    %18 = vector.load %arg6[%c0_12, %c0_13] : memref<512x256xbf16, #tpu.memory_space<vmem>>, vector<512x256xbf16>
    %cst_14 = arith.constant dense<0.000000e+00> : vector<16x256xf32>
    %19 = tpu.matmul %17, %18, %cst_14 {dimension_numbers = #tpu.dot_dimension_numbers<[1], [0], [0], [1], [0, 0, 1, 1], [], []>} : vector<16x512xbf16>, vector<512x256xbf16>, vector<16x256xf32> -> vector<16x256xf32>
    %c0_15 = arith.constant 0 : index
    %c0_16 = arith.constant 0 : index
    %20 = vector.load %arg7[%c0_15, %c0_16] : memref<1x256xf32, #tpu.memory_space<vmem>>, vector<1x256xf32>
    %21 = vector.broadcast %20 : vector<1x256xf32> to vector<16x256xf32>
    %22 = arith.addf %19, %21 : vector<16x256xf32>
    %cst_17 = arith.constant 0.000000e+00 : f32
    %23 = vector.broadcast %cst_17 : f32 to vector<16x256xf32>
    %24 = arith.maximumf %22, %23 : vector<16x256xf32>
    %25 = arith.truncf %24 : vector<16x256xf32> to vector<16x256xbf16>
    %c0_18 = arith.constant 0 : index
    %c0_19 = arith.constant 0 : index
    %26 = vector.load %arg8[%c0_18, %c0_19] : memref<256x128xbf16, #tpu.memory_space<vmem>>, vector<256x128xbf16>
    %cst_20 = arith.constant dense<0.000000e+00> : vector<16x128xf32>
    %27 = tpu.matmul %25, %26, %cst_20 {dimension_numbers = #tpu.dot_dimension_numbers<[1], [0], [0], [1], [0, 0, 1, 1], [], []>} : vector<16x256xbf16>, vector<256x128xbf16>, vector<16x128xf32> -> vector<16x128xf32>
    %c0_21 = arith.constant 0 : index
    %c0_22 = arith.constant 0 : index
    %28 = vector.load %arg9[%c0_21, %c0_22] : memref<1x128xf32, #tpu.memory_space<vmem>>, vector<1x128xf32>
    %29 = vector.broadcast %28 : vector<1x128xf32> to vector<16x128xf32>
    %30 = arith.addf %27, %29 : vector<16x128xf32>
    %c0_23 = arith.constant 0 : index
    %c0_24 = arith.constant 0 : index
    %31 = vector.load %arg10[%c0_23, %c0_24] : memref<16x128xf32, #tpu.memory_space<vmem>>, vector<16x128xf32>
    tpu.vector_store %arg10[%c0_23, %c0_24], %30 {strides = array<i32>} : memref<16x128xf32, #tpu.memory_space<vmem>>, vector<16x128xf32>,
    return
  }
  func.func @transform_0(%arg0: i32) -> (i32, i32) {
    %c0_i32 = arith.constant 0 : i32
    %c0_i32_0 = arith.constant 0 : i32
    return %arg0, %c0_i32 : i32, i32
  }
  func.func @transform_1(%arg0: i32) -> (i32, i32) {
    %c0_i32 = arith.constant 0 : i32
    %c0_i32_0 = arith.constant 0 : i32
    %c0_i32_1 = arith.constant 0 : i32
    return %c0_i32, %c0_i32_0 : i32, i32
  }
  func.func @transform_2(%arg0: i32) -> (i32, i32) {
    %c0_i32 = arith.constant 0 : i32
    %c0_i32_0 = arith.constant 0 : i32
    %c0_i32_1 = arith.constant 0 : i32
    return %c0_i32, %c0_i32_0 : i32, i32
  }
  func.func @transform_3(%arg0: i32) -> (i32, i32) {
    %c0_i32 = arith.constant 0 : i32
    %c0_i32_0 = arith.constant 0 : i32
    %c0_i32_1 = arith.constant 0 : i32
    return %c0_i32, %c0_i32_0 : i32, i32
  }
  func.func @transform_4(%arg0: i32) -> (i32, i32) {
    %c0_i32 = arith.constant 0 : i32
    %c0_i32_0 = arith.constant 0 : i32
    %c0_i32_1 = arith.constant 0 : i32
    return %c0_i32, %c0_i32_0 : i32, i32
  }
  func.func @transform_5(%arg0: i32) -> (i32, i32) {
    %c0_i32 = arith.constant 0 : i32
    %c0_i32_0 = arith.constant 0 : i32
    %c0_i32_1 = arith.constant 0 : i32
    return %c0_i32, %c0_i32_0 : i32, i32
  }
  func.func @transform_6(%arg0: i32) -> (i32, i32) {
    %c0_i32 = arith.constant 0 : i32
    %c0_i32_0 = arith.constant 0 : i32
    %c0_i32_1 = arith.constant 0 : i32
    return %c0_i32, %c0_i32_0 : i32, i32
  }
  func.func @transform_7(%arg0: i32) -> (i32, i32) {
    %c0_i32 = arith.constant 0 : i32
    %c0_i32_0 = arith.constant 0 : i32
    %c0_i32_1 = arith.constant 0 : i32
    return %c0_i32, %c0_i32_0 : i32, i32
  }
  func.func @transform_8(%arg0: i32) -> (i32, i32) {
    %c0_i32 = arith.constant 0 : i32
    %c0_i32_0 = arith.constant 0 : i32
    %c0_i32_1 = arith.constant 0 : i32
    return %c0_i32, %c0_i32_0 : i32, i32
  }
  func.func @transform_9(%arg0: i32) -> (i32, i32) {
    %c0_i32 = arith.constant 0 : i32
    %c0_i32_0 = arith.constant 0 : i32
    return %arg0, %c0_i32 : i32, i32
  }
}

</mosaic_0001>

<llo_original>
// kernel: deep_fc_net_forward.1
$region0: #{deep_fc_net_forward.1}
  #allocation0 [shape = 'u32[]', space=smem, size = 0x4, offset = 0x4, fixed_abs, tag = 'smem constant byte address 0x4 - core index']
  #allocation1 [shape = 'u32[144,128]{1,0:T(1,128)}', space=vmem, size = 0x12000, scoped, tag = 'internal scratch']
  %s0 = inlined_call_operand.vmem [shape: f32[16,3072], index: 0, kind: input, shape index: {}]
  %s1 = inlined_call_operand.hbm [shape: bf16[3072,1024], index: 1, kind: input, shape index: {}]
  %s2 = inlined_call_operand.hbm [shape: f32[1,1024], index: 2, kind: input, shape index: {}]
  %s3 = inlined_call_operand.hbm [shape: bf16[1024,512], index: 3, kind: input, shape index: {}]
  %s4 = inlined_call_operand.hbm [shape: f32[1,512], index: 4, kind: input, shape index: {}]
  %s5 = inlined_call_operand.hbm [shape: bf16[512,256], index: 5, kind: input, shape index: {}]
  %s6 = inlined_call_operand.hbm [shape: f32[1,256], index: 6, kind: input, shape index: {}]
  %s7 = inlined_call_operand.hbm [shape: bf16[256,128], index: 7, kind: input, shape index: {}]
  %s8 = inlined_call_operand.hbm [shape: f32[1,128], index: 8, kind: input, shape index: {}]
  %s9 = inlined_call_operand.vmem [shape: f32[16,128], index: 9, kind: output, shape index: {}]
  %s10 = sld [smem:[#allocation0]]
  $region78: #{deep_fc_net_forward.1} parent=0
    _
  %s12 = ssub.s32 1, %s10
  %s13 = scalar_select 0, %s12, %s10
  $region1: #{deep_fc_net_forward.1} parent=0
    #allocation2 [shape = 'u8[6291456]{0}', space=vmem, size = 0x600000, scoped, tag = 'input window, operand 1, single buffered']
    #allocation3 [shape = 's32[1]{0}', space=sflag, size = 0x4, scoped, tag = 'scoped memory for deep_fc_net_forward.1']
    #allocation4 [shape = 'u8[4096]{0}', space=vmem, size = 0x1000, scoped, tag = 'input window, operand 2, single buffered']
    #allocation5 [shape = 's32[1]{0}', space=sflag, size = 0x4, scoped, tag = 'scoped memory for deep_fc_net_forward.1']
    #allocation6 [shape = 'u8[1048576]{0}', space=vmem, size = 0x100000, scoped, tag = 'input window, operand 3, single buffered']
    #allocation7 [shape = 'u8[2048]{0}', space=vmem, size = 0x800, scoped, tag = 'input window, operand 4, single buffered']
    #allocation8 [shape = 's32[1]{0}', space=sflag, size = 0x4, scoped, tag = 'scoped memory for deep_fc_net_forward.1']
    #allocation9 [shape = 'u8[262144]{0}', space=vmem, size = 0x40000, scoped, tag = 'input window, operand 5, single buffered']
    #allocation10 [shape = 'u8[1024]{0}', space=vmem, size = 0x400, scoped, tag = 'input window, operand 6, single buffered']
    #allocation11 [shape = 's32[1]{0}', space=sflag, size = 0x4, scoped, tag = 'scoped memory for deep_fc_net_forward.1']
    #allocation12 [shape = 'u8[65536]{0}', space=vmem, size = 0x10000, scoped, tag = 'input window, operand 7, single buffered']
    #allocation13 [shape = 'u8[512]{0}', space=vmem, size = 0x400, scoped, tag = 'input window, operand 8, single buffered']
    #allocation14 [shape = 's32[1]{0}', space=sflag, size = 0x4, scoped, tag = 'scoped memory for deep_fc_net_forward.1']
    %14 = vsyncpa [#allocation3], 0
    %15 = vsyncpa [#allocation5], 0
    %16 = vsyncpa [#allocation8], 0
    %17 = vsyncpa [#allocation11], 0
    %18 = vsyncpa [#allocation14], 0
    // Predicated region
    $region2: #{deep_fc_net_forward.1} parent=1 // pred_check
      _
    $region3: #{deep_fc_net_forward.1} parent=1 // pred_check_branch
      %20 = sbr.rel (0) target = $region5
    $region4: #{deep_fc_net_forward.1} parent=1 // pred_region
      _
    $region5: #{deep_fc_net_forward.1} parent=1 // pred_fallthru
      _
    // Predicated region
    $region6: #{deep_fc_net_forward.1} parent=1 // pred_check
      _
    $region7: #{deep_fc_net_forward.1} parent=1 // pred_check_branch
      %22 = sbr.rel (0) target = $region9
    $region8: #{deep_fc_net_forward.1} parent=1 // pred_region
      %s24 = ssub.s32 196608, 196608
      %25 = vsyncadd [#allocation3], %s24
      %s26 = sshll.u32 [#allocation2], 4
      %s27 = int_to_ptr.vmem [resolvable:$true] %s26
      %32 = dma.hbm_to_vmem [thread:$0]  %s1, 196608, %s27, [#allocation3], 512, 512, 32
    $region9: #{deep_fc_net_forward.1} parent=1 // pred_fallthru
      _
    // Predicated region
    $region10: #{deep_fc_net_forward.1} parent=1 // pred_check
      _
    $region11: #{deep_fc_net_forward.1} parent=1 // pred_check_branch
      %34 = sbr.rel (0) target = $region13
    $region12: #{deep_fc_net_forward.1} parent=1 // pred_region
      %s36 = ssub.s32 128, 128
      %37 = vsyncadd [#allocation5], %s36
      %s39 = sshll.u32 [#allocation4], 4
      %s40 = int_to_ptr.vmem [resolvable:$true] %s39
      %42 = dma.hbm_to_vmem [thread:$0]  %s2, 128, %s40, [#allocation5]
    $region13: #{deep_fc_net_forward.1} parent=1 // pred_fallthru
      _
    // Predicated region
    $region14: #{deep_fc_net_forward.1} parent=1 // pred_check
      _
    $region15: #{deep_fc_net_forward.1} parent=1 // pred_check_branch
      %44 = sbr.rel (0) target = $region17
    $region16: #{deep_fc_net_forward.1} parent=1 // pred_region
      %s46 = ssub.s32 32768, 32768
      %47 = vsyncadd [#allocation5], %s46
      %s48 = sshll.u32 [#allocation6], 4
      %s49 = int_to_ptr.vmem [resolvable:$true] %s48
      %54 = dma.hbm_to_vmem [thread:$0]  %s3, 32768, %s49, [#allocation5], 256, 256, 16
    $region17: #{deep_fc_net_forward.1} parent=1 // pred_fallthru
      _
    // Predicated region
    $region18: #{deep_fc_net_forward.1} parent=1 // pred_check
      _
    $region19: #{deep_fc_net_forward.1} parent=1 // pred_check_branch
      %56 = sbr.rel (0) target = $region21
    $region20: #{deep_fc_net_forward.1} parent=1 // pred_region
      %s58 = ssub.s32 64, 64
      %59 = vsyncadd [#allocation8], %s58
      %s61 = sshll.u32 [#allocation7], 4
      %s62 = int_to_ptr.vmem [resolvable:$true] %s61
      %64 = dma.hbm_to_vmem [thread:$0]  %s4, 64, %s62, [#allocation8]
    $region21: #{deep_fc_net_forward.1} parent=1 // pred_fallthru
      _
    // Predicated region
    $region22: #{deep_fc_net_forward.1} parent=1 // pred_check
      _
    $region23: #{deep_fc_net_forward.1} parent=1 // pred_check_branch
      %66 = sbr.rel (0) target = $region25
    $region24: #{deep_fc_net_forward.1} parent=1 // pred_region
      %s68 = ssub.s32 8192, 8192
      %69 = vsyncadd [#allocation8], %s68
      %s70 = sshll.u32 [#allocation9], 4
      %s71 = int_to_ptr.vmem [resolvable:$true] %s70
      %76 = dma.hbm_to_vmem [thread:$0]  %s5, 8192, %s71, [#allocation8], 128, 128, 8
    $region25: #{deep_fc_net_forward.1} parent=1 // pred_fallthru
      _
    // Predicated region
    $region26: #{deep_fc_net_forward.1} parent=1 // pred_check
      _
    $region27: #{deep_fc_net_forward.1} parent=1 // pred_check_branch
      %78 = sbr.rel (0) target = $region29
    $region28: #{deep_fc_net_forward.1} parent=1 // pred_region
      %s80 = ssub.s32 32, 32
      %81 = vsyncadd [#allocation11], %s80
      %s83 = sshll.u32 [#allocation10], 4
      %s84 = int_to_ptr.vmem [resolvable:$true] %s83
      %86 = dma.hbm_to_vmem [thread:$0]  %s6, 32, %s84, [#allocation11]
    $region29: #{deep_fc_net_forward.1} parent=1 // pred_fallthru
      _
    // Predicated region
    $region30: #{deep_fc_net_forward.1} parent=1 // pred_check
      _
    $region31: #{deep_fc_net_forward.1} parent=1 // pred_check_branch
      %88 = sbr.rel (0) target = $region33
    $region32: #{deep_fc_net_forward.1} parent=1 // pred_region
      %s90 = ssub.s32 2048, 2048
      %91 = vsyncadd [#allocation11], %s90
      %s92 = sshll.u32 [#allocation12], 4
      %s93 = int_to_ptr.vmem [resolvable:$true] %s92
      %98 = dma.hbm_to_vmem [thread:$0]  %s7, 2048, %s93, [#allocation11], 64, 64, 4
    $region33: #{deep_fc_net_forward.1} parent=1 // pred_fallthru
      _
    // Predicated region
    $region34: #{deep_fc_net_forward.1} parent=1 // pred_check
      _
    $region35: #{deep_fc_net_forward.1} parent=1 // pred_check_branch
      %100 = sbr.rel (0) target = $region37
    $region36: #{deep_fc_net_forward.1} parent=1 // pred_region
      %s102 = ssub.s32 16, 16
      %103 = vsyncadd [#allocation14], %s102
      %s105 = sshll.u32 [#allocation13], 4
      %s106 = int_to_ptr.vmem [resolvable:$true] %s105
      %108 = dma.hbm_to_vmem [thread:$0]  %s8, 16, %s106, [#allocation14]
    $region37: #{deep_fc_net_forward.1} parent=1 // pred_fallthru
      _
    // Predicated region
    $region38: #{deep_fc_net_forward.1} parent=1 // pred_check
      _
    $region39: #{deep_fc_net_forward.1} parent=1 // pred_check_branch
      %110 = sbr.rel (0) target = $region41
    $region40: #{deep_fc_net_forward.1} parent=1 // pred_region
      %111 = dma.done [#allocation3], 196608
    $region41: #{deep_fc_net_forward.1} parent=1 // pred_fallthru
      _
    // Predicated region
    $region42: #{deep_fc_net_forward.1} parent=1 // pred_check
      _
    $region43: #{deep_fc_net_forward.1} parent=1 // pred_check_branch
      %113 = sbr.rel (0) target = $region45
    $region44: #{deep_fc_net_forward.1} parent=1 // pred_region
      %114 = dma.done [#allocation5], 128
    $region45: #{deep_fc_net_forward.1} parent=1 // pred_fallthru
      _
    // Predicated region
    $region46: #{deep_fc_net_forward.1} parent=1 // pred_check
      _
    $region47: #{deep_fc_net_forward.1} parent=1 // pred_check_branch
      %116 = sbr.rel (0) target = $region49
    $region48: #{deep_fc_net_forward.1} parent=1 // pred_region
      %117 = dma.done [#allocation5], 32768
    $region49: #{deep_fc_net_forward.1} parent=1 // pred_fallthru
      _
    // Predicated region
    $region50: #{deep_fc_net_forward.1} parent=1 // pred_check
      _
    $region51: #{deep_fc_net_forward.1} parent=1 // pred_check_branch
      %119 = sbr.rel (0) target = $region53
    $region52: #{deep_fc_net_forward.1} parent=1 // pred_region
      %120 = dma.done [#allocation8], 64
    $region53: #{deep_fc_net_forward.1} parent=1 // pred_fallthru
      _
    // Predicated region
    $region54: #{deep_fc_net_forward.1} parent=1 // pred_check
      _
    $region55: #{deep_fc_net_forward.1} parent=1 // pred_check_branch
      %122 = sbr.rel (0) target = $region57
    $region56: #{deep_fc_net_forward.1} parent=1 // pred_region
      %123 = dma.done [#allocation8], 8192
    $region57: #{deep_fc_net_forward.1} parent=1 // pred_fallthru
      _
    // Predicated region
    $region58: #{deep_fc_net_forward.1} parent=1 // pred_check
      _
    $region59: #{deep_fc_net_forward.1} parent=1 // pred_check_branch
      %125 = sbr.rel (0) target = $region61
    $region60: #{deep_fc_net_forward.1} parent=1 // pred_region
      %126 = dma.done [#allocation11], 32
    $region61: #{deep_fc_net_forward.1} parent=1 // pred_fallthru
      _
    // Predicated region
    $region62: #{deep_fc_net_forward.1} parent=1 // pred_check
      _
    $region63: #{deep_fc_net_forward.1} parent=1 // pred_check_branch
      %128 = sbr.rel (0) target = $region65
    $region64: #{deep_fc_net_forward.1} parent=1 // pred_region
      %129 = dma.done [#allocation11], 2048
    $region65: #{deep_fc_net_forward.1} parent=1 // pred_fallthru
      _
    // Predicated region
    $region66: #{deep_fc_net_forward.1} parent=1 // pred_check
      _
    $region67: #{deep_fc_net_forward.1} parent=1 // pred_check_branch
      %131 = sbr.rel (0) target = $region69
    $region68: #{deep_fc_net_forward.1} parent=1 // pred_region
      %132 = dma.done [#allocation14], 16
    $region69: #{deep_fc_net_forward.1} parent=1 // pred_fallthru
      _
    %v134 = vld [vmem:[%s0] sm:$0xff]
    %v135 = vld [vmem:[%s0 + $0x8] sm:$0xff]
    %v136 = vld [vmem:[%s0 + $0x10] sm:$0xff]
    %v137 = vld [vmem:[%s0 + $0x18] sm:$0xff]
    %v138 = vld [vmem:[%s0 + $0x20] sm:$0xff]
    %v139 = vld [vmem:[%s0 + $0x28] sm:$0xff]
    %v140 = vld [vmem:[%s0 + $0x30] sm:$0xff]
    %v141 = vld [vmem:[%s0 + $0x38] sm:$0xff]
    %v142 = vld [vmem:[%s0 + $0x40] sm:$0xff]
    %v143 = vld [vmem:[%s0 + $0x48] sm:$0xff]
    %v144 = vld [vmem:[%s0 + $0x50] sm:$0xff]
    %v145 = vld [vmem:[%s0 + $0x58] sm:$0xff]
    %v146 = vld [vmem:[%s0 + $0x60] sm:$0xff]
    %v147 = vld [vmem:[%s0 + $0x68] sm:$0xff]
    %v148 = vld [vmem:[%s0 + $0x70] sm:$0xff]
    %v149 = vld [vmem:[%s0 + $0x78] sm:$0xff]
    %v150 = vld [vmem:[%s0 + $0x80] sm:$0xff]
    %v151 = vld [vmem:[%s0 + $0x88] sm:$0xff]
    %v152 = vld [vmem:[%s0 + $0x90] sm:$0xff]
    %v153 = vld [vmem:[%s0 + $0x98] sm:$0xff]
    %v154 = vld [vmem:[%s0 + $0xa0] sm:$0xff]
    %v155 = vld [vmem:[%s0 + $0xa8] sm:$0xff]
    %v156 = vld [vmem:[%s0 + $0xb0] sm:$0xff]
    %v157 = vld [vmem:[%s0 + $0xb8] sm:$0xff]
    %v158 = vld [vmem:[%s0 + $0xc0] sm:$0xff]
    %v159 = vld [vmem:[%s0 + $0xc8] sm:$0xff]
    %v160 = vld [vmem:[%s0 + $0xd0] sm:$0xff]
    %v161 = vld [vmem:[%s0 + $0xd8] sm:$0xff]
    %v162 = vld [vmem:[%s0 + $0xe0] sm:$0xff]
    %v163 = vld [vmem:[%s0 + $0xe8] sm:$0xff]
    %v164 = vld [vmem:[%s0 + $0xf0] sm:$0xff]
    %v165 = vld [vmem:[%s0 + $0xf8] sm:$0xff]
    %v166 = vld [vmem:[%s0 + $0x100] sm:$0xff]
    %v167 = vld [vmem:[%s0 + $0x108] sm:$0xff]
    %v168 = vld [vmem:[%s0 + $0x110] sm:$0xff]
    %v169 = vld [vmem:[%s0 + $0x118] sm:$0xff]
    %v170 = vld [vmem:[%s0 + $0x120] sm:$0xff]
    %v171 = vld [vmem:[%s0 + $0x128] sm:$0xff]
    %v172 = vld [vmem:[%s0 + $0x130] sm:$0xff]
    %v173 = vld [vmem:[%s0 + $0x138] sm:$0xff]
    %v174 = vld [vmem:[%s0 + $0x140] sm:$0xff]
    %v175 = vld [vmem:[%s0 + $0x148] sm:$0xff]
    %v176 = vld [vmem:[%s0 + $0x150] sm:$0xff]
    %v177 = vld [vmem:[%s0 + $0x158] sm:$0xff]
    %v178 = vld [vmem:[%s0 + $0x160] sm:$0xff]
    %v179 = vld [vmem:[%s0 + $0x168] sm:$0xff]
    %v180 = vld [vmem:[%s0 + $0x170] sm:$0xff]
    %v181 = vld [vmem:[%s0 + $0x178] sm:$0xff]
    %v182 = vpack.c.bf16 %v158, %v134
    %v183 = vpack.c.bf16 %v159, %v135
    %v184 = vpack.c.bf16 %v160, %v136
    %v185 = vpack.c.bf16 %v161, %v137
    %v186 = vpack.c.bf16 %v162, %v138
    %v187 = vpack.c.bf16 %v163, %v139
    %v188 = vpack.c.bf16 %v164, %v140
    %v189 = vpack.c.bf16 %v165, %v141
    %v190 = vpack.c.bf16 %v166, %v142
    %v191 = vpack.c.bf16 %v167, %v143
    %v192 = vpack.c.bf16 %v168, %v144
    %v193 = vpack.c.bf16 %v169, %v145
    %v194 = vpack.c.bf16 %v170, %v146
    %v195 = vpack.c.bf16 %v171, %v147
    %v196 = vpack.c.bf16 %v172, %v148
    %v197 = vpack.c.bf16 %v173, %v149
    %v198 = vpack.c.bf16 %v174, %v150
    %v199 = vpack.c.bf16 %v175, %v151
    %v200 = vpack.c.bf16 %v176, %v152
    %v201 = vpack.c.bf16 %v177, %v153
    %v202 = vpack.c.bf16 %v178, %v154
    %v203 = vpack.c.bf16 %v179, %v155
    %v204 = vpack.c.bf16 %v180, %v156
    %v205 = vpack.c.bf16 %v181, %v157
    %v206 = vld [vmem:[#allocation2] sm:$0xff]
    %v207 = vld [vmem:[#allocation2 + $0x8] sm:$0xff]
    %v208 = vld [vmem:[#allocation2 + $0x10] sm:$0xff]
    %v209 = vld [vmem:[#allocation2 + $0x18] sm:$0xff]
    %v210 = vld [vmem:[#allocation2 + $0x20] sm:$0xff]
    %v211 = vld [vmem:[#allocation2 + $0x28] sm:$0xff]
    %v212 = vld [vmem:[#allocation2 + $0x30] sm:$0xff]
    %v213 = vld [vmem:[#allocation2 + $0x38] sm:$0xff]
    %v214 = vld [vmem:[#allocation2 + $0x40] sm:$0xff]
    %v215 = vld [vmem:[#allocation2 + $0x48] sm:$0xff]
    %v216 = vld [vmem:[#allocation2 + $0x50] sm:$0xff]
    %v217 = vld [vmem:[#allocation2 + $0x58] sm:$0xff]
    %v218 = vld [vmem:[#allocation2 + $0x60] sm:$0xff]
    %v219 = vld [vmem:[#allocation2 + $0x68] sm:$0xff]
    %v220 = vld [vmem:[#allocation2 + $0x70] sm:$0xff]
    %v221 = vld [vmem:[#allocation2 + $0x78] sm:$0xff]
    %v222 = vld [vmem:[#allocation2 + $0x80] sm:$0xff]
    %v223 = vld [vmem:[#allocation2 + $0x88] sm:$0xff]
    %v224 = vld [vmem:[#allocation2 + $0x90] sm:$0xff]
    %v225 = vld [vmem:[#allocation2 + $0x98] sm:$0xff]
    %v226 = vld [vmem:[#allocation2 + $0xa0] sm:$0xff]
    %v227 = vld [vmem:[#allocation2 + $0xa8] sm:$0xff]
    %v228 = vld [vmem:[#allocation2 + $0xb0] sm:$0xff]
    %v229 = vld [vmem:[#allocation2 + $0xb8] sm:$0xff]
    %v230 = vld [vmem:[#allocation2 + $0xc0] sm:$0xff]
    %v231 = vld [vmem:[#allocation2 + $0xc8] sm:$0xff]
    %v232 = vld [vmem:[#allocation2 + $0xd0] sm:$0xff]
    %v233 = vld [vmem:[#allocation2 + $0xd8] sm:$0xff]
    %v234 = vld [vmem:[#allocation2 + $0xe0] sm:$0xff]
    %v235 = vld [vmem:[#allocation2 + $0xe8] sm:$0xff]
    %v236 = vld [vmem:[#allocation2 + $0xf0] sm:$0xff]
    %v237 = vld [vmem:[#allocation2 + $0xf8] sm:$0xff]
    %v238 = vld [vmem:[#allocation2 + $0x100] sm:$0xff]
    %v239 = vld [vmem:[#allocation2 + $0x108] sm:$0xff]
    %v240 = vld [vmem:[#allocation2 + $0x110] sm:$0xff]
    %v241 = vld [vmem:[#allocation2 + $0x118] sm:$0xff]
    %v242 = vld [vmem:[#allocation2 + $0x120] sm:$0xff]
    %v243 = vld [vmem:[#allocation2 + $0x128] sm:$0xff]
    %v244 = vld [vmem:[#allocation2 + $0x130] sm:$0xff]
    %v245 = vld [vmem:[#allocation2 + $0x138] sm:$0xff]
    %v246 = vld [vmem:[#allocation2 + $0x140] sm:$0xff]
    %v247 = vld [vmem:[#allocation2 + $0x148] sm:$0xff]
    %v248 = vld [vmem:[#allocation2 + $0x150] sm:$0xff]
    %v249 = vld [vmem:[#allocation2 + $0x158] sm:$0xff]
    %v250 = vld [vmem:[#allocation2 + $0x160] sm:$0xff]
    %v251 = vld [vmem:[#allocation2 + $0x168] sm:$0xff]
    %v252 = vld [vmem:[#allocation2 + $0x170] sm:$0xff]
    %v253 = vld [vmem:[#allocation2 + $0x178] sm:$0xff]
    %v254 = vld [vmem:[#allocation2 + $0x180] sm:$0xff]
    %v255 = vld [vmem:[#allocation2 + $0x188] sm:$0xff]
    %v256 = vld [vmem:[#allocation2 + $0x190] sm:$0xff]
    %v257 = vld [vmem:[#allocation2 + $0x198] sm:$0xff]
    %v258 = vld [vmem:[#allocation2 + $0x1a0] sm:$0xff]
    %v259 = vld [vmem:[#allocation2 + $0x1a8] sm:$0xff]
    %v260 = vld [vmem:[#allocation2 + $0x1b0] sm:$0xff]
    %v261 = vld [vmem:[#allocation2 + $0x1b8] sm:$0xff]
    %v262 = vld [vmem:[#allocation2 + $0x1c0] sm:$0xff]
    %v263 = vld [vmem:[#allocation2 + $0x1c8] sm:$0xff]
    %v264 = vld [vmem:[#allocation2 + $0x1d0] sm:$0xff]
    %v265 = vld [vmem:[#allocation2 + $0x1d8] sm:$0xff]
    %v266 = vld [vmem:[#allocation2 + $0x1e0] sm:$0xff]
    %v267 = vld [vmem:[#allocation2 + $0x1e8] sm:$0xff]
    %v268 = vld [vmem:[#allocation2 + $0x1f0] sm:$0xff]
    %v269 = vld [vmem:[#allocation2 + $0x1f8] sm:$0xff]
    %v270 = vld [vmem:[#allocation2 + $0x200] sm:$0xff]
    %v271 = vld [vmem:[#allocation2 + $0x208] sm:$0xff]
    %v272 = vld [vmem:[#allocation2 + $0x210] sm:$0xff]
    %v273 = vld [vmem:[#allocation2 + $0x218] sm:$0xff]
    %v274 = vld [vmem:[#allocation2 + $0x220] sm:$0xff]
    %v275 = vld [vmem:[#allocation2 + $0x228] sm:$0xff]
    %v276 = vld [vmem:[#allocation2 + $0x230] sm:$0xff]
    %v277 = vld [vmem:[#allocation2 + $0x238] sm:$0xff]
    %v278 = vld [vmem:[#allocation2 + $0x240] sm:$0xff]
    %v279 = vld [vmem:[#allocation2 + $0x248] sm:$0xff]
    %v280 = vld [vmem:[#allocation2 + $0x250] sm:$0xff]
    %v281 = vld [vmem:[#allocation2 + $0x258] sm:$0xff]
    %v282 = vld [vmem:[#allocation2 + $0x260] sm:$0xff]
    %v283 = vld [vmem:[#allocation2 + $0x268] sm:$0xff]
    %v284 = vld [vmem:[#allocation2 + $0x270] sm:$0xff]
    %v285 = vld [vmem:[#allocation2 + $0x278] sm:$0xff]
    %v286 = vld [vmem:[#allocation2 + $0x280] sm:$0xff]
    %v287 = vld [vmem:[#allocation2 + $0x288] sm:$0xff]
    %v288 = vld [vmem:[#allocation2 + $0x290] sm:$0xff]
    %v289 = vld [vmem:[#allocation2 + $0x298] sm:$0xff]
    %v290 = vld [vmem:[#allocation2 + $0x2a0] sm:$0xff]
    %v291 = vld [vmem:[#allocation2 + $0x2a8] sm:$0xff]
    %v292 = vld [vmem:[#allocation2 + $0x2b0] sm:$0xff]
    %v293 = vld [vmem:[#allocation2 + $0x2b8] sm:$0xff]
    %v294 = vld [vmem:[#allocation2 + $0x2c0] sm:$0xff]
    %v295 = vld [vmem:[#allocation2 + $0x2c8] sm:$0xff]
    %v296 = vld [vmem:[#allocation2 + $0x2d0] sm:$0xff]
    %v297 = vld [vmem:[#allocation2 + $0x2d8] sm:$0xff]
    %v298 = vld [vmem:[#allocation2 + $0x2e0] sm:$0xff]
    %v299 = vld [vmem:[#allocation2 + $0x2e8] sm:$0xff]
    %v300 = vld [vmem:[#allocation2 + $0x2f0] sm:$0xff]
    %v301 = vld [vmem:[#allocation2 + $0x2f8] sm:$0xff]
    %v302 = vld [vmem:[#allocation2 + $0x300] sm:$0xff]
    %v303 = vld [vmem:[#allocation2 + $0x308] sm:$0xff]
    %v304 = vld [vmem:[#allocation2 + $0x310] sm:$0xff]
    %v305 = vld [vmem:[#allocation2 + $0x318] sm:$0xff]
    %v306 = vld [vmem:[#allocation2 + $0x320] sm:$0xff]
    %v307 = vld [vmem:[#allocation2 + $0x328] sm:$0xff]
    %v308 = vld [vmem:[#allocation2 + $0x330] sm:$0xff]
    %v309 = vld [vmem:[#allocation2 + $0x338] sm:$0xff]
    %v310 = vld [vmem:[#allocation2 + $0x340] sm:$0xff]
    %v311 = vld [vmem:[#allocation2 + $0x348] sm:$0xff]
    %v312 = vld [vmem:[#allocation2 + $0x350] sm:$0xff]
    %v313 = vld [vmem:[#allocation2 + $0x358] sm:$0xff]
    %v314 = vld [vmem:[#allocation2 + $0x360] sm:$0xff]
    %v315 = vld [vmem:[#allocation2 + $0x368] sm:$0xff]
    %v316 = vld [vmem:[#allocation2 + $0x370] sm:$0xff]
    %v317 = vld [vmem:[#allocation2 + $0x378] sm:$0xff]
    %v318 = vld [vmem:[#allocation2 + $0x380] sm:$0xff]
    %v319 = vld [vmem:[#allocation2 + $0x388] sm:$0xff]
    %v320 = vld [vmem:[#allocation2 + $0x390] sm:$0xff]
    %v321 = vld [vmem:[#allocation2 + $0x398] sm:$0xff]
    %v322 = vld [vmem:[#allocation2 + $0x3a0] sm:$0xff]
    %v323 = vld [vmem:[#allocation2 + $0x3a8] sm:$0xff]
    %v324 = vld [vmem:[#allocation2 + $0x3b0] sm:$0xff]
    %v325 = vld [vmem:[#allocation2 + $0x3b8] sm:$0xff]
    %v326 = vld [vmem:[#allocation2 + $0x3c0] sm:$0xff]
    %v327 = vld [vmem:[#allocation2 + $0x3c8] sm:$0xff]
    %v328 = vld [vmem:[#allocation2 + $0x3d0] sm:$0xff]
    %v329 = vld [vmem:[#allocation2 + $0x3d8] sm:$0xff]
    %v330 = vld [vmem:[#allocation2 + $0x3e0] sm:$0xff]
    %v331 = vld [vmem:[#allocation2 + $0x3e8] sm:$0xff]
    %v332 = vld [vmem:[#allocation2 + $0x3f0] sm:$0xff]
    %v333 = vld [vmem:[#allocation2 + $0x3f8] sm:$0xff]
    %v334 = vld [vmem:[#allocation2 + $0x400] sm:$0xff]
    %v335 = vld [vmem:[#allocation2 + $0x408] sm:$0xff]
    %v336 = vld [vmem:[#allocation2 + $0x410] sm:$0xff]
    %v337 = vld [vmem:[#allocation2 + $0x418] sm:$0xff]
    %v338 = vld [vmem:[#allocation2 + $0x420] sm:$0xff]
    %v339 = vld [vmem:[#allocation2 + $0x428] sm:$0xff]
    %v340 = vld [vmem:[#allocation2 + $0x430] sm:$0xff]
    %v341 = vld [vmem:[#allocation2 + $0x438] sm:$0xff]
    %v342 = vld [vmem:[#allocation2 + $0x440] sm:$0xff]
    %v343 = vld [vmem:[#allocation2 + $0x448] sm:$0xff]
    %v344 = vld [vmem:[#allocation2 + $0x450] sm:$0xff]
    %v345 = vld [vmem:[#allocation2 + $0x458] sm:$0xff]
    %v346 = vld [vmem:[#allocation2 + $0x460] sm:$0xff]
    %v347 = vld [vmem:[#allocation2 + $0x468] sm:$0xff]
    %v348 = vld [vmem:[#allocation2 + $0x470] sm:$0xff]
    %v349 = vld [vmem:[#allocation2 + $0x478] sm:$0xff]
    %v350 = vld [vmem:[#allocation2 + $0x480] sm:$0xff]
    %v351 = vld [vmem:[#allocation2 + $0x488] sm:$0xff]
    %v352 = vld [vmem:[#allocation2 + $0x490] sm:$0xff]
    %v353 = vld [vmem:[#allocation2 + $0x498] sm:$0xff]
    %v354 = vld [vmem:[#allocation2 + $0x4a0] sm:$0xff]
    %v355 = vld [vmem:[#allocation2 + $0x4a8] sm:$0xff]
    %v356 = vld [vmem:[#allocation2 + $0x4b0] sm:$0xff]
    %v357 = vld [vmem:[#allocation2 + $0x4b8] sm:$0xff]
    %v358 = vld [vmem:[#allocation2 + $0x4c0] sm:$0xff]
    %v359 = vld [vmem:[#allocation2 + $0x4c8] sm:$0xff]
    %v360 = vld [vmem:[#allocation2 + $0x4d0] sm:$0xff]
    %v361 = vld [vmem:[#allocation2 + $0x4d8] sm:$0xff]
    %v362 = vld [vmem:[#allocation2 + $0x4e0] sm:$0xff]
    %v363 = vld [vmem:[#allocation2 + $0x4e8] sm:$0xff]
    %v364 = vld [vmem:[#allocation2 + $0x4f0] sm:$0xff]
    %v365 = vld [vmem:[#allocation2 + $0x4f8] sm:$0xff]
    %v366 = vld [vmem:[#allocation2 + $0x500] sm:$0xff]
    %v367 = vld [vmem:[#allocation2 + $0x508] sm:$0xff]
    %v368 = vld [vmem:[#allocation2 + $0x510] sm:$0xff]
    %v369 = vld [vmem:[#allocation2 + $0x518] sm:$0xff]
    %v370 = vld [vmem:[#allocation2 + $0x520] sm:$0xff]
    %v371 = vld [vmem:[#allocation2 + $0x528] sm:$0xff]
    %v372 = vld [vmem:[#allocation2 + $0x530] sm:$0xff]
    %v373 = vld [vmem:[#allocation2 + $0x538] sm:$0xff]
    %v374 = vld [vmem:[#allocation2 + $0x540] sm:$0xff]
    %v375 = vld [vmem:[#allocation2 + $0x548] sm:$0xff]
    %v376 = vld [vmem:[#allocation2 + $0x550] sm:$0xff]
    %v377 = vld [vmem:[#allocation2 + $0x558] sm:$0xff]
    %v378 = vld [vmem:[#allocation2 + $0x560] sm:$0xff]
    %v379 = vld [vmem:[#allocation2 + $0x568] sm:$0xff]
    %v380 = vld [vmem:[#allocation2 + $0x570] sm:$0xff]
    %v381 = vld [vmem:[#allocation2 + $0x578] sm:$0xff]
    %v382 = vld [vmem:[#allocation2 + $0x580] sm:$0xff]
    %v383 = vld [vmem:[#allocation2 + $0x588] sm:$0xff]
    %v384 = vld [vmem:[#allocation2 + $0x590] sm:$0xff]
    %v385 = vld [vmem:[#allocation2 + $0x598] sm:$0xff]
    %v386 = vld [vmem:[#allocation2 + $0x5a0] sm:$0xff]
    %v387 = vld [vmem:[#allocation2 + $0x5a8] sm:$0xff]
    %v388 = vld [vmem:[#allocation2 + $0x5b0] sm:$0xff]
    %v389 = vld [vmem:[#allocation2 + $0x5b8] sm:$0xff]
    %v390 = vld [vmem:[#allocation2 + $0x5c0] sm:$0xff]
    %v391 = vld [vmem:[#allocation2 + $0x5c8] sm:$0xff]
    %v392 = vld [vmem:[#allocation2 + $0x5d0] sm:$0xff]
    %v393 = vld [vmem:[#allocation2 + $0x5d8] sm:$0xff]
    %v394 = vld [vmem:[#allocation2 + $0x5e0] sm:$0xff]
    %v395 = vld [vmem:[#allocation2 + $0x5e8] sm:$0xff]
    %v396 = vld [vmem:[#allocation2 + $0x5f0] sm:$0xff]
    %v397 = vld [vmem:[#allocation2 + $0x5f8] sm:$0xff]
    %v398 = vld [vmem:[#allocation2 + $0x600] sm:$0xff]
    %v399 = vld [vmem:[#allocation2 + $0x608] sm:$0xff]
    %v400 = vld [vmem:[#allocation2 + $0x610] sm:$0xff]
    %v401 = vld [vmem:[#allocation2 + $0x618] sm:$0xff]
    %v402 = vld [vmem:[#allocation2 + $0x620] sm:$0xff]
    %v403 = vld [vmem:[#allocation2 + $0x628] sm:$0xff]
    %v404 = vld [vmem:[#allocation2 + $0x630] sm:$0xff]
    %v405 = vld [vmem:[#allocation2 + $0x638] sm:$0xff]
    %v406 = vld [vmem:[#allocation2 + $0x640] sm:$0xff]
    %v407 = vld [vmem:[#allocation2 + $0x648] sm:$0xff]
    %v408 = vld [vmem:[#allocation2 + $0x650] sm:$0xff]
    %v409 = vld [vmem:[#allocation2 + $0x658] sm:$0xff]
    %v410 = vld [vmem:[#allocation2 + $0x660] sm:$0xff]
    %v411 = vld [vmem:[#allocation2 + $0x668] sm:$0xff]
    %v412 = vld [vmem:[#allocation2 + $0x670] sm:$0xff]
    %v413 = vld [vmem:[#allocation2 + $0x678] sm:$0xff]
    %v414 = vld [vmem:[#allocation2 + $0x680] sm:$0xff]
    %v415 = vld [vmem:[#allocation2 + $0x688] sm:$0xff]
    %v416 = vld [vmem:[#allocation2 + $0x690] sm:$0xff]
    %v417 = vld [vmem:[#allocation2 + $0x698] sm:$0xff]
    %v418 = vld [vmem:[#allocation2 + $0x6a0] sm:$0xff]
    %v419 = vld [vmem:[#allocation2 + $0x6a8] sm:$0xff]
    %v420 = vld [vmem:[#allocation2 + $0x6b0] sm:$0xff]
    %v421 = vld [vmem:[#allocation2 + $0x6b8] sm:$0xff]
    %v422 = vld [vmem:[#allocation2 + $0x6c0] sm:$0xff]
    %v423 = vld [vmem:[#allocation2 + $0x6c8] sm:$0xff]
    %v424 = vld [vmem:[#allocation2 + $0x6d0] sm:$0xff]
    %v425 = vld [vmem:[#allocation2 + $0x6d8] sm:$0xff]
    %v426 = vld [vmem:[#allocation2 + $0x6e0] sm:$0xff]
    %v427 = vld [vmem:[#allocation2 + $0x6e8] sm:$0xff]
    %v428 = vld [vmem:[#allocation2 + $0x6f0] sm:$0xff]
    %v429 = vld [vmem:[#allocation2 + $0x6f8] sm:$0xff]
    %v430 = vld [vmem:[#allocation2 + $0x700] sm:$0xff]
    %v431 = vld [vmem:[#allocation2 + $0x708] sm:$0xff]
    %v432 = vld [vmem:[#allocation2 + $0x710] sm:$0xff]
    %v433 = vld [vmem:[#allocation2 + $0x718] sm:$0xff]
    %v434 = vld [vmem:[#allocation2 + $0x720] sm:$0xff]
    %v435 = vld [vmem:[#allocation2 + $0x728] sm:$0xff]
    %v436 = vld [vmem:[#allocation2 + $0x730] sm:$0xff]
    %v437 = vld [vmem:[#allocation2 + $0x738] sm:$0xff]
    %v438 = vld [vmem:[#allocation2 + $0x740] sm:$0xff]
    %v439 = vld [vmem:[#allocation2 + $0x748] sm:$0xff]
    %v440 = vld [vmem:[#allocation2 + $0x750] sm:$0xff]
    %v441 = vld [vmem:[#allocation2 + $0x758] sm:$0xff]
    %v442 = vld [vmem:[#allocation2 + $0x760] sm:$0xff]
    %v443 = vld [vmem:[#allocation2 + $0x768] sm:$0xff]
    %v444 = vld [vmem:[#allocation2 + $0x770] sm:$0xff]
    %v445 = vld [vmem:[#allocation2 + $0x778] sm:$0xff]
    %v446 = vld [vmem:[#allocation2 + $0x780] sm:$0xff]
    %v447 = vld [vmem:[#allocation2 + $0x788] sm:$0xff]
    %v448 = vld [vmem:[#allocation2 + $0x790] sm:$0xff]
    %v449 = vld [vmem:[#allocation2 + $0x798] sm:$0xff]
    %v450 = vld [vmem:[#allocation2 + $0x7a0] sm:$0xff]
    %v451 = vld [vmem:[#allocation2 + $0x7a8] sm:$0xff]
    %v452 = vld [vmem:[#allocation2 + $0x7b0] sm:$0xff]
    %v453 = vld [vmem:[#allocation2 + $0x7b8] sm:$0xff]
    %v454 = vld [vmem:[#allocation2 + $0x7c0] sm:$0xff]
    %v455 = vld [vmem:[#allocation2 + $0x7c8] sm:$0xff]
    %v456 = vld [vmem:[#allocation2 + $0x7d0] sm:$0xff]
    %v457 = vld [vmem:[#allocation2 + $0x7d8] sm:$0xff]
    %v458 = vld [vmem:[#allocation2 + $0x7e0] sm:$0xff]
    %v459 = vld [vmem:[#allocation2 + $0x7e8] sm:$0xff]
    %v460 = vld [vmem:[#allocation2 + $0x7f0] sm:$0xff]
    %v461 = vld [vmem:[#allocation2 + $0x7f8] sm:$0xff]
    %v462 = vld [vmem:[#allocation2 + $0x800] sm:$0xff]
    %v463 = vld [vmem:[#allocation2 + $0x808] sm:$0xff]
    %v464 = vld [vmem:[#allocation2 + $0x810] sm:$0xff]
    %v465 = vld [vmem:[#allocation2 + $0x818] sm:$0xff]
    %v466 = vld [vmem:[#allocation2 + $0x820] sm:$0xff]
    %v467 = vld [vmem:[#allocation2 + $0x828] sm:$0xff]
    %v468 = vld [vmem:[#allocation2 + $0x830] sm:$0xff]
    %v469 = vld [vmem:[#allocation2 + $0x838] sm:$0xff]
    %v470 = vld [vmem:[#allocation2 + $0x840] sm:$0xff]
    %v471 = vld [vmem:[#allocation2 + $0x848] sm:$0xff]
    %v472 = vld [vmem:[#allocation2 + $0x850] sm:$0xff]
    %v473 = vld [vmem:[#allocation2 + $0x858] sm:$0xff]
    %v474 = vld [vmem:[#allocation2 + $0x860] sm:$0xff]
    %v475 = vld [vmem:[#allocation2 + $0x868] sm:$0xff]
    %v476 = vld [vmem:[#allocation2 + $0x870] sm:$0xff]
    %v477 = vld [vmem:[#allocation2 + $0x878] sm:$0xff]
    %v478 = vld [vmem:[#allocation2 + $0x880] sm:$0xff]
    %v479 = vld [vmem:[#allocation2 + $0x888] sm:$0xff]
    %v480 = vld [vmem:[#allocation2 + $0x890] sm:$0xff]
    %v481 = vld [vmem:[#allocation2 + $0x898] sm:$0xff]
    %v482 = vld [vmem:[#allocation2 + $0x8a0] sm:$0xff]
    %v483 = vld [vmem:[#allocation2 + $0x8a8] sm:$0xff]
    %v484 = vld [vmem:[#allocation2 + $0x8b0] sm:$0xff]
    %v485 = vld [vmem:[#allocation2 + $0x8b8] sm:$0xff]
    %v486 = vld [vmem:[#allocation2 + $0x8c0] sm:$0xff]
    %v487 = vld [vmem:[#allocation2 + $0x8c8] sm:$0xff]
    %v488 = vld [vmem:[#allocation2 + $0x8d0] sm:$0xff]
    %v489 = vld [vmem:[#allocation2 + $0x8d8] sm:$0xff]
    %v490 = vld [vmem:[#allocation2 + $0x8e0] sm:$0xff]
    %v491 = vld [vmem:[#allocation2 + $0x8e8] sm:$0xff]
    %v492 = vld [vmem:[#allocation2 + $0x8f0] sm:$0xff]
    %v493 = vld [vmem:[#allocation2 + $0x8f8] sm:$0xff]
    %v494 = vld [vmem:[#allocation2 + $0x900] sm:$0xff]
    %v495 = vld [vmem:[#allocation2 + $0x908] sm:$0xff]
    %v496 = vld [vmem:[#allocation2 + $0x910] sm:$0xff]
    %v497 = vld [vmem:[#allocation2 + $0x918] sm:$0xff]
    %v498 = vld [vmem:[#allocation2 + $0x920] sm:$0xff]
    %v499 = vld [vmem:[#allocation2 + $0x928] sm:$0xff]
    %v500 = vld [vmem:[#allocation2 + $0x930] sm:$0xff]
    %v501 = vld [vmem:[#allocation2 + $0x938] sm:$0xff]
    %v502 = vld [vmem:[#allocation2 + $0x940] sm:$0xff]
    %v503 = vld [vmem:[#allocation2 + $0x948] sm:$0xff]
    %v504 = vld [vmem:[#allocation2 + $0x950] sm:$0xff]
    %v505 = vld [vmem:[#allocation2 + $0x958] sm:$0xff]
    %v506 = vld [vmem:[#allocation2 + $0x960] sm:$0xff]
    %v507 = vld [vmem:[#allocation2 + $0x968] sm:$0xff]
    %v508 = vld [vmem:[#allocation2 + $0x970] sm:$0xff]
    %v509 = vld [vmem:[#allocation2 + $0x978] sm:$0xff]
    %v510 = vld [vmem:[#allocation2 + $0x980] sm:$0xff]
    %v511 = vld [vmem:[#allocation2 + $0x988] sm:$0xff]
    %v512 = vld [vmem:[#allocation2 + $0x990] sm:$0xff]
    %v513 = vld [vmem:[#allocation2 + $0x998] sm:$0xff]
    %v514 = vld [vmem:[#allocation2 + $0x9a0] sm:$0xff]
    %v515 = vld [vmem:[#allocation2 + $0x9a8] sm:$0xff]
    %v516 = vld [vmem:[#allocation2 + $0x9b0] sm:$0xff]
    %v517 = vld [vmem:[#allocation2 + $0x9b8] sm:$0xff]
    %v518 = vld [vmem:[#allocation2 + $0x9c0] sm:$0xff]
    %v519 = vld [vmem:[#allocation2 + $0x9c8] sm:$0xff]
    %v520 = vld [vmem:[#allocation2 + $0x9d0] sm:$0xff]
    %v521 = vld [vmem:[#allocation2 + $0x9d8] sm:$0xff]
    %v522 = vld [vmem:[#allocation2 + $0x9e0] sm:$0xff]
    %v523 = vld [vmem:[#allocation2 + $0x9e8] sm:$0xff]
    %v524 = vld [vmem:[#allocation2 + $0x9f0] sm:$0xff]
    %v525 = vld [vmem:[#allocation2 + $0x9f8] sm:$0xff]
    %v526 = vld [vmem:[#allocation2 + $0xa00] sm:$0xff]
    %v527 = vld [vmem:[#allocation2 + $0xa08] sm:$0xff]
    %v528 = vld [vmem:[#allocation2 + $0xa10] sm:$0xff]
    %v529 = vld [vmem:[#allocation2 + $0xa18] sm:$0xff]
    %v530 = vld [vmem:[#allocation2 + $0xa20] sm:$0xff]
    %v531 = vld [vmem:[#allocation2 + $0xa28] sm:$0xff]
    %v532 = vld [vmem:[#allocation2 + $0xa30] sm:$0xff]
    %v533 = vld [vmem:[#allocation2 + $0xa38] sm:$0xff]
    %v534 = vld [vmem:[#allocation2 + $0xa40] sm:$0xff]
    %v535 = vld [vmem:[#allocation2 + $0xa48] sm:$0xff]
    %v536 = vld [vmem:[#allocation2 + $0xa50] sm:$0xff]
    %v537 = vld [vmem:[#allocation2 + $0xa58] sm:$0xff]
    %v538 = vld [vmem:[#allocation2 + $0xa60] sm:$0xff]
    %v539 = vld [vmem:[#allocation2 + $0xa68] sm:$0xff]
    %v540 = vld [vmem:[#allocation2 + $0xa70] sm:$0xff]
    %v541 = vld [vmem:[#allocation2 + $0xa78] sm:$0xff]
    %v542 = vld [vmem:[#allocation2 + $0xa80] sm:$0xff]
    %v543 = vld [vmem:[#allocation2 + $0xa88] sm:$0xff]
    %v544 = vld [vmem:[#allocation2 + $0xa90] sm:$0xff]
    %v545 = vld [vmem:[#allocation2 + $0xa98] sm:$0xff]
    %v546 = vld [vmem:[#allocation2 + $0xaa0] sm:$0xff]
    %v547 = vld [vmem:[#allocation2 + $0xaa8] sm:$0xff]
    %v548 = vld [vmem:[#allocation2 + $0xab0] sm:$0xff]
    %v549 = vld [vmem:[#allocation2 + $0xab8] sm:$0xff]
    %v550 = vld [vmem:[#allocation2 + $0xac0] sm:$0xff]
    %v551 = vld [vmem:[#allocation2 + $0xac8] sm:$0xff]
    %v552 = vld [vmem:[#allocation2 + $0xad0] sm:$0xff]
    %v553 = vld [vmem:[#allocation2 + $0xad8] sm:$0xff]
    %v554 = vld [vmem:[#allocation2 + $0xae0] sm:$0xff]
    %v555 = vld [vmem:[#allocation2 + $0xae8] sm:$0xff]
    %v556 = vld [vmem:[#allocation2 + $0xaf0] sm:$0xff]
    %v557 = vld [vmem:[#allocation2 + $0xaf8] sm:$0xff]
    %v558 = vld [vmem:[#allocation2 + $0xb00] sm:$0xff]
    %v559 = vld [vmem:[#allocation2 + $0xb08] sm:$0xff]
    %v560 = vld [vmem:[#allocation2 + $0xb10] sm:$0xff]
    %v561 = vld [vmem:[#allocation2 + $0xb18] sm:$0xff]
    %v562 = vld [vmem:[#allocation2 + $0xb20] sm:$0xff]
    %v563 = vld [vmem:[#allocation2 + $0xb28] sm:$0xff]
    %v564 = vld [vmem:[#allocation2 + $0xb30] sm:$0xff]
    %v565 = vld [vmem:[#allocation2 + $0xb38] sm:$0xff]
    %v566 = vld [vmem:[#allocation2 + $0xb40] sm:$0xff]
    %v567 = vld [vmem:[#allocation2 + $0xb48] sm:$0xff]
    %v568 = vld [vmem:[#allocation2 + $0xb50] sm:$0xff]
    %v569 = vld [vmem:[#allocation2 + $0xb58] sm:$0xff]
    %v570 = vld [vmem:[#allocation2 + $0xb60] sm:$0xff]
    %v571 = vld [vmem:[#allocation2 + $0xb68] sm:$0xff]
    %v572 = vld [vmem:[#allocation2 + $0xb70] sm:$0xff]
    %v573 = vld [vmem:[#allocation2 + $0xb78] sm:$0xff]
    %v574 = vld [vmem:[#allocation2 + $0xb80] sm:$0xff]
    %v575 = vld [vmem:[#allocation2 + $0xb88] sm:$0xff]
    %v576 = vld [vmem:[#allocation2 + $0xb90] sm:$0xff]
    %v577 = vld [vmem:[#allocation2 + $0xb98] sm:$0xff]
    %v578 = vld [vmem:[#allocation2 + $0xba0] sm:$0xff]
    %v579 = vld [vmem:[#allocation2 + $0xba8] sm:$0xff]
    %v580 = vld [vmem:[#allocation2 + $0xbb0] sm:$0xff]
    %v581 = vld [vmem:[#allocation2 + $0xbb8] sm:$0xff]
    %v582 = vld [vmem:[#allocation2 + $0xbc0] sm:$0xff]
    %v583 = vld [vmem:[#allocation2 + $0xbc8] sm:$0xff]
    %v584 = vld [vmem:[#allocation2 + $0xbd0] sm:$0xff]
    %v585 = vld [vmem:[#allocation2 + $0xbd8] sm:$0xff]
    %v586 = vld [vmem:[#allocation2 + $0xbe0] sm:$0xff]
    %v587 = vld [vmem:[#allocation2 + $0xbe8] sm:$0xff]
    %v588 = vld [vmem:[#allocation2 + $0xbf0] sm:$0xff]
    %v589 = vld [vmem:[#allocation2 + $0xbf8] sm:$0xff]
    %v590 = vld [vmem:[#allocation2 + $0xc00] sm:$0xff]
    %v591 = vld [vmem:[#allocation2 + $0xc08] sm:$0xff]
    %v592 = vld [vmem:[#allocation2 + $0xc10] sm:$0xff]
    %v593 = vld [vmem:[#allocation2 + $0xc18] sm:$0xff]
    %v594 = vld [vmem:[#allocation2 + $0xc20] sm:$0xff]
    %v595 = vld [vmem:[#allocation2 + $0xc28] sm:$0xff]
    %v596 = vld [vmem:[#allocation2 + $0xc30] sm:$0xff]
    %v597 = vld [vmem:[#allocation2 + $0xc38] sm:$0xff]
    %v598 = vld [vmem:[#allocation2 + $0xc40] sm:$0xff]
    %v599 = vld [vmem:[#allocation2 + $0xc48] sm:$0xff]
    %v600 = vld [vmem:[#allocation2 + $0xc50] sm:$0xff]
    %v601 = vld [vmem:[#allocation2 + $0xc58] sm:$0xff]
    %v602 = vld [vmem:[#allocation2 + $0xc60] sm:$0xff]
    %v603 = vld [vmem:[#allocation2 + $0xc68] sm:$0xff]
    %v604 = vld [vmem:[#allocation2 + $0xc70] sm:$0xff]
    %v605 = vld [vmem:[#allocation2 + $0xc78] sm:$0xff]
    %v606 = vld [vmem:[#allocation2 + $0xc80] sm:$0xff]
    %v607 = vld [vmem:[#allocation2 + $0xc88] sm:$0xff]
    %v608 = vld [vmem:[#allocation2 + $0xc90] sm:$0xff]
    %v609 = vld [vmem:[#allocation2 + $0xc98] sm:$0xff]
    %v610 = vld [vmem:[#allocation2 + $0xca0] sm:$0xff]
    %v611 = vld [vmem:[#allocation2 + $0xca8] sm:$0xff]
    %v612 = vld [vmem:[#allocation2 + $0xcb0] sm:$0xff]
    %v613 = vld [vmem:[#allocation2 + $0xcb8] sm:$0xff]
    %v614 = vld [vmem:[#allocation2 + $0xcc0] sm:$0xff]
    %v615 = vld [vmem:[#allocation2 + $0xcc8] sm:$0xff]
    %v616 = vld [vmem:[#allocation2 + $0xcd0] sm:$0xff]
    %v617 = vld [vmem:[#allocation2 + $0xcd8] sm:$0xff]
    %v618 = vld [vmem:[#allocation2 + $0xce0] sm:$0xff]
    %v619 = vld [vmem:[#allocation2 + $0xce8] sm:$0xff]
    %v620 = vld [vmem:[#allocation2 + $0xcf0] sm:$0xff]
    %v621 = vld [vmem:[#allocation2 + $0xcf8] sm:$0xff]
    %v622 = vld [vmem:[#allocation2 + $0xd00] sm:$0xff]
    %v623 = vld [vmem:[#allocation2 + $0xd08] sm:$0xff]
    %v624 = vld [vmem:[#allocation2 + $0xd10] sm:$0xff]
    %v625 = vld [vmem:[#allocation2 + $0xd18] sm:$0xff]
    %v626 = vld [vmem:[#allocation2 + $0xd20] sm:$0xff]
    %v627 = vld [vmem:[#allocation2 + $0xd28] sm:$0xff]
    %v628 = vld [vmem:[#allocation2 + $0xd30] sm:$0xff]
    %v629 = vld [vmem:[#allocation2 + $0xd38] sm:$0xff]
    %v630 = vld [vmem:[#allocation2 + $0xd40] sm:$0xff]
    %v631 = vld [vmem:[#allocation2 + $0xd48] sm:$0xff]
    %v632 = vld [vmem:[#allocation2 + $0xd50] sm:$0xff]
    %v633 = vld [vmem:[#allocation2 + $0xd58] sm:$0xff]
    %v634 = vld [vmem:[#allocation2 + $0xd60] sm:$0xff]
    %v635 = vld [vmem:[#allocation2 + $0xd68] sm:$0xff]
    %v636 = vld [vmem:[#allocation2 + $0xd70] sm:$0xff]
    %v637 = vld [vmem:[#allocation2 + $0xd78] sm:$0xff]
    %v638 = vld [vmem:[#allocation2 + $0xd80] sm:$0xff]
    %v639 = vld [vmem:[#allocation2 + $0xd88] sm:$0xff]
    %v640 = vld [vmem:[#allocation2 + $0xd90] sm:$0xff]
    %v641 = vld [vmem:[#allocation2 + $0xd98] sm:$0xff]
    %v642 = vld [vmem:[#allocation2 + $0xda0] sm:$0xff]
    %v643 = vld [vmem:[#allocation2 + $0xda8] sm:$0xff]
    %v644 = vld [vmem:[#allocation2 + $0xdb0] sm:$0xff]
    %v645 = vld [vmem:[#allocation2 + $0xdb8] sm:$0xff]
    %v646 = vld [vmem:[#allocation2 + $0xdc0] sm:$0xff]
    %v647 = vld [vmem:[#allocation2 + $0xdc8] sm:$0xff]
    %v648 = vld [vmem:[#allocation2 + $0xdd0] sm:$0xff]
    %v649 = vld [vmem:[#allocation2 + $0xdd8] sm:$0xff]
    %v650 = vld [vmem:[#allocation2 + $0xde0] sm:$0xff]
    %v651 = vld [vmem:[#allocation2 + $0xde8] sm:$0xff]
    %v652 = vld [vmem:[#allocation2 + $0xdf0] sm:$0xff]
    %v653 = vld [vmem:[#allocation2 + $0xdf8] sm:$0xff]
    %v654 = vld [vmem:[#allocation2 + $0xe00] sm:$0xff]
    %v655 = vld [vmem:[#allocation2 + $0xe08] sm:$0xff]
    %v656 = vld [vmem:[#allocation2 + $0xe10] sm:$0xff]
    %v657 = vld [vmem:[#allocation2 + $0xe18] sm:$0xff]
    %v658 = vld [vmem:[#allocation2 + $0xe20] sm:$0xff]
    %v659 = vld [vmem:[#allocation2 + $0xe28] sm:$0xff]
    %v660 = vld [vmem:[#allocation2 + $0xe30] sm:$0xff]
    %v661 = vld [vmem:[#allocation2 + $0xe38] sm:$0xff]
    %v662 = vld [vmem:[#allocation2 + $0xe40] sm:$0xff]
    %v663 = vld [vmem:[#allocation2 + $0xe48] sm:$0xff]
    %v664 = vld [vmem:[#allocation2 + $0xe50] sm:$0xff]
    %v665 = vld [vmem:[#allocation2 + $0xe58] sm:$0xff]
    %v666 = vld [vmem:[#allocation2 + $0xe60] sm:$0xff]
    %v667 = vld [vmem:[#allocation2 + $0xe68] sm:$0xff]
    %v668 = vld [vmem:[#allocation2 + $0xe70] sm:$0xff]
    %v669 = vld [vmem:[#allocation2 + $0xe78] sm:$0xff]
    %v670 = vld [vmem:[#allocation2 + $0xe80] sm:$0xff]
    %v671 = vld [vmem:[#allocation2 + $0xe88] sm:$0xff]
    %v672 = vld [vmem:[#allocation2 + $0xe90] sm:$0xff]
    %v673 = vld [vmem:[#allocation2 + $0xe98] sm:$0xff]
    %v674 = vld [vmem:[#allocation2 + $0xea0] sm:$0xff]
    %v675 = vld [vmem:[#allocation2 + $0xea8] sm:$0xff]
    %v676 = vld [vmem:[#allocation2 + $0xeb0] sm:$0xff]
    %v677 = vld [vmem:[#allocation2 + $0xeb8] sm:$0xff]
    %v678 = vld [vmem:[#allocation2 + $0xec0] sm:$0xff]
    %v679 = vld [vmem:[#allocation2 + $0xec8] sm:$0xff]
    %v680 = vld [vmem:[#allocation2 + $0xed0] sm:$0xff]
    %v681 = vld [vmem:[#allocation2 + $0xed8] sm:$0xff]
    %v682 = vld [vmem:[#allocation2 + $0xee0] sm:$0xff]
    %v683 = vld [vmem:[#allocation2 + $0xee8] sm:$0xff]
    %v684 = vld [vmem:[#allocation2 + $0xef0] sm:$0xff]
    %v685 = vld [vmem:[#allocation2 + $0xef8] sm:$0xff]
    %v686 = vld [vmem:[#allocation2 + $0xf00] sm:$0xff]
    %v687 = vld [vmem:[#allocation2 + $0xf08] sm:$0xff]
    %v688 = vld [vmem:[#allocation2 + $0xf10] sm:$0xff]
    %v689 = vld [vmem:[#allocation2 + $0xf18] sm:$0xff]
    %v690 = vld [vmem:[#allocation2 + $0xf20] sm:$0xff]
    %v691 = vld [vmem:[#allocation2 + $0xf28] sm:$0xff]
    %v692 = vld [vmem:[#allocation2 + $0xf30] sm:$0xff]
    %v693 = vld [vmem:[#allocation2 + $0xf38] sm:$0xff]
    %v694 = vld [vmem:[#allocation2 + $0xf40] sm:$0xff]
    %v695 = vld [vmem:[#allocation2 + $0xf48] sm:$0xff]
    %v696 = vld [vmem:[#allocation2 + $0xf50] sm:$0xff]
    %v697 = vld [vmem:[#allocation2 + $0xf58] sm:$0xff]
    %v698 = vld [vmem:[#allocation2 + $0xf60] sm:$0xff]
    %v699 = vld [vmem:[#allocation2 + $0xf68] sm:$0xff]
    %v700 = vld [vmem:[#allocation2 + $0xf70] sm:$0xff]
    %v701 = vld [vmem:[#allocation2 + $0xf78] sm:$0xff]
    %v702 = vld [vmem:[#allocation2 + $0xf80] sm:$0xff]
    %v703 = vld [vmem:[#allocation2 + $0xf88] sm:$0xff]
    %v704 = vld [vmem:[#allocation2 + $0xf90] sm:$0xff]
    %v705 = vld [vmem:[#allocation2 + $0xf98] sm:$0xff]
    %v706 = vld [vmem:[#allocation2 + $0xfa0] sm:$0xff]
    %v707 = vld [vmem:[#allocation2 + $0xfa8] sm:$0xff]
    %v708 = vld [vmem:[#allocation2 + $0xfb0] sm:$0xff]
    %v709 = vld [vmem:[#allocation2 + $0xfb8] sm:$0xff]
    %v710 = vld [vmem:[#allocation2 + $0xfc0] sm:$0xff]
    %v711 = vld [vmem:[#allocation2 + $0xfc8] sm:$0xff]
    %v712 = vld [vmem:[#allocation2 + $0xfd0] sm:$0xff]
    %v713 = vld [vmem:[#allocation2 + $0xfd8] sm:$0xff]
    %v714 = vld [vmem:[#allocation2 + $0xfe0] sm:$0xff]
    %v715 = vld [vmem:[#allocation2 + $0xfe8] sm:$0xff]
    %v716 = vld [vmem:[#allocation2 + $0xff0] sm:$0xff]
    %v717 = vld [vmem:[#allocation2 + $0xff8] sm:$0xff]
    %v718 = vld [vmem:[#allocation2 + $0x1000] sm:$0xff]
    %v719 = vld [vmem:[#allocation2 + $0x1008] sm:$0xff]
    %v720 = vld [vmem:[#allocation2 + $0x1010] sm:$0xff]
    %v721 = vld [vmem:[#allocation2 + $0x1018] sm:$0xff]
    %v722 = vld [vmem:[#allocation2 + $0x1020] sm:$0xff]
    %v723 = vld [vmem:[#allocation2 + $0x1028] sm:$0xff]
    %v724 = vld [vmem:[#allocation2 + $0x1030] sm:$0xff]
    %v725 = vld [vmem:[#allocation2 + $0x1038] sm:$0xff]
    %v726 = vld [vmem:[#allocation2 + $0x1040] sm:$0xff]
    %v727 = vld [vmem:[#allocation2 + $0x1048] sm:$0xff]
    %v728 = vld [vmem:[#allocation2 + $0x1050] sm:$0xff]
    %v729 = vld [vmem:[#allocation2 + $0x1058] sm:$0xff]
    %v730 = vld [vmem:[#allocation2 + $0x1060] sm:$0xff]
    %v731 = vld [vmem:[#allocation2 + $0x1068] sm:$0xff]
    %v732 = vld [vmem:[#allocation2 + $0x1070] sm:$0xff]
    %v733 = vld [vmem:[#allocation2 + $0x1078] sm:$0xff]
    %v734 = vld [vmem:[#allocation2 + $0x1080] sm:$0xff]
    %v735 = vld [vmem:[#allocation2 + $0x1088] sm:$0xff]
    %v736 = vld [vmem:[#allocation2 + $0x1090] sm:$0xff]
    %v737 = vld [vmem:[#allocation2 + $0x1098] sm:$0xff]
    %v738 = vld [vmem:[#allocation2 + $0x10a0] sm:$0xff]
    %v739 = vld [vmem:[#allocation2 + $0x10a8] sm:$0xff]
    %v740 = vld [vmem:[#allocation2 + $0x10b0] sm:$0xff]
    %v741 = vld [vmem:[#allocation2 + $0x10b8] sm:$0xff]
    %v742 = vld [vmem:[#allocation2 + $0x10c0] sm:$0xff]
    %v743 = vld [vmem:[#allocation2 + $0x10c8] sm:$0xff]
    %v744 = vld [vmem:[#allocation2 + $0x10d0] sm:$0xff]
    %v745 = vld [vmem:[#allocation2 + $0x10d8] sm:$0xff]
    %v746 = vld [vmem:[#allocation2 + $0x10e0] sm:$0xff]
    %v747 = vld [vmem:[#allocation2 + $0x10e8] sm:$0xff]
    %v748 = vld [vmem:[#allocation2 + $0x10f0] sm:$0xff]
    %v749 = vld [vmem:[#allocation2 + $0x10f8] sm:$0xff]
    %v750 = vld [vmem:[#allocation2 + $0x1100] sm:$0xff]
    %v751 = vld [vmem:[#allocation2 + $0x1108] sm:$0xff]
    %v752 = vld [vmem:[#allocation2 + $0x1110] sm:$0xff]
    %v753 = vld [vmem:[#allocation2 + $0x1118] sm:$0xff]
    %v754 = vld [vmem:[#allocation2 + $0x1120] sm:$0xff]
    %v755 = vld [vmem:[#allocation2 + $0x1128] sm:$0xff]
    %v756 = vld [vmem:[#allocation2 + $0x1130] sm:$0xff]
    %v757 = vld [vmem:[#allocation2 + $0x1138] sm:$0xff]
    %v758 = vld [vmem:[#allocation2 + $0x1140] sm:$0xff]
    %v759 = vld [vmem:[#allocation2 + $0x1148] sm:$0xff]
    %v760 = vld [vmem:[#allocation2 + $0x1150] sm:$0xff]
    %v761 = vld [vmem:[#allocation2 + $0x1158] sm:$0xff]
    %v762 = vld [vmem:[#allocation2 + $0x1160] sm:$0xff]
    %v763 = vld [vmem:[#allocation2 + $0x1168] sm:$0xff]
    %v764 = vld [vmem:[#allocation2 + $0x1170] sm:$0xff]
    %v765 = vld [vmem:[#allocation2 + $0x1178] sm:$0xff]
    %v766 = vld [vmem:[#allocation2 + $0x1180] sm:$0xff]
    %v767 = vld [vmem:[#allocation2 + $0x1188] sm:$0xff]
    %v768 = vld [vmem:[#allocation2 + $0x1190] sm:$0xff]
    %v769 = vld [vmem:[#allocation2 + $0x1198] sm:$0xff]
    %v770 = vld [vmem:[#allocation2 + $0x11a0] sm:$0xff]
    %v771 = vld [vmem:[#allocation2 + $0x11a8] sm:$0xff]
    %v772 = vld [vmem:[#allocation2 + $0x11b0] sm:$0xff]
    %v773 = vld [vmem:[#allocation2 + $0x11b8] sm:$0xff]
    %v774 = vld [vmem:[#allocation2 + $0x11c0] sm:$0xff]
    %v775 = vld [vmem:[#allocation2 + $0x11c8] sm:$0xff]
    %v776 = vld [vmem:[#allocation2 + $0x11d0] sm:$0xff]
    %v777 = vld [vmem:[#allocation2 + $0x11d8] sm:$0xff]
    %v778 = vld [vmem:[#allocation2 + $0x11e0] sm:$0xff]
    %v779 = vld [vmem:[#allocation2 + $0x11e8] sm:$0xff]
    %v780 = vld [vmem:[#allocation2 + $0x11f0] sm:$0xff]
    %v781 = vld [vmem:[#allocation2 + $0x11f8] sm:$0xff]
    %v782 = vld [vmem:[#allocation2 + $0x1200] sm:$0xff]
    %v783 = vld [vmem:[#allocation2 + $0x1208] sm:$0xff]
    %v784 = vld [vmem:[#allocation2 + $0x1210] sm:$0xff]
    %v785 = vld [vmem:[#allocation2 + $0x1218] sm:$0xff]
    %v786 = vld [vmem:[#allocation2 + $0x1220] sm:$0xff]
    %v787 = vld [vmem:[#allocation2 + $0x1228] sm:$0xff]
    %v788 = vld [vmem:[#allocation2 + $0x1230] sm:$0xff]
    %v789 = vld [vmem:[#allocation2 + $0x1238] sm:$0xff]
    %v790 = vld [vmem:[#allocation2 + $0x1240] sm:$0xff]
    %v791 = vld [vmem:[#allocation2 + $0x1248] sm:$0xff]
    %v792 = vld [vmem:[#allocation2 + $0x1250] sm:$0xff]
    %v793 = vld [vmem:[#allocation2 + $0x1258] sm:$0xff]
    %v794 = vld [vmem:[#allocation2 + $0x1260] sm:$0xff]
    %v795 = vld [vmem:[#allocation2 + $0x1268] sm:$0xff]
    %v796 = vld [vmem:[#allocation2 + $0x1270] sm:$0xff]
    %v797 = vld [vmem:[#allocation2 + $0x1278] sm:$0xff]
    %v798 = vld [vmem:[#allocation2 + $0x1280] sm:$0xff]
    %v799 = vld [vmem:[#allocation2 + $0x1288] sm:$0xff]
    %v800 = vld [vmem:[#allocation2 + $0x1290] sm:$0xff]
    %v801 = vld [vmem:[#allocation2 + $0x1298] sm:$0xff]
    %v802 = vld [vmem:[#allocation2 + $0x12a0] sm:$0xff]
    %v803 = vld [vmem:[#allocation2 + $0x12a8] sm:$0xff]
    %v804 = vld [vmem:[#allocation2 + $0x12b0] sm:$0xff]
    %v805 = vld [vmem:[#allocation2 + $0x12b8] sm:$0xff]
    %v806 = vld [vmem:[#allocation2 + $0x12c0] sm:$0xff]
    %v807 = vld [vmem:[#allocation2 + $0x12c8] sm:$0xff]
    %v808 = vld [vmem:[#allocation2 + $0x12d0] sm:$0xff]
    %v809 = vld [vmem:[#allocation2 + $0x12d8] sm:$0xff]
    %v810 = vld [vmem:[#allocation2 + $0x12e0] sm:$0xff]
    %v811 = vld [vmem:[#allocation2 + $0x12e8] sm:$0xff]
    %v812 = vld [vmem:[#allocation2 + $0x12f0] sm:$0xff]
    %v813 = vld [vmem:[#allocation2 + $0x12f8] sm:$0xff]
    %v814 = vld [vmem:[#allocation2 + $0x1300] sm:$0xff]
    %v815 = vld [vmem:[#allocation2 + $0x1308] sm:$0xff]
    %v816 = vld [vmem:[#allocation2 + $0x1310] sm:$0xff]
    %v817 = vld [vmem:[#allocation2 + $0x1318] sm:$0xff]
    %v818 = vld [vmem:[#allocation2 + $0x1320] sm:$0xff]
    %v819 = vld [vmem:[#allocation2 + $0x1328] sm:$0xff]
    %v820 = vld [vmem:[#allocation2 + $0x1330] sm:$0xff]
    %v821 = vld [vmem:[#allocation2 + $0x1338] sm:$0xff]
    %v822 = vld [vmem:[#allocation2 + $0x1340] sm:$0xff]
    %v823 = vld [vmem:[#allocation2 + $0x1348] sm:$0xff]
    %v824 = vld [vmem:[#allocation2 + $0x1350] sm:$0xff]
    %v825 = vld [vmem:[#allocation2 + $0x1358] sm:$0xff]
    %v826 = vld [vmem:[#allocation2 + $0x1360] sm:$0xff]
    %v827 = vld [vmem:[#allocation2 + $0x1368] sm:$0xff]
    %v828 = vld [vmem:[#allocation2 + $0x1370] sm:$0xff]
    %v829 = vld [vmem:[#allocation2 + $0x1378] sm:$0xff]
    %v830 = vld [vmem:[#allocation2 + $0x1380] sm:$0xff]
    %v831 = vld [vmem:[#allocation2 + $0x1388] sm:$0xff]
    %v832 = vld [vmem:[#allocation2 + $0x1390] sm:$0xff]
    %v833 = vld [vmem:[#allocation2 + $0x1398] sm:$0xff]
    %v834 = vld [vmem:[#allocation2 + $0x13a0] sm:$0xff]
    %v835 = vld [vmem:[#allocation2 + $0x13a8] sm:$0xff]
    %v836 = vld [vmem:[#allocation2 + $0x13b0] sm:$0xff]
    %v837 = vld [vmem:[#allocation2 + $0x13b8] sm:$0xff]
    %v838 = vld [vmem:[#allocation2 + $0x13c0] sm:$0xff]
    %v839 = vld [vmem:[#allocation2 + $0x13c8] sm:$0xff]
    %v840 = vld [vmem:[#allocation2 + $0x13d0] sm:$0xff]
    %v841 = vld [vmem:[#allocation2 + $0x13d8] sm:$0xff]
    %v842 = vld [vmem:[#allocation2 + $0x13e0] sm:$0xff]
    %v843 = vld [vmem:[#allocation2 + $0x13e8] sm:$0xff]
    %v844 = vld [vmem:[#allocation2 + $0x13f0] sm:$0xff]
    %v845 = vld [vmem:[#allocation2 + $0x13f8] sm:$0xff]
    %v846 = vld [vmem:[#allocation2 + $0x1400] sm:$0xff]
    %v847 = vld [vmem:[#allocation2 + $0x1408] sm:$0xff]
    %v848 = vld [vmem:[#allocation2 + $0x1410] sm:$0xff]
    %v849 = vld [vmem:[#allocation2 + $0x1418] sm:$0xff]
    %v850 = vld [vmem:[#allocation2 + $0x1420] sm:$0xff]
    %v851 = vld [vmem:[#allocation2 + $0x1428] sm:$0xff]
    %v852 = vld [vmem:[#allocation2 + $0x1430] sm:$0xff]
    %v853 = vld [vmem:[#allocation2 + $0x1438] sm:$0xff]
    %v854 = vld [vmem:[#allocation2 + $0x1440] sm:$0xff]
    %v855 = vld [vmem:[#allocation2 + $0x1448] sm:$0xff]
    %v856 = vld [vmem:[#allocation2 + $0x1450] sm:$0xff]
    %v857 = vld [vmem:[#allocation2 + $0x1458] sm:$0xff]
    %v858 = vld [vmem:[#allocation2 + $0x1460] sm:$0xff]
    %v859 = vld [vmem:[#allocation2 + $0x1468] sm:$0xff]
    %v860 = vld [vmem:[#allocation2 + $0x1470] sm:$0xff]
    %v861 = vld [vmem:[#allocation2 + $0x1478] sm:$0xff]
    %v862 = vld [vmem:[#allocation2 + $0x1480] sm:$0xff]
    %v863 = vld [vmem:[#allocation2 + $0x1488] sm:$0xff]
    %v864 = vld [vmem:[#allocation2 + $0x1490] sm:$0xff]
    %v865 = vld [vmem:[#allocation2 + $0x1498] sm:$0xff]
    %v866 = vld [vmem:[#allocation2 + $0x14a0] sm:$0xff]
    %v867 = vld [vmem:[#allocation2 + $0x14a8] sm:$0xff]
    %v868 = vld [vmem:[#allocation2 + $0x14b0] sm:$0xff]
    %v869 = vld [vmem:[#allocation2 + $0x14b8] sm:$0xff]
    %v870 = vld [vmem:[#allocation2 + $0x14c0] sm:$0xff]
    %v871 = vld [vmem:[#allocation2 + $0x14c8] sm:$0xff]
    %v872 = vld [vmem:[#allocation2 + $0x14d0] sm:$0xff]
    %v873 = vld [vmem:[#allocation2 + $0x14d8] sm:$0xff]
    %v874 = vld [vmem:[#allocation2 + $0x14e0] sm:$0xff]
    %v875 = vld [vmem:[#allocation2 + $0x14e8] sm:$0xff]
    %v876 = vld [vmem:[#allocation2 + $0x14f0] sm:$0xff]
    %v877 = vld [vmem:[#allocation2 + $0x14f8] sm:$0xff]
    %v878 = vld [vmem:[#allocation2 + $0x1500] sm:$0xff]
    %v879 = vld [vmem:[#allocation2 + $0x1508] sm:$0xff]
    %v880 = vld [vmem:[#allocation2 + $0x1510] sm:$0xff]
    %v881 = vld [vmem:[#allocation2 + $0x1518] sm:$0xff]
    %v882 = vld [vmem:[#allocation2 + $0x1520] sm:$0xff]
    %v883 = vld [vmem:[#allocation2 + $0x1528] sm:$0xff]
    %v884 = vld [vmem:[#allocation2 + $0x1530] sm:$0xff]
    %v885 = vld [vmem:[#allocation2 + $0x1538] sm:$0xff]
    %v886 = vld [vmem:[#allocation2 + $0x1540] sm:$0xff]
    %v887 = vld [vmem:[#allocation2 + $0x1548] sm:$0xff]
    %v888 = vld [vmem:[#allocation2 + $0x1550] sm:$0xff]
    %v889 = vld [vmem:[#allocation2 + $0x1558] sm:$0xff]
    %v890 = vld [vmem:[#allocation2 + $0x1560] sm:$0xff]
    %v891 = vld [vmem:[#allocation2 + $0x1568] sm:$0xff]
    %v892 = vld [vmem:[#allocation2 + $0x1570] sm:$0xff]
    %v893 = vld [vmem:[#allocation2 + $0x1578] sm:$0xff]
    %v894 = vld [vmem:[#allocation2 + $0x1580] sm:$0xff]
    %v895 = vld [vmem:[#allocation2 + $0x1588] sm:$0xff]
    %v896 = vld [vmem:[#allocation2 + $0x1590] sm:$0xff]
    %v897 = vld [vmem:[#allocation2 + $0x1598] sm:$0xff]
    %v898 = vld [vmem:[#allocation2 + $0x15a0] sm:$0xff]
    %v899 = vld [vmem:[#allocation2 + $0x15a8] sm:$0xff]
    %v900 = vld [vmem:[#allocation2 + $0x15b0] sm:$0xff]
    %v901 = vld [vmem:[#allocation2 + $0x15b8] sm:$0xff]
    %v902 = vld [vmem:[#allocation2 + $0x15c0] sm:$0xff]
    %v903 = vld [vmem:[#allocation2 + $0x15c8] sm:$0xff]
    %v904 = vld [vmem:[#allocation2 + $0x15d0] sm:$0xff]
    %v905 = vld [vmem:[#allocation2 + $0x15d8] sm:$0xff]
    %v906 = vld [vmem:[#allocation2 + $0x15e0] sm:$0xff]
    %v907 = vld [vmem:[#allocation2 + $0x15e8] sm:$0xff]
    %v908 = vld [vmem:[#allocation2 + $0x15f0] sm:$0xff]
    %v909 = vld [vmem:[#allocation2 + $0x15f8] sm:$0xff]
    %v910 = vld [vmem:[#allocation2 + $0x1600] sm:$0xff]
    %v911 = vld [vmem:[#allocation2 + $0x1608] sm:$0xff]
    %v912 = vld [vmem:[#allocation2 + $0x1610] sm:$0xff]
    %v913 = vld [vmem:[#allocation2 + $0x1618] sm:$0xff]
    %v914 = vld [vmem:[#allocation2 + $0x1620] sm:$0xff]
    %v915 = vld [vmem:[#allocation2 + $0x1628] sm:$0xff]
    %v916 = vld [vmem:[#allocation2 + $0x1630] sm:$0xff]
    %v917 = vld [vmem:[#allocation2 + $0x1638] sm:$0xff]
    %v918 = vld [vmem:[#allocation2 + $0x1640] sm:$0xff]
    %v919 = vld [vmem:[#allocation2 + $0x1648] sm:$0xff]
    %v920 = vld [vmem:[#allocation2 + $0x1650] sm:$0xff]
    %v921 = vld [vmem:[#allocation2 + $0x1658] sm:$0xff]
    %v922 = vld [vmem:[#allocation2 + $0x1660] sm:$0xff]
    %v923 = vld [vmem:[#allocation2 + $0x1668] sm:$0xff]
    %v924 = vld [vmem:[#allocation2 + $0x1670] sm:$0xff]
    %v925 = vld [vmem:[#allocation2 + $0x1678] sm:$0xff]
    %v926 = vld [vmem:[#allocation2 + $0x1680] sm:$0xff]
    %v927 = vld [vmem:[#allocation2 + $0x1688] sm:$0xff]
    %v928 = vld [vmem:[#allocation2 + $0x1690] sm:$0xff]
    %v929 = vld [vmem:[#allocation2 + $0x1698] sm:$0xff]
    %v930 = vld [vmem:[#allocation2 + $0x16a0] sm:$0xff]
    %v931 = vld [vmem:[#allocation2 + $0x16a8] sm:$0xff]
    %v932 = vld [vmem:[#allocation2 + $0x16b0] sm:$0xff]
    %v933 = vld [vmem:[#allocation2 + $0x16b8] sm:$0xff]
    %v934 = vld [vmem:[#allocation2 + $0x16c0] sm:$0xff]
    %v935 = vld [vmem:[#allocation2 + $0x16c8] sm:$0xff]
    %v936 = vld [vmem:[#allocation2 + $0x16d0] sm:$0xff]
    %v937 = vld [vmem:[#allocation2 + $0x16d8] sm:$0xff]
    %v938 = vld [vmem:[#allocation2 + $0x16e0] sm:$0xff]
    %v939 = vld [vmem:[#allocation2 + $0x16e8] sm:$0xff]
    %v940 = vld [vmem:[#allocation2 + $0x16f0] sm:$0xff]
    %v941 = vld [vmem:[#allocation2 + $0x16f8] sm:$0xff]
    %v942 = vld [vmem:[#allocation2 + $0x1700] sm:$0xff]
    %v943 = vld [vmem:[#allocation2 + $0x1708] sm:$0xff]
    %v944 = vld [vmem:[#allocation2 + $0x1710] sm:$0xff]
    %v945 = vld [vmem:[#allocation2 + $0x1718] sm:$0xff]
    %v946 = vld [vmem:[#allocation2 + $0x1720] sm:$0xff]
    %v947 = vld [vmem:[#allocation2 + $0x1728] sm:$0xff]
    %v948 = vld [vmem:[#allocation2 + $0x1730] sm:$0xff]
    %v949 = vld [vmem:[#allocation2 + $0x1738] sm:$0xff]
    %v950 = vld [vmem:[#allocation2 + $0x1740] sm:$0xff]
    %v951 = vld [vmem:[#allocation2 + $0x1748] sm:$0xff]
    %v952 = vld [vmem:[#allocation2 + $0x1750] sm:$0xff]
    %v953 = vld [vmem:[#allocation2 + $0x1758] sm:$0xff]
    %v954 = vld [vmem:[#allocation2 + $0x1760] sm:$0xff]
    %v955 = vld [vmem:[#allocation2 + $0x1768] sm:$0xff]
    %v956 = vld [vmem:[#allocation2 + $0x1770] sm:$0xff]
    %v957 = vld [vmem:[#allocation2 + $0x1778] sm:$0xff]
    %v958 = vld [vmem:[#allocation2 + $0x1780] sm:$0xff]
    %v959 = vld [vmem:[#allocation2 + $0x1788] sm:$0xff]
    %v960 = vld [vmem:[#allocation2 + $0x1790] sm:$0xff]
    %v961 = vld [vmem:[#allocation2 + $0x1798] sm:$0xff]
    %v962 = vld [vmem:[#allocation2 + $0x17a0] sm:$0xff]
    %v963 = vld [vmem:[#allocation2 + $0x17a8] sm:$0xff]
    %v964 = vld [vmem:[#allocation2 + $0x17b0] sm:$0xff]
    %v965 = vld [vmem:[#allocation2 + $0x17b8] sm:$0xff]
    %v966 = vld [vmem:[#allocation2 + $0x17c0] sm:$0xff]
    %v967 = vld [vmem:[#allocation2 + $0x17c8] sm:$0xff]
    %v968 = vld [vmem:[#allocation2 + $0x17d0] sm:$0xff]
    %v969 = vld [vmem:[#allocation2 + $0x17d8] sm:$0xff]
    %v970 = vld [vmem:[#allocation2 + $0x17e0] sm:$0xff]
    %v971 = vld [vmem:[#allocation2 + $0x17e8] sm:$0xff]
    %v972 = vld [vmem:[#allocation2 + $0x17f0] sm:$0xff]
    %v973 = vld [vmem:[#allocation2 + $0x17f8] sm:$0xff]
    %v974 = vld [vmem:[#allocation2 + $0x1800] sm:$0xff]
    %v975 = vld [vmem:[#allocation2 + $0x1808] sm:$0xff]
    %v976 = vld [vmem:[#allocation2 + $0x1810] sm:$0xff]
    %v977 = vld [vmem:[#allocation2 + $0x1818] sm:$0xff]
    %v978 = vld [vmem:[#allocation2 + $0x1820] sm:$0xff]
    %v979 = vld [vmem:[#allocation2 + $0x1828] sm:$0xff]
    %v980 = vld [vmem:[#allocation2 + $0x1830] sm:$0xff]
    %v981 = vld [vmem:[#allocation2 + $0x1838] sm:$0xff]
    %v982 = vld [vmem:[#allocation2 + $0x1840] sm:$0xff]
    %v983 = vld [vmem:[#allocation2 + $0x1848] sm:$0xff]
    %v984 = vld [vmem:[#allocation2 + $0x1850] sm:$0xff]
    %v985 = vld [vmem:[#allocation2 + $0x1858] sm:$0xff]
    %v986 = vld [vmem:[#allocation2 + $0x1860] sm:$0xff]
    %v987 = vld [vmem:[#allocation2 + $0x1868] sm:$0xff]
    %v988 = vld [vmem:[#allocation2 + $0x1870] sm:$0xff]
    %v989 = vld [vmem:[#allocation2 + $0x1878] sm:$0xff]
    %v990 = vld [vmem:[#allocation2 + $0x1880] sm:$0xff]
    %v991 = vld [vmem:[#allocation2 + $0x1888] sm:$0xff]
    %v992 = vld [vmem:[#allocation2 + $0x1890] sm:$0xff]
    %v993 = vld [vmem:[#allocation2 + $0x1898] sm:$0xff]
    %v994 = vld [vmem:[#allocation2 + $0x18a0] sm:$0xff]
    %v995 = vld [vmem:[#allocation2 + $0x18a8] sm:$0xff]
    %v996 = vld [vmem:[#allocation2 + $0x18b0] sm:$0xff]
    %v997 = vld [vmem:[#allocation2 + $0x18b8] sm:$0xff]
    %v998 = vld [vmem:[#allocation2 + $0x18c0] sm:$0xff]
    %v999 = vld [vmem:[#allocation2 + $0x18c8] sm:$0xff]
    %v1000 = vld [vmem:[#allocation2 + $0x18d0] sm:$0xff]
    %v1001 = vld [vmem:[#allocation2 + $0x18d8] sm:$0xff]
    %v1002 = vld [vmem:[#allocation2 + $0x18e0] sm:$0xff]
    %v1003 = vld [vmem:[#allocation2 + $0x18e8] sm:$0xff]
    %v1004 = vld [vmem:[#allocation2 + $0x18f0] sm:$0xff]
    %v1005 = vld [vmem:[#allocation2 + $0x18f8] sm:$0xff]
    %v1006 = vld [vmem:[#allocation2 + $0x1900] sm:$0xff]
    %v1007 = vld [vmem:[#allocation2 + $0x1908] sm:$0xff]
    %v1008 = vld [vmem:[#allocation2 + $0x1910] sm:$0xff]
    %v1009 = vld [vmem:[#allocation2 + $0x1918] sm:$0xff]
    %v1010 = vld [vmem:[#allocation2 + $0x1920] sm:$0xff]
    %v1011 = vld [vmem:[#allocation2 + $0x1928] sm:$0xff]
    %v1012 = vld [vmem:[#allocation2 + $0x1930] sm:$0xff]
    %v1013 = vld [vmem:[#allocation2 + $0x1938] sm:$0xff]
    %v1014 = vld [vmem:[#allocation2 + $0x1940] sm:$0xff]
    %v1015 = vld [vmem:[#allocation2 + $0x1948] sm:$0xff]
    %v1016 = vld [vmem:[#allocation2 + $0x1950] sm:$0xff]
    %v1017 = vld [vmem:[#allocation2 + $0x1958] sm:$0xff]
    %v1018 = vld [vmem:[#allocation2 + $0x1960] sm:$0xff]
    %v1019 = vld [vmem:[#allocation2 + $0x1968] sm:$0xff]
    %v1020 = vld [vmem:[#allocation2 + $0x1970] sm:$0xff]
    %v1021 = vld [vmem:[#allocation2 + $0x1978] sm:$0xff]
    %v1022 = vld [vmem:[#allocation2 + $0x1980] sm:$0xff]
    %v1023 = vld [vmem:[#allocation2 + $0x1988] sm:$0xff]
    %v1024 = vld [vmem:[#allocation2 + $0x1990] sm:$0xff]
    %v1025 = vld [vmem:[#allocation2 + $0x1998] sm:$0xff]
    %v1026 = vld [vmem:[#allocation2 + $0x19a0] sm:$0xff]
    %v1027 = vld [vmem:[#allocation2 + $0x19a8] sm:$0xff]
    %v1028 = vld [vmem:[#allocation2 + $0x19b0] sm:$0xff]
    %v1029 = vld [vmem:[#allocation2 + $0x19b8] sm:$0xff]
    %v1030 = vld [vmem:[#allocation2 + $0x19c0] sm:$0xff]
    %v1031 = vld [vmem:[#allocation2 + $0x19c8] sm:$0xff]
    %v1032 = vld [vmem:[#allocation2 + $0x19d0] sm:$0xff]
    %v1033 = vld [vmem:[#allocation2 + $0x19d8] sm:$0xff]
    %v1034 = vld [vmem:[#allocation2 + $0x19e0] sm:$0xff]
    %v1035 = vld [vmem:[#allocation2 + $0x19e8] sm:$0xff]
    %v1036 = vld [vmem:[#allocation2 + $0x19f0] sm:$0xff]
    %v1037 = vld [vmem:[#allocation2 + $0x19f8] sm:$0xff]
    %v1038 = vld [vmem:[#allocation2 + $0x1a00] sm:$0xff]
    %v1039 = vld [vmem:[#allocation2 + $0x1a08] sm:$0xff]
    %v1040 = vld [vmem:[#allocation2 + $0x1a10] sm:$0xff]
    %v1041 = vld [vmem:[#allocation2 + $0x1a18] sm:$0xff]
    %v1042 = vld [vmem:[#allocation2 + $0x1a20] sm:$0xff]
    %v1043 = vld [vmem:[#allocation2 + $0x1a28] sm:$0xff]
    %v1044 = vld [vmem:[#allocation2 + $0x1a30] sm:$0xff]
    %v1045 = vld [vmem:[#allocation2 + $0x1a38] sm:$0xff]
    %v1046 = vld [vmem:[#allocation2 + $0x1a40] sm:$0xff]
    %v1047 = vld [vmem:[#allocation2 + $0x1a48] sm:$0xff]
    %v1048 = vld [vmem:[#allocation2 + $0x1a50] sm:$0xff]
    %v1049 = vld [vmem:[#allocation2 + $0x1a58] sm:$0xff]
    %v1050 = vld [vmem:[#allocation2 + $0x1a60] sm:$0xff]
    %v1051 = vld [vmem:[#allocation2 + $0x1a68] sm:$0xff]
    %v1052 = vld [vmem:[#allocation2 + $0x1a70] sm:$0xff]
    %v1053 = vld [vmem:[#allocation2 + $0x1a78] sm:$0xff]
    %v1054 = vld [vmem:[#allocation2 + $0x1a80] sm:$0xff]
    %v1055 = vld [vmem:[#allocation2 + $0x1a88] sm:$0xff]
    %v1056 = vld [vmem:[#allocation2 + $0x1a90] sm:$0xff]
    %v1057 = vld [vmem:[#allocation2 + $0x1a98] sm:$0xff]
    %v1058 = vld [vmem:[#allocation2 + $0x1aa0] sm:$0xff]
    %v1059 = vld [vmem:[#allocation2 + $0x1aa8] sm:$0xff]
    %v1060 = vld [vmem:[#allocation2 + $0x1ab0] sm:$0xff]
    %v1061 = vld [vmem:[#allocation2 + $0x1ab8] sm:$0xff]
    %v1062 = vld [vmem:[#allocation2 + $0x1ac0] sm:$0xff]
    %v1063 = vld [vmem:[#allocation2 + $0x1ac8] sm:$0xff]
    %v1064 = vld [vmem:[#allocation2 + $0x1ad0] sm:$0xff]
    %v1065 = vld [vmem:[#allocation2 + $0x1ad8] sm:$0xff]
    %v1066 = vld [vmem:[#allocation2 + $0x1ae0] sm:$0xff]
    %v1067 = vld [vmem:[#allocation2 + $0x1ae8] sm:$0xff]
    %v1068 = vld [vmem:[#allocation2 + $0x1af0] sm:$0xff]
    %v1069 = vld [vmem:[#allocation2 + $0x1af8] sm:$0xff]
    %v1070 = vld [vmem:[#allocation2 + $0x1b00] sm:$0xff]
    %v1071 = vld [vmem:[#allocation2 + $0x1b08] sm:$0xff]
    %v1072 = vld [vmem:[#allocation2 + $0x1b10] sm:$0xff]
    %v1073 = vld [vmem:[#allocation2 + $0x1b18] sm:$0xff]
    %v1074 = vld [vmem:[#allocation2 + $0x1b20] sm:$0xff]
    %v1075 = vld [vmem:[#allocation2 + $0x1b28] sm:$0xff]
    %v1076 = vld [vmem:[#allocation2 + $0x1b30] sm:$0xff]
    %v1077 = vld [vmem:[#allocation2 + $0x1b38] sm:$0xff]
    %v1078 = vld [vmem:[#allocation2 + $0x1b40] sm:$0xff]
    %v1079 = vld [vmem:[#allocation2 + $0x1b48] sm:$0xff]
    %v1080 = vld [vmem:[#allocation2 + $0x1b50] sm:$0xff]
    %v1081 = vld [vmem:[#allocation2 + $0x1b58] sm:$0xff]
    %v1082 = vld [vmem:[#allocation2 + $0x1b60] sm:$0xff]
    %v1083 = vld [vmem:[#allocation2 + $0x1b68] sm:$0xff]
    %v1084 = vld [vmem:[#allocation2 + $0x1b70] sm:$0xff]
    %v1085 = vld [vmem:[#allocation2 + $0x1b78] sm:$0xff]
    %v1086 = vld [vmem:[#allocation2 + $0x1b80] sm:$0xff]
    %v1087 = vld [vmem:[#allocation2 + $0x1b88] sm:$0xff]
    %v1088 = vld [vmem:[#allocation2 + $0x1b90] sm:$0xff]
    %v1089 = vld [vmem:[#allocation2 + $0x1b98] sm:$0xff]
    %v1090 = vld [vmem:[#allocation2 + $0x1ba0] sm:$0xff]
    %v1091 = vld [vmem:[#allocation2 + $0x1ba8] sm:$0xff]
    %v1092 = vld [vmem:[#allocation2 + $0x1bb0] sm:$0xff]
    %v1093 = vld [vmem:[#allocation2 + $0x1bb8] sm:$0xff]
    %v1094 = vld [vmem:[#allocation2 + $0x1bc0] sm:$0xff]
    %v1095 = vld [vmem:[#allocation2 + $0x1bc8] sm:$0xff]
    %v1096 = vld [vmem:[#allocation2 + $0x1bd0] sm:$0xff]
    %v1097 = vld [vmem:[#allocation2 + $0x1bd8] sm:$0xff]
    %v1098 = vld [vmem:[#allocation2 + $0x1be0] sm:$0xff]
    %v1099 = vld [vmem:[#allocation2 + $0x1be8] sm:$0xff]
    %v1100 = vld [vmem:[#allocation2 + $0x1bf0] sm:$0xff]
    %v1101 = vld [vmem:[#allocation2 + $0x1bf8] sm:$0xff]
    %v1102 = vld [vmem:[#allocation2 + $0x1c00] sm:$0xff]
    %v1103 = vld [vmem:[#allocation2 + $0x1c08] sm:$0xff]
    %v1104 = vld [vmem:[#allocation2 + $0x1c10] sm:$0xff]
    %v1105 = vld [vmem:[#allocation2 + $0x1c18] sm:$0xff]
    %v1106 = vld [vmem:[#allocation2 + $0x1c20] sm:$0xff]
    %v1107 = vld [vmem:[#allocation2 + $0x1c28] sm:$0xff]
    %v1108 = vld [vmem:[#allocation2 + $0x1c30] sm:$0xff]
    %v1109 = vld [vmem:[#allocation2 + $0x1c38] sm:$0xff]
    %v1110 = vld [vmem:[#allocation2 + $0x1c40] sm:$0xff]
    %v1111 = vld [vmem:[#allocation2 + $0x1c48] sm:$0xff]
    %v1112 = vld [vmem:[#allocation2 + $0x1c50] sm:$0xff]
    %v1113 = vld [vmem:[#allocation2 + $0x1c58] sm:$0xff]
    %v1114 = vld [vmem:[#allocation2 + $0x1c60] sm:$0xff]
    %v1115 = vld [vmem:[#allocation2 + $0x1c68] sm:$0xff]
    %v1116 = vld [vmem:[#allocation2 + $0x1c70] sm:$0xff]
    %v1117 = vld [vmem:[#allocation2 + $0x1c78] sm:$0xff]
    %v1118 = vld [vmem:[#allocation2 + $0x1c80] sm:$0xff]
    %v1119 = vld [vmem:[#allocation2 + $0x1c88] sm:$0xff]
    %v1120 = vld [vmem:[#allocation2 + $0x1c90] sm:$0xff]
    %v1121 = vld [vmem:[#allocation2 + $0x1c98] sm:$0xff]
    %v1122 = vld [vmem:[#allocation2 + $0x1ca0] sm:$0xff]
    %v1123 = vld [vmem:[#allocation2 + $0x1ca8] sm:$0xff]
    %v1124 = vld [vmem:[#allocation2 + $0x1cb0] sm:$0xff]
    %v1125 = vld [vmem:[#allocation2 + $0x1cb8] sm:$0xff]
    %v1126 = vld [vmem:[#allocation2 + $0x1cc0] sm:$0xff]
    %v1127 = vld [vmem:[#allocation2 + $0x1cc8] sm:$0xff]
    %v1128 = vld [vmem:[#allocation2 + $0x1cd0] sm:$0xff]
    %v1129 = vld [vmem:[#allocation2 + $0x1cd8] sm:$0xff]
    %v1130 = vld [vmem:[#allocation2 + $0x1ce0] sm:$0xff]
    %v1131 = vld [vmem:[#allocation2 + $0x1ce8] sm:$0xff]
    %v1132 = vld [vmem:[#allocation2 + $0x1cf0] sm:$0xff]
    %v1133 = vld [vmem:[#allocation2 + $0x1cf8] sm:$0xff]
    %v1134 = vld [vmem:[#allocation2 + $0x1d00] sm:$0xff]
    %v1135 = vld [vmem:[#allocation2 + $0x1d08] sm:$0xff]
    %v1136 = vld [vmem:[#allocation2 + $0x1d10] sm:$0xff]
    %v1137 = vld [vmem:[#allocation2 + $0x1d18] sm:$0xff]
    %v1138 = vld [vmem:[#allocation2 + $0x1d20] sm:$0xff]
    %v1139 = vld [vmem:[#allocation2 + $0x1d28] sm:$0xff]
    %v1140 = vld [vmem:[#allocation2 + $0x1d30] sm:$0xff]
    %v1141 = vld [vmem:[#allocation2 + $0x1d38] sm:$0xff]
    %v1142 = vld [vmem:[#allocation2 + $0x1d40] sm:$0xff]
    %v1143 = vld [vmem:[#allocation2 + $0x1d48] sm:$0xff]
    %v1144 = vld [vmem:[#allocation2 + $0x1d50] sm:$0xff]
    %v1145 = vld [vmem:[#allocation2 + $0x1d58] sm:$0xff]
    %v1146 = vld [vmem:[#allocation2 + $0x1d60] sm:$0xff]
    %v1147 = vld [vmem:[#allocation2 + $0x1d68] sm:$0xff]
    %v1148 = vld [vmem:[#allocation2 + $0x1d70] sm:$0xff]
    %v1149 = vld [vmem:[#allocation2 + $0x1d78] sm:$0xff]
    %v1150 = vld [vmem:[#allocation2 + $0x1d80] sm:$0xff]
    %v1151 = vld [vmem:[#allocation2 + $0x1d88] sm:$0xff]
    %v1152 = vld [vmem:[#allocation2 + $0x1d90] sm:$0xff]
    %v1153 = vld [vmem:[#allocation2 + $0x1d98] sm:$0xff]
    %v1154 = vld [vmem:[#allocation2 + $0x1da0] sm:$0xff]
    %v1155 = vld [vmem:[#allocation2 + $0x1da8] sm:$0xff]
    %v1156 = vld [vmem:[#allocation2 + $0x1db0] sm:$0xff]
    %v1157 = vld [vmem:[#allocation2 + $0x1db8] sm:$0xff]
    %v1158 = vld [vmem:[#allocation2 + $0x1dc0] sm:$0xff]
    %v1159 = vld [vmem:[#allocation2 + $0x1dc8] sm:$0xff]
    %v1160 = vld [vmem:[#allocation2 + $0x1dd0] sm:$0xff]
    %v1161 = vld [vmem:[#allocation2 + $0x1dd8] sm:$0xff]
    %v1162 = vld [vmem:[#allocation2 + $0x1de0] sm:$0xff]
    %v1163 = vld [vmem:[#allocation2 + $0x1de8] sm:$0xff]
    %v1164 = vld [vmem:[#allocation2 + $0x1df0] sm:$0xff]
    %v1165 = vld [vmem:[#allocation2 + $0x1df8] sm:$0xff]
    %v1166 = vld [vmem:[#allocation2 + $0x1e00] sm:$0xff]
    %v1167 = vld [vmem:[#allocation2 + $0x1e08] sm:$0xff]
    %v1168 = vld [vmem:[#allocation2 + $0x1e10] sm:$0xff]
    %v1169 = vld [vmem:[#allocation2 + $0x1e18] sm:$0xff]
    %v1170 = vld [vmem:[#allocation2 + $0x1e20] sm:$0xff]
    %v1171 = vld [vmem:[#allocation2 + $0x1e28] sm:$0xff]
    %v1172 = vld [vmem:[#allocation2 + $0x1e30] sm:$0xff]
    %v1173 = vld [vmem:[#allocation2 + $0x1e38] sm:$0xff]
    %v1174 = vld [vmem:[#allocation2 + $0x1e40] sm:$0xff]
    %v1175 = vld [vmem:[#allocation2 + $0x1e48] sm:$0xff]
    %v1176 = vld [vmem:[#allocation2 + $0x1e50] sm:$0xff]
    %v1177 = vld [vmem:[#allocation2 + $0x1e58] sm:$0xff]
    %v1178 = vld [vmem:[#allocation2 + $0x1e60] sm:$0xff]
    %v1179 = vld [vmem:[#allocation2 + $0x1e68] sm:$0xff]
    %v1180 = vld [vmem:[#allocation2 + $0x1e70] sm:$0xff]
    %v1181 = vld [vmem:[#allocation2 + $0x1e78] sm:$0xff]
    %v1182 = vld [vmem:[#allocation2 + $0x1e80] sm:$0xff]
    %v1183 = vld [vmem:[#allocation2 + $0x1e88] sm:$0xff]
    %v1184 = vld [vmem:[#allocation2 + $0x1e90] sm:$0xff]
    %v1185 = vld [vmem:[#allocation2 + $0x1e98] sm:$0xff]
    %v1186 = vld [vmem:[#allocation2 + $0x1ea0] sm:$0xff]
    %v1187 = vld [vmem:[#allocation2 + $0x1ea8] sm:$0xff]
    %v1188 = vld [vmem:[#allocation2 + $0x1eb0] sm:$0xff]
    %v1189 = vld [vmem:[#allocation2 + $0x1eb8] sm:$0xff]
    %v1190 = vld [vmem:[#allocation2 + $0x1ec0] sm:$0xff]
    %v1191 = vld [vmem:[#allocation2 + $0x1ec8] sm:$0xff]
    %v1192 = vld [vmem:[#allocation2 + $0x1ed0] sm:$0xff]
    %v1193 = vld [vmem:[#allocation2 + $0x1ed8] sm:$0xff]
    %v1194 = vld [vmem:[#allocation2 + $0x1ee0] sm:$0xff]
    %v1195 = vld [vmem:[#allocation2 + $0x1ee8] sm:$0xff]
    %v1196 = vld [vmem:[#allocation2 + $0x1ef0] sm:$0xff]
    %v1197 = vld [vmem:[#allocation2 + $0x1ef8] sm:$0xff]
    %v1198 = vld [vmem:[#allocation2 + $0x1f00] sm:$0xff]
    %v1199 = vld [vmem:[#allocation2 + $0x1f08] sm:$0xff]
    %v1200 = vld [vmem:[#allocation2 + $0x1f10] sm:$0xff]
    %v1201 = vld [vmem:[#allocation2 + $0x1f18] sm:$0xff]
    %v1202 = vld [vmem:[#allocation2 + $0x1f20] sm:$0xff]
    %v1203 = vld [vmem:[#allocation2 + $0x1f28] sm:$0xff]
    %v1204 = vld [vmem:[#allocation2 + $0x1f30] sm:$0xff]
    %v1205 = vld [vmem:[#allocation2 + $0x1f38] sm:$0xff]
    %v1206 = vld [vmem:[#allocation2 + $0x1f40] sm:$0xff]
    %v1207 = vld [vmem:[#allocation2 + $0x1f48] sm:$0xff]
    %v1208 = vld [vmem:[#allocation2 + $0x1f50] sm:$0xff]
    %v1209 = vld [vmem:[#allocation2 + $0x1f58] sm:$0xff]
    %v1210 = vld [vmem:[#allocation2 + $0x1f60] sm:$0xff]
    %v1211 = vld [vmem:[#allocation2 + $0x1f68] sm:$0xff]
    %v1212 = vld [vmem:[#allocation2 + $0x1f70] sm:$0xff]
    %v1213 = vld [vmem:[#allocation2 + $0x1f78] sm:$0xff]
    %v1214 = vld [vmem:[#allocation2 + $0x1f80] sm:$0xff]
    %v1215 = vld [vmem:[#allocation2 + $0x1f88] sm:$0xff]
    %v1216 = vld [vmem:[#allocation2 + $0x1f90] sm:$0xff]
    %v1217 = vld [vmem:[#allocation2 + $0x1f98] sm:$0xff]
    %v1218 = vld [vmem:[#allocation2 + $0x1fa0] sm:$0xff]
    %v1219 = vld [vmem:[#allocation2 + $0x1fa8] sm:$0xff]
    %v1220 = vld [vmem:[#allocation2 + $0x1fb0] sm:$0xff]
    %v1221 = vld [vmem:[#allocation2 + $0x1fb8] sm:$0xff]
    %v1222 = vld [vmem:[#allocation2 + $0x1fc0] sm:$0xff]
    %v1223 = vld [vmem:[#allocation2 + $0x1fc8] sm:$0xff]
    %v1224 = vld [vmem:[#allocation2 + $0x1fd0] sm:$0xff]
    %v1225 = vld [vmem:[#allocation2 + $0x1fd8] sm:$0xff]
    %v1226 = vld [vmem:[#allocation2 + $0x1fe0] sm:$0xff]
    %v1227 = vld [vmem:[#allocation2 + $0x1fe8] sm:$0xff]
    %v1228 = vld [vmem:[#allocation2 + $0x1ff0] sm:$0xff]
    %v1229 = vld [vmem:[#allocation2 + $0x1ff8] sm:$0xff]
    %v1230 = vld [vmem:[#allocation2 + $0x2000] sm:$0xff]
    %v1231 = vld [vmem:[#allocation2 + $0x2008] sm:$0xff]
    %v1232 = vld [vmem:[#allocation2 + $0x2010] sm:$0xff]
    %v1233 = vld [vmem:[#allocation2 + $0x2018] sm:$0xff]
    %v1234 = vld [vmem:[#allocation2 + $0x2020] sm:$0xff]
    %v1235 = vld [vmem:[#allocation2 + $0x2028] sm:$0xff]
    %v1236 = vld [vmem:[#allocation2 + $0x2030] sm:$0xff]
    %v1237 = vld [vmem:[#allocation2 + $0x2038] sm:$0xff]
    %v1238 = vld [vmem:[#allocation2 + $0x2040] sm:$0xff]
    %v1239 = vld [vmem:[#allocation2 + $0x2048] sm:$0xff]
    %v1240 = vld [vmem:[#allocation2 + $0x2050] sm:$0xff]
    %v1241 = vld [vmem:[#allocation2 + $0x2058] sm:$0xff]
    %v1242 = vld [vmem:[#allocation2 + $0x2060] sm:$0xff]
    %v1243 = vld [vmem:[#allocation2 + $0x2068] sm:$0xff]
    %v1244 = vld [vmem:[#allocation2 + $0x2070] sm:$0xff]
    %v1245 = vld [vmem:[#allocation2 + $0x2078] sm:$0xff]
    %v1246 = vld [vmem:[#allocation2 + $0x2080] sm:$0xff]
    %v1247 = vld [vmem:[#allocation2 + $0x2088] sm:$0xff]
    %v1248 = vld [vmem:[#allocation2 + $0x2090] sm:$0xff]
    %v1249 = vld [vmem:[#allocation2 + $0x2098] sm:$0xff]
    %v1250 = vld [vmem:[#allocation2 + $0x20a0] sm:$0xff]
    %v1251 = vld [vmem:[#allocation2 + $0x20a8] sm:$0xff]
    %v1252 = vld [vmem:[#allocation2 + $0x20b0] sm:$0xff]
    %v1253 = vld [vmem:[#allocation2 + $0x20b8] sm:$0xff]
    %v1254 = vld [vmem:[#allocation2 + $0x20c0] sm:$0xff]
    %v1255 = vld [vmem:[#allocation2 + $0x20c8] sm:$0xff]
    %v1256 = vld [vmem:[#allocation2 + $0x20d0] sm:$0xff]
    %v1257 = vld [vmem:[#allocation2 + $0x20d8] sm:$0xff]
    %v1258 = vld [vmem:[#allocation2 + $0x20e0] sm:$0xff]
    %v1259 = vld [vmem:[#allocation2 + $0x20e8] sm:$0xff]
    %v1260 = vld [vmem:[#allocation2 + $0x20f0] sm:$0xff]
    %v1261 = vld [vmem:[#allocation2 + $0x20f8] sm:$0xff]
    %v1262 = vld [vmem:[#allocation2 + $0x2100] sm:$0xff]
    %v1263 = vld [vmem:[#allocation2 + $0x2108] sm:$0xff]
    %v1264 = vld [vmem:[#allocation2 + $0x2110] sm:$0xff]
    %v1265 = vld [vmem:[#allocation2 + $0x2118] sm:$0xff]
    %v1266 = vld [vmem:[#allocation2 + $0x2120] sm:$0xff]
    %v1267 = vld [vmem:[#allocation2 + $0x2128] sm:$0xff]
    %v1268 = vld [vmem:[#allocation2 + $0x2130] sm:$0xff]
    %v1269 = vld [vmem:[#allocation2 + $0x2138] sm:$0xff]
    %v1270 = vld [vmem:[#allocation2 + $0x2140] sm:$0xff]
    %v1271 = vld [vmem:[#allocation2 + $0x2148] sm:$0xff]
    %v1272 = vld [vmem:[#allocation2 + $0x2150] sm:$0xff]
    %v1273 = vld [vmem:[#allocation2 + $0x2158] sm:$0xff]
    %v1274 = vld [vmem:[#allocation2 + $0x2160] sm:$0xff]
    %v1275 = vld [vmem:[#allocation2 + $0x2168] sm:$0xff]
    %v1276 = vld [vmem:[#allocation2 + $0x2170] sm:$0xff]
    %v1277 = vld [vmem:[#allocation2 + $0x2178] sm:$0xff]
    %v1278 = vld [vmem:[#allocation2 + $0x2180] sm:$0xff]
    %v1279 = vld [vmem:[#allocation2 + $0x2188] sm:$0xff]
    %v1280 = vld [vmem:[#allocation2 + $0x2190] sm:$0xff]
    %v1281 = vld [vmem:[#allocation2 + $0x2198] sm:$0xff]
    %v1282 = vld [vmem:[#allocation2 + $0x21a0] sm:$0xff]
    %v1283 = vld [vmem:[#allocation2 + $0x21a8] sm:$0xff]
    %v1284 = vld [vmem:[#allocation2 + $0x21b0] sm:$0xff]
    %v1285 = vld [vmem:[#allocation2 + $0x21b8] sm:$0xff]
    %v1286 = vld [vmem:[#allocation2 + $0x21c0] sm:$0xff]
    %v1287 = vld [vmem:[#allocation2 + $0x21c8] sm:$0xff]
    %v1288 = vld [vmem:[#allocation2 + $0x21d0] sm:$0xff]
    %v1289 = vld [vmem:[#allocation2 + $0x21d8] sm:$0xff]
    %v1290 = vld [vmem:[#allocation2 + $0x21e0] sm:$0xff]
    %v1291 = vld [vmem:[#allocation2 + $0x21e8] sm:$0xff]
    %v1292 = vld [vmem:[#allocation2 + $0x21f0] sm:$0xff]
    %v1293 = vld [vmem:[#allocation2 + $0x21f8] sm:$0xff]
    %v1294 = vld [vmem:[#allocation2 + $0x2200] sm:$0xff]
    %v1295 = vld [vmem:[#allocation2 + $0x2208] sm:$0xff]
    %v1296 = vld [vmem:[#allocation2 + $0x2210] sm:$0xff]
    %v1297 = vld [vmem:[#allocation2 + $0x2218] sm:$0xff]
    %v1298 = vld [vmem:[#allocation2 + $0x2220] sm:$0xff]
    %v1299 = vld [vmem:[#allocation2 + $0x2228] sm:$0xff]
    %v1300 = vld [vmem:[#allocation2 + $0x2230] sm:$0xff]
    %v1301 = vld [vmem:[#allocation2 + $0x2238] sm:$0xff]
    %v1302 = vld [vmem:[#allocation2 + $0x2240] sm:$0xff]
    %v1303 = vld [vmem:[#allocation2 + $0x2248] sm:$0xff]
    %v1304 = vld [vmem:[#allocation2 + $0x2250] sm:$0xff]
    %v1305 = vld [vmem:[#allocation2 + $0x2258] sm:$0xff]
    %v1306 = vld [vmem:[#allocation2 + $0x2260] sm:$0xff]
    %v1307 = vld [vmem:[#allocation2 + $0x2268] sm:$0xff]
    %v1308 = vld [vmem:[#allocation2 + $0x2270] sm:$0xff]
    %v1309 = vld [vmem:[#allocation2 + $0x2278] sm:$0xff]
    %v1310 = vld [vmem:[#allocation2 + $0x2280] sm:$0xff]
    %v1311 = vld [vmem:[#allocation2 + $0x2288] sm:$0xff]
    %v1312 = vld [vmem:[#allocation2 + $0x2290] sm:$0xff]
    %v1313 = vld [vmem:[#allocation2 + $0x2298] sm:$0xff]
    %v1314 = vld [vmem:[#allocation2 + $0x22a0] sm:$0xff]
    %v1315 = vld [vmem:[#allocation2 + $0x22a8] sm:$0xff]
    %v1316 = vld [vmem:[#allocation2 + $0x22b0] sm:$0xff]
    %v1317 = vld [vmem:[#allocation2 + $0x22b8] sm:$0xff]
    %v1318 = vld [vmem:[#allocation2 + $0x22c0] sm:$0xff]
    %v1319 = vld [vmem:[#allocation2 + $0x22c8] sm:$0xff]
    %v1320 = vld [vmem:[#allocation2 + $0x22d0] sm:$0xff]
    %v1321 = vld [vmem:[#allocation2 + $0x22d8] sm:$0xff]
    %v1322 = vld [vmem:[#allocation2 + $0x22e0] sm:$0xff]
    %v1323 = vld [vmem:[#allocation2 + $0x22e8] sm:$0xff]
    %v1324 = vld [vmem:[#allocation2 + $0x22f0] sm:$0xff]
    %v1325 = vld [vmem:[#allocation2 + $0x22f8] sm:$0xff]
    %v1326 = vld [vmem:[#allocation2 + $0x2300] sm:$0xff]
    %v1327 = vld [vmem:[#allocation2 + $0x2308] sm:$0xff]
    %v1328 = vld [vmem:[#allocation2 + $0x2310] sm:$0xff]
    %v1329 = vld [vmem:[#allocation2 + $0x2318] sm:$0xff]
    %v1330 = vld [vmem:[#allocation2 + $0x2320] sm:$0xff]
    %v1331 = vld [vmem:[#allocation2 + $0x2328] sm:$0xff]
    %v1332 = vld [vmem:[#allocation2 + $0x2330] sm:$0xff]
    %v1333 = vld [vmem:[#allocation2 + $0x2338] sm:$0xff]
    %v1334 = vld [vmem:[#allocation2 + $0x2340] sm:$0xff]
    %v1335 = vld [vmem:[#allocation2 + $0x2348] sm:$0xff]
    %v1336 = vld [vmem:[#allocation2 + $0x2350] sm:$0xff]
    %v1337 = vld [vmem:[#allocation2 + $0x2358] sm:$0xff]
    %v1338 = vld [vmem:[#allocation2 + $0x2360] sm:$0xff]
    %v1339 = vld [vmem:[#allocation2 + $0x2368] sm:$0xff]
    %v1340 = vld [vmem:[#allocation2 + $0x2370] sm:$0xff]
    %v1341 = vld [vmem:[#allocation2 + $0x2378] sm:$0xff]
    %v1342 = vld [vmem:[#allocation2 + $0x2380] sm:$0xff]
    %v1343 = vld [vmem:[#allocation2 + $0x2388] sm:$0xff]
    %v1344 = vld [vmem:[#allocation2 + $0x2390] sm:$0xff]
    %v1345 = vld [vmem:[#allocation2 + $0x2398] sm:$0xff]
    %v1346 = vld [vmem:[#allocation2 + $0x23a0] sm:$0xff]
    %v1347 = vld [vmem:[#allocation2 + $0x23a8] sm:$0xff]
    %v1348 = vld [vmem:[#allocation2 + $0x23b0] sm:$0xff]
    %v1349 = vld [vmem:[#allocation2 + $0x23b8] sm:$0xff]
    %v1350 = vld [vmem:[#allocation2 + $0x23c0] sm:$0xff]
    %v1351 = vld [vmem:[#allocation2 + $0x23c8] sm:$0xff]
    %v1352 = vld [vmem:[#allocation2 + $0x23d0] sm:$0xff]
    %v1353 = vld [vmem:[#allocation2 + $0x23d8] sm:$0xff]
    %v1354 = vld [vmem:[#allocation2 + $0x23e0] sm:$0xff]
    %v1355 = vld [vmem:[#allocation2 + $0x23e8] sm:$0xff]
    %v1356 = vld [vmem:[#allocation2 + $0x23f0] sm:$0xff]
    %v1357 = vld [vmem:[#allocation2 + $0x23f8] sm:$0xff]
    %v1358 = vld [vmem:[#allocation2 + $0x2400] sm:$0xff]
    %v1359 = vld [vmem:[#allocation2 + $0x2408] sm:$0xff]
    %v1360 = vld [vmem:[#allocation2 + $0x2410] sm:$0xff]
    %v1361 = vld [vmem:[#allocation2 + $0x2418] sm:$0xff]
    %v1362 = vld [vmem:[#allocation2 + $0x2420] sm:$0xff]
    %v1363 = vld [vmem:[#allocation2 + $0x2428] sm:$0xff]
    %v1364 = vld [vmem:[#allocation2 + $0x2430] sm:$0xff]
    %v1365 = vld [vmem:[#allocation2 + $0x2438] sm:$0xff]
    %v1366 = vld [vmem:[#allocation2 + $0x2440] sm:$0xff]
    %v1367 = vld [vmem:[#allocation2 + $0x2448] sm:$0xff]
    %v1368 = vld [vmem:[#allocation2 + $0x2450] sm:$0xff]
    %v1369 = vld [vmem:[#allocation2 + $0x2458] sm:$0xff]
    %v1370 = vld [vmem:[#allocation2 + $0x2460] sm:$0xff]
    %v1371 = vld [vmem:[#allocation2 + $0x2468] sm:$0xff]
    %v1372 = vld [vmem:[#allocation2 + $0x2470] sm:$0xff]
    %v1373 = vld [vmem:[#allocation2 + $0x2478] sm:$0xff]
    %v1374 = vld [vmem:[#allocation2 + $0x2480] sm:$0xff]
    %v1375 = vld [vmem:[#allocation2 + $0x2488] sm:$0xff]
    %v1376 = vld [vmem:[#allocation2 + $0x2490] sm:$0xff]
    %v1377 = vld [vmem:[#allocation2 + $0x2498] sm:$0xff]
    %v1378 = vld [vmem:[#allocation2 + $0x24a0] sm:$0xff]
    %v1379 = vld [vmem:[#allocation2 + $0x24a8] sm:$0xff]
    %v1380 = vld [vmem:[#allocation2 + $0x24b0] sm:$0xff]
    %v1381 = vld [vmem:[#allocation2 + $0x24b8] sm:$0xff]
    %v1382 = vld [vmem:[#allocation2 + $0x24c0] sm:$0xff]
    %v1383 = vld [vmem:[#allocation2 + $0x24c8] sm:$0xff]
    %v1384 = vld [vmem:[#allocation2 + $0x24d0] sm:$0xff]
    %v1385 = vld [vmem:[#allocation2 + $0x24d8] sm:$0xff]
    %v1386 = vld [vmem:[#allocation2 + $0x24e0] sm:$0xff]
    %v1387 = vld [vmem:[#allocation2 + $0x24e8] sm:$0xff]
    %v1388 = vld [vmem:[#allocation2 + $0x24f0] sm:$0xff]
    %v1389 = vld [vmem:[#allocation2 + $0x24f8] sm:$0xff]
    %v1390 = vld [vmem:[#allocation2 + $0x2500] sm:$0xff]
    %v1391 = vld [vmem:[#allocation2 + $0x2508] sm:$0xff]
    %v1392 = vld [vmem:[#allocation2 + $0x2510] sm:$0xff]
    %v1393 = vld [vmem:[#allocation2 + $0x2518] sm:$0xff]
    %v1394 = vld [vmem:[#allocation2 + $0x2520] sm:$0xff]
    %v1395 = vld [vmem:[#allocation2 + $0x2528] sm:$0xff]
    %v1396 = vld [vmem:[#allocation2 + $0x2530] sm:$0xff]
    %v1397 = vld [vmem:[#allocation2 + $0x2538] sm:$0xff]
    %v1398 = vld [vmem:[#allocation2 + $0x2540] sm:$0xff]
    %v1399 = vld [vmem:[#allocation2 + $0x2548] sm:$0xff]
    %v1400 = vld [vmem:[#allocation2 + $0x2550] sm:$0xff]
    %v1401 = vld [vmem:[#allocation2 + $0x2558] sm:$0xff]
    %v1402 = vld [vmem:[#allocation2 + $0x2560] sm:$0xff]
    %v1403 = vld [vmem:[#allocation2 + $0x2568] sm:$0xff]
    %v1404 = vld [vmem:[#allocation2 + $0x2570] sm:$0xff]
    %v1405 = vld [vmem:[#allocation2 + $0x2578] sm:$0xff]
    %v1406 = vld [vmem:[#allocation2 + $0x2580] sm:$0xff]
    %v1407 = vld [vmem:[#allocation2 + $0x2588] sm:$0xff]
    %v1408 = vld [vmem:[#allocation2 + $0x2590] sm:$0xff]
    %v1409 = vld [vmem:[#allocation2 + $0x2598] sm:$0xff]
    %v1410 = vld [vmem:[#allocation2 + $0x25a0] sm:$0xff]
    %v1411 = vld [vmem:[#allocation2 + $0x25a8] sm:$0xff]
    %v1412 = vld [vmem:[#allocation2 + $0x25b0] sm:$0xff]
    %v1413 = vld [vmem:[#allocation2 + $0x25b8] sm:$0xff]
    %v1414 = vld [vmem:[#allocation2 + $0x25c0] sm:$0xff]
    %v1415 = vld [vmem:[#allocation2 + $0x25c8] sm:$0xff]
    %v1416 = vld [vmem:[#allocation2 + $0x25d0] sm:$0xff]
    %v1417 = vld [vmem:[#allocation2 + $0x25d8] sm:$0xff]
    %v1418 = vld [vmem:[#allocation2 + $0x25e0] sm:$0xff]
    %v1419 = vld [vmem:[#allocation2 + $0x25e8] sm:$0xff]
    %v1420 = vld [vmem:[#allocation2 + $0x25f0] sm:$0xff]
    %v1421 = vld [vmem:[#allocation2 + $0x25f8] sm:$0xff]
    %v1422 = vld [vmem:[#allocation2 + $0x2600] sm:$0xff]
    %v1423 = vld [vmem:[#allocation2 + $0x2608] sm:$0xff]
    %v1424 = vld [vmem:[#allocation2 + $0x2610] sm:$0xff]
    %v1425 = vld [vmem:[#allocation2 + $0x2618] sm:$0xff]
    %v1426 = vld [vmem:[#allocation2 + $0x2620] sm:$0xff]
    %v1427 = vld [vmem:[#allocation2 + $0x2628] sm:$0xff]
    %v1428 = vld [vmem:[#allocation2 + $0x2630] sm:$0xff]
    %v1429 = vld [vmem:[#allocation2 + $0x2638] sm:$0xff]
    %v1430 = vld [vmem:[#allocation2 + $0x2640] sm:$0xff]
    %v1431 = vld [vmem:[#allocation2 + $0x2648] sm:$0xff]
    %v1432 = vld [vmem:[#allocation2 + $0x2650] sm:$0xff]
    %v1433 = vld [vmem:[#allocation2 + $0x2658] sm:$0xff]
    %v1434 = vld [vmem:[#allocation2 + $0x2660] sm:$0xff]
    %v1435 = vld [vmem:[#allocation2 + $0x2668] sm:$0xff]
    %v1436 = vld [vmem:[#allocation2 + $0x2670] sm:$0xff]
    %v1437 = vld [vmem:[#allocation2 + $0x2678] sm:$0xff]
    %v1438 = vld [vmem:[#allocation2 + $0x2680] sm:$0xff]
    %v1439 = vld [vmem:[#allocation2 + $0x2688] sm:$0xff]
    %v1440 = vld [vmem:[#allocation2 + $0x2690] sm:$0xff]
    %v1441 = vld [vmem:[#allocation2 + $0x2698] sm:$0xff]
    %v1442 = vld [vmem:[#allocation2 + $0x26a0] sm:$0xff]
    %v1443 = vld [vmem:[#allocation2 + $0x26a8] sm:$0xff]
    %v1444 = vld [vmem:[#allocation2 + $0x26b0] sm:$0xff]
    %v1445 = vld [vmem:[#allocation2 + $0x26b8] sm:$0xff]
    %v1446 = vld [vmem:[#allocation2 + $0x26c0] sm:$0xff]
    %v1447 = vld [vmem:[#allocation2 + $0x26c8] sm:$0xff]
    %v1448 = vld [vmem:[#allocation2 + $0x26d0] sm:$0xff]
    %v1449 = vld [vmem:[#allocation2 + $0x26d8] sm:$0xff]
    %v1450 = vld [vmem:[#allocation2 + $0x26e0] sm:$0xff]
    %v1451 = vld [vmem:[#allocation2 + $0x26e8] sm:$0xff]
    %v1452 = vld [vmem:[#allocation2 + $0x26f0] sm:$0xff]
    %v1453 = vld [vmem:[#allocation2 + $0x26f8] sm:$0xff]
    %v1454 = vld [vmem:[#allocation2 + $0x2700] sm:$0xff]
    %v1455 = vld [vmem:[#allocation2 + $0x2708] sm:$0xff]
    %v1456 = vld [vmem:[#allocation2 + $0x2710] sm:$0xff]
    %v1457 = vld [vmem:[#allocation2 + $0x2718] sm:$0xff]
    %v1458 = vld [vmem:[#allocation2 + $0x2720] sm:$0xff]
    %v1459 = vld [vmem:[#allocation2 + $0x2728] sm:$0xff]
    %v1460 = vld [vmem:[#allocation2 + $0x2730] sm:$0xff]
    %v1461 = vld [vmem:[#allocation2 + $0x2738] sm:$0xff]
    %v1462 = vld [vmem:[#allocation2 + $0x2740] sm:$0xff]
    %v1463 = vld [vmem:[#allocation2 + $0x2748] sm:$0xff]
    %v1464 = vld [vmem:[#allocation2 + $0x2750] sm:$0xff]
    %v1465 = vld [vmem:[#allocation2 + $0x2758] sm:$0xff]
    %v1466 = vld [vmem:[#allocation2 + $0x2760] sm:$0xff]
    %v1467 = vld [vmem:[#allocation2 + $0x2768] sm:$0xff]
    %v1468 = vld [vmem:[#allocation2 + $0x2770] sm:$0xff]
    %v1469 = vld [vmem:[#allocation2 + $0x2778] sm:$0xff]
    %v1470 = vld [vmem:[#allocation2 + $0x2780] sm:$0xff]
    %v1471 = vld [vmem:[#allocation2 + $0x2788] sm:$0xff]
    %v1472 = vld [vmem:[#allocation2 + $0x2790] sm:$0xff]
    %v1473 = vld [vmem:[#allocation2 + $0x2798] sm:$0xff]
    %v1474 = vld [vmem:[#allocation2 + $0x27a0] sm:$0xff]
    %v1475 = vld [vmem:[#allocation2 + $0x27a8] sm:$0xff]
    %v1476 = vld [vmem:[#allocation2 + $0x27b0] sm:$0xff]
    %v1477 = vld [vmem:[#allocation2 + $0x27b8] sm:$0xff]
    %v1478 = vld [vmem:[#allocation2 + $0x27c0] sm:$0xff]
    %v1479 = vld [vmem:[#allocation2 + $0x27c8] sm:$0xff]
    %v1480 = vld [vmem:[#allocation2 + $0x27d0] sm:$0xff]
    %v1481 = vld [vmem:[#allocation2 + $0x27d8] sm:$0xff]
    %v1482 = vld [vmem:[#allocation2 + $0x27e0] sm:$0xff]
    %v1483 = vld [vmem:[#allocation2 + $0x27e8] sm:$0xff]
    %v1484 = vld [vmem:[#allocation2 + $0x27f0] sm:$0xff]
    %v1485 = vld [vmem:[#allocation2 + $0x27f8] sm:$0xff]
    %v1486 = vld [vmem:[#allocation2 + $0x2800] sm:$0xff]
    %v1487 = vld [vmem:[#allocation2 + $0x2808] sm:$0xff]
    %v1488 = vld [vmem:[#allocation2 + $0x2810] sm:$0xff]
    %v1489 = vld [vmem:[#allocation2 + $0x2818] sm:$0xff]
    %v1490 = vld [vmem:[#allocation2 + $0x2820] sm:$0xff]
    %v1491 = vld [vmem:[#allocation2 + $0x2828] sm:$0xff]
    %v1492 = vld [vmem:[#allocation2 + $0x2830] sm:$0xff]
    %v1493 = vld [vmem:[#allocation2 + $0x2838] sm:$0xff]
    %v1494 = vld [vmem:[#allocation2 + $0x2840] sm:$0xff]
    %v1495 = vld [vmem:[#allocation2 + $0x2848] sm:$0xff]
    %v1496 = vld [vmem:[#allocation2 + $0x2850] sm:$0xff]
    %v1497 = vld [vmem:[#allocation2 + $0x2858] sm:$0xff]
    %v1498 = vld [vmem:[#allocation2 + $0x2860] sm:$0xff]
    %v1499 = vld [vmem:[#allocation2 + $0x2868] sm:$0xff]
    %v1500 = vld [vmem:[#allocation2 + $0x2870] sm:$0xff]
    %v1501 = vld [vmem:[#allocation2 + $0x2878] sm:$0xff]
    %v1502 = vld [vmem:[#allocation2 + $0x2880] sm:$0xff]
    %v1503 = vld [vmem:[#allocation2 + $0x2888] sm:$0xff]
    %v1504 = vld [vmem:[#allocation2 + $0x2890] sm:$0xff]
    %v1505 = vld [vmem:[#allocation2 + $0x2898] sm:$0xff]
    %v1506 = vld [vmem:[#allocation2 + $0x28a0] sm:$0xff]
    %v1507 = vld [vmem:[#allocation2 + $0x28a8] sm:$0xff]
    %v1508 = vld [vmem:[#allocation2 + $0x28b0] sm:$0xff]
    %v1509 = vld [vmem:[#allocation2 + $0x28b8] sm:$0xff]
    %v1510 = vld [vmem:[#allocation2 + $0x28c0] sm:$0xff]
    %v1511 = vld [vmem:[#allocation2 + $0x28c8] sm:$0xff]
    %v1512 = vld [vmem:[#allocation2 + $0x28d0] sm:$0xff]
    %v1513 = vld [vmem:[#allocation2 + $0x28d8] sm:$0xff]
    %v1514 = vld [vmem:[#allocation2 + $0x28e0] sm:$0xff]
    %v1515 = vld [vmem:[#allocation2 + $0x28e8] sm:$0xff]
    %v1516 = vld [vmem:[#allocation2 + $0x28f0] sm:$0xff]
    %v1517 = vld [vmem:[#allocation2 + $0x28f8] sm:$0xff]
    %v1518 = vld [vmem:[#allocation2 + $0x2900] sm:$0xff]
    %v1519 = vld [vmem:[#allocation2 + $0x2908] sm:$0xff]
    %v1520 = vld [vmem:[#allocation2 + $0x2910] sm:$0xff]
    %v1521 = vld [vmem:[#allocation2 + $0x2918] sm:$0xff]
    %v1522 = vld [vmem:[#allocation2 + $0x2920] sm:$0xff]
    %v1523 = vld [vmem:[#allocation2 + $0x2928] sm:$0xff]
    %v1524 = vld [vmem:[#allocation2 + $0x2930] sm:$0xff]
    %v1525 = vld [vmem:[#allocation2 + $0x2938] sm:$0xff]
    %v1526 = vld [vmem:[#allocation2 + $0x2940] sm:$0xff]
    %v1527 = vld [vmem:[#allocation2 + $0x2948] sm:$0xff]
    %v1528 = vld [vmem:[#allocation2 + $0x2950] sm:$0xff]
    %v1529 = vld [vmem:[#allocation2 + $0x2958] sm:$0xff]
    %v1530 = vld [vmem:[#allocation2 + $0x2960] sm:$0xff]
    %v1531 = vld [vmem:[#allocation2 + $0x2968] sm:$0xff]
    %v1532 = vld [vmem:[#allocation2 + $0x2970] sm:$0xff]
    %v1533 = vld [vmem:[#allocation2 + $0x2978] sm:$0xff]
    %v1534 = vld [vmem:[#allocation2 + $0x2980] sm:$0xff]
    %v1535 = vld [vmem:[#allocation2 + $0x2988] sm:$0xff]
    %v1536 = vld [vmem:[#allocation2 + $0x2990] sm:$0xff]
    %v1537 = vld [vmem:[#allocation2 + $0x2998] sm:$0xff]
    %v1538 = vld [vmem:[#allocation2 + $0x29a0] sm:$0xff]
    %v1539 = vld [vmem:[#allocation2 + $0x29a8] sm:$0xff]
    %v1540 = vld [vmem:[#allocation2 + $0x29b0] sm:$0xff]
    %v1541 = vld [vmem:[#allocation2 + $0x29b8] sm:$0xff]
    %v1542 = vld [vmem:[#allocation2 + $0x29c0] sm:$0xff]
    %v1543 = vld [vmem:[#allocation2 + $0x29c8] sm:$0xff]
    %v1544 = vld [vmem:[#allocation2 + $0x29d0] sm:$0xff]
    %v1545 = vld [vmem:[#allocation2 + $0x29d8] sm:$0xff]
    %v1546 = vld [vmem:[#allocation2 + $0x29e0] sm:$0xff]
    %v1547 = vld [vmem:[#allocation2 + $0x29e8] sm:$0xff]
    %v1548 = vld [vmem:[#allocation2 + $0x29f0] sm:$0xff]
    %v1549 = vld [vmem:[#allocation2 + $0x29f8] sm:$0xff]
    %v1550 = vld [vmem:[#allocation2 + $0x2a00] sm:$0xff]
    %v1551 = vld [vmem:[#allocation2 + $0x2a08] sm:$0xff]
    %v1552 = vld [vmem:[#allocation2 + $0x2a10] sm:$0xff]
    %v1553 = vld [vmem:[#allocation2 + $0x2a18] sm:$0xff]
    %v1554 = vld [vmem:[#allocation2 + $0x2a20] sm:$0xff]
    %v1555 = vld [vmem:[#allocation2 + $0x2a28] sm:$0xff]
    %v1556 = vld [vmem:[#allocation2 + $0x2a30] sm:$0xff]
    %v1557 = vld [vmem:[#allocation2 + $0x2a38] sm:$0xff]
    %v1558 = vld [vmem:[#allocation2 + $0x2a40] sm:$0xff]
    %v1559 = vld [vmem:[#allocation2 + $0x2a48] sm:$0xff]
    %v1560 = vld [vmem:[#allocation2 + $0x2a50] sm:$0xff]
    %v1561 = vld [vmem:[#allocation2 + $0x2a58] sm:$0xff]
    %v1562 = vld [vmem:[#allocation2 + $0x2a60] sm:$0xff]
    %v1563 = vld [vmem:[#allocation2 + $0x2a68] sm:$0xff]
    %v1564 = vld [vmem:[#allocation2 + $0x2a70] sm:$0xff]
    %v1565 = vld [vmem:[#allocation2 + $0x2a78] sm:$0xff]
    %v1566 = vld [vmem:[#allocation2 + $0x2a80] sm:$0xff]
    %v1567 = vld [vmem:[#allocation2 + $0x2a88] sm:$0xff]
    %v1568 = vld [vmem:[#allocation2 + $0x2a90] sm:$0xff]
    %v1569 = vld [vmem:[#allocation2 + $0x2a98] sm:$0xff]
    %v1570 = vld [vmem:[#allocation2 + $0x2aa0] sm:$0xff]
    %v1571 = vld [vmem:[#allocation2 + $0x2aa8] sm:$0xff]
    %v1572 = vld [vmem:[#allocation2 + $0x2ab0] sm:$0xff]
    %v1573 = vld [vmem:[#allocation2 + $0x2ab8] sm:$0xff]
    %v1574 = vld [vmem:[#allocation2 + $0x2ac0] sm:$0xff]
    %v1575 = vld [vmem:[#allocation2 + $0x2ac8] sm:$0xff]
    %v1576 = vld [vmem:[#allocation2 + $0x2ad0] sm:$0xff]
    %v1577 = vld [vmem:[#allocation2 + $0x2ad8] sm:$0xff]
    %v1578 = vld [vmem:[#allocation2 + $0x2ae0] sm:$0xff]
    %v1579 = vld [vmem:[#allocation2 + $0x2ae8] sm:$0xff]
    %v1580 = vld [vmem:[#allocation2 + $0x2af0] sm:$0xff]
    %v1581 = vld [vmem:[#allocation2 + $0x2af8] sm:$0xff]
    %v1582 = vld [vmem:[#allocation2 + $0x2b00] sm:$0xff]
    %v1583 = vld [vmem:[#allocation2 + $0x2b08] sm:$0xff]
    %v1584 = vld [vmem:[#allocation2 + $0x2b10] sm:$0xff]
    %v1585 = vld [vmem:[#allocation2 + $0x2b18] sm:$0xff]
    %v1586 = vld [vmem:[#allocation2 + $0x2b20] sm:$0xff]
    %v1587 = vld [vmem:[#allocation2 + $0x2b28] sm:$0xff]
    %v1588 = vld [vmem:[#allocation2 + $0x2b30] sm:$0xff]
    %v1589 = vld [vmem:[#allocation2 + $0x2b38] sm:$0xff]
    %v1590 = vld [vmem:[#allocation2 + $0x2b40] sm:$0xff]
    %v1591 = vld [vmem:[#allocation2 + $0x2b48] sm:$0xff]
    %v1592 = vld [vmem:[#allocation2 + $0x2b50] sm:$0xff]
    %v1593 = vld [vmem:[#allocation2 + $0x2b58] sm:$0xff]
    %v1594 = vld [vmem:[#allocation2 + $0x2b60] sm:$0xff]
    %v1595 = vld [vmem:[#allocation2 + $0x2b68] sm:$0xff]
    %v1596 = vld [vmem:[#allocation2 + $0x2b70] sm:$0xff]
    %v1597 = vld [vmem:[#allocation2 + $0x2b78] sm:$0xff]
    %v1598 = vld [vmem:[#allocation2 + $0x2b80] sm:$0xff]
    %v1599 = vld [vmem:[#allocation2 + $0x2b88] sm:$0xff]
    %v1600 = vld [vmem:[#allocation2 + $0x2b90] sm:$0xff]
    %v1601 = vld [vmem:[#allocation2 + $0x2b98] sm:$0xff]
    %v1602 = vld [vmem:[#allocation2 + $0x2ba0] sm:$0xff]
    %v1603 = vld [vmem:[#allocation2 + $0x2ba8] sm:$0xff]
    %v1604 = vld [vmem:[#allocation2 + $0x2bb0] sm:$0xff]
    %v1605 = vld [vmem:[#allocation2 + $0x2bb8] sm:$0xff]
    %v1606 = vld [vmem:[#allocation2 + $0x2bc0] sm:$0xff]
    %v1607 = vld [vmem:[#allocation2 + $0x2bc8] sm:$0xff]
    %v1608 = vld [vmem:[#allocation2 + $0x2bd0] sm:$0xff]
    %v1609 = vld [vmem:[#allocation2 + $0x2bd8] sm:$0xff]
    %v1610 = vld [vmem:[#allocation2 + $0x2be0] sm:$0xff]
    %v1611 = vld [vmem:[#allocation2 + $0x2be8] sm:$0xff]
    %v1612 = vld [vmem:[#allocation2 + $0x2bf0] sm:$0xff]
    %v1613 = vld [vmem:[#allocation2 + $0x2bf8] sm:$0xff]
    %v1614 = vld [vmem:[#allocation2 + $0x2c00] sm:$0xff]
    %v1615 = vld [vmem:[#allocation2 + $0x2c08] sm:$0xff]
    %v1616 = vld [vmem:[#allocation2 + $0x2c10] sm:$0xff]
    %v1617 = vld [vmem:[#allocation2 + $0x2c18] sm:$0xff]
    %v1618 = vld [vmem:[#allocation2 + $0x2c20] sm:$0xff]
    %v1619 = vld [vmem:[#allocation2 + $0x2c28] sm:$0xff]
    %v1620 = vld [vmem:[#allocation2 + $0x2c30] sm:$0xff]
    %v1621 = vld [vmem:[#allocation2 + $0x2c38] sm:$0xff]
    %v1622 = vld [vmem:[#allocation2 + $0x2c40] sm:$0xff]
    %v1623 = vld [vmem:[#allocation2 + $0x2c48] sm:$0xff]
    %v1624 = vld [vmem:[#allocation2 + $0x2c50] sm:$0xff]
    %v1625 = vld [vmem:[#allocation2 + $0x2c58] sm:$0xff]
    %v1626 = vld [vmem:[#allocation2 + $0x2c60] sm:$0xff]
    %v1627 = vld [vmem:[#allocation2 + $0x2c68] sm:$0xff]
    %v1628 = vld [vmem:[#allocation2 + $0x2c70] sm:$0xff]
    %v1629 = vld [vmem:[#allocation2 + $0x2c78] sm:$0xff]
    %v1630 = vld [vmem:[#allocation2 + $0x2c80] sm:$0xff]
    %v1631 = vld [vmem:[#allocation2 + $0x2c88] sm:$0xff]
    %v1632 = vld [vmem:[#allocation2 + $0x2c90] sm:$0xff]
    %v1633 = vld [vmem:[#allocation2 + $0x2c98] sm:$0xff]
    %v1634 = vld [vmem:[#allocation2 + $0x2ca0] sm:$0xff]
    %v1635 = vld [vmem:[#allocation2 + $0x2ca8] sm:$0xff]
    %v1636 = vld [vmem:[#allocation2 + $0x2cb0] sm:$0xff]
    %v1637 = vld [vmem:[#allocation2 + $0x2cb8] sm:$0xff]
    %v1638 = vld [vmem:[#allocation2 + $0x2cc0] sm:$0xff]
    %v1639 = vld [vmem:[#allocation2 + $0x2cc8] sm:$0xff]
    %v1640 = vld [vmem:[#allocation2 + $0x2cd0] sm:$0xff]
    %v1641 = vld [vmem:[#allocation2 + $0x2cd8] sm:$0xff]
    %v1642 = vld [vmem:[#allocation2 + $0x2ce0] sm:$0xff]
    %v1643 = vld [vmem:[#allocation2 + $0x2ce8] sm:$0xff]
    %v1644 = vld [vmem:[#allocation2 + $0x2cf0] sm:$0xff]
    %v1645 = vld [vmem:[#allocation2 + $0x2cf8] sm:$0xff]
    %v1646 = vld [vmem:[#allocation2 + $0x2d00] sm:$0xff]
    %v1647 = vld [vmem:[#allocation2 + $0x2d08] sm:$0xff]
    %v1648 = vld [vmem:[#allocation2 + $0x2d10] sm:$0xff]
    %v1649 = vld [vmem:[#allocation2 + $0x2d18] sm:$0xff]
    %v1650 = vld [vmem:[#allocation2 + $0x2d20] sm:$0xff]
    %v1651 = vld [vmem:[#allocation2 + $0x2d28] sm:$0xff]
    %v1652 = vld [vmem:[#allocation2 + $0x2d30] sm:$0xff]
    %v1653 = vld [vmem:[#allocation2 + $0x2d38] sm:$0xff]
    %v1654 = vld [vmem:[#allocation2 + $0x2d40] sm:$0xff]
    %v1655 = vld [vmem:[#allocation2 + $0x2d48] sm:$0xff]
    %v1656 = vld [vmem:[#allocation2 + $0x2d50] sm:$0xff]
    %v1657 = vld [vmem:[#allocation2 + $0x2d58] sm:$0xff]
    %v1658 = vld [vmem:[#allocation2 + $0x2d60] sm:$0xff]
    %v1659 = vld [vmem:[#allocation2 + $0x2d68] sm:$0xff]
    %v1660 = vld [vmem:[#allocation2 + $0x2d70] sm:$0xff]
    %v1661 = vld [vmem:[#allocation2 + $0x2d78] sm:$0xff]
    %v1662 = vld [vmem:[#allocation2 + $0x2d80] sm:$0xff]
    %v1663 = vld [vmem:[#allocation2 + $0x2d88] sm:$0xff]
    %v1664 = vld [vmem:[#allocation2 + $0x2d90] sm:$0xff]
    %v1665 = vld [vmem:[#allocation2 + $0x2d98] sm:$0xff]
    %v1666 = vld [vmem:[#allocation2 + $0x2da0] sm:$0xff]
    %v1667 = vld [vmem:[#allocation2 + $0x2da8] sm:$0xff]
    %v1668 = vld [vmem:[#allocation2 + $0x2db0] sm:$0xff]
    %v1669 = vld [vmem:[#allocation2 + $0x2db8] sm:$0xff]
    %v1670 = vld [vmem:[#allocation2 + $0x2dc0] sm:$0xff]
    %v1671 = vld [vmem:[#allocation2 + $0x2dc8] sm:$0xff]
    %v1672 = vld [vmem:[#allocation2 + $0x2dd0] sm:$0xff]
    %v1673 = vld [vmem:[#allocation2 + $0x2dd8] sm:$0xff]
    %v1674 = vld [vmem:[#allocation2 + $0x2de0] sm:$0xff]
    %v1675 = vld [vmem:[#allocation2 + $0x2de8] sm:$0xff]
    %v1676 = vld [vmem:[#allocation2 + $0x2df0] sm:$0xff]
    %v1677 = vld [vmem:[#allocation2 + $0x2df8] sm:$0xff]
    %v1678 = vld [vmem:[#allocation2 + $0x2e00] sm:$0xff]
    %v1679 = vld [vmem:[#allocation2 + $0x2e08] sm:$0xff]
    %v1680 = vld [vmem:[#allocation2 + $0x2e10] sm:$0xff]
    %v1681 = vld [vmem:[#allocation2 + $0x2e18] sm:$0xff]
    %v1682 = vld [vmem:[#allocation2 + $0x2e20] sm:$0xff]
    %v1683 = vld [vmem:[#allocation2 + $0x2e28] sm:$0xff]
    %v1684 = vld [vmem:[#allocation2 + $0x2e30] sm:$0xff]
    %v1685 = vld [vmem:[#allocation2 + $0x2e38] sm:$0xff]
    %v1686 = vld [vmem:[#allocation2 + $0x2e40] sm:$0xff]
    %v1687 = vld [vmem:[#allocation2 + $0x2e48] sm:$0xff]
    %v1688 = vld [vmem:[#allocation2 + $0x2e50] sm:$0xff]
    %v1689 = vld [vmem:[#allocation2 + $0x2e58] sm:$0xff]
    %v1690 = vld [vmem:[#allocation2 + $0x2e60] sm:$0xff]
    %v1691 = vld [vmem:[#allocation2 + $0x2e68] sm:$0xff]
    %v1692 = vld [vmem:[#allocation2 + $0x2e70] sm:$0xff]
    %v1693 = vld [vmem:[#allocation2 + $0x2e78] sm:$0xff]
    %v1694 = vld [vmem:[#allocation2 + $0x2e80] sm:$0xff]
    %v1695 = vld [vmem:[#allocation2 + $0x2e88] sm:$0xff]
    %v1696 = vld [vmem:[#allocation2 + $0x2e90] sm:$0xff]
    %v1697 = vld [vmem:[#allocation2 + $0x2e98] sm:$0xff]
    %v1698 = vld [vmem:[#allocation2 + $0x2ea0] sm:$0xff]
    %v1699 = vld [vmem:[#allocation2 + $0x2ea8] sm:$0xff]
    %v1700 = vld [vmem:[#allocation2 + $0x2eb0] sm:$0xff]
    %v1701 = vld [vmem:[#allocation2 + $0x2eb8] sm:$0xff]
    %v1702 = vld [vmem:[#allocation2 + $0x2ec0] sm:$0xff]
    %v1703 = vld [vmem:[#allocation2 + $0x2ec8] sm:$0xff]
    %v1704 = vld [vmem:[#allocation2 + $0x2ed0] sm:$0xff]
    %v1705 = vld [vmem:[#allocation2 + $0x2ed8] sm:$0xff]
    %v1706 = vld [vmem:[#allocation2 + $0x2ee0] sm:$0xff]
    %v1707 = vld [vmem:[#allocation2 + $0x2ee8] sm:$0xff]
    %v1708 = vld [vmem:[#allocation2 + $0x2ef0] sm:$0xff]
    %v1709 = vld [vmem:[#allocation2 + $0x2ef8] sm:$0xff]
    %v1710 = vld [vmem:[#allocation2 + $0x2f00] sm:$0xff]
    %v1711 = vld [vmem:[#allocation2 + $0x2f08] sm:$0xff]
    %v1712 = vld [vmem:[#allocation2 + $0x2f10] sm:$0xff]
    %v1713 = vld [vmem:[#allocation2 + $0x2f18] sm:$0xff]
    %v1714 = vld [vmem:[#allocation2 + $0x2f20] sm:$0xff]
    %v1715 = vld [vmem:[#allocation2 + $0x2f28] sm:$0xff]
    %v1716 = vld [vmem:[#allocation2 + $0x2f30] sm:$0xff]
    %v1717 = vld [vmem:[#allocation2 + $0x2f38] sm:$0xff]
    %v1718 = vld [vmem:[#allocation2 + $0x2f40] sm:$0xff]
    %v1719 = vld [vmem:[#allocation2 + $0x2f48] sm:$0xff]
    %v1720 = vld [vmem:[#allocation2 + $0x2f50] sm:$0xff]
    %v1721 = vld [vmem:[#allocation2 + $0x2f58] sm:$0xff]
    %v1722 = vld [vmem:[#allocation2 + $0x2f60] sm:$0xff]
    %v1723 = vld [vmem:[#allocation2 + $0x2f68] sm:$0xff]
    %v1724 = vld [vmem:[#allocation2 + $0x2f70] sm:$0xff]
    %v1725 = vld [vmem:[#allocation2 + $0x2f78] sm:$0xff]
    %v1726 = vld [vmem:[#allocation2 + $0x2f80] sm:$0xff]
    %v1727 = vld [vmem:[#allocation2 + $0x2f88] sm:$0xff]
    %v1728 = vld [vmem:[#allocation2 + $0x2f90] sm:$0xff]
    %v1729 = vld [vmem:[#allocation2 + $0x2f98] sm:$0xff]
    %v1730 = vld [vmem:[#allocation2 + $0x2fa0] sm:$0xff]
    %v1731 = vld [vmem:[#allocation2 + $0x2fa8] sm:$0xff]
    %v1732 = vld [vmem:[#allocation2 + $0x2fb0] sm:$0xff]
    %v1733 = vld [vmem:[#allocation2 + $0x2fb8] sm:$0xff]
    %v1734 = vld [vmem:[#allocation2 + $0x2fc0] sm:$0xff]
    %v1735 = vld [vmem:[#allocation2 + $0x2fc8] sm:$0xff]
    %v1736 = vld [vmem:[#allocation2 + $0x2fd0] sm:$0xff]
    %v1737 = vld [vmem:[#allocation2 + $0x2fd8] sm:$0xff]
    %v1738 = vld [vmem:[#allocation2 + $0x2fe0] sm:$0xff]
    %v1739 = vld [vmem:[#allocation2 + $0x2fe8] sm:$0xff]
    %v1740 = vld [vmem:[#allocation2 + $0x2ff0] sm:$0xff]
    %v1741 = vld [vmem:[#allocation2 + $0x2ff8] sm:$0xff]
    %v1742 = vld [vmem:[#allocation4] sm:$0xff]
    %v1744 = vlaneseq
    %v1745 = vshrl.u32 %v1744, 7
    %v1746 = vsub.s32 0, %v1745
    %v1747 = vrot.slane %v1742, %v1746
    %v1748 = vlaneseq
    %v1749 = vshrl.u32 %v1748, 7
    %v1750 = vsub.s32 1, %v1749
    %v1751 = vrot.slane %v1742, %v1750
    %v1752 = vlaneseq
    %v1753 = vshrl.u32 %v1752, 7
    %v1754 = vsub.s32 2, %v1753
    %v1755 = vrot.slane %v1742, %v1754
    %v1756 = vlaneseq
    %v1757 = vshrl.u32 %v1756, 7
    %v1758 = vsub.s32 3, %v1757
    %v1759 = vrot.slane %v1742, %v1758
    %v1760 = vlaneseq
    %v1761 = vshrl.u32 %v1760, 7
    %v1762 = vsub.s32 4, %v1761
    %v1763 = vrot.slane %v1742, %v1762
    %v1764 = vlaneseq
    %v1765 = vshrl.u32 %v1764, 7
    %v1766 = vsub.s32 5, %v1765
    %v1767 = vrot.slane %v1742, %v1766
    %v1768 = vlaneseq
    %v1769 = vshrl.u32 %v1768, 7
    %v1770 = vsub.s32 6, %v1769
    %v1771 = vrot.slane %v1742, %v1770
    %v1772 = vlaneseq
    %v1773 = vshrl.u32 %v1772, 7
    %v1774 = vsub.s32 7, %v1773
    %v1775 = vrot.slane %v1742, %v1774
    %v3320 = vunpack.c.l.b16 %v206
    %v3321 = vunpack.c.h.b16 %v206
    %v3322 = vunpack.c.l.b16 %v207
    %v3323 = vunpack.c.h.b16 %v207
    %v3324 = vunpack.c.l.b16 %v208
    %v3325 = vunpack.c.h.b16 %v208
    %v3326 = vunpack.c.l.b16 %v209
    %v3327 = vunpack.c.h.b16 %v209
    %v3328 = vunpack.c.l.b16 %v210
    %v3329 = vunpack.c.h.b16 %v210
    %v3330 = vunpack.c.l.b16 %v211
    %v3331 = vunpack.c.h.b16 %v211
    %v3332 = vunpack.c.l.b16 %v212
    %v3333 = vunpack.c.h.b16 %v212
    %v3334 = vunpack.c.l.b16 %v213
    %v3335 = vunpack.c.h.b16 %v213
    %v3336 = vunpack.c.l.b16 %v214
    %v3337 = vunpack.c.h.b16 %v214
    %v3338 = vunpack.c.l.b16 %v215
    %v3339 = vunpack.c.h.b16 %v215
    %v3340 = vunpack.c.l.b16 %v216
    %v3341 = vunpack.c.h.b16 %v216
    %v3342 = vunpack.c.l.b16 %v217
    %v3343 = vunpack.c.h.b16 %v217
    %v3344 = vunpack.c.l.b16 %v218
    %v3345 = vunpack.c.h.b16 %v218
    %v3346 = vunpack.c.l.b16 %v219
    %v3347 = vunpack.c.h.b16 %v219
    %v3348 = vunpack.c.l.b16 %v220
    %v3349 = vunpack.c.h.b16 %v220
    %v3350 = vunpack.c.l.b16 %v221
    %v3351 = vunpack.c.h.b16 %v221
    %v3352 = vunpack.c.l.b16 %v222
    %v3353 = vunpack.c.h.b16 %v222
    %v3354 = vunpack.c.l.b16 %v223
    %v3355 = vunpack.c.h.b16 %v223
    %v3356 = vunpack.c.l.b16 %v224
    %v3357 = vunpack.c.h.b16 %v224
    %v3358 = vunpack.c.l.b16 %v225
    %v3359 = vunpack.c.h.b16 %v225
    %v3360 = vunpack.c.l.b16 %v226
    %v3361 = vunpack.c.h.b16 %v226
    %v3362 = vunpack.c.l.b16 %v227
    %v3363 = vunpack.c.h.b16 %v227
    %v3364 = vunpack.c.l.b16 %v228
    %v3365 = vunpack.c.h.b16 %v228
    %v3366 = vunpack.c.l.b16 %v229
    %v3367 = vunpack.c.h.b16 %v229
    %v3368 = vunpack.c.l.b16 %v230
    %v3369 = vunpack.c.h.b16 %v230
    %v3370 = vunpack.c.l.b16 %v231
    %v3371 = vunpack.c.h.b16 %v231
    %v3372 = vunpack.c.l.b16 %v232
    %v3373 = vunpack.c.h.b16 %v232
    %v3374 = vunpack.c.l.b16 %v233
    %v3375 = vunpack.c.h.b16 %v233
    %v3376 = vunpack.c.l.b16 %v234
    %v3377 = vunpack.c.h.b16 %v234
    %v3378 = vunpack.c.l.b16 %v235
    %v3379 = vunpack.c.h.b16 %v235
    %v3380 = vunpack.c.l.b16 %v236
    %v3381 = vunpack.c.h.b16 %v236
    %v3382 = vunpack.c.l.b16 %v237
    %v3383 = vunpack.c.h.b16 %v237
    %v3384 = vunpack.c.l.b16 %v238
    %v3385 = vunpack.c.h.b16 %v238
    %v3386 = vunpack.c.l.b16 %v239
    %v3387 = vunpack.c.h.b16 %v239
    %v3388 = vunpack.c.l.b16 %v240
    %v3389 = vunpack.c.h.b16 %v240
    %v3390 = vunpack.c.l.b16 %v241
    %v3391 = vunpack.c.h.b16 %v241
    %v3392 = vunpack.c.l.b16 %v242
    %v3393 = vunpack.c.h.b16 %v242
    %v3394 = vunpack.c.l.b16 %v243
    %v3395 = vunpack.c.h.b16 %v243
    %v3396 = vunpack.c.l.b16 %v244
    %v3397 = vunpack.c.h.b16 %v244
    %v3398 = vunpack.c.l.b16 %v245
    %v3399 = vunpack.c.h.b16 %v245
    %v3400 = vunpack.c.l.b16 %v246
    %v3401 = vunpack.c.h.b16 %v246
    %v3402 = vunpack.c.l.b16 %v247
    %v3403 = vunpack.c.h.b16 %v247
    %v3404 = vunpack.c.l.b16 %v248
    %v3405 = vunpack.c.h.b16 %v248
    %v3406 = vunpack.c.l.b16 %v249
    %v3407 = vunpack.c.h.b16 %v249
    %v3408 = vunpack.c.l.b16 %v250
    %v3409 = vunpack.c.h.b16 %v250
    %v3410 = vunpack.c.l.b16 %v251
    %v3411 = vunpack.c.h.b16 %v251
    %v3412 = vunpack.c.l.b16 %v252
    %v3413 = vunpack.c.h.b16 %v252
    %v3414 = vunpack.c.l.b16 %v253
    %v3415 = vunpack.c.h.b16 %v253
    %v3416 = vunpack.c.l.b16 %v254
    %v3417 = vunpack.c.h.b16 %v254
    %v3418 = vunpack.c.l.b16 %v255
    %v3419 = vunpack.c.h.b16 %v255
    %v3420 = vunpack.c.l.b16 %v256
    %v3421 = vunpack.c.h.b16 %v256
    %v3422 = vunpack.c.l.b16 %v257
    %v3423 = vunpack.c.h.b16 %v257
    %v3424 = vunpack.c.l.b16 %v258
    %v3425 = vunpack.c.h.b16 %v258
    %v3426 = vunpack.c.l.b16 %v259
    %v3427 = vunpack.c.h.b16 %v259
    %v3428 = vunpack.c.l.b16 %v260
    %v3429 = vunpack.c.h.b16 %v260
    %v3430 = vunpack.c.l.b16 %v261
    %v3431 = vunpack.c.h.b16 %v261
    %v3432 = vunpack.c.l.b16 %v262
    %v3433 = vunpack.c.h.b16 %v262
    %v3434 = vunpack.c.l.b16 %v263
    %v3435 = vunpack.c.h.b16 %v263
    %v3436 = vunpack.c.l.b16 %v264
    %v3437 = vunpack.c.h.b16 %v264
    %v3438 = vunpack.c.l.b16 %v265
    %v3439 = vunpack.c.h.b16 %v265
    %v3440 = vunpack.c.l.b16 %v266
    %v3441 = vunpack.c.h.b16 %v266
    %v3442 = vunpack.c.l.b16 %v267
    %v3443 = vunpack.c.h.b16 %v267
    %v3444 = vunpack.c.l.b16 %v268
    %v3445 = vunpack.c.h.b16 %v268
    %v3446 = vunpack.c.l.b16 %v269
    %v3447 = vunpack.c.h.b16 %v269
    %v3448 = vunpack.c.l.b16 %v270
    %v3449 = vunpack.c.h.b16 %v270
    %v3450 = vunpack.c.l.b16 %v271
    %v3451 = vunpack.c.h.b16 %v271
    %v3452 = vunpack.c.l.b16 %v272
    %v3453 = vunpack.c.h.b16 %v272
    %v3454 = vunpack.c.l.b16 %v273
    %v3455 = vunpack.c.h.b16 %v273
    %v3456 = vunpack.c.l.b16 %v274
    %v3457 = vunpack.c.h.b16 %v274
    %v3458 = vunpack.c.l.b16 %v275
    %v3459 = vunpack.c.h.b16 %v275
    %v3460 = vunpack.c.l.b16 %v276
    %v3461 = vunpack.c.h.b16 %v276
    %v3462 = vunpack.c.l.b16 %v277
    %v3463 = vunpack.c.h.b16 %v277
    %v3464 = vunpack.c.l.b16 %v278
    %v3465 = vunpack.c.h.b16 %v278
    %v3466 = vunpack.c.l.b16 %v279
    %v3467 = vunpack.c.h.b16 %v279
    %v3468 = vunpack.c.l.b16 %v280
    %v3469 = vunpack.c.h.b16 %v280
    %v3470 = vunpack.c.l.b16 %v281
    %v3471 = vunpack.c.h.b16 %v281
    %v3472 = vunpack.c.l.b16 %v282
    %v3473 = vunpack.c.h.b16 %v282
    %v3474 = vunpack.c.l.b16 %v283
    %v3475 = vunpack.c.h.b16 %v283
    %v3476 = vunpack.c.l.b16 %v284
    %v3477 = vunpack.c.h.b16 %v284
    %v3478 = vunpack.c.l.b16 %v285
    %v3479 = vunpack.c.h.b16 %v285
    %v3480 = vunpack.c.l.b16 %v286
    %v3481 = vunpack.c.h.b16 %v286
    %v3482 = vunpack.c.l.b16 %v287
    %v3483 = vunpack.c.h.b16 %v287
    %v3484 = vunpack.c.l.b16 %v288
    %v3485 = vunpack.c.h.b16 %v288
    %v3486 = vunpack.c.l.b16 %v289
    %v3487 = vunpack.c.h.b16 %v289
    %v3488 = vunpack.c.l.b16 %v290
    %v3489 = vunpack.c.h.b16 %v290
    %v3490 = vunpack.c.l.b16 %v291
    %v3491 = vunpack.c.h.b16 %v291
    %v3492 = vunpack.c.l.b16 %v292
    %v3493 = vunpack.c.h.b16 %v292
    %v3494 = vunpack.c.l.b16 %v293
    %v3495 = vunpack.c.h.b16 %v293
    %v3496 = vunpack.c.l.b16 %v294
    %v3497 = vunpack.c.h.b16 %v294
    %v3498 = vunpack.c.l.b16 %v295
    %v3499 = vunpack.c.h.b16 %v295
    %v3500 = vunpack.c.l.b16 %v296
    %v3501 = vunpack.c.h.b16 %v296
    %v3502 = vunpack.c.l.b16 %v297
    %v3503 = vunpack.c.h.b16 %v297
    %v3504 = vunpack.c.l.b16 %v298
    %v3505 = vunpack.c.h.b16 %v298
    %v3506 = vunpack.c.l.b16 %v299
    %v3507 = vunpack.c.h.b16 %v299
    %v3508 = vunpack.c.l.b16 %v300
    %v3509 = vunpack.c.h.b16 %v300
    %v3510 = vunpack.c.l.b16 %v301
    %v3511 = vunpack.c.h.b16 %v301
    %v3512 = vunpack.c.l.b16 %v302
    %v3513 = vunpack.c.h.b16 %v302
    %v3514 = vunpack.c.l.b16 %v303
    %v3515 = vunpack.c.h.b16 %v303
    %v3516 = vunpack.c.l.b16 %v304
    %v3517 = vunpack.c.h.b16 %v304
    %v3518 = vunpack.c.l.b16 %v305
    %v3519 = vunpack.c.h.b16 %v305
    %v3520 = vunpack.c.l.b16 %v306
    %v3521 = vunpack.c.h.b16 %v306
    %v3522 = vunpack.c.l.b16 %v307
    %v3523 = vunpack.c.h.b16 %v307
    %v3524 = vunpack.c.l.b16 %v308
    %v3525 = vunpack.c.h.b16 %v308
    %v3526 = vunpack.c.l.b16 %v309
    %v3527 = vunpack.c.h.b16 %v309
    %v3528 = vunpack.c.l.b16 %v310
    %v3529 = vunpack.c.h.b16 %v310
    %v3530 = vunpack.c.l.b16 %v311
    %v3531 = vunpack.c.h.b16 %v311
    %v3532 = vunpack.c.l.b16 %v312
    %v3533 = vunpack.c.h.b16 %v312
    %v3534 = vunpack.c.l.b16 %v313
    %v3535 = vunpack.c.h.b16 %v313
    %v3536 = vunpack.c.l.b16 %v314
    %v3537 = vunpack.c.h.b16 %v314
    %v3538 = vunpack.c.l.b16 %v315
    %v3539 = vunpack.c.h.b16 %v315
    %v3540 = vunpack.c.l.b16 %v316
    %v3541 = vunpack.c.h.b16 %v316
    %v3542 = vunpack.c.l.b16 %v317
    %v3543 = vunpack.c.h.b16 %v317
    %v3544 = vunpack.c.l.b16 %v318
    %v3545 = vunpack.c.h.b16 %v318
    %v3546 = vunpack.c.l.b16 %v319
    %v3547 = vunpack.c.h.b16 %v319
    %v3548 = vunpack.c.l.b16 %v320
    %v3549 = vunpack.c.h.b16 %v320
    %v3550 = vunpack.c.l.b16 %v321
    %v3551 = vunpack.c.h.b16 %v321
    %v3552 = vunpack.c.l.b16 %v322
    %v3553 = vunpack.c.h.b16 %v322
    %v3554 = vunpack.c.l.b16 %v323
    %v3555 = vunpack.c.h.b16 %v323
    %v3556 = vunpack.c.l.b16 %v324
    %v3557 = vunpack.c.h.b16 %v324
    %v3558 = vunpack.c.l.b16 %v325
    %v3559 = vunpack.c.h.b16 %v325
    %v3560 = vunpack.c.l.b16 %v326
    %v3561 = vunpack.c.h.b16 %v326
    %v3562 = vunpack.c.l.b16 %v327
    %v3563 = vunpack.c.h.b16 %v327
    %v3564 = vunpack.c.l.b16 %v328
    %v3565 = vunpack.c.h.b16 %v328
    %v3566 = vunpack.c.l.b16 %v329
    %v3567 = vunpack.c.h.b16 %v329
    %v3568 = vunpack.c.l.b16 %v330
    %v3569 = vunpack.c.h.b16 %v330
    %v3570 = vunpack.c.l.b16 %v331
    %v3571 = vunpack.c.h.b16 %v331
    %v3572 = vunpack.c.l.b16 %v332
    %v3573 = vunpack.c.h.b16 %v332
    %v3574 = vunpack.c.l.b16 %v333
    %v3575 = vunpack.c.h.b16 %v333
    %v3576 = vunpack.c.l.b16 %v334
    %v3577 = vunpack.c.h.b16 %v334
    %v3578 = vunpack.c.l.b16 %v335
    %v3579 = vunpack.c.h.b16 %v335
    %v3580 = vunpack.c.l.b16 %v336
    %v3581 = vunpack.c.h.b16 %v336
    %v3582 = vunpack.c.l.b16 %v337
    %v3583 = vunpack.c.h.b16 %v337
    %v3584 = vunpack.c.l.b16 %v338
    %v3585 = vunpack.c.h.b16 %v338
    %v3586 = vunpack.c.l.b16 %v339
    %v3587 = vunpack.c.h.b16 %v339
    %v3588 = vunpack.c.l.b16 %v340
    %v3589 = vunpack.c.h.b16 %v340
    %v3590 = vunpack.c.l.b16 %v341
    %v3591 = vunpack.c.h.b16 %v341
    %v3592 = vunpack.c.l.b16 %v342
    %v3593 = vunpack.c.h.b16 %v342
    %v3594 = vunpack.c.l.b16 %v343
    %v3595 = vunpack.c.h.b16 %v343
    %v3596 = vunpack.c.l.b16 %v344
    %v3597 = vunpack.c.h.b16 %v344
    %v3598 = vunpack.c.l.b16 %v345
    %v3599 = vunpack.c.h.b16 %v345
    %v3600 = vunpack.c.l.b16 %v346
    %v3601 = vunpack.c.h.b16 %v346
    %v3602 = vunpack.c.l.b16 %v347
    %v3603 = vunpack.c.h.b16 %v347
    %v3604 = vunpack.c.l.b16 %v348
    %v3605 = vunpack.c.h.b16 %v348
    %v3606 = vunpack.c.l.b16 %v349
    %v3607 = vunpack.c.h.b16 %v349
    %v3608 = vunpack.c.l.b16 %v350
    %v3609 = vunpack.c.h.b16 %v350
    %v3610 = vunpack.c.l.b16 %v351
    %v3611 = vunpack.c.h.b16 %v351
    %v3612 = vunpack.c.l.b16 %v352
    %v3613 = vunpack.c.h.b16 %v352
    %v3614 = vunpack.c.l.b16 %v353
    %v3615 = vunpack.c.h.b16 %v353
    %v3616 = vunpack.c.l.b16 %v354
    %v3617 = vunpack.c.h.b16 %v354
    %v3618 = vunpack.c.l.b16 %v355
    %v3619 = vunpack.c.h.b16 %v355
    %v3620 = vunpack.c.l.b16 %v356
    %v3621 = vunpack.c.h.b16 %v356
    %v3622 = vunpack.c.l.b16 %v357
    %v3623 = vunpack.c.h.b16 %v357
    %v3624 = vunpack.c.l.b16 %v358
    %v3625 = vunpack.c.h.b16 %v358
    %v3626 = vunpack.c.l.b16 %v359
    %v3627 = vunpack.c.h.b16 %v359
    %v3628 = vunpack.c.l.b16 %v360
    %v3629 = vunpack.c.h.b16 %v360
    %v3630 = vunpack.c.l.b16 %v361
    %v3631 = vunpack.c.h.b16 %v361
    %v3632 = vunpack.c.l.b16 %v362
    %v3633 = vunpack.c.h.b16 %v362
    %v3634 = vunpack.c.l.b16 %v363
    %v3635 = vunpack.c.h.b16 %v363
    %v3636 = vunpack.c.l.b16 %v364
    %v3637 = vunpack.c.h.b16 %v364
    %v3638 = vunpack.c.l.b16 %v365
    %v3639 = vunpack.c.h.b16 %v365
    %v3640 = vunpack.c.l.b16 %v366
    %v3641 = vunpack.c.h.b16 %v366
    %v3642 = vunpack.c.l.b16 %v367
    %v3643 = vunpack.c.h.b16 %v367
    %v3644 = vunpack.c.l.b16 %v368
    %v3645 = vunpack.c.h.b16 %v368
    %v3646 = vunpack.c.l.b16 %v369
    %v3647 = vunpack.c.h.b16 %v369
    %v3648 = vunpack.c.l.b16 %v370
    %v3649 = vunpack.c.h.b16 %v370
    %v3650 = vunpack.c.l.b16 %v371
    %v3651 = vunpack.c.h.b16 %v371
    %v3652 = vunpack.c.l.b16 %v372
    %v3653 = vunpack.c.h.b16 %v372
    %v3654 = vunpack.c.l.b16 %v373
    %v3655 = vunpack.c.h.b16 %v373
    %v3656 = vunpack.c.l.b16 %v374
    %v3657 = vunpack.c.h.b16 %v374
    %v3658 = vunpack.c.l.b16 %v375
    %v3659 = vunpack.c.h.b16 %v375
    %v3660 = vunpack.c.l.b16 %v376
    %v3661 = vunpack.c.h.b16 %v376
    %v3662 = vunpack.c.l.b16 %v377
    %v3663 = vunpack.c.h.b16 %v377
    %v3664 = vunpack.c.l.b16 %v378
    %v3665 = vunpack.c.h.b16 %v378
    %v3666 = vunpack.c.l.b16 %v379
    %v3667 = vunpack.c.h.b16 %v379
    %v3668 = vunpack.c.l.b16 %v380
    %v3669 = vunpack.c.h.b16 %v380
    %v3670 = vunpack.c.l.b16 %v381
    %v3671 = vunpack.c.h.b16 %v381
    %v3672 = vunpack.c.l.b16 %v382
    %v3673 = vunpack.c.h.b16 %v382
    %v3674 = vunpack.c.l.b16 %v383
    %v3675 = vunpack.c.h.b16 %v383
    %v3676 = vunpack.c.l.b16 %v384
    %v3677 = vunpack.c.h.b16 %v384
    %v3678 = vunpack.c.l.b16 %v385
    %v3679 = vunpack.c.h.b16 %v385
    %v3680 = vunpack.c.l.b16 %v386
    %v3681 = vunpack.c.h.b16 %v386
    %v3682 = vunpack.c.l.b16 %v387
    %v3683 = vunpack.c.h.b16 %v387
    %v3684 = vunpack.c.l.b16 %v388
    %v3685 = vunpack.c.h.b16 %v388
    %v3686 = vunpack.c.l.b16 %v389
    %v3687 = vunpack.c.h.b16 %v389
    %v3688 = vunpack.c.l.b16 %v390
    %v3689 = vunpack.c.h.b16 %v390
    %v3690 = vunpack.c.l.b16 %v391
    %v3691 = vunpack.c.h.b16 %v391
    %v3692 = vunpack.c.l.b16 %v392
    %v3693 = vunpack.c.h.b16 %v392
    %v3694 = vunpack.c.l.b16 %v393
    %v3695 = vunpack.c.h.b16 %v393
    %v3696 = vunpack.c.l.b16 %v394
    %v3697 = vunpack.c.h.b16 %v394
    %v3698 = vunpack.c.l.b16 %v395
    %v3699 = vunpack.c.h.b16 %v395
    %v3700 = vunpack.c.l.b16 %v396
    %v3701 = vunpack.c.h.b16 %v396
    %v3702 = vunpack.c.l.b16 %v397
    %v3703 = vunpack.c.h.b16 %v397
    %v3704 = vunpack.c.l.b16 %v398
    %v3705 = vunpack.c.h.b16 %v398
    %v3706 = vunpack.c.l.b16 %v399
    %v3707 = vunpack.c.h.b16 %v399
    %v3708 = vunpack.c.l.b16 %v400
    %v3709 = vunpack.c.h.b16 %v400
    %v3710 = vunpack.c.l.b16 %v401
    %v3711 = vunpack.c.h.b16 %v401
    %v3712 = vunpack.c.l.b16 %v402
    %v3713 = vunpack.c.h.b16 %v402
    %v3714 = vunpack.c.l.b16 %v403
    %v3715 = vunpack.c.h.b16 %v403
    %v3716 = vunpack.c.l.b16 %v404
    %v3717 = vunpack.c.h.b16 %v404
    %v3718 = vunpack.c.l.b16 %v405
    %v3719 = vunpack.c.h.b16 %v405
    %v3720 = vunpack.c.l.b16 %v406
    %v3721 = vunpack.c.h.b16 %v406
    %v3722 = vunpack.c.l.b16 %v407
    %v3723 = vunpack.c.h.b16 %v407
    %v3724 = vunpack.c.l.b16 %v408
    %v3725 = vunpack.c.h.b16 %v408
    %v3726 = vunpack.c.l.b16 %v409
    %v3727 = vunpack.c.h.b16 %v409
    %v3728 = vunpack.c.l.b16 %v410
    %v3729 = vunpack.c.h.b16 %v410
    %v3730 = vunpack.c.l.b16 %v411
    %v3731 = vunpack.c.h.b16 %v411
    %v3732 = vunpack.c.l.b16 %v412
    %v3733 = vunpack.c.h.b16 %v412
    %v3734 = vunpack.c.l.b16 %v413
    %v3735 = vunpack.c.h.b16 %v413
    %v3736 = vunpack.c.l.b16 %v414
    %v3737 = vunpack.c.h.b16 %v414
    %v3738 = vunpack.c.l.b16 %v415
    %v3739 = vunpack.c.h.b16 %v415
    %v3740 = vunpack.c.l.b16 %v416
    %v3741 = vunpack.c.h.b16 %v416
    %v3742 = vunpack.c.l.b16 %v417
    %v3743 = vunpack.c.h.b16 %v417
    %v3744 = vunpack.c.l.b16 %v418
    %v3745 = vunpack.c.h.b16 %v418
    %v3746 = vunpack.c.l.b16 %v419
    %v3747 = vunpack.c.h.b16 %v419
    %v3748 = vunpack.c.l.b16 %v420
    %v3749 = vunpack.c.h.b16 %v420
    %v3750 = vunpack.c.l.b16 %v421
    %v3751 = vunpack.c.h.b16 %v421
    %v3752 = vunpack.c.l.b16 %v422
    %v3753 = vunpack.c.h.b16 %v422
    %v3754 = vunpack.c.l.b16 %v423
    %v3755 = vunpack.c.h.b16 %v423
    %v3756 = vunpack.c.l.b16 %v424
    %v3757 = vunpack.c.h.b16 %v424
    %v3758 = vunpack.c.l.b16 %v425
    %v3759 = vunpack.c.h.b16 %v425
    %v3760 = vunpack.c.l.b16 %v426
    %v3761 = vunpack.c.h.b16 %v426
    %v3762 = vunpack.c.l.b16 %v427
    %v3763 = vunpack.c.h.b16 %v427
    %v3764 = vunpack.c.l.b16 %v428
    %v3765 = vunpack.c.h.b16 %v428
    %v3766 = vunpack.c.l.b16 %v429
    %v3767 = vunpack.c.h.b16 %v429
    %v3768 = vunpack.c.l.b16 %v430
    %v3769 = vunpack.c.h.b16 %v430
    %v3770 = vunpack.c.l.b16 %v431
    %v3771 = vunpack.c.h.b16 %v431
    %v3772 = vunpack.c.l.b16 %v432
    %v3773 = vunpack.c.h.b16 %v432
    %v3774 = vunpack.c.l.b16 %v433
    %v3775 = vunpack.c.h.b16 %v433
    %v3776 = vunpack.c.l.b16 %v434
    %v3777 = vunpack.c.h.b16 %v434
    %v3778 = vunpack.c.l.b16 %v435
    %v3779 = vunpack.c.h.b16 %v435
    %v3780 = vunpack.c.l.b16 %v436
    %v3781 = vunpack.c.h.b16 %v436
    %v3782 = vunpack.c.l.b16 %v437
    %v3783 = vunpack.c.h.b16 %v437
    %v3784 = vunpack.c.l.b16 %v438
    %v3785 = vunpack.c.h.b16 %v438
    %v3786 = vunpack.c.l.b16 %v439
    %v3787 = vunpack.c.h.b16 %v439
    %v3788 = vunpack.c.l.b16 %v440
    %v3789 = vunpack.c.h.b16 %v440
    %v3790 = vunpack.c.l.b16 %v441
    %v3791 = vunpack.c.h.b16 %v441
    %v3792 = vunpack.c.l.b16 %v442
    %v3793 = vunpack.c.h.b16 %v442
    %v3794 = vunpack.c.l.b16 %v443
    %v3795 = vunpack.c.h.b16 %v443
    %v3796 = vunpack.c.l.b16 %v444
    %v3797 = vunpack.c.h.b16 %v444
    %v3798 = vunpack.c.l.b16 %v445
    %v3799 = vunpack.c.h.b16 %v445
    %v3800 = vunpack.c.l.b16 %v446
    %v3801 = vunpack.c.h.b16 %v446
    %v3802 = vunpack.c.l.b16 %v447
    %v3803 = vunpack.c.h.b16 %v447
    %v3804 = vunpack.c.l.b16 %v448
    %v3805 = vunpack.c.h.b16 %v448
    %v3806 = vunpack.c.l.b16 %v449
    %v3807 = vunpack.c.h.b16 %v449
    %v3808 = vunpack.c.l.b16 %v450
    %v3809 = vunpack.c.h.b16 %v450
    %v3810 = vunpack.c.l.b16 %v451
    %v3811 = vunpack.c.h.b16 %v451
    %v3812 = vunpack.c.l.b16 %v452
    %v3813 = vunpack.c.h.b16 %v452
    %v3814 = vunpack.c.l.b16 %v453
    %v3815 = vunpack.c.h.b16 %v453
    %v3816 = vunpack.c.l.b16 %v454
    %v3817 = vunpack.c.h.b16 %v454
    %v3818 = vunpack.c.l.b16 %v455
    %v3819 = vunpack.c.h.b16 %v455
    %v3820 = vunpack.c.l.b16 %v456
    %v3821 = vunpack.c.h.b16 %v456
    %v3822 = vunpack.c.l.b16 %v457
    %v3823 = vunpack.c.h.b16 %v457
    %v3824 = vunpack.c.l.b16 %v458
    %v3825 = vunpack.c.h.b16 %v458
    %v3826 = vunpack.c.l.b16 %v459
    %v3827 = vunpack.c.h.b16 %v459
    %v3828 = vunpack.c.l.b16 %v460
    %v3829 = vunpack.c.h.b16 %v460
    %v3830 = vunpack.c.l.b16 %v461
    %v3831 = vunpack.c.h.b16 %v461
    %v3832 = vunpack.c.l.b16 %v462
    %v3833 = vunpack.c.h.b16 %v462
    %v3834 = vunpack.c.l.b16 %v463
    %v3835 = vunpack.c.h.b16 %v463
    %v3836 = vunpack.c.l.b16 %v464
    %v3837 = vunpack.c.h.b16 %v464
    %v3838 = vunpack.c.l.b16 %v465
    %v3839 = vunpack.c.h.b16 %v465
    %v3840 = vunpack.c.l.b16 %v466
    %v3841 = vunpack.c.h.b16 %v466
    %v3842 = vunpack.c.l.b16 %v467
    %v3843 = vunpack.c.h.b16 %v467
    %v3844 = vunpack.c.l.b16 %v468
    %v3845 = vunpack.c.h.b16 %v468
    %v3846 = vunpack.c.l.b16 %v469
    %v3847 = vunpack.c.h.b16 %v469
    %v3848 = vunpack.c.l.b16 %v470
    %v3849 = vunpack.c.h.b16 %v470
    %v3850 = vunpack.c.l.b16 %v471
    %v3851 = vunpack.c.h.b16 %v471
    %v3852 = vunpack.c.l.b16 %v472
    %v3853 = vunpack.c.h.b16 %v472
    %v3854 = vunpack.c.l.b16 %v473
    %v3855 = vunpack.c.h.b16 %v473
    %v3856 = vunpack.c.l.b16 %v474
    %v3857 = vunpack.c.h.b16 %v474
    %v3858 = vunpack.c.l.b16 %v475
    %v3859 = vunpack.c.h.b16 %v475
    %v3860 = vunpack.c.l.b16 %v476
    %v3861 = vunpack.c.h.b16 %v476
    %v3862 = vunpack.c.l.b16 %v477
    %v3863 = vunpack.c.h.b16 %v477
    %v3864 = vunpack.c.l.b16 %v478
    %v3865 = vunpack.c.h.b16 %v478
    %v3866 = vunpack.c.l.b16 %v479
    %v3867 = vunpack.c.h.b16 %v479
    %v3868 = vunpack.c.l.b16 %v480
    %v3869 = vunpack.c.h.b16 %v480
    %v3870 = vunpack.c.l.b16 %v481
    %v3871 = vunpack.c.h.b16 %v481
    %v3872 = vunpack.c.l.b16 %v482
    %v3873 = vunpack.c.h.b16 %v482
    %v3874 = vunpack.c.l.b16 %v483
    %v3875 = vunpack.c.h.b16 %v483
    %v3876 = vunpack.c.l.b16 %v484
    %v3877 = vunpack.c.h.b16 %v484
    %v3878 = vunpack.c.l.b16 %v485
    %v3879 = vunpack.c.h.b16 %v485
    %v3880 = vunpack.c.l.b16 %v486
    %v3881 = vunpack.c.h.b16 %v486
    %v3882 = vunpack.c.l.b16 %v487
    %v3883 = vunpack.c.h.b16 %v487
    %v3884 = vunpack.c.l.b16 %v488
    %v3885 = vunpack.c.h.b16 %v488
    %v3886 = vunpack.c.l.b16 %v489
    %v3887 = vunpack.c.h.b16 %v489
    %v3888 = vunpack.c.l.b16 %v490
    %v3889 = vunpack.c.h.b16 %v490
    %v3890 = vunpack.c.l.b16 %v491
    %v3891 = vunpack.c.h.b16 %v491
    %v3892 = vunpack.c.l.b16 %v492
    %v3893 = vunpack.c.h.b16 %v492
    %v3894 = vunpack.c.l.b16 %v493
    %v3895 = vunpack.c.h.b16 %v493
    %v3896 = vunpack.c.l.b16 %v494
    %v3897 = vunpack.c.h.b16 %v494
    %v3898 = vunpack.c.l.b16 %v495
    %v3899 = vunpack.c.h.b16 %v495
    %v3900 = vunpack.c.l.b16 %v496
    %v3901 = vunpack.c.h.b16 %v496
    %v3902 = vunpack.c.l.b16 %v497
    %v3903 = vunpack.c.h.b16 %v497
    %v3904 = vunpack.c.l.b16 %v498
    %v3905 = vunpack.c.h.b16 %v498
    %v3906 = vunpack.c.l.b16 %v499
    %v3907 = vunpack.c.h.b16 %v499
    %v3908 = vunpack.c.l.b16 %v500
    %v3909 = vunpack.c.h.b16 %v500
    %v3910 = vunpack.c.l.b16 %v501
    %v3911 = vunpack.c.h.b16 %v501
    %v3912 = vunpack.c.l.b16 %v502
    %v3913 = vunpack.c.h.b16 %v502
    %v3914 = vunpack.c.l.b16 %v503
    %v3915 = vunpack.c.h.b16 %v503
    %v3916 = vunpack.c.l.b16 %v504
    %v3917 = vunpack.c.h.b16 %v504
    %v3918 = vunpack.c.l.b16 %v505
    %v3919 = vunpack.c.h.b16 %v505
    %v3920 = vunpack.c.l.b16 %v506
    %v3921 = vunpack.c.h.b16 %v506
    %v3922 = vunpack.c.l.b16 %v507
    %v3923 = vunpack.c.h.b16 %v507
    %v3924 = vunpack.c.l.b16 %v508
    %v3925 = vunpack.c.h.b16 %v508
    %v3926 = vunpack.c.l.b16 %v509
    %v3927 = vunpack.c.h.b16 %v509
    %v3928 = vunpack.c.l.b16 %v510
    %v3929 = vunpack.c.h.b16 %v510
    %v3930 = vunpack.c.l.b16 %v511
    %v3931 = vunpack.c.h.b16 %v511
    %v3932 = vunpack.c.l.b16 %v512
    %v3933 = vunpack.c.h.b16 %v512
    %v3934 = vunpack.c.l.b16 %v513
    %v3935 = vunpack.c.h.b16 %v513
    %v3936 = vunpack.c.l.b16 %v514
    %v3937 = vunpack.c.h.b16 %v514
    %v3938 = vunpack.c.l.b16 %v515
    %v3939 = vunpack.c.h.b16 %v515
    %v3940 = vunpack.c.l.b16 %v516
    %v3941 = vunpack.c.h.b16 %v516
    %v3942 = vunpack.c.l.b16 %v517
    %v3943 = vunpack.c.h.b16 %v517
    %v3944 = vunpack.c.l.b16 %v518
    %v3945 = vunpack.c.h.b16 %v518
    %v3946 = vunpack.c.l.b16 %v519
    %v3947 = vunpack.c.h.b16 %v519
    %v3948 = vunpack.c.l.b16 %v520
    %v3949 = vunpack.c.h.b16 %v520
    %v3950 = vunpack.c.l.b16 %v521
    %v3951 = vunpack.c.h.b16 %v521
    %v3952 = vunpack.c.l.b16 %v522
    %v3953 = vunpack.c.h.b16 %v522
    %v3954 = vunpack.c.l.b16 %v523
    %v3955 = vunpack.c.h.b16 %v523
    %v3956 = vunpack.c.l.b16 %v524
    %v3957 = vunpack.c.h.b16 %v524
    %v3958 = vunpack.c.l.b16 %v525
    %v3959 = vunpack.c.h.b16 %v525
    %v3960 = vunpack.c.l.b16 %v526
    %v3961 = vunpack.c.h.b16 %v526
    %v3962 = vunpack.c.l.b16 %v527
    %v3963 = vunpack.c.h.b16 %v527
    %v3964 = vunpack.c.l.b16 %v528
    %v3965 = vunpack.c.h.b16 %v528
    %v3966 = vunpack.c.l.b16 %v529
    %v3967 = vunpack.c.h.b16 %v529
    %v3968 = vunpack.c.l.b16 %v530
    %v3969 = vunpack.c.h.b16 %v530
    %v3970 = vunpack.c.l.b16 %v531
    %v3971 = vunpack.c.h.b16 %v531
    %v3972 = vunpack.c.l.b16 %v532
    %v3973 = vunpack.c.h.b16 %v532
    %v3974 = vunpack.c.l.b16 %v533
    %v3975 = vunpack.c.h.b16 %v533
    %v3976 = vunpack.c.l.b16 %v534
    %v3977 = vunpack.c.h.b16 %v534
    %v3978 = vunpack.c.l.b16 %v535
    %v3979 = vunpack.c.h.b16 %v535
    %v3980 = vunpack.c.l.b16 %v536
    %v3981 = vunpack.c.h.b16 %v536
    %v3982 = vunpack.c.l.b16 %v537
    %v3983 = vunpack.c.h.b16 %v537
    %v3984 = vunpack.c.l.b16 %v538
    %v3985 = vunpack.c.h.b16 %v538
    %v3986 = vunpack.c.l.b16 %v539
    %v3987 = vunpack.c.h.b16 %v539
    %v3988 = vunpack.c.l.b16 %v540
    %v3989 = vunpack.c.h.b16 %v540
    %v3990 = vunpack.c.l.b16 %v541
    %v3991 = vunpack.c.h.b16 %v541
    %v3992 = vunpack.c.l.b16 %v542
    %v3993 = vunpack.c.h.b16 %v542
    %v3994 = vunpack.c.l.b16 %v543
    %v3995 = vunpack.c.h.b16 %v543
    %v3996 = vunpack.c.l.b16 %v544
    %v3997 = vunpack.c.h.b16 %v544
    %v3998 = vunpack.c.l.b16 %v545
    %v3999 = vunpack.c.h.b16 %v545
    %v4000 = vunpack.c.l.b16 %v546
    %v4001 = vunpack.c.h.b16 %v546
    %v4002 = vunpack.c.l.b16 %v547
    %v4003 = vunpack.c.h.b16 %v547
    %v4004 = vunpack.c.l.b16 %v548
    %v4005 = vunpack.c.h.b16 %v548
    %v4006 = vunpack.c.l.b16 %v549
    %v4007 = vunpack.c.h.b16 %v549
    %v4008 = vunpack.c.l.b16 %v550
    %v4009 = vunpack.c.h.b16 %v550
    %v4010 = vunpack.c.l.b16 %v551
    %v4011 = vunpack.c.h.b16 %v551
    %v4012 = vunpack.c.l.b16 %v552
    %v4013 = vunpack.c.h.b16 %v552
    %v4014 = vunpack.c.l.b16 %v553
    %v4015 = vunpack.c.h.b16 %v553
    %v4016 = vunpack.c.l.b16 %v554
    %v4017 = vunpack.c.h.b16 %v554
    %v4018 = vunpack.c.l.b16 %v555
    %v4019 = vunpack.c.h.b16 %v555
    %v4020 = vunpack.c.l.b16 %v556
    %v4021 = vunpack.c.h.b16 %v556
    %v4022 = vunpack.c.l.b16 %v557
    %v4023 = vunpack.c.h.b16 %v557
    %v4024 = vunpack.c.l.b16 %v558
    %v4025 = vunpack.c.h.b16 %v558
    %v4026 = vunpack.c.l.b16 %v559
    %v4027 = vunpack.c.h.b16 %v559
    %v4028 = vunpack.c.l.b16 %v560
    %v4029 = vunpack.c.h.b16 %v560
    %v4030 = vunpack.c.l.b16 %v561
    %v4031 = vunpack.c.h.b16 %v561
    %v4032 = vunpack.c.l.b16 %v562
    %v4033 = vunpack.c.h.b16 %v562
    %v4034 = vunpack.c.l.b16 %v563
    %v4035 = vunpack.c.h.b16 %v563
    %v4036 = vunpack.c.l.b16 %v564
    %v4037 = vunpack.c.h.b16 %v564
    %v4038 = vunpack.c.l.b16 %v565
    %v4039 = vunpack.c.h.b16 %v565
    %v4040 = vunpack.c.l.b16 %v566
    %v4041 = vunpack.c.h.b16 %v566
    %v4042 = vunpack.c.l.b16 %v567
    %v4043 = vunpack.c.h.b16 %v567
    %v4044 = vunpack.c.l.b16 %v568
    %v4045 = vunpack.c.h.b16 %v568
    %v4046 = vunpack.c.l.b16 %v569
    %v4047 = vunpack.c.h.b16 %v569
    %v4048 = vunpack.c.l.b16 %v570
    %v4049 = vunpack.c.h.b16 %v570
    %v4050 = vunpack.c.l.b16 %v571
    %v4051 = vunpack.c.h.b16 %v571
    %v4052 = vunpack.c.l.b16 %v572
    %v4053 = vunpack.c.h.b16 %v572
    %v4054 = vunpack.c.l.b16 %v573
    %v4055 = vunpack.c.h.b16 %v573
    %v4056 = vunpack.c.l.b16 %v574
    %v4057 = vunpack.c.h.b16 %v574
    %v4058 = vunpack.c.l.b16 %v575
    %v4059 = vunpack.c.h.b16 %v575
    %v4060 = vunpack.c.l.b16 %v576
    %v4061 = vunpack.c.h.b16 %v576
    %v4062 = vunpack.c.l.b16 %v577
    %v4063 = vunpack.c.h.b16 %v577
    %v4064 = vunpack.c.l.b16 %v578
    %v4065 = vunpack.c.h.b16 %v578
    %v4066 = vunpack.c.l.b16 %v579
    %v4067 = vunpack.c.h.b16 %v579
    %v4068 = vunpack.c.l.b16 %v580
    %v4069 = vunpack.c.h.b16 %v580
    %v4070 = vunpack.c.l.b16 %v581
    %v4071 = vunpack.c.h.b16 %v581
    %v4072 = vunpack.c.l.b16 %v582
    %v4073 = vunpack.c.h.b16 %v582
    %v4074 = vunpack.c.l.b16 %v583
    %v4075 = vunpack.c.h.b16 %v583
    %v4076 = vunpack.c.l.b16 %v584
    %v4077 = vunpack.c.h.b16 %v584
    %v4078 = vunpack.c.l.b16 %v585
    %v4079 = vunpack.c.h.b16 %v585
    %v4080 = vunpack.c.l.b16 %v586
    %v4081 = vunpack.c.h.b16 %v586
    %v4082 = vunpack.c.l.b16 %v587
    %v4083 = vunpack.c.h.b16 %v587
    %v4084 = vunpack.c.l.b16 %v588
    %v4085 = vunpack.c.h.b16 %v588
    %v4086 = vunpack.c.l.b16 %v589
    %v4087 = vunpack.c.h.b16 %v589
    %v4088 = vunpack.c.l.b16 %v590
    %v4089 = vunpack.c.h.b16 %v590
    %v4090 = vunpack.c.l.b16 %v591
    %v4091 = vunpack.c.h.b16 %v591
    %v4092 = vunpack.c.l.b16 %v592
    %v4093 = vunpack.c.h.b16 %v592
    %v4094 = vunpack.c.l.b16 %v593
    %v4095 = vunpack.c.h.b16 %v593
    %v4096 = vunpack.c.l.b16 %v594
    %v4097 = vunpack.c.h.b16 %v594
    %v4098 = vunpack.c.l.b16 %v595
    %v4099 = vunpack.c.h.b16 %v595
    %v4100 = vunpack.c.l.b16 %v596
    %v4101 = vunpack.c.h.b16 %v596
    %v4102 = vunpack.c.l.b16 %v597
    %v4103 = vunpack.c.h.b16 %v597
    %v4104 = vunpack.c.l.b16 %v598
    %v4105 = vunpack.c.h.b16 %v598
    %v4106 = vunpack.c.l.b16 %v599
    %v4107 = vunpack.c.h.b16 %v599
    %v4108 = vunpack.c.l.b16 %v600
    %v4109 = vunpack.c.h.b16 %v600
    %v4110 = vunpack.c.l.b16 %v601
    %v4111 = vunpack.c.h.b16 %v601
    %v4112 = vunpack.c.l.b16 %v602
    %v4113 = vunpack.c.h.b16 %v602
    %v4114 = vunpack.c.l.b16 %v603
    %v4115 = vunpack.c.h.b16 %v603
    %v4116 = vunpack.c.l.b16 %v604
    %v4117 = vunpack.c.h.b16 %v604
    %v4118 = vunpack.c.l.b16 %v605
    %v4119 = vunpack.c.h.b16 %v605
    %v4120 = vunpack.c.l.b16 %v606
    %v4121 = vunpack.c.h.b16 %v606
    %v4122 = vunpack.c.l.b16 %v607
    %v4123 = vunpack.c.h.b16 %v607
    %v4124 = vunpack.c.l.b16 %v608
    %v4125 = vunpack.c.h.b16 %v608
    %v4126 = vunpack.c.l.b16 %v609
    %v4127 = vunpack.c.h.b16 %v609
    %v4128 = vunpack.c.l.b16 %v610
    %v4129 = vunpack.c.h.b16 %v610
    %v4130 = vunpack.c.l.b16 %v611
    %v4131 = vunpack.c.h.b16 %v611
    %v4132 = vunpack.c.l.b16 %v612
    %v4133 = vunpack.c.h.b16 %v612
    %v4134 = vunpack.c.l.b16 %v613
    %v4135 = vunpack.c.h.b16 %v613
    %v4136 = vunpack.c.l.b16 %v614
    %v4137 = vunpack.c.h.b16 %v614
    %v4138 = vunpack.c.l.b16 %v615
    %v4139 = vunpack.c.h.b16 %v615
    %v4140 = vunpack.c.l.b16 %v616
    %v4141 = vunpack.c.h.b16 %v616
    %v4142 = vunpack.c.l.b16 %v617
    %v4143 = vunpack.c.h.b16 %v617
    %v4144 = vunpack.c.l.b16 %v618
    %v4145 = vunpack.c.h.b16 %v618
    %v4146 = vunpack.c.l.b16 %v619
    %v4147 = vunpack.c.h.b16 %v619
    %v4148 = vunpack.c.l.b16 %v620
    %v4149 = vunpack.c.h.b16 %v620
    %v4150 = vunpack.c.l.b16 %v621
    %v4151 = vunpack.c.h.b16 %v621
    %v4152 = vunpack.c.l.b16 %v622
    %v4153 = vunpack.c.h.b16 %v622
    %v4154 = vunpack.c.l.b16 %v623
    %v4155 = vunpack.c.h.b16 %v623
    %v4156 = vunpack.c.l.b16 %v624
    %v4157 = vunpack.c.h.b16 %v624
    %v4158 = vunpack.c.l.b16 %v625
    %v4159 = vunpack.c.h.b16 %v625
    %v4160 = vunpack.c.l.b16 %v626
    %v4161 = vunpack.c.h.b16 %v626
    %v4162 = vunpack.c.l.b16 %v627
    %v4163 = vunpack.c.h.b16 %v627
    %v4164 = vunpack.c.l.b16 %v628
    %v4165 = vunpack.c.h.b16 %v628
    %v4166 = vunpack.c.l.b16 %v629
    %v4167 = vunpack.c.h.b16 %v629
    %v4168 = vunpack.c.l.b16 %v630
    %v4169 = vunpack.c.h.b16 %v630
    %v4170 = vunpack.c.l.b16 %v631
    %v4171 = vunpack.c.h.b16 %v631
    %v4172 = vunpack.c.l.b16 %v632
    %v4173 = vunpack.c.h.b16 %v632
    %v4174 = vunpack.c.l.b16 %v633
    %v4175 = vunpack.c.h.b16 %v633
    %v4176 = vunpack.c.l.b16 %v634
    %v4177 = vunpack.c.h.b16 %v634
    %v4178 = vunpack.c.l.b16 %v635
    %v4179 = vunpack.c.h.b16 %v635
    %v4180 = vunpack.c.l.b16 %v636
    %v4181 = vunpack.c.h.b16 %v636
    %v4182 = vunpack.c.l.b16 %v637
    %v4183 = vunpack.c.h.b16 %v637
    %v4184 = vunpack.c.l.b16 %v638
    %v4185 = vunpack.c.h.b16 %v638
    %v4186 = vunpack.c.l.b16 %v639
    %v4187 = vunpack.c.h.b16 %v639
    %v4188 = vunpack.c.l.b16 %v640
    %v4189 = vunpack.c.h.b16 %v640
    %v4190 = vunpack.c.l.b16 %v641
    %v4191 = vunpack.c.h.b16 %v641
    %v4192 = vunpack.c.l.b16 %v642
    %v4193 = vunpack.c.h.b16 %v642
    %v4194 = vunpack.c.l.b16 %v643
    %v4195 = vunpack.c.h.b16 %v643
    %v4196 = vunpack.c.l.b16 %v644
    %v4197 = vunpack.c.h.b16 %v644
    %v4198 = vunpack.c.l.b16 %v645
    %v4199 = vunpack.c.h.b16 %v645
    %v4200 = vunpack.c.l.b16 %v646
    %v4201 = vunpack.c.h.b16 %v646
    %v4202 = vunpack.c.l.b16 %v647
    %v4203 = vunpack.c.h.b16 %v647
    %v4204 = vunpack.c.l.b16 %v648
    %v4205 = vunpack.c.h.b16 %v648
    %v4206 = vunpack.c.l.b16 %v649
    %v4207 = vunpack.c.h.b16 %v649
    %v4208 = vunpack.c.l.b16 %v650
    %v4209 = vunpack.c.h.b16 %v650
    %v4210 = vunpack.c.l.b16 %v651
    %v4211 = vunpack.c.h.b16 %v651
    %v4212 = vunpack.c.l.b16 %v652
    %v4213 = vunpack.c.h.b16 %v652
    %v4214 = vunpack.c.l.b16 %v653
    %v4215 = vunpack.c.h.b16 %v653
    %v4216 = vunpack.c.l.b16 %v654
    %v4217 = vunpack.c.h.b16 %v654
    %v4218 = vunpack.c.l.b16 %v655
    %v4219 = vunpack.c.h.b16 %v655
    %v4220 = vunpack.c.l.b16 %v656
    %v4221 = vunpack.c.h.b16 %v656
    %v4222 = vunpack.c.l.b16 %v657
    %v4223 = vunpack.c.h.b16 %v657
    %v4224 = vunpack.c.l.b16 %v658
    %v4225 = vunpack.c.h.b16 %v658
    %v4226 = vunpack.c.l.b16 %v659
    %v4227 = vunpack.c.h.b16 %v659
    %v4228 = vunpack.c.l.b16 %v660
    %v4229 = vunpack.c.h.b16 %v660
    %v4230 = vunpack.c.l.b16 %v661
    %v4231 = vunpack.c.h.b16 %v661
    %v4232 = vunpack.c.l.b16 %v662
    %v4233 = vunpack.c.h.b16 %v662
    %v4234 = vunpack.c.l.b16 %v663
    %v4235 = vunpack.c.h.b16 %v663
    %v4236 = vunpack.c.l.b16 %v664
    %v4237 = vunpack.c.h.b16 %v664
    %v4238 = vunpack.c.l.b16 %v665
    %v4239 = vunpack.c.h.b16 %v665
    %v4240 = vunpack.c.l.b16 %v666
    %v4241 = vunpack.c.h.b16 %v666
    %v4242 = vunpack.c.l.b16 %v667
    %v4243 = vunpack.c.h.b16 %v667
    %v4244 = vunpack.c.l.b16 %v668
    %v4245 = vunpack.c.h.b16 %v668
    %v4246 = vunpack.c.l.b16 %v669
    %v4247 = vunpack.c.h.b16 %v669
    %v4248 = vunpack.c.l.b16 %v670
    %v4249 = vunpack.c.h.b16 %v670
    %v4250 = vunpack.c.l.b16 %v671
    %v4251 = vunpack.c.h.b16 %v671
    %v4252 = vunpack.c.l.b16 %v672
    %v4253 = vunpack.c.h.b16 %v672
    %v4254 = vunpack.c.l.b16 %v673
    %v4255 = vunpack.c.h.b16 %v673
    %v4256 = vunpack.c.l.b16 %v674
    %v4257 = vunpack.c.h.b16 %v674
    %v4258 = vunpack.c.l.b16 %v675
    %v4259 = vunpack.c.h.b16 %v675
    %v4260 = vunpack.c.l.b16 %v676
    %v4261 = vunpack.c.h.b16 %v676
    %v4262 = vunpack.c.l.b16 %v677
    %v4263 = vunpack.c.h.b16 %v677
    %v4264 = vunpack.c.l.b16 %v678
    %v4265 = vunpack.c.h.b16 %v678
    %v4266 = vunpack.c.l.b16 %v679
    %v4267 = vunpack.c.h.b16 %v679
    %v4268 = vunpack.c.l.b16 %v680
    %v4269 = vunpack.c.h.b16 %v680
    %v4270 = vunpack.c.l.b16 %v681
    %v4271 = vunpack.c.h.b16 %v681
    %v4272 = vunpack.c.l.b16 %v682
    %v4273 = vunpack.c.h.b16 %v682
    %v4274 = vunpack.c.l.b16 %v683
    %v4275 = vunpack.c.h.b16 %v683
    %v4276 = vunpack.c.l.b16 %v684
    %v4277 = vunpack.c.h.b16 %v684
    %v4278 = vunpack.c.l.b16 %v685
    %v4279 = vunpack.c.h.b16 %v685
    %v4280 = vunpack.c.l.b16 %v686
    %v4281 = vunpack.c.h.b16 %v686
    %v4282 = vunpack.c.l.b16 %v687
    %v4283 = vunpack.c.h.b16 %v687
    %v4284 = vunpack.c.l.b16 %v688
    %v4285 = vunpack.c.h.b16 %v688
    %v4286 = vunpack.c.l.b16 %v689
    %v4287 = vunpack.c.h.b16 %v689
    %v4288 = vunpack.c.l.b16 %v690
    %v4289 = vunpack.c.h.b16 %v690
    %v4290 = vunpack.c.l.b16 %v691
    %v4291 = vunpack.c.h.b16 %v691
    %v4292 = vunpack.c.l.b16 %v692
    %v4293 = vunpack.c.h.b16 %v692
    %v4294 = vunpack.c.l.b16 %v693
    %v4295 = vunpack.c.h.b16 %v693
    %v4296 = vunpack.c.l.b16 %v694
    %v4297 = vunpack.c.h.b16 %v694
    %v4298 = vunpack.c.l.b16 %v695
    %v4299 = vunpack.c.h.b16 %v695
    %v4300 = vunpack.c.l.b16 %v696
    %v4301 = vunpack.c.h.b16 %v696
    %v4302 = vunpack.c.l.b16 %v697
    %v4303 = vunpack.c.h.b16 %v697
    %v4304 = vunpack.c.l.b16 %v698
    %v4305 = vunpack.c.h.b16 %v698
    %v4306 = vunpack.c.l.b16 %v699
    %v4307 = vunpack.c.h.b16 %v699
    %v4308 = vunpack.c.l.b16 %v700
    %v4309 = vunpack.c.h.b16 %v700
    %v4310 = vunpack.c.l.b16 %v701
    %v4311 = vunpack.c.h.b16 %v701
    %v4312 = vunpack.c.l.b16 %v702
    %v4313 = vunpack.c.h.b16 %v702
    %v4314 = vunpack.c.l.b16 %v703
    %v4315 = vunpack.c.h.b16 %v703
    %v4316 = vunpack.c.l.b16 %v704
    %v4317 = vunpack.c.h.b16 %v704
    %v4318 = vunpack.c.l.b16 %v705
    %v4319 = vunpack.c.h.b16 %v705
    %v4320 = vunpack.c.l.b16 %v706
    %v4321 = vunpack.c.h.b16 %v706
    %v4322 = vunpack.c.l.b16 %v707
    %v4323 = vunpack.c.h.b16 %v707
    %v4324 = vunpack.c.l.b16 %v708
    %v4325 = vunpack.c.h.b16 %v708
    %v4326 = vunpack.c.l.b16 %v709
    %v4327 = vunpack.c.h.b16 %v709
    %v4328 = vunpack.c.l.b16 %v710
    %v4329 = vunpack.c.h.b16 %v710
    %v4330 = vunpack.c.l.b16 %v711
    %v4331 = vunpack.c.h.b16 %v711
    %v4332 = vunpack.c.l.b16 %v712
    %v4333 = vunpack.c.h.b16 %v712
    %v4334 = vunpack.c.l.b16 %v713
    %v4335 = vunpack.c.h.b16 %v713
    %v4336 = vunpack.c.l.b16 %v714
    %v4337 = vunpack.c.h.b16 %v714
    %v4338 = vunpack.c.l.b16 %v715
    %v4339 = vunpack.c.h.b16 %v715
    %v4340 = vunpack.c.l.b16 %v716
    %v4341 = vunpack.c.h.b16 %v716
    %v4342 = vunpack.c.l.b16 %v717
    %v4343 = vunpack.c.h.b16 %v717
    %v4344 = vunpack.c.l.b16 %v718
    %v4345 = vunpack.c.h.b16 %v718
    %v4346 = vunpack.c.l.b16 %v719
    %v4347 = vunpack.c.h.b16 %v719
    %v4348 = vunpack.c.l.b16 %v720
    %v4349 = vunpack.c.h.b16 %v720
    %v4350 = vunpack.c.l.b16 %v721
    %v4351 = vunpack.c.h.b16 %v721
    %v4352 = vunpack.c.l.b16 %v722
    %v4353 = vunpack.c.h.b16 %v722
    %v4354 = vunpack.c.l.b16 %v723
    %v4355 = vunpack.c.h.b16 %v723
    %v4356 = vunpack.c.l.b16 %v724
    %v4357 = vunpack.c.h.b16 %v724
    %v4358 = vunpack.c.l.b16 %v725
    %v4359 = vunpack.c.h.b16 %v725
    %v4360 = vunpack.c.l.b16 %v726
    %v4361 = vunpack.c.h.b16 %v726
    %v4362 = vunpack.c.l.b16 %v727
    %v4363 = vunpack.c.h.b16 %v727
    %v4364 = vunpack.c.l.b16 %v728
    %v4365 = vunpack.c.h.b16 %v728
    %v4366 = vunpack.c.l.b16 %v729
    %v4367 = vunpack.c.h.b16 %v729
    %v4368 = vunpack.c.l.b16 %v730
    %v4369 = vunpack.c.h.b16 %v730
    %v4370 = vunpack.c.l.b16 %v731
    %v4371 = vunpack.c.h.b16 %v731
    %v4372 = vunpack.c.l.b16 %v732
    %v4373 = vunpack.c.h.b16 %v732
    %v4374 = vunpack.c.l.b16 %v733
    %v4375 = vunpack.c.h.b16 %v733
    %v4376 = vunpack.c.l.b16 %v734
    %v4377 = vunpack.c.h.b16 %v734
    %v4378 = vunpack.c.l.b16 %v735
    %v4379 = vunpack.c.h.b16 %v735
    %v4380 = vunpack.c.l.b16 %v736
    %v4381 = vunpack.c.h.b16 %v736
    %v4382 = vunpack.c.l.b16 %v737
    %v4383 = vunpack.c.h.b16 %v737
    %v4384 = vunpack.c.l.b16 %v738
    %v4385 = vunpack.c.h.b16 %v738
    %v4386 = vunpack.c.l.b16 %v739
    %v4387 = vunpack.c.h.b16 %v739
    %v4388 = vunpack.c.l.b16 %v740
    %v4389 = vunpack.c.h.b16 %v740
    %v4390 = vunpack.c.l.b16 %v741
    %v4391 = vunpack.c.h.b16 %v741
    %v4392 = vunpack.c.l.b16 %v742
    %v4393 = vunpack.c.h.b16 %v742
    %v4394 = vunpack.c.l.b16 %v743
    %v4395 = vunpack.c.h.b16 %v743
    %v4396 = vunpack.c.l.b16 %v744
    %v4397 = vunpack.c.h.b16 %v744
    %v4398 = vunpack.c.l.b16 %v745
    %v4399 = vunpack.c.h.b16 %v745
    %v4400 = vunpack.c.l.b16 %v746
    %v4401 = vunpack.c.h.b16 %v746
    %v4402 = vunpack.c.l.b16 %v747
    %v4403 = vunpack.c.h.b16 %v747
    %v4404 = vunpack.c.l.b16 %v748
    %v4405 = vunpack.c.h.b16 %v748
    %v4406 = vunpack.c.l.b16 %v749
    %v4407 = vunpack.c.h.b16 %v749
    %v4408 = vunpack.c.l.b16 %v750
    %v4409 = vunpack.c.h.b16 %v750
    %v4410 = vunpack.c.l.b16 %v751
    %v4411 = vunpack.c.h.b16 %v751
    %v4412 = vunpack.c.l.b16 %v752
    %v4413 = vunpack.c.h.b16 %v752
    %v4414 = vunpack.c.l.b16 %v753
    %v4415 = vunpack.c.h.b16 %v753
    %v4416 = vunpack.c.l.b16 %v754
    %v4417 = vunpack.c.h.b16 %v754
    %v4418 = vunpack.c.l.b16 %v755
    %v4419 = vunpack.c.h.b16 %v755
    %v4420 = vunpack.c.l.b16 %v756
    %v4421 = vunpack.c.h.b16 %v756
    %v4422 = vunpack.c.l.b16 %v757
    %v4423 = vunpack.c.h.b16 %v757
    %v4424 = vunpack.c.l.b16 %v758
    %v4425 = vunpack.c.h.b16 %v758
    %v4426 = vunpack.c.l.b16 %v759
    %v4427 = vunpack.c.h.b16 %v759
    %v4428 = vunpack.c.l.b16 %v760
    %v4429 = vunpack.c.h.b16 %v760
    %v4430 = vunpack.c.l.b16 %v761
    %v4431 = vunpack.c.h.b16 %v761
    %v4432 = vunpack.c.l.b16 %v762
    %v4433 = vunpack.c.h.b16 %v762
    %v4434 = vunpack.c.l.b16 %v763
    %v4435 = vunpack.c.h.b16 %v763
    %v4436 = vunpack.c.l.b16 %v764
    %v4437 = vunpack.c.h.b16 %v764
    %v4438 = vunpack.c.l.b16 %v765
    %v4439 = vunpack.c.h.b16 %v765
    %v4440 = vunpack.c.l.b16 %v766
    %v4441 = vunpack.c.h.b16 %v766
    %v4442 = vunpack.c.l.b16 %v767
    %v4443 = vunpack.c.h.b16 %v767
    %v4444 = vunpack.c.l.b16 %v768
    %v4445 = vunpack.c.h.b16 %v768
    %v4446 = vunpack.c.l.b16 %v769
    %v4447 = vunpack.c.h.b16 %v769
    %v4448 = vunpack.c.l.b16 %v770
    %v4449 = vunpack.c.h.b16 %v770
    %v4450 = vunpack.c.l.b16 %v771
    %v4451 = vunpack.c.h.b16 %v771
    %v4452 = vunpack.c.l.b16 %v772
    %v4453 = vunpack.c.h.b16 %v772
    %v4454 = vunpack.c.l.b16 %v773
    %v4455 = vunpack.c.h.b16 %v773
    %v4456 = vunpack.c.l.b16 %v774
    %v4457 = vunpack.c.h.b16 %v774
    %v4458 = vunpack.c.l.b16 %v775
    %v4459 = vunpack.c.h.b16 %v775
    %v4460 = vunpack.c.l.b16 %v776
    %v4461 = vunpack.c.h.b16 %v776
    %v4462 = vunpack.c.l.b16 %v777
    %v4463 = vunpack.c.h.b16 %v777
    %v4464 = vunpack.c.l.b16 %v778
    %v4465 = vunpack.c.h.b16 %v778
    %v4466 = vunpack.c.l.b16 %v779
    %v4467 = vunpack.c.h.b16 %v779
    %v4468 = vunpack.c.l.b16 %v780
    %v4469 = vunpack.c.h.b16 %v780
    %v4470 = vunpack.c.l.b16 %v781
    %v4471 = vunpack.c.h.b16 %v781
    %v4472 = vunpack.c.l.b16 %v782
    %v4473 = vunpack.c.h.b16 %v782
    %v4474 = vunpack.c.l.b16 %v783
    %v4475 = vunpack.c.h.b16 %v783
    %v4476 = vunpack.c.l.b16 %v784
    %v4477 = vunpack.c.h.b16 %v784
    %v4478 = vunpack.c.l.b16 %v785
    %v4479 = vunpack.c.h.b16 %v785
    %v4480 = vunpack.c.l.b16 %v786
    %v4481 = vunpack.c.h.b16 %v786
    %v4482 = vunpack.c.l.b16 %v787
    %v4483 = vunpack.c.h.b16 %v787
    %v4484 = vunpack.c.l.b16 %v788
    %v4485 = vunpack.c.h.b16 %v788
    %v4486 = vunpack.c.l.b16 %v789
    %v4487 = vunpack.c.h.b16 %v789
    %v4488 = vunpack.c.l.b16 %v790
    %v4489 = vunpack.c.h.b16 %v790
    %v4490 = vunpack.c.l.b16 %v791
    %v4491 = vunpack.c.h.b16 %v791
    %v4492 = vunpack.c.l.b16 %v792
    %v4493 = vunpack.c.h.b16 %v792
    %v4494 = vunpack.c.l.b16 %v793
    %v4495 = vunpack.c.h.b16 %v793
    %v4496 = vunpack.c.l.b16 %v794
    %v4497 = vunpack.c.h.b16 %v794
    %v4498 = vunpack.c.l.b16 %v795
    %v4499 = vunpack.c.h.b16 %v795
    %v4500 = vunpack.c.l.b16 %v796
    %v4501 = vunpack.c.h.b16 %v796
    %v4502 = vunpack.c.l.b16 %v797
    %v4503 = vunpack.c.h.b16 %v797
    %v4504 = vunpack.c.l.b16 %v798
    %v4505 = vunpack.c.h.b16 %v798
    %v4506 = vunpack.c.l.b16 %v799
    %v4507 = vunpack.c.h.b16 %v799
    %v4508 = vunpack.c.l.b16 %v800
    %v4509 = vunpack.c.h.b16 %v800
    %v4510 = vunpack.c.l.b16 %v801
    %v4511 = vunpack.c.h.b16 %v801
    %v4512 = vunpack.c.l.b16 %v802
    %v4513 = vunpack.c.h.b16 %v802
    %v4514 = vunpack.c.l.b16 %v803
    %v4515 = vunpack.c.h.b16 %v803
    %v4516 = vunpack.c.l.b16 %v804
    %v4517 = vunpack.c.h.b16 %v804
    %v4518 = vunpack.c.l.b16 %v805
    %v4519 = vunpack.c.h.b16 %v805
    %v4520 = vunpack.c.l.b16 %v806
    %v4521 = vunpack.c.h.b16 %v806
    %v4522 = vunpack.c.l.b16 %v807
    %v4523 = vunpack.c.h.b16 %v807
    %v4524 = vunpack.c.l.b16 %v808
    %v4525 = vunpack.c.h.b16 %v808
    %v4526 = vunpack.c.l.b16 %v809
    %v4527 = vunpack.c.h.b16 %v809
    %v4528 = vunpack.c.l.b16 %v810
    %v4529 = vunpack.c.h.b16 %v810
    %v4530 = vunpack.c.l.b16 %v811
    %v4531 = vunpack.c.h.b16 %v811
    %v4532 = vunpack.c.l.b16 %v812
    %v4533 = vunpack.c.h.b16 %v812
    %v4534 = vunpack.c.l.b16 %v813
    %v4535 = vunpack.c.h.b16 %v813
    %v4536 = vunpack.c.l.b16 %v814
    %v4537 = vunpack.c.h.b16 %v814
    %v4538 = vunpack.c.l.b16 %v815
    %v4539 = vunpack.c.h.b16 %v815
    %v4540 = vunpack.c.l.b16 %v816
    %v4541 = vunpack.c.h.b16 %v816
    %v4542 = vunpack.c.l.b16 %v817
    %v4543 = vunpack.c.h.b16 %v817
    %v4544 = vunpack.c.l.b16 %v818
    %v4545 = vunpack.c.h.b16 %v818
    %v4546 = vunpack.c.l.b16 %v819
    %v4547 = vunpack.c.h.b16 %v819
    %v4548 = vunpack.c.l.b16 %v820
    %v4549 = vunpack.c.h.b16 %v820
    %v4550 = vunpack.c.l.b16 %v821
    %v4551 = vunpack.c.h.b16 %v821
    %v4552 = vunpack.c.l.b16 %v822
    %v4553 = vunpack.c.h.b16 %v822
    %v4554 = vunpack.c.l.b16 %v823
    %v4555 = vunpack.c.h.b16 %v823
    %v4556 = vunpack.c.l.b16 %v824
    %v4557 = vunpack.c.h.b16 %v824
    %v4558 = vunpack.c.l.b16 %v825
    %v4559 = vunpack.c.h.b16 %v825
    %v4560 = vunpack.c.l.b16 %v826
    %v4561 = vunpack.c.h.b16 %v826
    %v4562 = vunpack.c.l.b16 %v827
    %v4563 = vunpack.c.h.b16 %v827
    %v4564 = vunpack.c.l.b16 %v828
    %v4565 = vunpack.c.h.b16 %v828
    %v4566 = vunpack.c.l.b16 %v829
    %v4567 = vunpack.c.h.b16 %v829
    %v4568 = vunpack.c.l.b16 %v830
    %v4569 = vunpack.c.h.b16 %v830
    %v4570 = vunpack.c.l.b16 %v831
    %v4571 = vunpack.c.h.b16 %v831
    %v4572 = vunpack.c.l.b16 %v832
    %v4573 = vunpack.c.h.b16 %v832
    %v4574 = vunpack.c.l.b16 %v833
    %v4575 = vunpack.c.h.b16 %v833
    %v4576 = vunpack.c.l.b16 %v834
    %v4577 = vunpack.c.h.b16 %v834
    %v4578 = vunpack.c.l.b16 %v835
    %v4579 = vunpack.c.h.b16 %v835
    %v4580 = vunpack.c.l.b16 %v836
    %v4581 = vunpack.c.h.b16 %v836
    %v4582 = vunpack.c.l.b16 %v837
    %v4583 = vunpack.c.h.b16 %v837
    %v4584 = vunpack.c.l.b16 %v838
    %v4585 = vunpack.c.h.b16 %v838
    %v4586 = vunpack.c.l.b16 %v839
    %v4587 = vunpack.c.h.b16 %v839
    %v4588 = vunpack.c.l.b16 %v840
    %v4589 = vunpack.c.h.b16 %v840
    %v4590 = vunpack.c.l.b16 %v841
    %v4591 = vunpack.c.h.b16 %v841
    %v4592 = vunpack.c.l.b16 %v842
    %v4593 = vunpack.c.h.b16 %v842
    %v4594 = vunpack.c.l.b16 %v843
    %v4595 = vunpack.c.h.b16 %v843
    %v4596 = vunpack.c.l.b16 %v844
    %v4597 = vunpack.c.h.b16 %v844
    %v4598 = vunpack.c.l.b16 %v845
    %v4599 = vunpack.c.h.b16 %v845
    %v4600 = vunpack.c.l.b16 %v846
    %v4601 = vunpack.c.h.b16 %v846
    %v4602 = vunpack.c.l.b16 %v847
    %v4603 = vunpack.c.h.b16 %v847
    %v4604 = vunpack.c.l.b16 %v848
    %v4605 = vunpack.c.h.b16 %v848
    %v4606 = vunpack.c.l.b16 %v849
    %v4607 = vunpack.c.h.b16 %v849
    %v4608 = vunpack.c.l.b16 %v850
    %v4609 = vunpack.c.h.b16 %v850
    %v4610 = vunpack.c.l.b16 %v851
    %v4611 = vunpack.c.h.b16 %v851
    %v4612 = vunpack.c.l.b16 %v852
    %v4613 = vunpack.c.h.b16 %v852
    %v4614 = vunpack.c.l.b16 %v853
    %v4615 = vunpack.c.h.b16 %v853
    %v4616 = vunpack.c.l.b16 %v854
    %v4617 = vunpack.c.h.b16 %v854
    %v4618 = vunpack.c.l.b16 %v855
    %v4619 = vunpack.c.h.b16 %v855
    %v4620 = vunpack.c.l.b16 %v856
    %v4621 = vunpack.c.h.b16 %v856
    %v4622 = vunpack.c.l.b16 %v857
    %v4623 = vunpack.c.h.b16 %v857
    %v4624 = vunpack.c.l.b16 %v858
    %v4625 = vunpack.c.h.b16 %v858
    %v4626 = vunpack.c.l.b16 %v859
    %v4627 = vunpack.c.h.b16 %v859
    %v4628 = vunpack.c.l.b16 %v860
    %v4629 = vunpack.c.h.b16 %v860
    %v4630 = vunpack.c.l.b16 %v861
    %v4631 = vunpack.c.h.b16 %v861
    %v4632 = vunpack.c.l.b16 %v862
    %v4633 = vunpack.c.h.b16 %v862
    %v4634 = vunpack.c.l.b16 %v863
    %v4635 = vunpack.c.h.b16 %v863
    %v4636 = vunpack.c.l.b16 %v864
    %v4637 = vunpack.c.h.b16 %v864
    %v4638 = vunpack.c.l.b16 %v865
    %v4639 = vunpack.c.h.b16 %v865
    %v4640 = vunpack.c.l.b16 %v866
    %v4641 = vunpack.c.h.b16 %v866
    %v4642 = vunpack.c.l.b16 %v867
    %v4643 = vunpack.c.h.b16 %v867
    %v4644 = vunpack.c.l.b16 %v868
    %v4645 = vunpack.c.h.b16 %v868
    %v4646 = vunpack.c.l.b16 %v869
    %v4647 = vunpack.c.h.b16 %v869
    %v4648 = vunpack.c.l.b16 %v870
    %v4649 = vunpack.c.h.b16 %v870
    %v4650 = vunpack.c.l.b16 %v871
    %v4651 = vunpack.c.h.b16 %v871
    %v4652 = vunpack.c.l.b16 %v872
    %v4653 = vunpack.c.h.b16 %v872
    %v4654 = vunpack.c.l.b16 %v873
    %v4655 = vunpack.c.h.b16 %v873
    %v4656 = vunpack.c.l.b16 %v874
    %v4657 = vunpack.c.h.b16 %v874
    %v4658 = vunpack.c.l.b16 %v875
    %v4659 = vunpack.c.h.b16 %v875
    %v4660 = vunpack.c.l.b16 %v876
    %v4661 = vunpack.c.h.b16 %v876
    %v4662 = vunpack.c.l.b16 %v877
    %v4663 = vunpack.c.h.b16 %v877
    %v4664 = vunpack.c.l.b16 %v878
    %v4665 = vunpack.c.h.b16 %v878
    %v4666 = vunpack.c.l.b16 %v879
    %v4667 = vunpack.c.h.b16 %v879
    %v4668 = vunpack.c.l.b16 %v880
    %v4669 = vunpack.c.h.b16 %v880
    %v4670 = vunpack.c.l.b16 %v881
    %v4671 = vunpack.c.h.b16 %v881
    %v4672 = vunpack.c.l.b16 %v882
    %v4673 = vunpack.c.h.b16 %v882
    %v4674 = vunpack.c.l.b16 %v883
    %v4675 = vunpack.c.h.b16 %v883
    %v4676 = vunpack.c.l.b16 %v884
    %v4677 = vunpack.c.h.b16 %v884
    %v4678 = vunpack.c.l.b16 %v885
    %v4679 = vunpack.c.h.b16 %v885
    %v4680 = vunpack.c.l.b16 %v886
    %v4681 = vunpack.c.h.b16 %v886
    %v4682 = vunpack.c.l.b16 %v887
    %v4683 = vunpack.c.h.b16 %v887
    %v4684 = vunpack.c.l.b16 %v888
    %v4685 = vunpack.c.h.b16 %v888
    %v4686 = vunpack.c.l.b16 %v889
    %v4687 = vunpack.c.h.b16 %v889
    %v4688 = vunpack.c.l.b16 %v890
    %v4689 = vunpack.c.h.b16 %v890
    %v4690 = vunpack.c.l.b16 %v891
    %v4691 = vunpack.c.h.b16 %v891
    %v4692 = vunpack.c.l.b16 %v892
    %v4693 = vunpack.c.h.b16 %v892
    %v4694 = vunpack.c.l.b16 %v893
    %v4695 = vunpack.c.h.b16 %v893
    %v4696 = vunpack.c.l.b16 %v894
    %v4697 = vunpack.c.h.b16 %v894
    %v4698 = vunpack.c.l.b16 %v895
    %v4699 = vunpack.c.h.b16 %v895
    %v4700 = vunpack.c.l.b16 %v896
    %v4701 = vunpack.c.h.b16 %v896
    %v4702 = vunpack.c.l.b16 %v897
    %v4703 = vunpack.c.h.b16 %v897
    %v4704 = vunpack.c.l.b16 %v898
    %v4705 = vunpack.c.h.b16 %v898
    %v4706 = vunpack.c.l.b16 %v899
    %v4707 = vunpack.c.h.b16 %v899
    %v4708 = vunpack.c.l.b16 %v900
    %v4709 = vunpack.c.h.b16 %v900
    %v4710 = vunpack.c.l.b16 %v901
    %v4711 = vunpack.c.h.b16 %v901
    %v4712 = vunpack.c.l.b16 %v902
    %v4713 = vunpack.c.h.b16 %v902
    %v4714 = vunpack.c.l.b16 %v903
    %v4715 = vunpack.c.h.b16 %v903
    %v4716 = vunpack.c.l.b16 %v904
    %v4717 = vunpack.c.h.b16 %v904
    %v4718 = vunpack.c.l.b16 %v905
    %v4719 = vunpack.c.h.b16 %v905
    %v4720 = vunpack.c.l.b16 %v906
    %v4721 = vunpack.c.h.b16 %v906
    %v4722 = vunpack.c.l.b16 %v907
    %v4723 = vunpack.c.h.b16 %v907
    %v4724 = vunpack.c.l.b16 %v908
    %v4725 = vunpack.c.h.b16 %v908
    %v4726 = vunpack.c.l.b16 %v909
    %v4727 = vunpack.c.h.b16 %v909
    %v4728 = vunpack.c.l.b16 %v910
    %v4729 = vunpack.c.h.b16 %v910
    %v4730 = vunpack.c.l.b16 %v911
    %v4731 = vunpack.c.h.b16 %v911
    %v4732 = vunpack.c.l.b16 %v912
    %v4733 = vunpack.c.h.b16 %v912
    %v4734 = vunpack.c.l.b16 %v913
    %v4735 = vunpack.c.h.b16 %v913
    %v4736 = vunpack.c.l.b16 %v914
    %v4737 = vunpack.c.h.b16 %v914
    %v4738 = vunpack.c.l.b16 %v915
    %v4739 = vunpack.c.h.b16 %v915
    %v4740 = vunpack.c.l.b16 %v916
    %v4741 = vunpack.c.h.b16 %v916
    %v4742 = vunpack.c.l.b16 %v917
    %v4743 = vunpack.c.h.b16 %v917
    %v4744 = vunpack.c.l.b16 %v918
    %v4745 = vunpack.c.h.b16 %v918
    %v4746 = vunpack.c.l.b16 %v919
    %v4747 = vunpack.c.h.b16 %v919
    %v4748 = vunpack.c.l.b16 %v920
    %v4749 = vunpack.c.h.b16 %v920
    %v4750 = vunpack.c.l.b16 %v921
    %v4751 = vunpack.c.h.b16 %v921
    %v4752 = vunpack.c.l.b16 %v922
    %v4753 = vunpack.c.h.b16 %v922
    %v4754 = vunpack.c.l.b16 %v923
    %v4755 = vunpack.c.h.b16 %v923
    %v4756 = vunpack.c.l.b16 %v924
    %v4757 = vunpack.c.h.b16 %v924
    %v4758 = vunpack.c.l.b16 %v925
    %v4759 = vunpack.c.h.b16 %v925
    %v4760 = vunpack.c.l.b16 %v926
    %v4761 = vunpack.c.h.b16 %v926
    %v4762 = vunpack.c.l.b16 %v927
    %v4763 = vunpack.c.h.b16 %v927
    %v4764 = vunpack.c.l.b16 %v928
    %v4765 = vunpack.c.h.b16 %v928
    %v4766 = vunpack.c.l.b16 %v929
    %v4767 = vunpack.c.h.b16 %v929
    %v4768 = vunpack.c.l.b16 %v930
    %v4769 = vunpack.c.h.b16 %v930
    %v4770 = vunpack.c.l.b16 %v931
    %v4771 = vunpack.c.h.b16 %v931
    %v4772 = vunpack.c.l.b16 %v932
    %v4773 = vunpack.c.h.b16 %v932
    %v4774 = vunpack.c.l.b16 %v933
    %v4775 = vunpack.c.h.b16 %v933
    %v4776 = vunpack.c.l.b16 %v934
    %v4777 = vunpack.c.h.b16 %v934
    %v4778 = vunpack.c.l.b16 %v935
    %v4779 = vunpack.c.h.b16 %v935
    %v4780 = vunpack.c.l.b16 %v936
    %v4781 = vunpack.c.h.b16 %v936
    %v4782 = vunpack.c.l.b16 %v937
    %v4783 = vunpack.c.h.b16 %v937
    %v4784 = vunpack.c.l.b16 %v938
    %v4785 = vunpack.c.h.b16 %v938
    %v4786 = vunpack.c.l.b16 %v939
    %v4787 = vunpack.c.h.b16 %v939
    %v4788 = vunpack.c.l.b16 %v940
    %v4789 = vunpack.c.h.b16 %v940
    %v4790 = vunpack.c.l.b16 %v941
    %v4791 = vunpack.c.h.b16 %v941
    %v4792 = vunpack.c.l.b16 %v942
    %v4793 = vunpack.c.h.b16 %v942
    %v4794 = vunpack.c.l.b16 %v943
    %v4795 = vunpack.c.h.b16 %v943
    %v4796 = vunpack.c.l.b16 %v944
    %v4797 = vunpack.c.h.b16 %v944
    %v4798 = vunpack.c.l.b16 %v945
    %v4799 = vunpack.c.h.b16 %v945
    %v4800 = vunpack.c.l.b16 %v946
    %v4801 = vunpack.c.h.b16 %v946
    %v4802 = vunpack.c.l.b16 %v947
    %v4803 = vunpack.c.h.b16 %v947
    %v4804 = vunpack.c.l.b16 %v948
    %v4805 = vunpack.c.h.b16 %v948
    %v4806 = vunpack.c.l.b16 %v949
    %v4807 = vunpack.c.h.b16 %v949
    %v4808 = vunpack.c.l.b16 %v950
    %v4809 = vunpack.c.h.b16 %v950
    %v4810 = vunpack.c.l.b16 %v951
    %v4811 = vunpack.c.h.b16 %v951
    %v4812 = vunpack.c.l.b16 %v952
    %v4813 = vunpack.c.h.b16 %v952
    %v4814 = vunpack.c.l.b16 %v953
    %v4815 = vunpack.c.h.b16 %v953
    %v4816 = vunpack.c.l.b16 %v954
    %v4817 = vunpack.c.h.b16 %v954
    %v4818 = vunpack.c.l.b16 %v955
    %v4819 = vunpack.c.h.b16 %v955
    %v4820 = vunpack.c.l.b16 %v956
    %v4821 = vunpack.c.h.b16 %v956
    %v4822 = vunpack.c.l.b16 %v957
    %v4823 = vunpack.c.h.b16 %v957
    %v4824 = vunpack.c.l.b16 %v958
    %v4825 = vunpack.c.h.b16 %v958
    %v4826 = vunpack.c.l.b16 %v959
    %v4827 = vunpack.c.h.b16 %v959
    %v4828 = vunpack.c.l.b16 %v960
    %v4829 = vunpack.c.h.b16 %v960
    %v4830 = vunpack.c.l.b16 %v961
    %v4831 = vunpack.c.h.b16 %v961
    %v4832 = vunpack.c.l.b16 %v962
    %v4833 = vunpack.c.h.b16 %v962
    %v4834 = vunpack.c.l.b16 %v963
    %v4835 = vunpack.c.h.b16 %v963
    %v4836 = vunpack.c.l.b16 %v964
    %v4837 = vunpack.c.h.b16 %v964
    %v4838 = vunpack.c.l.b16 %v965
    %v4839 = vunpack.c.h.b16 %v965
    %v4840 = vunpack.c.l.b16 %v966
    %v4841 = vunpack.c.h.b16 %v966
    %v4842 = vunpack.c.l.b16 %v967
    %v4843 = vunpack.c.h.b16 %v967
    %v4844 = vunpack.c.l.b16 %v968
    %v4845 = vunpack.c.h.b16 %v968
    %v4846 = vunpack.c.l.b16 %v969
    %v4847 = vunpack.c.h.b16 %v969
    %v4848 = vunpack.c.l.b16 %v970
    %v4849 = vunpack.c.h.b16 %v970
    %v4850 = vunpack.c.l.b16 %v971
    %v4851 = vunpack.c.h.b16 %v971
    %v4852 = vunpack.c.l.b16 %v972
    %v4853 = vunpack.c.h.b16 %v972
    %v4854 = vunpack.c.l.b16 %v973
    %v4855 = vunpack.c.h.b16 %v973
    %v4856 = vunpack.c.l.b16 %v974
    %v4857 = vunpack.c.h.b16 %v974
    %v4858 = vunpack.c.l.b16 %v975
    %v4859 = vunpack.c.h.b16 %v975
    %v4860 = vunpack.c.l.b16 %v976
    %v4861 = vunpack.c.h.b16 %v976
    %v4862 = vunpack.c.l.b16 %v977
    %v4863 = vunpack.c.h.b16 %v977
    %v4864 = vunpack.c.l.b16 %v978
    %v4865 = vunpack.c.h.b16 %v978
    %v4866 = vunpack.c.l.b16 %v979
    %v4867 = vunpack.c.h.b16 %v979
    %v4868 = vunpack.c.l.b16 %v980
    %v4869 = vunpack.c.h.b16 %v980
    %v4870 = vunpack.c.l.b16 %v981
    %v4871 = vunpack.c.h.b16 %v981
    %v4872 = vunpack.c.l.b16 %v982
    %v4873 = vunpack.c.h.b16 %v982
    %v4874 = vunpack.c.l.b16 %v983
    %v4875 = vunpack.c.h.b16 %v983
    %v4876 = vunpack.c.l.b16 %v984
    %v4877 = vunpack.c.h.b16 %v984
    %v4878 = vunpack.c.l.b16 %v985
    %v4879 = vunpack.c.h.b16 %v985
    %v4880 = vunpack.c.l.b16 %v986
    %v4881 = vunpack.c.h.b16 %v986
    %v4882 = vunpack.c.l.b16 %v987
    %v4883 = vunpack.c.h.b16 %v987
    %v4884 = vunpack.c.l.b16 %v988
    %v4885 = vunpack.c.h.b16 %v988
    %v4886 = vunpack.c.l.b16 %v989
    %v4887 = vunpack.c.h.b16 %v989
    %v4888 = vunpack.c.l.b16 %v990
    %v4889 = vunpack.c.h.b16 %v990
    %v4890 = vunpack.c.l.b16 %v991
    %v4891 = vunpack.c.h.b16 %v991
    %v4892 = vunpack.c.l.b16 %v992
    %v4893 = vunpack.c.h.b16 %v992
    %v4894 = vunpack.c.l.b16 %v993
    %v4895 = vunpack.c.h.b16 %v993
    %v4896 = vunpack.c.l.b16 %v994
    %v4897 = vunpack.c.h.b16 %v994
    %v4898 = vunpack.c.l.b16 %v995
    %v4899 = vunpack.c.h.b16 %v995
    %v4900 = vunpack.c.l.b16 %v996
    %v4901 = vunpack.c.h.b16 %v996
    %v4902 = vunpack.c.l.b16 %v997
    %v4903 = vunpack.c.h.b16 %v997
    %v4904 = vunpack.c.l.b16 %v998
    %v4905 = vunpack.c.h.b16 %v998
    %v4906 = vunpack.c.l.b16 %v999
    %v4907 = vunpack.c.h.b16 %v999
    %v4908 = vunpack.c.l.b16 %v1000
    %v4909 = vunpack.c.h.b16 %v1000
    %v4910 = vunpack.c.l.b16 %v1001
    %v4911 = vunpack.c.h.b16 %v1001
    %v4912 = vunpack.c.l.b16 %v1002
    %v4913 = vunpack.c.h.b16 %v1002
    %v4914 = vunpack.c.l.b16 %v1003
    %v4915 = vunpack.c.h.b16 %v1003
    %v4916 = vunpack.c.l.b16 %v1004
    %v4917 = vunpack.c.h.b16 %v1004
    %v4918 = vunpack.c.l.b16 %v1005
    %v4919 = vunpack.c.h.b16 %v1005
    %v4920 = vunpack.c.l.b16 %v1006
    %v4921 = vunpack.c.h.b16 %v1006
    %v4922 = vunpack.c.l.b16 %v1007
    %v4923 = vunpack.c.h.b16 %v1007
    %v4924 = vunpack.c.l.b16 %v1008
    %v4925 = vunpack.c.h.b16 %v1008
    %v4926 = vunpack.c.l.b16 %v1009
    %v4927 = vunpack.c.h.b16 %v1009
    %v4928 = vunpack.c.l.b16 %v1010
    %v4929 = vunpack.c.h.b16 %v1010
    %v4930 = vunpack.c.l.b16 %v1011
    %v4931 = vunpack.c.h.b16 %v1011
    %v4932 = vunpack.c.l.b16 %v1012
    %v4933 = vunpack.c.h.b16 %v1012
    %v4934 = vunpack.c.l.b16 %v1013
    %v4935 = vunpack.c.h.b16 %v1013
    %v4936 = vunpack.c.l.b16 %v1014
    %v4937 = vunpack.c.h.b16 %v1014
    %v4938 = vunpack.c.l.b16 %v1015
    %v4939 = vunpack.c.h.b16 %v1015
    %v4940 = vunpack.c.l.b16 %v1016
    %v4941 = vunpack.c.h.b16 %v1016
    %v4942 = vunpack.c.l.b16 %v1017
    %v4943 = vunpack.c.h.b16 %v1017
    %v4944 = vunpack.c.l.b16 %v1018
    %v4945 = vunpack.c.h.b16 %v1018
    %v4946 = vunpack.c.l.b16 %v1019
    %v4947 = vunpack.c.h.b16 %v1019
    %v4948 = vunpack.c.l.b16 %v1020
    %v4949 = vunpack.c.h.b16 %v1020
    %v4950 = vunpack.c.l.b16 %v1021
    %v4951 = vunpack.c.h.b16 %v1021
    %v4952 = vunpack.c.l.b16 %v1022
    %v4953 = vunpack.c.h.b16 %v1022
    %v4954 = vunpack.c.l.b16 %v1023
    %v4955 = vunpack.c.h.b16 %v1023
    %v4956 = vunpack.c.l.b16 %v1024
    %v4957 = vunpack.c.h.b16 %v1024
    %v4958 = vunpack.c.l.b16 %v1025
    %v4959 = vunpack.c.h.b16 %v1025
    %v4960 = vunpack.c.l.b16 %v1026
    %v4961 = vunpack.c.h.b16 %v1026
    %v4962 = vunpack.c.l.b16 %v1027
    %v4963 = vunpack.c.h.b16 %v1027
    %v4964 = vunpack.c.l.b16 %v1028
    %v4965 = vunpack.c.h.b16 %v1028
    %v4966 = vunpack.c.l.b16 %v1029
    %v4967 = vunpack.c.h.b16 %v1029
    %v4968 = vunpack.c.l.b16 %v1030
    %v4969 = vunpack.c.h.b16 %v1030
    %v4970 = vunpack.c.l.b16 %v1031
    %v4971 = vunpack.c.h.b16 %v1031
    %v4972 = vunpack.c.l.b16 %v1032
    %v4973 = vunpack.c.h.b16 %v1032
    %v4974 = vunpack.c.l.b16 %v1033
    %v4975 = vunpack.c.h.b16 %v1033
    %v4976 = vunpack.c.l.b16 %v1034
    %v4977 = vunpack.c.h.b16 %v1034
    %v4978 = vunpack.c.l.b16 %v1035
    %v4979 = vunpack.c.h.b16 %v1035
    %v4980 = vunpack.c.l.b16 %v1036
    %v4981 = vunpack.c.h.b16 %v1036
    %v4982 = vunpack.c.l.b16 %v1037
    %v4983 = vunpack.c.h.b16 %v1037
    %v4984 = vunpack.c.l.b16 %v1038
    %v4985 = vunpack.c.h.b16 %v1038
    %v4986 = vunpack.c.l.b16 %v1039
    %v4987 = vunpack.c.h.b16 %v1039
    %v4988 = vunpack.c.l.b16 %v1040
    %v4989 = vunpack.c.h.b16 %v1040
    %v4990 = vunpack.c.l.b16 %v1041
    %v4991 = vunpack.c.h.b16 %v1041
    %v4992 = vunpack.c.l.b16 %v1042
    %v4993 = vunpack.c.h.b16 %v1042
    %v4994 = vunpack.c.l.b16 %v1043
    %v4995 = vunpack.c.h.b16 %v1043
    %v4996 = vunpack.c.l.b16 %v1044
    %v4997 = vunpack.c.h.b16 %v1044
    %v4998 = vunpack.c.l.b16 %v1045
    %v4999 = vunpack.c.h.b16 %v1045
    %v5000 = vunpack.c.l.b16 %v1046
    %v5001 = vunpack.c.h.b16 %v1046
    %v5002 = vunpack.c.l.b16 %v1047
    %v5003 = vunpack.c.h.b16 %v1047
    %v5004 = vunpack.c.l.b16 %v1048
    %v5005 = vunpack.c.h.b16 %v1048
    %v5006 = vunpack.c.l.b16 %v1049
    %v5007 = vunpack.c.h.b16 %v1049
    %v5008 = vunpack.c.l.b16 %v1050
    %v5009 = vunpack.c.h.b16 %v1050
    %v5010 = vunpack.c.l.b16 %v1051
    %v5011 = vunpack.c.h.b16 %v1051
    %v5012 = vunpack.c.l.b16 %v1052
    %v5013 = vunpack.c.h.b16 %v1052
    %v5014 = vunpack.c.l.b16 %v1053
    %v5015 = vunpack.c.h.b16 %v1053
    %v5016 = vunpack.c.l.b16 %v1054
    %v5017 = vunpack.c.h.b16 %v1054
    %v5018 = vunpack.c.l.b16 %v1055
    %v5019 = vunpack.c.h.b16 %v1055
    %v5020 = vunpack.c.l.b16 %v1056
    %v5021 = vunpack.c.h.b16 %v1056
    %v5022 = vunpack.c.l.b16 %v1057
    %v5023 = vunpack.c.h.b16 %v1057
    %v5024 = vunpack.c.l.b16 %v1058
    %v5025 = vunpack.c.h.b16 %v1058
    %v5026 = vunpack.c.l.b16 %v1059
    %v5027 = vunpack.c.h.b16 %v1059
    %v5028 = vunpack.c.l.b16 %v1060
    %v5029 = vunpack.c.h.b16 %v1060
    %v5030 = vunpack.c.l.b16 %v1061
    %v5031 = vunpack.c.h.b16 %v1061
    %v5032 = vunpack.c.l.b16 %v1062
    %v5033 = vunpack.c.h.b16 %v1062
    %v5034 = vunpack.c.l.b16 %v1063
    %v5035 = vunpack.c.h.b16 %v1063
    %v5036 = vunpack.c.l.b16 %v1064
    %v5037 = vunpack.c.h.b16 %v1064
    %v5038 = vunpack.c.l.b16 %v1065
    %v5039 = vunpack.c.h.b16 %v1065
    %v5040 = vunpack.c.l.b16 %v1066
    %v5041 = vunpack.c.h.b16 %v1066
    %v5042 = vunpack.c.l.b16 %v1067
    %v5043 = vunpack.c.h.b16 %v1067
    %v5044 = vunpack.c.l.b16 %v1068
    %v5045 = vunpack.c.h.b16 %v1068
    %v5046 = vunpack.c.l.b16 %v1069
    %v5047 = vunpack.c.h.b16 %v1069
    %v5048 = vunpack.c.l.b16 %v1070
    %v5049 = vunpack.c.h.b16 %v1070
    %v5050 = vunpack.c.l.b16 %v1071
    %v5051 = vunpack.c.h.b16 %v1071
    %v5052 = vunpack.c.l.b16 %v1072
    %v5053 = vunpack.c.h.b16 %v1072
    %v5054 = vunpack.c.l.b16 %v1073
    %v5055 = vunpack.c.h.b16 %v1073
    %v5056 = vunpack.c.l.b16 %v1074
    %v5057 = vunpack.c.h.b16 %v1074
    %v5058 = vunpack.c.l.b16 %v1075
    %v5059 = vunpack.c.h.b16 %v1075
    %v5060 = vunpack.c.l.b16 %v1076
    %v5061 = vunpack.c.h.b16 %v1076
    %v5062 = vunpack.c.l.b16 %v1077
    %v5063 = vunpack.c.h.b16 %v1077
    %v5064 = vunpack.c.l.b16 %v1078
    %v5065 = vunpack.c.h.b16 %v1078
    %v5066 = vunpack.c.l.b16 %v1079
    %v5067 = vunpack.c.h.b16 %v1079
    %v5068 = vunpack.c.l.b16 %v1080
    %v5069 = vunpack.c.h.b16 %v1080
    %v5070 = vunpack.c.l.b16 %v1081
    %v5071 = vunpack.c.h.b16 %v1081
    %v5072 = vunpack.c.l.b16 %v1082
    %v5073 = vunpack.c.h.b16 %v1082
    %v5074 = vunpack.c.l.b16 %v1083
    %v5075 = vunpack.c.h.b16 %v1083
    %v5076 = vunpack.c.l.b16 %v1084
    %v5077 = vunpack.c.h.b16 %v1084
    %v5078 = vunpack.c.l.b16 %v1085
    %v5079 = vunpack.c.h.b16 %v1085
    %v5080 = vunpack.c.l.b16 %v1086
    %v5081 = vunpack.c.h.b16 %v1086
    %v5082 = vunpack.c.l.b16 %v1087
    %v5083 = vunpack.c.h.b16 %v1087
    %v5084 = vunpack.c.l.b16 %v1088
    %v5085 = vunpack.c.h.b16 %v1088
    %v5086 = vunpack.c.l.b16 %v1089
    %v5087 = vunpack.c.h.b16 %v1089
    %v5088 = vunpack.c.l.b16 %v1090
    %v5089 = vunpack.c.h.b16 %v1090
    %v5090 = vunpack.c.l.b16 %v1091
    %v5091 = vunpack.c.h.b16 %v1091
    %v5092 = vunpack.c.l.b16 %v1092
    %v5093 = vunpack.c.h.b16 %v1092
    %v5094 = vunpack.c.l.b16 %v1093
    %v5095 = vunpack.c.h.b16 %v1093
    %v5096 = vunpack.c.l.b16 %v1094
    %v5097 = vunpack.c.h.b16 %v1094
    %v5098 = vunpack.c.l.b16 %v1095
    %v5099 = vunpack.c.h.b16 %v1095
    %v5100 = vunpack.c.l.b16 %v1096
    %v5101 = vunpack.c.h.b16 %v1096
    %v5102 = vunpack.c.l.b16 %v1097
    %v5103 = vunpack.c.h.b16 %v1097
    %v5104 = vunpack.c.l.b16 %v1098
    %v5105 = vunpack.c.h.b16 %v1098
    %v5106 = vunpack.c.l.b16 %v1099
    %v5107 = vunpack.c.h.b16 %v1099
    %v5108 = vunpack.c.l.b16 %v1100
    %v5109 = vunpack.c.h.b16 %v1100
    %v5110 = vunpack.c.l.b16 %v1101
    %v5111 = vunpack.c.h.b16 %v1101
    %v5112 = vunpack.c.l.b16 %v1102
    %v5113 = vunpack.c.h.b16 %v1102
    %v5114 = vunpack.c.l.b16 %v1103
    %v5115 = vunpack.c.h.b16 %v1103
    %v5116 = vunpack.c.l.b16 %v1104
    %v5117 = vunpack.c.h.b16 %v1104
    %v5118 = vunpack.c.l.b16 %v1105
    %v5119 = vunpack.c.h.b16 %v1105
    %v5120 = vunpack.c.l.b16 %v1106
    %v5121 = vunpack.c.h.b16 %v1106
    %v5122 = vunpack.c.l.b16 %v1107
    %v5123 = vunpack.c.h.b16 %v1107
    %v5124 = vunpack.c.l.b16 %v1108
    %v5125 = vunpack.c.h.b16 %v1108
    %v5126 = vunpack.c.l.b16 %v1109
    %v5127 = vunpack.c.h.b16 %v1109
    %v5128 = vunpack.c.l.b16 %v1110
    %v5129 = vunpack.c.h.b16 %v1110
    %v5130 = vunpack.c.l.b16 %v1111
    %v5131 = vunpack.c.h.b16 %v1111
    %v5132 = vunpack.c.l.b16 %v1112
    %v5133 = vunpack.c.h.b16 %v1112
    %v5134 = vunpack.c.l.b16 %v1113
    %v5135 = vunpack.c.h.b16 %v1113
    %v5136 = vunpack.c.l.b16 %v1114
    %v5137 = vunpack.c.h.b16 %v1114
    %v5138 = vunpack.c.l.b16 %v1115
    %v5139 = vunpack.c.h.b16 %v1115
    %v5140 = vunpack.c.l.b16 %v1116
    %v5141 = vunpack.c.h.b16 %v1116
    %v5142 = vunpack.c.l.b16 %v1117
    %v5143 = vunpack.c.h.b16 %v1117
    %v5144 = vunpack.c.l.b16 %v1118
    %v5145 = vunpack.c.h.b16 %v1118
    %v5146 = vunpack.c.l.b16 %v1119
    %v5147 = vunpack.c.h.b16 %v1119
    %v5148 = vunpack.c.l.b16 %v1120
    %v5149 = vunpack.c.h.b16 %v1120
    %v5150 = vunpack.c.l.b16 %v1121
    %v5151 = vunpack.c.h.b16 %v1121
    %v5152 = vunpack.c.l.b16 %v1122
    %v5153 = vunpack.c.h.b16 %v1122
    %v5154 = vunpack.c.l.b16 %v1123
    %v5155 = vunpack.c.h.b16 %v1123
    %v5156 = vunpack.c.l.b16 %v1124
    %v5157 = vunpack.c.h.b16 %v1124
    %v5158 = vunpack.c.l.b16 %v1125
    %v5159 = vunpack.c.h.b16 %v1125
    %v5160 = vunpack.c.l.b16 %v1126
    %v5161 = vunpack.c.h.b16 %v1126
    %v5162 = vunpack.c.l.b16 %v1127
    %v5163 = vunpack.c.h.b16 %v1127
    %v5164 = vunpack.c.l.b16 %v1128
    %v5165 = vunpack.c.h.b16 %v1128
    %v5166 = vunpack.c.l.b16 %v1129
    %v5167 = vunpack.c.h.b16 %v1129
    %v5168 = vunpack.c.l.b16 %v1130
    %v5169 = vunpack.c.h.b16 %v1130
    %v5170 = vunpack.c.l.b16 %v1131
    %v5171 = vunpack.c.h.b16 %v1131
    %v5172 = vunpack.c.l.b16 %v1132
    %v5173 = vunpack.c.h.b16 %v1132
    %v5174 = vunpack.c.l.b16 %v1133
    %v5175 = vunpack.c.h.b16 %v1133
    %v5176 = vunpack.c.l.b16 %v1134
    %v5177 = vunpack.c.h.b16 %v1134
    %v5178 = vunpack.c.l.b16 %v1135
    %v5179 = vunpack.c.h.b16 %v1135
    %v5180 = vunpack.c.l.b16 %v1136
    %v5181 = vunpack.c.h.b16 %v1136
    %v5182 = vunpack.c.l.b16 %v1137
    %v5183 = vunpack.c.h.b16 %v1137
    %v5184 = vunpack.c.l.b16 %v1138
    %v5185 = vunpack.c.h.b16 %v1138
    %v5186 = vunpack.c.l.b16 %v1139
    %v5187 = vunpack.c.h.b16 %v1139
    %v5188 = vunpack.c.l.b16 %v1140
    %v5189 = vunpack.c.h.b16 %v1140
    %v5190 = vunpack.c.l.b16 %v1141
    %v5191 = vunpack.c.h.b16 %v1141
    %v5192 = vunpack.c.l.b16 %v1142
    %v5193 = vunpack.c.h.b16 %v1142
    %v5194 = vunpack.c.l.b16 %v1143
    %v5195 = vunpack.c.h.b16 %v1143
    %v5196 = vunpack.c.l.b16 %v1144
    %v5197 = vunpack.c.h.b16 %v1144
    %v5198 = vunpack.c.l.b16 %v1145
    %v5199 = vunpack.c.h.b16 %v1145
    %v5200 = vunpack.c.l.b16 %v1146
    %v5201 = vunpack.c.h.b16 %v1146
    %v5202 = vunpack.c.l.b16 %v1147
    %v5203 = vunpack.c.h.b16 %v1147
    %v5204 = vunpack.c.l.b16 %v1148
    %v5205 = vunpack.c.h.b16 %v1148
    %v5206 = vunpack.c.l.b16 %v1149
    %v5207 = vunpack.c.h.b16 %v1149
    %v5208 = vunpack.c.l.b16 %v1150
    %v5209 = vunpack.c.h.b16 %v1150
    %v5210 = vunpack.c.l.b16 %v1151
    %v5211 = vunpack.c.h.b16 %v1151
    %v5212 = vunpack.c.l.b16 %v1152
    %v5213 = vunpack.c.h.b16 %v1152
    %v5214 = vunpack.c.l.b16 %v1153
    %v5215 = vunpack.c.h.b16 %v1153
    %v5216 = vunpack.c.l.b16 %v1154
    %v5217 = vunpack.c.h.b16 %v1154
    %v5218 = vunpack.c.l.b16 %v1155
    %v5219 = vunpack.c.h.b16 %v1155
    %v5220 = vunpack.c.l.b16 %v1156
    %v5221 = vunpack.c.h.b16 %v1156
    %v5222 = vunpack.c.l.b16 %v1157
    %v5223 = vunpack.c.h.b16 %v1157
    %v5224 = vunpack.c.l.b16 %v1158
    %v5225 = vunpack.c.h.b16 %v1158
    %v5226 = vunpack.c.l.b16 %v1159
    %v5227 = vunpack.c.h.b16 %v1159
    %v5228 = vunpack.c.l.b16 %v1160
    %v5229 = vunpack.c.h.b16 %v1160
    %v5230 = vunpack.c.l.b16 %v1161
    %v5231 = vunpack.c.h.b16 %v1161
    %v5232 = vunpack.c.l.b16 %v1162
    %v5233 = vunpack.c.h.b16 %v1162
    %v5234 = vunpack.c.l.b16 %v1163
    %v5235 = vunpack.c.h.b16 %v1163
    %v5236 = vunpack.c.l.b16 %v1164
    %v5237 = vunpack.c.h.b16 %v1164
    %v5238 = vunpack.c.l.b16 %v1165
    %v5239 = vunpack.c.h.b16 %v1165
    %v5240 = vunpack.c.l.b16 %v1166
    %v5241 = vunpack.c.h.b16 %v1166
    %v5242 = vunpack.c.l.b16 %v1167
    %v5243 = vunpack.c.h.b16 %v1167
    %v5244 = vunpack.c.l.b16 %v1168
    %v5245 = vunpack.c.h.b16 %v1168
    %v5246 = vunpack.c.l.b16 %v1169
    %v5247 = vunpack.c.h.b16 %v1169
    %v5248 = vunpack.c.l.b16 %v1170
    %v5249 = vunpack.c.h.b16 %v1170
    %v5250 = vunpack.c.l.b16 %v1171
    %v5251 = vunpack.c.h.b16 %v1171
    %v5252 = vunpack.c.l.b16 %v1172
    %v5253 = vunpack.c.h.b16 %v1172
    %v5254 = vunpack.c.l.b16 %v1173
    %v5255 = vunpack.c.h.b16 %v1173
    %v5256 = vunpack.c.l.b16 %v1174
    %v5257 = vunpack.c.h.b16 %v1174
    %v5258 = vunpack.c.l.b16 %v1175
    %v5259 = vunpack.c.h.b16 %v1175
    %v5260 = vunpack.c.l.b16 %v1176
    %v5261 = vunpack.c.h.b16 %v1176
    %v5262 = vunpack.c.l.b16 %v1177
    %v5263 = vunpack.c.h.b16 %v1177
    %v5264 = vunpack.c.l.b16 %v1178
    %v5265 = vunpack.c.h.b16 %v1178
    %v5266 = vunpack.c.l.b16 %v1179
    %v5267 = vunpack.c.h.b16 %v1179
    %v5268 = vunpack.c.l.b16 %v1180
    %v5269 = vunpack.c.h.b16 %v1180
    %v5270 = vunpack.c.l.b16 %v1181
    %v5271 = vunpack.c.h.b16 %v1181
    %v5272 = vunpack.c.l.b16 %v1182
    %v5273 = vunpack.c.h.b16 %v1182
    %v5274 = vunpack.c.l.b16 %v1183
    %v5275 = vunpack.c.h.b16 %v1183
    %v5276 = vunpack.c.l.b16 %v1184
    %v5277 = vunpack.c.h.b16 %v1184
    %v5278 = vunpack.c.l.b16 %v1185
    %v5279 = vunpack.c.h.b16 %v1185
    %v5280 = vunpack.c.l.b16 %v1186
    %v5281 = vunpack.c.h.b16 %v1186
    %v5282 = vunpack.c.l.b16 %v1187
    %v5283 = vunpack.c.h.b16 %v1187
    %v5284 = vunpack.c.l.b16 %v1188
    %v5285 = vunpack.c.h.b16 %v1188
    %v5286 = vunpack.c.l.b16 %v1189
    %v5287 = vunpack.c.h.b16 %v1189
    %v5288 = vunpack.c.l.b16 %v1190
    %v5289 = vunpack.c.h.b16 %v1190
    %v5290 = vunpack.c.l.b16 %v1191
    %v5291 = vunpack.c.h.b16 %v1191
    %v5292 = vunpack.c.l.b16 %v1192
    %v5293 = vunpack.c.h.b16 %v1192
    %v5294 = vunpack.c.l.b16 %v1193
    %v5295 = vunpack.c.h.b16 %v1193
    %v5296 = vunpack.c.l.b16 %v1194
    %v5297 = vunpack.c.h.b16 %v1194
    %v5298 = vunpack.c.l.b16 %v1195
    %v5299 = vunpack.c.h.b16 %v1195
    %v5300 = vunpack.c.l.b16 %v1196
    %v5301 = vunpack.c.h.b16 %v1196
    %v5302 = vunpack.c.l.b16 %v1197
    %v5303 = vunpack.c.h.b16 %v1197
    %v5304 = vunpack.c.l.b16 %v1198
    %v5305 = vunpack.c.h.b16 %v1198
    %v5306 = vunpack.c.l.b16 %v1199
    %v5307 = vunpack.c.h.b16 %v1199
    %v5308 = vunpack.c.l.b16 %v1200
    %v5309 = vunpack.c.h.b16 %v1200
    %v5310 = vunpack.c.l.b16 %v1201
    %v5311 = vunpack.c.h.b16 %v1201
    %v5312 = vunpack.c.l.b16 %v1202
    %v5313 = vunpack.c.h.b16 %v1202
    %v5314 = vunpack.c.l.b16 %v1203
    %v5315 = vunpack.c.h.b16 %v1203
    %v5316 = vunpack.c.l.b16 %v1204
    %v5317 = vunpack.c.h.b16 %v1204
    %v5318 = vunpack.c.l.b16 %v1205
    %v5319 = vunpack.c.h.b16 %v1205
    %v5320 = vunpack.c.l.b16 %v1206
    %v5321 = vunpack.c.h.b16 %v1206
    %v5322 = vunpack.c.l.b16 %v1207
    %v5323 = vunpack.c.h.b16 %v1207
    %v5324 = vunpack.c.l.b16 %v1208
    %v5325 = vunpack.c.h.b16 %v1208
    %v5326 = vunpack.c.l.b16 %v1209
    %v5327 = vunpack.c.h.b16 %v1209
    %v5328 = vunpack.c.l.b16 %v1210
    %v5329 = vunpack.c.h.b16 %v1210
    %v5330 = vunpack.c.l.b16 %v1211
    %v5331 = vunpack.c.h.b16 %v1211
    %v5332 = vunpack.c.l.b16 %v1212
    %v5333 = vunpack.c.h.b16 %v1212
    %v5334 = vunpack.c.l.b16 %v1213
    %v5335 = vunpack.c.h.b16 %v1213
    %v5336 = vunpack.c.l.b16 %v1214
    %v5337 = vunpack.c.h.b16 %v1214
    %v5338 = vunpack.c.l.b16 %v1215
    %v5339 = vunpack.c.h.b16 %v1215
    %v5340 = vunpack.c.l.b16 %v1216
    %v5341 = vunpack.c.h.b16 %v1216
    %v5342 = vunpack.c.l.b16 %v1217
    %v5343 = vunpack.c.h.b16 %v1217
    %v5344 = vunpack.c.l.b16 %v1218
    %v5345 = vunpack.c.h.b16 %v1218
    %v5346 = vunpack.c.l.b16 %v1219
    %v5347 = vunpack.c.h.b16 %v1219
    %v5348 = vunpack.c.l.b16 %v1220
    %v5349 = vunpack.c.h.b16 %v1220
    %v5350 = vunpack.c.l.b16 %v1221
    %v5351 = vunpack.c.h.b16 %v1221
    %v5352 = vunpack.c.l.b16 %v1222
    %v5353 = vunpack.c.h.b16 %v1222
    %v5354 = vunpack.c.l.b16 %v1223
    %v5355 = vunpack.c.h.b16 %v1223
    %v5356 = vunpack.c.l.b16 %v1224
    %v5357 = vunpack.c.h.b16 %v1224
    %v5358 = vunpack.c.l.b16 %v1225
    %v5359 = vunpack.c.h.b16 %v1225
    %v5360 = vunpack.c.l.b16 %v1226
    %v5361 = vunpack.c.h.b16 %v1226
    %v5362 = vunpack.c.l.b16 %v1227
    %v5363 = vunpack.c.h.b16 %v1227
    %v5364 = vunpack.c.l.b16 %v1228
    %v5365 = vunpack.c.h.b16 %v1228
    %v5366 = vunpack.c.l.b16 %v1229
    %v5367 = vunpack.c.h.b16 %v1229
    %v5368 = vunpack.c.l.b16 %v1230
    %v5369 = vunpack.c.h.b16 %v1230
    %v5370 = vunpack.c.l.b16 %v1231
    %v5371 = vunpack.c.h.b16 %v1231
    %v5372 = vunpack.c.l.b16 %v1232
    %v5373 = vunpack.c.h.b16 %v1232
    %v5374 = vunpack.c.l.b16 %v1233
    %v5375 = vunpack.c.h.b16 %v1233
    %v5376 = vunpack.c.l.b16 %v1234
    %v5377 = vunpack.c.h.b16 %v1234
    %v5378 = vunpack.c.l.b16 %v1235
    %v5379 = vunpack.c.h.b16 %v1235
    %v5380 = vunpack.c.l.b16 %v1236
    %v5381 = vunpack.c.h.b16 %v1236
    %v5382 = vunpack.c.l.b16 %v1237
    %v5383 = vunpack.c.h.b16 %v1237
    %v5384 = vunpack.c.l.b16 %v1238
    %v5385 = vunpack.c.h.b16 %v1238
    %v5386 = vunpack.c.l.b16 %v1239
    %v5387 = vunpack.c.h.b16 %v1239
    %v5388 = vunpack.c.l.b16 %v1240
    %v5389 = vunpack.c.h.b16 %v1240
    %v5390 = vunpack.c.l.b16 %v1241
    %v5391 = vunpack.c.h.b16 %v1241
    %v5392 = vunpack.c.l.b16 %v1242
    %v5393 = vunpack.c.h.b16 %v1242
    %v5394 = vunpack.c.l.b16 %v1243
    %v5395 = vunpack.c.h.b16 %v1243
    %v5396 = vunpack.c.l.b16 %v1244
    %v5397 = vunpack.c.h.b16 %v1244
    %v5398 = vunpack.c.l.b16 %v1245
    %v5399 = vunpack.c.h.b16 %v1245
    %v5400 = vunpack.c.l.b16 %v1246
    %v5401 = vunpack.c.h.b16 %v1246
    %v5402 = vunpack.c.l.b16 %v1247
    %v5403 = vunpack.c.h.b16 %v1247
    %v5404 = vunpack.c.l.b16 %v1248
    %v5405 = vunpack.c.h.b16 %v1248
    %v5406 = vunpack.c.l.b16 %v1249
    %v5407 = vunpack.c.h.b16 %v1249
    %v5408 = vunpack.c.l.b16 %v1250
    %v5409 = vunpack.c.h.b16 %v1250
    %v5410 = vunpack.c.l.b16 %v1251
    %v5411 = vunpack.c.h.b16 %v1251
    %v5412 = vunpack.c.l.b16 %v1252
    %v5413 = vunpack.c.h.b16 %v1252
    %v5414 = vunpack.c.l.b16 %v1253
    %v5415 = vunpack.c.h.b16 %v1253
    %v5416 = vunpack.c.l.b16 %v1254
    %v5417 = vunpack.c.h.b16 %v1254
    %v5418 = vunpack.c.l.b16 %v1255
    %v5419 = vunpack.c.h.b16 %v1255
    %v5420 = vunpack.c.l.b16 %v1256
    %v5421 = vunpack.c.h.b16 %v1256
    %v5422 = vunpack.c.l.b16 %v1257
    %v5423 = vunpack.c.h.b16 %v1257
    %v5424 = vunpack.c.l.b16 %v1258
    %v5425 = vunpack.c.h.b16 %v1258
    %v5426 = vunpack.c.l.b16 %v1259
    %v5427 = vunpack.c.h.b16 %v1259
    %v5428 = vunpack.c.l.b16 %v1260
    %v5429 = vunpack.c.h.b16 %v1260
    %v5430 = vunpack.c.l.b16 %v1261
    %v5431 = vunpack.c.h.b16 %v1261
    %v5432 = vunpack.c.l.b16 %v1262
    %v5433 = vunpack.c.h.b16 %v1262
    %v5434 = vunpack.c.l.b16 %v1263
    %v5435 = vunpack.c.h.b16 %v1263
    %v5436 = vunpack.c.l.b16 %v1264
    %v5437 = vunpack.c.h.b16 %v1264
    %v5438 = vunpack.c.l.b16 %v1265
    %v5439 = vunpack.c.h.b16 %v1265
    %v5440 = vunpack.c.l.b16 %v1266
    %v5441 = vunpack.c.h.b16 %v1266
    %v5442 = vunpack.c.l.b16 %v1267
    %v5443 = vunpack.c.h.b16 %v1267
    %v5444 = vunpack.c.l.b16 %v1268
    %v5445 = vunpack.c.h.b16 %v1268
    %v5446 = vunpack.c.l.b16 %v1269
    %v5447 = vunpack.c.h.b16 %v1269
    %v5448 = vunpack.c.l.b16 %v1270
    %v5449 = vunpack.c.h.b16 %v1270
    %v5450 = vunpack.c.l.b16 %v1271
    %v5451 = vunpack.c.h.b16 %v1271
    %v5452 = vunpack.c.l.b16 %v1272
    %v5453 = vunpack.c.h.b16 %v1272
    %v5454 = vunpack.c.l.b16 %v1273
    %v5455 = vunpack.c.h.b16 %v1273
    %v5456 = vunpack.c.l.b16 %v1274
    %v5457 = vunpack.c.h.b16 %v1274
    %v5458 = vunpack.c.l.b16 %v1275
    %v5459 = vunpack.c.h.b16 %v1275
    %v5460 = vunpack.c.l.b16 %v1276
    %v5461 = vunpack.c.h.b16 %v1276
    %v5462 = vunpack.c.l.b16 %v1277
    %v5463 = vunpack.c.h.b16 %v1277
    %v5464 = vunpack.c.l.b16 %v1278
    %v5465 = vunpack.c.h.b16 %v1278
    %v5466 = vunpack.c.l.b16 %v1279
    %v5467 = vunpack.c.h.b16 %v1279
    %v5468 = vunpack.c.l.b16 %v1280
    %v5469 = vunpack.c.h.b16 %v1280
    %v5470 = vunpack.c.l.b16 %v1281
    %v5471 = vunpack.c.h.b16 %v1281
    %v5472 = vunpack.c.l.b16 %v1282
    %v5473 = vunpack.c.h.b16 %v1282
    %v5474 = vunpack.c.l.b16 %v1283
    %v5475 = vunpack.c.h.b16 %v1283
    %v5476 = vunpack.c.l.b16 %v1284
    %v5477 = vunpack.c.h.b16 %v1284
    %v5478 = vunpack.c.l.b16 %v1285
    %v5479 = vunpack.c.h.b16 %v1285
    %v5480 = vunpack.c.l.b16 %v1286
    %v5481 = vunpack.c.h.b16 %v1286
    %v5482 = vunpack.c.l.b16 %v1287
    %v5483 = vunpack.c.h.b16 %v1287
    %v5484 = vunpack.c.l.b16 %v1288
    %v5485 = vunpack.c.h.b16 %v1288
    %v5486 = vunpack.c.l.b16 %v1289
    %v5487 = vunpack.c.h.b16 %v1289
    %v5488 = vunpack.c.l.b16 %v1290
    %v5489 = vunpack.c.h.b16 %v1290
    %v5490 = vunpack.c.l.b16 %v1291
    %v5491 = vunpack.c.h.b16 %v1291
    %v5492 = vunpack.c.l.b16 %v1292
    %v5493 = vunpack.c.h.b16 %v1292
    %v5494 = vunpack.c.l.b16 %v1293
    %v5495 = vunpack.c.h.b16 %v1293
    %v5496 = vunpack.c.l.b16 %v1294
    %v5497 = vunpack.c.h.b16 %v1294
    %v5498 = vunpack.c.l.b16 %v1295
    %v5499 = vunpack.c.h.b16 %v1295
    %v5500 = vunpack.c.l.b16 %v1296
    %v5501 = vunpack.c.h.b16 %v1296
    %v5502 = vunpack.c.l.b16 %v1297
    %v5503 = vunpack.c.h.b16 %v1297
    %v5504 = vunpack.c.l.b16 %v1298
    %v5505 = vunpack.c.h.b16 %v1298
    %v5506 = vunpack.c.l.b16 %v1299
    %v5507 = vunpack.c.h.b16 %v1299
    %v5508 = vunpack.c.l.b16 %v1300
    %v5509 = vunpack.c.h.b16 %v1300
    %v5510 = vunpack.c.l.b16 %v1301
    %v5511 = vunpack.c.h.b16 %v1301
    %v5512 = vunpack.c.l.b16 %v1302
    %v5513 = vunpack.c.h.b16 %v1302
    %v5514 = vunpack.c.l.b16 %v1303
    %v5515 = vunpack.c.h.b16 %v1303
    %v5516 = vunpack.c.l.b16 %v1304
    %v5517 = vunpack.c.h.b16 %v1304
    %v5518 = vunpack.c.l.b16 %v1305
    %v5519 = vunpack.c.h.b16 %v1305
    %v5520 = vunpack.c.l.b16 %v1306
    %v5521 = vunpack.c.h.b16 %v1306
    %v5522 = vunpack.c.l.b16 %v1307
    %v5523 = vunpack.c.h.b16 %v1307
    %v5524 = vunpack.c.l.b16 %v1308
    %v5525 = vunpack.c.h.b16 %v1308
    %v5526 = vunpack.c.l.b16 %v1309
    %v5527 = vunpack.c.h.b16 %v1309
    %v5528 = vunpack.c.l.b16 %v1310
    %v5529 = vunpack.c.h.b16 %v1310
    %v5530 = vunpack.c.l.b16 %v1311
    %v5531 = vunpack.c.h.b16 %v1311
    %v5532 = vunpack.c.l.b16 %v1312
    %v5533 = vunpack.c.h.b16 %v1312
    %v5534 = vunpack.c.l.b16 %v1313
    %v5535 = vunpack.c.h.b16 %v1313
    %v5536 = vunpack.c.l.b16 %v1314
    %v5537 = vunpack.c.h.b16 %v1314
    %v5538 = vunpack.c.l.b16 %v1315
    %v5539 = vunpack.c.h.b16 %v1315
    %v5540 = vunpack.c.l.b16 %v1316
    %v5541 = vunpack.c.h.b16 %v1316
    %v5542 = vunpack.c.l.b16 %v1317
    %v5543 = vunpack.c.h.b16 %v1317
    %v5544 = vunpack.c.l.b16 %v1318
    %v5545 = vunpack.c.h.b16 %v1318
    %v5546 = vunpack.c.l.b16 %v1319
    %v5547 = vunpack.c.h.b16 %v1319
    %v5548 = vunpack.c.l.b16 %v1320
    %v5549 = vunpack.c.h.b16 %v1320
    %v5550 = vunpack.c.l.b16 %v1321
    %v5551 = vunpack.c.h.b16 %v1321
    %v5552 = vunpack.c.l.b16 %v1322
    %v5553 = vunpack.c.h.b16 %v1322
    %v5554 = vunpack.c.l.b16 %v1323
    %v5555 = vunpack.c.h.b16 %v1323
    %v5556 = vunpack.c.l.b16 %v1324
    %v5557 = vunpack.c.h.b16 %v1324
    %v5558 = vunpack.c.l.b16 %v1325
    %v5559 = vunpack.c.h.b16 %v1325
    %v5560 = vunpack.c.l.b16 %v1326
    %v5561 = vunpack.c.h.b16 %v1326
    %v5562 = vunpack.c.l.b16 %v1327
    %v5563 = vunpack.c.h.b16 %v1327
    %v5564 = vunpack.c.l.b16 %v1328
    %v5565 = vunpack.c.h.b16 %v1328
    %v5566 = vunpack.c.l.b16 %v1329
    %v5567 = vunpack.c.h.b16 %v1329
    %v5568 = vunpack.c.l.b16 %v1330
    %v5569 = vunpack.c.h.b16 %v1330
    %v5570 = vunpack.c.l.b16 %v1331
    %v5571 = vunpack.c.h.b16 %v1331
    %v5572 = vunpack.c.l.b16 %v1332
    %v5573 = vunpack.c.h.b16 %v1332
    %v5574 = vunpack.c.l.b16 %v1333
    %v5575 = vunpack.c.h.b16 %v1333
    %v5576 = vunpack.c.l.b16 %v1334
    %v5577 = vunpack.c.h.b16 %v1334
    %v5578 = vunpack.c.l.b16 %v1335
    %v5579 = vunpack.c.h.b16 %v1335
    %v5580 = vunpack.c.l.b16 %v1336
    %v5581 = vunpack.c.h.b16 %v1336
    %v5582 = vunpack.c.l.b16 %v1337
    %v5583 = vunpack.c.h.b16 %v1337
    %v5584 = vunpack.c.l.b16 %v1338
    %v5585 = vunpack.c.h.b16 %v1338
    %v5586 = vunpack.c.l.b16 %v1339
    %v5587 = vunpack.c.h.b16 %v1339
    %v5588 = vunpack.c.l.b16 %v1340
    %v5589 = vunpack.c.h.b16 %v1340
    %v5590 = vunpack.c.l.b16 %v1341
    %v5591 = vunpack.c.h.b16 %v1341
    %v5592 = vunpack.c.l.b16 %v1342
    %v5593 = vunpack.c.h.b16 %v1342
    %v5594 = vunpack.c.l.b16 %v1343
    %v5595 = vunpack.c.h.b16 %v1343
    %v5596 = vunpack.c.l.b16 %v1344
    %v5597 = vunpack.c.h.b16 %v1344
    %v5598 = vunpack.c.l.b16 %v1345
    %v5599 = vunpack.c.h.b16 %v1345
    %v5600 = vunpack.c.l.b16 %v1346
    %v5601 = vunpack.c.h.b16 %v1346
    %v5602 = vunpack.c.l.b16 %v1347
    %v5603 = vunpack.c.h.b16 %v1347
    %v5604 = vunpack.c.l.b16 %v1348
    %v5605 = vunpack.c.h.b16 %v1348
    %v5606 = vunpack.c.l.b16 %v1349
    %v5607 = vunpack.c.h.b16 %v1349
    %v5608 = vunpack.c.l.b16 %v1350
    %v5609 = vunpack.c.h.b16 %v1350
    %v5610 = vunpack.c.l.b16 %v1351
    %v5611 = vunpack.c.h.b16 %v1351
    %v5612 = vunpack.c.l.b16 %v1352
    %v5613 = vunpack.c.h.b16 %v1352
    %v5614 = vunpack.c.l.b16 %v1353
    %v5615 = vunpack.c.h.b16 %v1353
    %v5616 = vunpack.c.l.b16 %v1354
    %v5617 = vunpack.c.h.b16 %v1354
    %v5618 = vunpack.c.l.b16 %v1355
    %v5619 = vunpack.c.h.b16 %v1355
    %v5620 = vunpack.c.l.b16 %v1356
    %v5621 = vunpack.c.h.b16 %v1356
    %v5622 = vunpack.c.l.b16 %v1357
    %v5623 = vunpack.c.h.b16 %v1357
    %v5624 = vunpack.c.l.b16 %v1358
    %v5625 = vunpack.c.h.b16 %v1358
    %v5626 = vunpack.c.l.b16 %v1359
    %v5627 = vunpack.c.h.b16 %v1359
    %v5628 = vunpack.c.l.b16 %v1360
    %v5629 = vunpack.c.h.b16 %v1360
    %v5630 = vunpack.c.l.b16 %v1361
    %v5631 = vunpack.c.h.b16 %v1361
    %v5632 = vunpack.c.l.b16 %v1362
    %v5633 = vunpack.c.h.b16 %v1362
    %v5634 = vunpack.c.l.b16 %v1363
    %v5635 = vunpack.c.h.b16 %v1363
    %v5636 = vunpack.c.l.b16 %v1364
    %v5637 = vunpack.c.h.b16 %v1364
    %v5638 = vunpack.c.l.b16 %v1365
    %v5639 = vunpack.c.h.b16 %v1365
    %v5640 = vunpack.c.l.b16 %v1366
    %v5641 = vunpack.c.h.b16 %v1366
    %v5642 = vunpack.c.l.b16 %v1367
    %v5643 = vunpack.c.h.b16 %v1367
    %v5644 = vunpack.c.l.b16 %v1368
    %v5645 = vunpack.c.h.b16 %v1368
    %v5646 = vunpack.c.l.b16 %v1369
    %v5647 = vunpack.c.h.b16 %v1369
    %v5648 = vunpack.c.l.b16 %v1370
    %v5649 = vunpack.c.h.b16 %v1370
    %v5650 = vunpack.c.l.b16 %v1371
    %v5651 = vunpack.c.h.b16 %v1371
    %v5652 = vunpack.c.l.b16 %v1372
    %v5653 = vunpack.c.h.b16 %v1372
    %v5654 = vunpack.c.l.b16 %v1373
    %v5655 = vunpack.c.h.b16 %v1373
    %v5656 = vunpack.c.l.b16 %v1374
    %v5657 = vunpack.c.h.b16 %v1374
    %v5658 = vunpack.c.l.b16 %v1375
    %v5659 = vunpack.c.h.b16 %v1375
    %v5660 = vunpack.c.l.b16 %v1376
    %v5661 = vunpack.c.h.b16 %v1376
    %v5662 = vunpack.c.l.b16 %v1377
    %v5663 = vunpack.c.h.b16 %v1377
    %v5664 = vunpack.c.l.b16 %v1378
    %v5665 = vunpack.c.h.b16 %v1378
    %v5666 = vunpack.c.l.b16 %v1379
    %v5667 = vunpack.c.h.b16 %v1379
    %v5668 = vunpack.c.l.b16 %v1380
    %v5669 = vunpack.c.h.b16 %v1380
    %v5670 = vunpack.c.l.b16 %v1381
    %v5671 = vunpack.c.h.b16 %v1381
    %v5672 = vunpack.c.l.b16 %v1382
    %v5673 = vunpack.c.h.b16 %v1382
    %v5674 = vunpack.c.l.b16 %v1383
    %v5675 = vunpack.c.h.b16 %v1383
    %v5676 = vunpack.c.l.b16 %v1384
    %v5677 = vunpack.c.h.b16 %v1384
    %v5678 = vunpack.c.l.b16 %v1385
    %v5679 = vunpack.c.h.b16 %v1385
    %v5680 = vunpack.c.l.b16 %v1386
    %v5681 = vunpack.c.h.b16 %v1386
    %v5682 = vunpack.c.l.b16 %v1387
    %v5683 = vunpack.c.h.b16 %v1387
    %v5684 = vunpack.c.l.b16 %v1388
    %v5685 = vunpack.c.h.b16 %v1388
    %v5686 = vunpack.c.l.b16 %v1389
    %v5687 = vunpack.c.h.b16 %v1389
    %v5688 = vunpack.c.l.b16 %v1390
    %v5689 = vunpack.c.h.b16 %v1390
    %v5690 = vunpack.c.l.b16 %v1391
    %v5691 = vunpack.c.h.b16 %v1391
    %v5692 = vunpack.c.l.b16 %v1392
    %v5693 = vunpack.c.h.b16 %v1392
    %v5694 = vunpack.c.l.b16 %v1393
    %v5695 = vunpack.c.h.b16 %v1393
    %v5696 = vunpack.c.l.b16 %v1394
    %v5697 = vunpack.c.h.b16 %v1394
    %v5698 = vunpack.c.l.b16 %v1395
    %v5699 = vunpack.c.h.b16 %v1395
    %v5700 = vunpack.c.l.b16 %v1396
    %v5701 = vunpack.c.h.b16 %v1396
    %v5702 = vunpack.c.l.b16 %v1397
    %v5703 = vunpack.c.h.b16 %v1397
    %v5704 = vunpack.c.l.b16 %v1398
    %v5705 = vunpack.c.h.b16 %v1398
    %v5706 = vunpack.c.l.b16 %v1399
    %v5707 = vunpack.c.h.b16 %v1399
    %v5708 = vunpack.c.l.b16 %v1400
    %v5709 = vunpack.c.h.b16 %v1400
    %v5710 = vunpack.c.l.b16 %v1401
    %v5711 = vunpack.c.h.b16 %v1401
    %v5712 = vunpack.c.l.b16 %v1402
    %v5713 = vunpack.c.h.b16 %v1402
    %v5714 = vunpack.c.l.b16 %v1403
    %v5715 = vunpack.c.h.b16 %v1403
    %v5716 = vunpack.c.l.b16 %v1404
    %v5717 = vunpack.c.h.b16 %v1404
    %v5718 = vunpack.c.l.b16 %v1405
    %v5719 = vunpack.c.h.b16 %v1405
    %v5720 = vunpack.c.l.b16 %v1406
    %v5721 = vunpack.c.h.b16 %v1406
    %v5722 = vunpack.c.l.b16 %v1407
    %v5723 = vunpack.c.h.b16 %v1407
    %v5724 = vunpack.c.l.b16 %v1408
    %v5725 = vunpack.c.h.b16 %v1408
    %v5726 = vunpack.c.l.b16 %v1409
    %v5727 = vunpack.c.h.b16 %v1409
    %v5728 = vunpack.c.l.b16 %v1410
    %v5729 = vunpack.c.h.b16 %v1410
    %v5730 = vunpack.c.l.b16 %v1411
    %v5731 = vunpack.c.h.b16 %v1411
    %v5732 = vunpack.c.l.b16 %v1412
    %v5733 = vunpack.c.h.b16 %v1412
    %v5734 = vunpack.c.l.b16 %v1413
    %v5735 = vunpack.c.h.b16 %v1413
    %v5736 = vunpack.c.l.b16 %v1414
    %v5737 = vunpack.c.h.b16 %v1414
    %v5738 = vunpack.c.l.b16 %v1415
    %v5739 = vunpack.c.h.b16 %v1415
    %v5740 = vunpack.c.l.b16 %v1416
    %v5741 = vunpack.c.h.b16 %v1416
    %v5742 = vunpack.c.l.b16 %v1417
    %v5743 = vunpack.c.h.b16 %v1417
    %v5744 = vunpack.c.l.b16 %v1418
    %v5745 = vunpack.c.h.b16 %v1418
    %v5746 = vunpack.c.l.b16 %v1419
    %v5747 = vunpack.c.h.b16 %v1419
    %v5748 = vunpack.c.l.b16 %v1420
    %v5749 = vunpack.c.h.b16 %v1420
    %v5750 = vunpack.c.l.b16 %v1421
    %v5751 = vunpack.c.h.b16 %v1421
    %v5752 = vunpack.c.l.b16 %v1422
    %v5753 = vunpack.c.h.b16 %v1422
    %v5754 = vunpack.c.l.b16 %v1423
    %v5755 = vunpack.c.h.b16 %v1423
    %v5756 = vunpack.c.l.b16 %v1424
    %v5757 = vunpack.c.h.b16 %v1424
    %v5758 = vunpack.c.l.b16 %v1425
    %v5759 = vunpack.c.h.b16 %v1425
    %v5760 = vunpack.c.l.b16 %v1426
    %v5761 = vunpack.c.h.b16 %v1426
    %v5762 = vunpack.c.l.b16 %v1427
    %v5763 = vunpack.c.h.b16 %v1427
    %v5764 = vunpack.c.l.b16 %v1428
    %v5765 = vunpack.c.h.b16 %v1428
    %v5766 = vunpack.c.l.b16 %v1429
    %v5767 = vunpack.c.h.b16 %v1429
    %v5768 = vunpack.c.l.b16 %v1430
    %v5769 = vunpack.c.h.b16 %v1430
    %v5770 = vunpack.c.l.b16 %v1431
    %v5771 = vunpack.c.h.b16 %v1431
    %v5772 = vunpack.c.l.b16 %v1432
    %v5773 = vunpack.c.h.b16 %v1432
    %v5774 = vunpack.c.l.b16 %v1433
    %v5775 = vunpack.c.h.b16 %v1433
    %v5776 = vunpack.c.l.b16 %v1434
    %v5777 = vunpack.c.h.b16 %v1434
    %v5778 = vunpack.c.l.b16 %v1435
    %v5779 = vunpack.c.h.b16 %v1435
    %v5780 = vunpack.c.l.b16 %v1436
    %v5781 = vunpack.c.h.b16 %v1436
    %v5782 = vunpack.c.l.b16 %v1437
    %v5783 = vunpack.c.h.b16 %v1437
    %v5784 = vunpack.c.l.b16 %v1438
    %v5785 = vunpack.c.h.b16 %v1438
    %v5786 = vunpack.c.l.b16 %v1439
    %v5787 = vunpack.c.h.b16 %v1439
    %v5788 = vunpack.c.l.b16 %v1440
    %v5789 = vunpack.c.h.b16 %v1440
    %v5790 = vunpack.c.l.b16 %v1441
    %v5791 = vunpack.c.h.b16 %v1441
    %v5792 = vunpack.c.l.b16 %v1442
    %v5793 = vunpack.c.h.b16 %v1442
    %v5794 = vunpack.c.l.b16 %v1443
    %v5795 = vunpack.c.h.b16 %v1443
    %v5796 = vunpack.c.l.b16 %v1444
    %v5797 = vunpack.c.h.b16 %v1444
    %v5798 = vunpack.c.l.b16 %v1445
    %v5799 = vunpack.c.h.b16 %v1445
    %v5800 = vunpack.c.l.b16 %v1446
    %v5801 = vunpack.c.h.b16 %v1446
    %v5802 = vunpack.c.l.b16 %v1447
    %v5803 = vunpack.c.h.b16 %v1447
    %v5804 = vunpack.c.l.b16 %v1448
    %v5805 = vunpack.c.h.b16 %v1448
    %v5806 = vunpack.c.l.b16 %v1449
    %v5807 = vunpack.c.h.b16 %v1449
    %v5808 = vunpack.c.l.b16 %v1450
    %v5809 = vunpack.c.h.b16 %v1450
    %v5810 = vunpack.c.l.b16 %v1451
    %v5811 = vunpack.c.h.b16 %v1451
    %v5812 = vunpack.c.l.b16 %v1452
    %v5813 = vunpack.c.h.b16 %v1452
    %v5814 = vunpack.c.l.b16 %v1453
    %v5815 = vunpack.c.h.b16 %v1453
    %v5816 = vunpack.c.l.b16 %v1454
    %v5817 = vunpack.c.h.b16 %v1454
    %v5818 = vunpack.c.l.b16 %v1455
    %v5819 = vunpack.c.h.b16 %v1455
    %v5820 = vunpack.c.l.b16 %v1456
    %v5821 = vunpack.c.h.b16 %v1456
    %v5822 = vunpack.c.l.b16 %v1457
    %v5823 = vunpack.c.h.b16 %v1457
    %v5824 = vunpack.c.l.b16 %v1458
    %v5825 = vunpack.c.h.b16 %v1458
    %v5826 = vunpack.c.l.b16 %v1459
    %v5827 = vunpack.c.h.b16 %v1459
    %v5828 = vunpack.c.l.b16 %v1460
    %v5829 = vunpack.c.h.b16 %v1460
    %v5830 = vunpack.c.l.b16 %v1461
    %v5831 = vunpack.c.h.b16 %v1461
    %v5832 = vunpack.c.l.b16 %v1462
    %v5833 = vunpack.c.h.b16 %v1462
    %v5834 = vunpack.c.l.b16 %v1463
    %v5835 = vunpack.c.h.b16 %v1463
    %v5836 = vunpack.c.l.b16 %v1464
    %v5837 = vunpack.c.h.b16 %v1464
    %v5838 = vunpack.c.l.b16 %v1465
    %v5839 = vunpack.c.h.b16 %v1465
    %v5840 = vunpack.c.l.b16 %v1466
    %v5841 = vunpack.c.h.b16 %v1466
    %v5842 = vunpack.c.l.b16 %v1467
    %v5843 = vunpack.c.h.b16 %v1467
    %v5844 = vunpack.c.l.b16 %v1468
    %v5845 = vunpack.c.h.b16 %v1468
    %v5846 = vunpack.c.l.b16 %v1469
    %v5847 = vunpack.c.h.b16 %v1469
    %v5848 = vunpack.c.l.b16 %v1470
    %v5849 = vunpack.c.h.b16 %v1470
    %v5850 = vunpack.c.l.b16 %v1471
    %v5851 = vunpack.c.h.b16 %v1471
    %v5852 = vunpack.c.l.b16 %v1472
    %v5853 = vunpack.c.h.b16 %v1472
    %v5854 = vunpack.c.l.b16 %v1473
    %v5855 = vunpack.c.h.b16 %v1473
    %v5856 = vunpack.c.l.b16 %v1474
    %v5857 = vunpack.c.h.b16 %v1474
    %v5858 = vunpack.c.l.b16 %v1475
    %v5859 = vunpack.c.h.b16 %v1475
    %v5860 = vunpack.c.l.b16 %v1476
    %v5861 = vunpack.c.h.b16 %v1476
    %v5862 = vunpack.c.l.b16 %v1477
    %v5863 = vunpack.c.h.b16 %v1477
    %v5864 = vunpack.c.l.b16 %v1478
    %v5865 = vunpack.c.h.b16 %v1478
    %v5866 = vunpack.c.l.b16 %v1479
    %v5867 = vunpack.c.h.b16 %v1479
    %v5868 = vunpack.c.l.b16 %v1480
    %v5869 = vunpack.c.h.b16 %v1480
    %v5870 = vunpack.c.l.b16 %v1481
    %v5871 = vunpack.c.h.b16 %v1481
    %v5872 = vunpack.c.l.b16 %v1482
    %v5873 = vunpack.c.h.b16 %v1482
    %v5874 = vunpack.c.l.b16 %v1483
    %v5875 = vunpack.c.h.b16 %v1483
    %v5876 = vunpack.c.l.b16 %v1484
    %v5877 = vunpack.c.h.b16 %v1484
    %v5878 = vunpack.c.l.b16 %v1485
    %v5879 = vunpack.c.h.b16 %v1485
    %v5880 = vunpack.c.l.b16 %v1486
    %v5881 = vunpack.c.h.b16 %v1486
    %v5882 = vunpack.c.l.b16 %v1487
    %v5883 = vunpack.c.h.b16 %v1487
    %v5884 = vunpack.c.l.b16 %v1488
    %v5885 = vunpack.c.h.b16 %v1488
    %v5886 = vunpack.c.l.b16 %v1489
    %v5887 = vunpack.c.h.b16 %v1489
    %v5888 = vunpack.c.l.b16 %v1490
    %v5889 = vunpack.c.h.b16 %v1490
    %v5890 = vunpack.c.l.b16 %v1491
    %v5891 = vunpack.c.h.b16 %v1491
    %v5892 = vunpack.c.l.b16 %v1492
    %v5893 = vunpack.c.h.b16 %v1492
    %v5894 = vunpack.c.l.b16 %v1493
    %v5895 = vunpack.c.h.b16 %v1493
    %v5896 = vunpack.c.l.b16 %v1494
    %v5897 = vunpack.c.h.b16 %v1494
    %v5898 = vunpack.c.l.b16 %v1495
    %v5899 = vunpack.c.h.b16 %v1495
    %v5900 = vunpack.c.l.b16 %v1496
    %v5901 = vunpack.c.h.b16 %v1496
    %v5902 = vunpack.c.l.b16 %v1497
    %v5903 = vunpack.c.h.b16 %v1497
    %v5904 = vunpack.c.l.b16 %v1498
    %v5905 = vunpack.c.h.b16 %v1498
    %v5906 = vunpack.c.l.b16 %v1499
    %v5907 = vunpack.c.h.b16 %v1499
    %v5908 = vunpack.c.l.b16 %v1500
    %v5909 = vunpack.c.h.b16 %v1500
    %v5910 = vunpack.c.l.b16 %v1501
    %v5911 = vunpack.c.h.b16 %v1501
    %v5912 = vunpack.c.l.b16 %v1502
    %v5913 = vunpack.c.h.b16 %v1502
    %v5914 = vunpack.c.l.b16 %v1503
    %v5915 = vunpack.c.h.b16 %v1503
    %v5916 = vunpack.c.l.b16 %v1504
    %v5917 = vunpack.c.h.b16 %v1504
    %v5918 = vunpack.c.l.b16 %v1505
    %v5919 = vunpack.c.h.b16 %v1505
    %v5920 = vunpack.c.l.b16 %v1506
    %v5921 = vunpack.c.h.b16 %v1506
    %v5922 = vunpack.c.l.b16 %v1507
    %v5923 = vunpack.c.h.b16 %v1507
    %v5924 = vunpack.c.l.b16 %v1508
    %v5925 = vunpack.c.h.b16 %v1508
    %v5926 = vunpack.c.l.b16 %v1509
    %v5927 = vunpack.c.h.b16 %v1509
    %v5928 = vunpack.c.l.b16 %v1510
    %v5929 = vunpack.c.h.b16 %v1510
    %v5930 = vunpack.c.l.b16 %v1511
    %v5931 = vunpack.c.h.b16 %v1511
    %v5932 = vunpack.c.l.b16 %v1512
    %v5933 = vunpack.c.h.b16 %v1512
    %v5934 = vunpack.c.l.b16 %v1513
    %v5935 = vunpack.c.h.b16 %v1513
    %v5936 = vunpack.c.l.b16 %v1514
    %v5937 = vunpack.c.h.b16 %v1514
    %v5938 = vunpack.c.l.b16 %v1515
    %v5939 = vunpack.c.h.b16 %v1515
    %v5940 = vunpack.c.l.b16 %v1516
    %v5941 = vunpack.c.h.b16 %v1516
    %v5942 = vunpack.c.l.b16 %v1517
    %v5943 = vunpack.c.h.b16 %v1517
    %v5944 = vunpack.c.l.b16 %v1518
    %v5945 = vunpack.c.h.b16 %v1518
    %v5946 = vunpack.c.l.b16 %v1519
    %v5947 = vunpack.c.h.b16 %v1519
    %v5948 = vunpack.c.l.b16 %v1520
    %v5949 = vunpack.c.h.b16 %v1520
    %v5950 = vunpack.c.l.b16 %v1521
    %v5951 = vunpack.c.h.b16 %v1521
    %v5952 = vunpack.c.l.b16 %v1522
    %v5953 = vunpack.c.h.b16 %v1522
    %v5954 = vunpack.c.l.b16 %v1523
    %v5955 = vunpack.c.h.b16 %v1523
    %v5956 = vunpack.c.l.b16 %v1524
    %v5957 = vunpack.c.h.b16 %v1524
    %v5958 = vunpack.c.l.b16 %v1525
    %v5959 = vunpack.c.h.b16 %v1525
    %v5960 = vunpack.c.l.b16 %v1526
    %v5961 = vunpack.c.h.b16 %v1526
    %v5962 = vunpack.c.l.b16 %v1527
    %v5963 = vunpack.c.h.b16 %v1527
    %v5964 = vunpack.c.l.b16 %v1528
    %v5965 = vunpack.c.h.b16 %v1528
    %v5966 = vunpack.c.l.b16 %v1529
    %v5967 = vunpack.c.h.b16 %v1529
    %v5968 = vunpack.c.l.b16 %v1530
    %v5969 = vunpack.c.h.b16 %v1530
    %v5970 = vunpack.c.l.b16 %v1531
    %v5971 = vunpack.c.h.b16 %v1531
    %v5972 = vunpack.c.l.b16 %v1532
    %v5973 = vunpack.c.h.b16 %v1532
    %v5974 = vunpack.c.l.b16 %v1533
    %v5975 = vunpack.c.h.b16 %v1533
    %v5976 = vunpack.c.l.b16 %v1534
    %v5977 = vunpack.c.h.b16 %v1534
    %v5978 = vunpack.c.l.b16 %v1535
    %v5979 = vunpack.c.h.b16 %v1535
    %v5980 = vunpack.c.l.b16 %v1536
    %v5981 = vunpack.c.h.b16 %v1536
    %v5982 = vunpack.c.l.b16 %v1537
    %v5983 = vunpack.c.h.b16 %v1537
    %v5984 = vunpack.c.l.b16 %v1538
    %v5985 = vunpack.c.h.b16 %v1538
    %v5986 = vunpack.c.l.b16 %v1539
    %v5987 = vunpack.c.h.b16 %v1539
    %v5988 = vunpack.c.l.b16 %v1540
    %v5989 = vunpack.c.h.b16 %v1540
    %v5990 = vunpack.c.l.b16 %v1541
    %v5991 = vunpack.c.h.b16 %v1541
    %v5992 = vunpack.c.l.b16 %v1542
    %v5993 = vunpack.c.h.b16 %v1542
    %v5994 = vunpack.c.l.b16 %v1543
    %v5995 = vunpack.c.h.b16 %v1543
    %v5996 = vunpack.c.l.b16 %v1544
    %v5997 = vunpack.c.h.b16 %v1544
    %v5998 = vunpack.c.l.b16 %v1545
    %v5999 = vunpack.c.h.b16 %v1545
    %v6000 = vunpack.c.l.b16 %v1546
    %v6001 = vunpack.c.h.b16 %v1546
    %v6002 = vunpack.c.l.b16 %v1547
    %v6003 = vunpack.c.h.b16 %v1547
    %v6004 = vunpack.c.l.b16 %v1548
    %v6005 = vunpack.c.h.b16 %v1548
    %v6006 = vunpack.c.l.b16 %v1549
    %v6007 = vunpack.c.h.b16 %v1549
    %v6008 = vunpack.c.l.b16 %v1550
    %v6009 = vunpack.c.h.b16 %v1550
    %v6010 = vunpack.c.l.b16 %v1551
    %v6011 = vunpack.c.h.b16 %v1551
    %v6012 = vunpack.c.l.b16 %v1552
    %v6013 = vunpack.c.h.b16 %v1552
    %v6014 = vunpack.c.l.b16 %v1553
    %v6015 = vunpack.c.h.b16 %v1553
    %v6016 = vunpack.c.l.b16 %v1554
    %v6017 = vunpack.c.h.b16 %v1554
    %v6018 = vunpack.c.l.b16 %v1555
    %v6019 = vunpack.c.h.b16 %v1555
    %v6020 = vunpack.c.l.b16 %v1556
    %v6021 = vunpack.c.h.b16 %v1556
    %v6022 = vunpack.c.l.b16 %v1557
    %v6023 = vunpack.c.h.b16 %v1557
    %v6024 = vunpack.c.l.b16 %v1558
    %v6025 = vunpack.c.h.b16 %v1558
    %v6026 = vunpack.c.l.b16 %v1559
    %v6027 = vunpack.c.h.b16 %v1559
    %v6028 = vunpack.c.l.b16 %v1560
    %v6029 = vunpack.c.h.b16 %v1560
    %v6030 = vunpack.c.l.b16 %v1561
    %v6031 = vunpack.c.h.b16 %v1561
    %v6032 = vunpack.c.l.b16 %v1562
    %v6033 = vunpack.c.h.b16 %v1562
    %v6034 = vunpack.c.l.b16 %v1563
    %v6035 = vunpack.c.h.b16 %v1563
    %v6036 = vunpack.c.l.b16 %v1564
    %v6037 = vunpack.c.h.b16 %v1564
    %v6038 = vunpack.c.l.b16 %v1565
    %v6039 = vunpack.c.h.b16 %v1565
    %v6040 = vunpack.c.l.b16 %v1566
    %v6041 = vunpack.c.h.b16 %v1566
    %v6042 = vunpack.c.l.b16 %v1567
    %v6043 = vunpack.c.h.b16 %v1567
    %v6044 = vunpack.c.l.b16 %v1568
    %v6045 = vunpack.c.h.b16 %v1568
    %v6046 = vunpack.c.l.b16 %v1569
    %v6047 = vunpack.c.h.b16 %v1569
    %v6048 = vunpack.c.l.b16 %v1570
    %v6049 = vunpack.c.h.b16 %v1570
    %v6050 = vunpack.c.l.b16 %v1571
    %v6051 = vunpack.c.h.b16 %v1571
    %v6052 = vunpack.c.l.b16 %v1572
    %v6053 = vunpack.c.h.b16 %v1572
    %v6054 = vunpack.c.l.b16 %v1573
    %v6055 = vunpack.c.h.b16 %v1573
    %v6056 = vunpack.c.l.b16 %v1574
    %v6057 = vunpack.c.h.b16 %v1574
    %v6058 = vunpack.c.l.b16 %v1575
    %v6059 = vunpack.c.h.b16 %v1575
    %v6060 = vunpack.c.l.b16 %v1576
    %v6061 = vunpack.c.h.b16 %v1576
    %v6062 = vunpack.c.l.b16 %v1577
    %v6063 = vunpack.c.h.b16 %v1577
    %v6064 = vunpack.c.l.b16 %v1578
    %v6065 = vunpack.c.h.b16 %v1578
    %v6066 = vunpack.c.l.b16 %v1579
    %v6067 = vunpack.c.h.b16 %v1579
    %v6068 = vunpack.c.l.b16 %v1580
    %v6069 = vunpack.c.h.b16 %v1580
    %v6070 = vunpack.c.l.b16 %v1581
    %v6071 = vunpack.c.h.b16 %v1581
    %v6072 = vunpack.c.l.b16 %v1582
    %v6073 = vunpack.c.h.b16 %v1582
    %v6074 = vunpack.c.l.b16 %v1583
    %v6075 = vunpack.c.h.b16 %v1583
    %v6076 = vunpack.c.l.b16 %v1584
    %v6077 = vunpack.c.h.b16 %v1584
    %v6078 = vunpack.c.l.b16 %v1585
    %v6079 = vunpack.c.h.b16 %v1585
    %v6080 = vunpack.c.l.b16 %v1586
    %v6081 = vunpack.c.h.b16 %v1586
    %v6082 = vunpack.c.l.b16 %v1587
    %v6083 = vunpack.c.h.b16 %v1587
    %v6084 = vunpack.c.l.b16 %v1588
    %v6085 = vunpack.c.h.b16 %v1588
    %v6086 = vunpack.c.l.b16 %v1589
    %v6087 = vunpack.c.h.b16 %v1589
    %v6088 = vunpack.c.l.b16 %v1590
    %v6089 = vunpack.c.h.b16 %v1590
    %v6090 = vunpack.c.l.b16 %v1591
    %v6091 = vunpack.c.h.b16 %v1591
    %v6092 = vunpack.c.l.b16 %v1592
    %v6093 = vunpack.c.h.b16 %v1592
    %v6094 = vunpack.c.l.b16 %v1593
    %v6095 = vunpack.c.h.b16 %v1593
    %v6096 = vunpack.c.l.b16 %v1594
    %v6097 = vunpack.c.h.b16 %v1594
    %v6098 = vunpack.c.l.b16 %v1595
    %v6099 = vunpack.c.h.b16 %v1595
    %v6100 = vunpack.c.l.b16 %v1596
    %v6101 = vunpack.c.h.b16 %v1596
    %v6102 = vunpack.c.l.b16 %v1597
    %v6103 = vunpack.c.h.b16 %v1597
    %v6104 = vunpack.c.l.b16 %v1598
    %v6105 = vunpack.c.h.b16 %v1598
    %v6106 = vunpack.c.l.b16 %v1599
    %v6107 = vunpack.c.h.b16 %v1599
    %v6108 = vunpack.c.l.b16 %v1600
    %v6109 = vunpack.c.h.b16 %v1600
    %v6110 = vunpack.c.l.b16 %v1601
    %v6111 = vunpack.c.h.b16 %v1601
    %v6112 = vunpack.c.l.b16 %v1602
    %v6113 = vunpack.c.h.b16 %v1602
    %v6114 = vunpack.c.l.b16 %v1603
    %v6115 = vunpack.c.h.b16 %v1603
    %v6116 = vunpack.c.l.b16 %v1604
    %v6117 = vunpack.c.h.b16 %v1604
    %v6118 = vunpack.c.l.b16 %v1605
    %v6119 = vunpack.c.h.b16 %v1605
    %v6120 = vunpack.c.l.b16 %v1606
    %v6121 = vunpack.c.h.b16 %v1606
    %v6122 = vunpack.c.l.b16 %v1607
    %v6123 = vunpack.c.h.b16 %v1607
    %v6124 = vunpack.c.l.b16 %v1608
    %v6125 = vunpack.c.h.b16 %v1608
    %v6126 = vunpack.c.l.b16 %v1609
    %v6127 = vunpack.c.h.b16 %v1609
    %v6128 = vunpack.c.l.b16 %v1610
    %v6129 = vunpack.c.h.b16 %v1610
    %v6130 = vunpack.c.l.b16 %v1611
    %v6131 = vunpack.c.h.b16 %v1611
    %v6132 = vunpack.c.l.b16 %v1612
    %v6133 = vunpack.c.h.b16 %v1612
    %v6134 = vunpack.c.l.b16 %v1613
    %v6135 = vunpack.c.h.b16 %v1613
    %v6136 = vunpack.c.l.b16 %v1614
    %v6137 = vunpack.c.h.b16 %v1614
    %v6138 = vunpack.c.l.b16 %v1615
    %v6139 = vunpack.c.h.b16 %v1615
    %v6140 = vunpack.c.l.b16 %v1616
    %v6141 = vunpack.c.h.b16 %v1616
    %v6142 = vunpack.c.l.b16 %v1617
    %v6143 = vunpack.c.h.b16 %v1617
    %v6144 = vunpack.c.l.b16 %v1618
    %v6145 = vunpack.c.h.b16 %v1618
    %v6146 = vunpack.c.l.b16 %v1619
    %v6147 = vunpack.c.h.b16 %v1619
    %v6148 = vunpack.c.l.b16 %v1620
    %v6149 = vunpack.c.h.b16 %v1620
    %v6150 = vunpack.c.l.b16 %v1621
    %v6151 = vunpack.c.h.b16 %v1621
    %v6152 = vunpack.c.l.b16 %v1622
    %v6153 = vunpack.c.h.b16 %v1622
    %v6154 = vunpack.c.l.b16 %v1623
    %v6155 = vunpack.c.h.b16 %v1623
    %v6156 = vunpack.c.l.b16 %v1624
    %v6157 = vunpack.c.h.b16 %v1624
    %v6158 = vunpack.c.l.b16 %v1625
    %v6159 = vunpack.c.h.b16 %v1625
    %v6160 = vunpack.c.l.b16 %v1626
    %v6161 = vunpack.c.h.b16 %v1626
    %v6162 = vunpack.c.l.b16 %v1627
    %v6163 = vunpack.c.h.b16 %v1627
    %v6164 = vunpack.c.l.b16 %v1628
    %v6165 = vunpack.c.h.b16 %v1628
    %v6166 = vunpack.c.l.b16 %v1629
    %v6167 = vunpack.c.h.b16 %v1629
    %v6168 = vunpack.c.l.b16 %v1630
    %v6169 = vunpack.c.h.b16 %v1630
    %v6170 = vunpack.c.l.b16 %v1631
    %v6171 = vunpack.c.h.b16 %v1631
    %v6172 = vunpack.c.l.b16 %v1632
    %v6173 = vunpack.c.h.b16 %v1632
    %v6174 = vunpack.c.l.b16 %v1633
    %v6175 = vunpack.c.h.b16 %v1633
    %v6176 = vunpack.c.l.b16 %v1634
    %v6177 = vunpack.c.h.b16 %v1634
    %v6178 = vunpack.c.l.b16 %v1635
    %v6179 = vunpack.c.h.b16 %v1635
    %v6180 = vunpack.c.l.b16 %v1636
    %v6181 = vunpack.c.h.b16 %v1636
    %v6182 = vunpack.c.l.b16 %v1637
    %v6183 = vunpack.c.h.b16 %v1637
    %v6184 = vunpack.c.l.b16 %v1638
    %v6185 = vunpack.c.h.b16 %v1638
    %v6186 = vunpack.c.l.b16 %v1639
    %v6187 = vunpack.c.h.b16 %v1639
    %v6188 = vunpack.c.l.b16 %v1640
    %v6189 = vunpack.c.h.b16 %v1640
    %v6190 = vunpack.c.l.b16 %v1641
    %v6191 = vunpack.c.h.b16 %v1641
    %v6192 = vunpack.c.l.b16 %v1642
    %v6193 = vunpack.c.h.b16 %v1642
    %v6194 = vunpack.c.l.b16 %v1643
    %v6195 = vunpack.c.h.b16 %v1643
    %v6196 = vunpack.c.l.b16 %v1644
    %v6197 = vunpack.c.h.b16 %v1644
    %v6198 = vunpack.c.l.b16 %v1645
    %v6199 = vunpack.c.h.b16 %v1645
    %v6200 = vunpack.c.l.b16 %v1646
    %v6201 = vunpack.c.h.b16 %v1646
    %v6202 = vunpack.c.l.b16 %v1647
    %v6203 = vunpack.c.h.b16 %v1647
    %v6204 = vunpack.c.l.b16 %v1648
    %v6205 = vunpack.c.h.b16 %v1648
    %v6206 = vunpack.c.l.b16 %v1649
    %v6207 = vunpack.c.h.b16 %v1649
    %v6208 = vunpack.c.l.b16 %v1650
    %v6209 = vunpack.c.h.b16 %v1650
    %v6210 = vunpack.c.l.b16 %v1651
    %v6211 = vunpack.c.h.b16 %v1651
    %v6212 = vunpack.c.l.b16 %v1652
    %v6213 = vunpack.c.h.b16 %v1652
    %v6214 = vunpack.c.l.b16 %v1653
    %v6215 = vunpack.c.h.b16 %v1653
    %v6216 = vunpack.c.l.b16 %v1654
    %v6217 = vunpack.c.h.b16 %v1654
    %v6218 = vunpack.c.l.b16 %v1655
    %v6219 = vunpack.c.h.b16 %v1655
    %v6220 = vunpack.c.l.b16 %v1656
    %v6221 = vunpack.c.h.b16 %v1656
    %v6222 = vunpack.c.l.b16 %v1657
    %v6223 = vunpack.c.h.b16 %v1657
    %v6224 = vunpack.c.l.b16 %v1658
    %v6225 = vunpack.c.h.b16 %v1658
    %v6226 = vunpack.c.l.b16 %v1659
    %v6227 = vunpack.c.h.b16 %v1659
    %v6228 = vunpack.c.l.b16 %v1660
    %v6229 = vunpack.c.h.b16 %v1660
    %v6230 = vunpack.c.l.b16 %v1661
    %v6231 = vunpack.c.h.b16 %v1661
    %v6232 = vunpack.c.l.b16 %v1662
    %v6233 = vunpack.c.h.b16 %v1662
    %v6234 = vunpack.c.l.b16 %v1663
    %v6235 = vunpack.c.h.b16 %v1663
    %v6236 = vunpack.c.l.b16 %v1664
    %v6237 = vunpack.c.h.b16 %v1664
    %v6238 = vunpack.c.l.b16 %v1665
    %v6239 = vunpack.c.h.b16 %v1665
    %v6240 = vunpack.c.l.b16 %v1666
    %v6241 = vunpack.c.h.b16 %v1666
    %v6242 = vunpack.c.l.b16 %v1667
    %v6243 = vunpack.c.h.b16 %v1667
    %v6244 = vunpack.c.l.b16 %v1668
    %v6245 = vunpack.c.h.b16 %v1668
    %v6246 = vunpack.c.l.b16 %v1669
    %v6247 = vunpack.c.h.b16 %v1669
    %v6248 = vunpack.c.l.b16 %v1670
    %v6249 = vunpack.c.h.b16 %v1670
    %v6250 = vunpack.c.l.b16 %v1671
    %v6251 = vunpack.c.h.b16 %v1671
    %v6252 = vunpack.c.l.b16 %v1672
    %v6253 = vunpack.c.h.b16 %v1672
    %v6254 = vunpack.c.l.b16 %v1673
    %v6255 = vunpack.c.h.b16 %v1673
    %v6256 = vunpack.c.l.b16 %v1674
    %v6257 = vunpack.c.h.b16 %v1674
    %v6258 = vunpack.c.l.b16 %v1675
    %v6259 = vunpack.c.h.b16 %v1675
    %v6260 = vunpack.c.l.b16 %v1676
    %v6261 = vunpack.c.h.b16 %v1676
    %v6262 = vunpack.c.l.b16 %v1677
    %v6263 = vunpack.c.h.b16 %v1677
    %v6264 = vunpack.c.l.b16 %v1678
    %v6265 = vunpack.c.h.b16 %v1678
    %v6266 = vunpack.c.l.b16 %v1679
    %v6267 = vunpack.c.h.b16 %v1679
    %v6268 = vunpack.c.l.b16 %v1680
    %v6269 = vunpack.c.h.b16 %v1680
    %v6270 = vunpack.c.l.b16 %v1681
    %v6271 = vunpack.c.h.b16 %v1681
    %v6272 = vunpack.c.l.b16 %v1682
    %v6273 = vunpack.c.h.b16 %v1682
    %v6274 = vunpack.c.l.b16 %v1683
    %v6275 = vunpack.c.h.b16 %v1683
    %v6276 = vunpack.c.l.b16 %v1684
    %v6277 = vunpack.c.h.b16 %v1684
    %v6278 = vunpack.c.l.b16 %v1685
    %v6279 = vunpack.c.h.b16 %v1685
    %v6280 = vunpack.c.l.b16 %v1686
    %v6281 = vunpack.c.h.b16 %v1686
    %v6282 = vunpack.c.l.b16 %v1687
    %v6283 = vunpack.c.h.b16 %v1687
    %v6284 = vunpack.c.l.b16 %v1688
    %v6285 = vunpack.c.h.b16 %v1688
    %v6286 = vunpack.c.l.b16 %v1689
    %v6287 = vunpack.c.h.b16 %v1689
    %v6288 = vunpack.c.l.b16 %v1690
    %v6289 = vunpack.c.h.b16 %v1690
    %v6290 = vunpack.c.l.b16 %v1691
    %v6291 = vunpack.c.h.b16 %v1691
    %v6292 = vunpack.c.l.b16 %v1692
    %v6293 = vunpack.c.h.b16 %v1692
    %v6294 = vunpack.c.l.b16 %v1693
    %v6295 = vunpack.c.h.b16 %v1693
    %v6296 = vunpack.c.l.b16 %v1694
    %v6297 = vunpack.c.h.b16 %v1694
    %v6298 = vunpack.c.l.b16 %v1695
    %v6299 = vunpack.c.h.b16 %v1695
    %v6300 = vunpack.c.l.b16 %v1696
    %v6301 = vunpack.c.h.b16 %v1696
    %v6302 = vunpack.c.l.b16 %v1697
    %v6303 = vunpack.c.h.b16 %v1697
    %v6304 = vunpack.c.l.b16 %v1698
    %v6305 = vunpack.c.h.b16 %v1698
    %v6306 = vunpack.c.l.b16 %v1699
    %v6307 = vunpack.c.h.b16 %v1699
    %v6308 = vunpack.c.l.b16 %v1700
    %v6309 = vunpack.c.h.b16 %v1700
    %v6310 = vunpack.c.l.b16 %v1701
    %v6311 = vunpack.c.h.b16 %v1701
    %v6312 = vunpack.c.l.b16 %v1702
    %v6313 = vunpack.c.h.b16 %v1702
    %v6314 = vunpack.c.l.b16 %v1703
    %v6315 = vunpack.c.h.b16 %v1703
    %v6316 = vunpack.c.l.b16 %v1704
    %v6317 = vunpack.c.h.b16 %v1704
    %v6318 = vunpack.c.l.b16 %v1705
    %v6319 = vunpack.c.h.b16 %v1705
    %v6320 = vunpack.c.l.b16 %v1706
    %v6321 = vunpack.c.h.b16 %v1706
    %v6322 = vunpack.c.l.b16 %v1707
    %v6323 = vunpack.c.h.b16 %v1707
    %v6324 = vunpack.c.l.b16 %v1708
    %v6325 = vunpack.c.h.b16 %v1708
    %v6326 = vunpack.c.l.b16 %v1709
    %v6327 = vunpack.c.h.b16 %v1709
    %v6328 = vunpack.c.l.b16 %v1710
    %v6329 = vunpack.c.h.b16 %v1710
    %v6330 = vunpack.c.l.b16 %v1711
    %v6331 = vunpack.c.h.b16 %v1711
    %v6332 = vunpack.c.l.b16 %v1712
    %v6333 = vunpack.c.h.b16 %v1712
    %v6334 = vunpack.c.l.b16 %v1713
    %v6335 = vunpack.c.h.b16 %v1713
    %v6336 = vunpack.c.l.b16 %v1714
    %v6337 = vunpack.c.h.b16 %v1714
    %v6338 = vunpack.c.l.b16 %v1715
    %v6339 = vunpack.c.h.b16 %v1715
    %v6340 = vunpack.c.l.b16 %v1716
    %v6341 = vunpack.c.h.b16 %v1716
    %v6342 = vunpack.c.l.b16 %v1717
    %v6343 = vunpack.c.h.b16 %v1717
    %v6344 = vunpack.c.l.b16 %v1718
    %v6345 = vunpack.c.h.b16 %v1718
    %v6346 = vunpack.c.l.b16 %v1719
    %v6347 = vunpack.c.h.b16 %v1719
    %v6348 = vunpack.c.l.b16 %v1720
    %v6349 = vunpack.c.h.b16 %v1720
    %v6350 = vunpack.c.l.b16 %v1721
    %v6351 = vunpack.c.h.b16 %v1721
    %v6352 = vunpack.c.l.b16 %v1722
    %v6353 = vunpack.c.h.b16 %v1722
    %v6354 = vunpack.c.l.b16 %v1723
    %v6355 = vunpack.c.h.b16 %v1723
    %v6356 = vunpack.c.l.b16 %v1724
    %v6357 = vunpack.c.h.b16 %v1724
    %v6358 = vunpack.c.l.b16 %v1725
    %v6359 = vunpack.c.h.b16 %v1725
    %v6360 = vunpack.c.l.b16 %v1726
    %v6361 = vunpack.c.h.b16 %v1726
    %v6362 = vunpack.c.l.b16 %v1727
    %v6363 = vunpack.c.h.b16 %v1727
    %v6364 = vunpack.c.l.b16 %v1728
    %v6365 = vunpack.c.h.b16 %v1728
    %v6366 = vunpack.c.l.b16 %v1729
    %v6367 = vunpack.c.h.b16 %v1729
    %v6368 = vunpack.c.l.b16 %v1730
    %v6369 = vunpack.c.h.b16 %v1730
    %v6370 = vunpack.c.l.b16 %v1731
    %v6371 = vunpack.c.h.b16 %v1731
    %v6372 = vunpack.c.l.b16 %v1732
    %v6373 = vunpack.c.h.b16 %v1732
    %v6374 = vunpack.c.l.b16 %v1733
    %v6375 = vunpack.c.h.b16 %v1733
    %v6376 = vunpack.c.l.b16 %v1734
    %v6377 = vunpack.c.h.b16 %v1734
    %v6378 = vunpack.c.l.b16 %v1735
    %v6379 = vunpack.c.h.b16 %v1735
    %v6380 = vunpack.c.l.b16 %v1736
    %v6381 = vunpack.c.h.b16 %v1736
    %v6382 = vunpack.c.l.b16 %v1737
    %v6383 = vunpack.c.h.b16 %v1737
    %v6384 = vunpack.c.l.b16 %v1738
    %v6385 = vunpack.c.h.b16 %v1738
    %v6386 = vunpack.c.l.b16 %v1739
    %v6387 = vunpack.c.h.b16 %v1739
    %v6388 = vunpack.c.l.b16 %v1740
    %v6389 = vunpack.c.h.b16 %v1740
    %v6390 = vunpack.c.l.b16 %v1741
    %v6391 = vunpack.c.h.b16 %v1741
    %v6392 = vpack.c.b16 %v3328, %v3320
    %v6393 = vpack.c.b16 %v3329, %v3321
    %v6394 = vpack.c.b16 %v3330, %v3322
    %v6395 = vpack.c.b16 %v3331, %v3323
    %v6396 = vpack.c.b16 %v3332, %v3324
    %v6397 = vpack.c.b16 %v3333, %v3325
    %v6398 = vpack.c.b16 %v3334, %v3326
    %v6399 = vpack.c.b16 %v3335, %v3327
    %v6400 = vpack.c.b16 %v3344, %v3336
    %v6401 = vpack.c.b16 %v3345, %v3337
    %v6402 = vpack.c.b16 %v3346, %v3338
    %v6403 = vpack.c.b16 %v3347, %v3339
    %v6404 = vpack.c.b16 %v3348, %v3340
    %v6405 = vpack.c.b16 %v3349, %v3341
    %v6406 = vpack.c.b16 %v3350, %v3342
    %v6407 = vpack.c.b16 %v3351, %v3343
    %v6408 = vpack.c.b16 %v3360, %v3352
    %v6409 = vpack.c.b16 %v3361, %v3353
    %v6410 = vpack.c.b16 %v3362, %v3354
    %v6411 = vpack.c.b16 %v3363, %v3355
    %v6412 = vpack.c.b16 %v3364, %v3356
    %v6413 = vpack.c.b16 %v3365, %v3357
    %v6414 = vpack.c.b16 %v3366, %v3358
    %v6415 = vpack.c.b16 %v3367, %v3359
    %v6416 = vpack.c.b16 %v3376, %v3368
    %v6417 = vpack.c.b16 %v3377, %v3369
    %v6418 = vpack.c.b16 %v3378, %v3370
    %v6419 = vpack.c.b16 %v3379, %v3371
    %v6420 = vpack.c.b16 %v3380, %v3372
    %v6421 = vpack.c.b16 %v3381, %v3373
    %v6422 = vpack.c.b16 %v3382, %v3374
    %v6423 = vpack.c.b16 %v3383, %v3375
    %v6424 = vpack.c.b16 %v3392, %v3384
    %v6425 = vpack.c.b16 %v3393, %v3385
    %v6426 = vpack.c.b16 %v3394, %v3386
    %v6427 = vpack.c.b16 %v3395, %v3387
    %v6428 = vpack.c.b16 %v3396, %v3388
    %v6429 = vpack.c.b16 %v3397, %v3389
    %v6430 = vpack.c.b16 %v3398, %v3390
    %v6431 = vpack.c.b16 %v3399, %v3391
    %v6432 = vpack.c.b16 %v3408, %v3400
    %v6433 = vpack.c.b16 %v3409, %v3401
    %v6434 = vpack.c.b16 %v3410, %v3402
    %v6435 = vpack.c.b16 %v3411, %v3403
    %v6436 = vpack.c.b16 %v3412, %v3404
    %v6437 = vpack.c.b16 %v3413, %v3405
    %v6438 = vpack.c.b16 %v3414, %v3406
    %v6439 = vpack.c.b16 %v3415, %v3407
    %v6440 = vpack.c.b16 %v3424, %v3416
    %v6441 = vpack.c.b16 %v3425, %v3417
    %v6442 = vpack.c.b16 %v3426, %v3418
    %v6443 = vpack.c.b16 %v3427, %v3419
    %v6444 = vpack.c.b16 %v3428, %v3420
    %v6445 = vpack.c.b16 %v3429, %v3421
    %v6446 = vpack.c.b16 %v3430, %v3422
    %v6447 = vpack.c.b16 %v3431, %v3423
    %v6448 = vpack.c.b16 %v3440, %v3432
    %v6449 = vpack.c.b16 %v3441, %v3433
    %v6450 = vpack.c.b16 %v3442, %v3434
    %v6451 = vpack.c.b16 %v3443, %v3435
    %v6452 = vpack.c.b16 %v3444, %v3436
    %v6453 = vpack.c.b16 %v3445, %v3437
    %v6454 = vpack.c.b16 %v3446, %v3438
    %v6455 = vpack.c.b16 %v3447, %v3439
    %v6456 = vpack.c.b16 %v3456, %v3448
    %v6457 = vpack.c.b16 %v3457, %v3449
    %v6458 = vpack.c.b16 %v3458, %v3450
    %v6459 = vpack.c.b16 %v3459, %v3451
    %v6460 = vpack.c.b16 %v3460, %v3452
    %v6461 = vpack.c.b16 %v3461, %v3453
    %v6462 = vpack.c.b16 %v3462, %v3454
    %v6463 = vpack.c.b16 %v3463, %v3455
    %v6464 = vpack.c.b16 %v3472, %v3464
    %v6465 = vpack.c.b16 %v3473, %v3465
    %v6466 = vpack.c.b16 %v3474, %v3466
    %v6467 = vpack.c.b16 %v3475, %v3467
    %v6468 = vpack.c.b16 %v3476, %v3468
    %v6469 = vpack.c.b16 %v3477, %v3469
    %v6470 = vpack.c.b16 %v3478, %v3470
    %v6471 = vpack.c.b16 %v3479, %v3471
    %v6472 = vpack.c.b16 %v3488, %v3480
    %v6473 = vpack.c.b16 %v3489, %v3481
    %v6474 = vpack.c.b16 %v3490, %v3482
    %v6475 = vpack.c.b16 %v3491, %v3483
    %v6476 = vpack.c.b16 %v3492, %v3484
    %v6477 = vpack.c.b16 %v3493, %v3485
    %v6478 = vpack.c.b16 %v3494, %v3486
    %v6479 = vpack.c.b16 %v3495, %v3487
    %v6480 = vpack.c.b16 %v3504, %v3496
    %v6481 = vpack.c.b16 %v3505, %v3497
    %v6482 = vpack.c.b16 %v3506, %v3498
    %v6483 = vpack.c.b16 %v3507, %v3499
    %v6484 = vpack.c.b16 %v3508, %v3500
    %v6485 = vpack.c.b16 %v3509, %v3501
    %v6486 = vpack.c.b16 %v3510, %v3502
    %v6487 = vpack.c.b16 %v3511, %v3503
    %v6488 = vpack.c.b16 %v3520, %v3512
    %v6489 = vpack.c.b16 %v3521, %v3513
    %v6490 = vpack.c.b16 %v3522, %v3514
    %v6491 = vpack.c.b16 %v3523, %v3515
    %v6492 = vpack.c.b16 %v3524, %v3516
    %v6493 = vpack.c.b16 %v3525, %v3517
    %v6494 = vpack.c.b16 %v3526, %v3518
    %v6495 = vpack.c.b16 %v3527, %v3519
    %v6496 = vpack.c.b16 %v3536, %v3528
    %v6497 = vpack.c.b16 %v3537, %v3529
    %v6498 = vpack.c.b16 %v3538, %v3530
    %v6499 = vpack.c.b16 %v3539, %v3531
    %v6500 = vpack.c.b16 %v3540, %v3532
    %v6501 = vpack.c.b16 %v3541, %v3533
    %v6502 = vpack.c.b16 %v3542, %v3534
    %v6503 = vpack.c.b16 %v3543, %v3535
    %v6504 = vpack.c.b16 %v3552, %v3544
    %v6505 = vpack.c.b16 %v3553, %v3545
    %v6506 = vpack.c.b16 %v3554, %v3546
    %v6507 = vpack.c.b16 %v3555, %v3547
    %v6508 = vpack.c.b16 %v3556, %v3548
    %v6509 = vpack.c.b16 %v3557, %v3549
    %v6510 = vpack.c.b16 %v3558, %v3550
    %v6511 = vpack.c.b16 %v3559, %v3551
    %v6512 = vpack.c.b16 %v3568, %v3560
    %v6513 = vpack.c.b16 %v3569, %v3561
    %v6514 = vpack.c.b16 %v3570, %v3562
    %v6515 = vpack.c.b16 %v3571, %v3563
    %v6516 = vpack.c.b16 %v3572, %v3564
    %v6517 = vpack.c.b16 %v3573, %v3565
    %v6518 = vpack.c.b16 %v3574, %v3566
    %v6519 = vpack.c.b16 %v3575, %v3567
    %v6520 = vpack.c.b16 %v3584, %v3576
    %v6521 = vpack.c.b16 %v3585, %v3577
    %v6522 = vpack.c.b16 %v3586, %v3578
    %v6523 = vpack.c.b16 %v3587, %v3579
    %v6524 = vpack.c.b16 %v3588, %v3580
    %v6525 = vpack.c.b16 %v3589, %v3581
    %v6526 = vpack.c.b16 %v3590, %v3582
    %v6527 = vpack.c.b16 %v3591, %v3583
    %v6528 = vpack.c.b16 %v3600, %v3592
    %v6529 = vpack.c.b16 %v3601, %v3593
    %v6530 = vpack.c.b16 %v3602, %v3594
    %v6531 = vpack.c.b16 %v3603, %v3595
    %v6532 = vpack.c.b16 %v3604, %v3596
    %v6533 = vpack.c.b16 %v3605, %v3597
    %v6534 = vpack.c.b16 %v3606, %v3598
    %v6535 = vpack.c.b16 %v3607, %v3599
    %v6536 = vpack.c.b16 %v3616, %v3608
    %v6537 = vpack.c.b16 %v3617, %v3609
    %v6538 = vpack.c.b16 %v3618, %v3610
    %v6539 = vpack.c.b16 %v3619, %v3611
    %v6540 = vpack.c.b16 %v3620, %v3612
    %v6541 = vpack.c.b16 %v3621, %v3613
    %v6542 = vpack.c.b16 %v3622, %v3614
    %v6543 = vpack.c.b16 %v3623, %v3615
    %v6544 = vpack.c.b16 %v3632, %v3624
    %v6545 = vpack.c.b16 %v3633, %v3625
    %v6546 = vpack.c.b16 %v3634, %v3626
    %v6547 = vpack.c.b16 %v3635, %v3627
    %v6548 = vpack.c.b16 %v3636, %v3628
    %v6549 = vpack.c.b16 %v3637, %v3629
    %v6550 = vpack.c.b16 %v3638, %v3630
    %v6551 = vpack.c.b16 %v3639, %v3631
    %v6552 = vpack.c.b16 %v3648, %v3640
    %v6553 = vpack.c.b16 %v3649, %v3641
    %v6554 = vpack.c.b16 %v3650, %v3642
    %v6555 = vpack.c.b16 %v3651, %v3643
    %v6556 = vpack.c.b16 %v3652, %v3644
    %v6557 = vpack.c.b16 %v3653, %v3645
    %v6558 = vpack.c.b16 %v3654, %v3646
    %v6559 = vpack.c.b16 %v3655, %v3647
    %v6560 = vpack.c.b16 %v3664, %v3656
    %v6561 = vpack.c.b16 %v3665, %v3657
    %v6562 = vpack.c.b16 %v3666, %v3658
    %v6563 = vpack.c.b16 %v3667, %v3659
    %v6564 = vpack.c.b16 %v3668, %v3660
    %v6565 = vpack.c.b16 %v3669, %v3661
    %v6566 = vpack.c.b16 %v3670, %v3662
    %v6567 = vpack.c.b16 %v3671, %v3663
    %v6568 = vpack.c.b16 %v3680, %v3672
    %v6569 = vpack.c.b16 %v3681, %v3673
    %v6570 = vpack.c.b16 %v3682, %v3674
    %v6571 = vpack.c.b16 %v3683, %v3675
    %v6572 = vpack.c.b16 %v3684, %v3676
    %v6573 = vpack.c.b16 %v3685, %v3677
    %v6574 = vpack.c.b16 %v3686, %v3678
    %v6575 = vpack.c.b16 %v3687, %v3679
    %v6576 = vpack.c.b16 %v3696, %v3688
    %v6577 = vpack.c.b16 %v3697, %v3689
    %v6578 = vpack.c.b16 %v3698, %v3690
    %v6579 = vpack.c.b16 %v3699, %v3691
    %v6580 = vpack.c.b16 %v3700, %v3692
    %v6581 = vpack.c.b16 %v3701, %v3693
    %v6582 = vpack.c.b16 %v3702, %v3694
    %v6583 = vpack.c.b16 %v3703, %v3695
    %v6584 = vpack.c.b16 %v3712, %v3704
    %v6585 = vpack.c.b16 %v3713, %v3705
    %v6586 = vpack.c.b16 %v3714, %v3706
    %v6587 = vpack.c.b16 %v3715, %v3707
    %v6588 = vpack.c.b16 %v3716, %v3708
    %v6589 = vpack.c.b16 %v3717, %v3709
    %v6590 = vpack.c.b16 %v3718, %v3710
    %v6591 = vpack.c.b16 %v3719, %v3711
    %v6592 = vpack.c.b16 %v3728, %v3720
    %v6593 = vpack.c.b16 %v3729, %v3721
    %v6594 = vpack.c.b16 %v3730, %v3722
    %v6595 = vpack.c.b16 %v3731, %v3723
    %v6596 = vpack.c.b16 %v3732, %v3724
    %v6597 = vpack.c.b16 %v3733, %v3725
    %v6598 = vpack.c.b16 %v3734, %v3726
    %v6599 = vpack.c.b16 %v3735, %v3727
    %v6600 = vpack.c.b16 %v3744, %v3736
    %v6601 = vpack.c.b16 %v3745, %v3737
    %v6602 = vpack.c.b16 %v3746, %v3738
    %v6603 = vpack.c.b16 %v3747, %v3739
    %v6604 = vpack.c.b16 %v3748, %v3740
    %v6605 = vpack.c.b16 %v3749, %v3741
    %v6606 = vpack.c.b16 %v3750, %v3742
    %v6607 = vpack.c.b16 %v3751, %v3743
    %v6608 = vpack.c.b16 %v3760, %v3752
    %v6609 = vpack.c.b16 %v3761, %v3753
    %v6610 = vpack.c.b16 %v3762, %v3754
    %v6611 = vpack.c.b16 %v3763, %v3755
    %v6612 = vpack.c.b16 %v3764, %v3756
    %v6613 = vpack.c.b16 %v3765, %v3757
    %v6614 = vpack.c.b16 %v3766, %v3758
    %v6615 = vpack.c.b16 %v3767, %v3759
    %v6616 = vpack.c.b16 %v3776, %v3768
    %v6617 = vpack.c.b16 %v3777, %v3769
    %v6618 = vpack.c.b16 %v3778, %v3770
    %v6619 = vpack.c.b16 %v3779, %v3771
    %v6620 = vpack.c.b16 %v3780, %v3772
    %v6621 = vpack.c.b16 %v3781, %v3773
    %v6622 = vpack.c.b16 %v3782, %v3774
    %v6623 = vpack.c.b16 %v3783, %v3775
    %v6624 = vpack.c.b16 %v3792, %v3784
    %v6625 = vpack.c.b16 %v3793, %v3785
    %v6626 = vpack.c.b16 %v3794, %v3786
    %v6627 = vpack.c.b16 %v3795, %v3787
    %v6628 = vpack.c.b16 %v3796, %v3788
    %v6629 = vpack.c.b16 %v3797, %v3789
    %v6630 = vpack.c.b16 %v3798, %v3790
    %v6631 = vpack.c.b16 %v3799, %v3791
    %v6632 = vpack.c.b16 %v3808, %v3800
    %v6633 = vpack.c.b16 %v3809, %v3801
    %v6634 = vpack.c.b16 %v3810, %v3802
    %v6635 = vpack.c.b16 %v3811, %v3803
    %v6636 = vpack.c.b16 %v3812, %v3804
    %v6637 = vpack.c.b16 %v3813, %v3805
    %v6638 = vpack.c.b16 %v3814, %v3806
    %v6639 = vpack.c.b16 %v3815, %v3807
    %v6640 = vpack.c.b16 %v3824, %v3816
    %v6641 = vpack.c.b16 %v3825, %v3817
    %v6642 = vpack.c.b16 %v3826, %v3818
    %v6643 = vpack.c.b16 %v3827, %v3819
    %v6644 = vpack.c.b16 %v3828, %v3820
    %v6645 = vpack.c.b16 %v3829, %v3821
    %v6646 = vpack.c.b16 %v3830, %v3822
    %v6647 = vpack.c.b16 %v3831, %v3823
    %v6648 = vpack.c.b16 %v3840, %v3832
    %v6649 = vpack.c.b16 %v3841, %v3833
    %v6650 = vpack.c.b16 %v3842, %v3834
    %v6651 = vpack.c.b16 %v3843, %v3835
    %v6652 = vpack.c.b16 %v3844, %v3836
    %v6653 = vpack.c.b16 %v3845, %v3837
    %v6654 = vpack.c.b16 %v3846, %v3838
    %v6655 = vpack.c.b16 %v3847, %v3839
    %v6656 = vpack.c.b16 %v3856, %v3848
    %v6657 = vpack.c.b16 %v3857, %v3849
    %v6658 = vpack.c.b16 %v3858, %v3850
    %v6659 = vpack.c.b16 %v3859, %v3851
    %v6660 = vpack.c.b16 %v3860, %v3852
    %v6661 = vpack.c.b16 %v3861, %v3853
    %v6662 = vpack.c.b16 %v3862, %v3854
    %v6663 = vpack.c.b16 %v3863, %v3855
    %v6664 = vpack.c.b16 %v3872, %v3864
    %v6665 = vpack.c.b16 %v3873, %v3865
    %v6666 = vpack.c.b16 %v3874, %v3866
    %v6667 = vpack.c.b16 %v3875, %v3867
    %v6668 = vpack.c.b16 %v3876, %v3868
    %v6669 = vpack.c.b16 %v3877, %v3869
    %v6670 = vpack.c.b16 %v3878, %v3870
    %v6671 = vpack.c.b16 %v3879, %v3871
    %v6672 = vpack.c.b16 %v3888, %v3880
    %v6673 = vpack.c.b16 %v3889, %v3881
    %v6674 = vpack.c.b16 %v3890, %v3882
    %v6675 = vpack.c.b16 %v3891, %v3883
    %v6676 = vpack.c.b16 %v3892, %v3884
    %v6677 = vpack.c.b16 %v3893, %v3885
    %v6678 = vpack.c.b16 %v3894, %v3886
    %v6679 = vpack.c.b16 %v3895, %v3887
    %v6680 = vpack.c.b16 %v3904, %v3896
    %v6681 = vpack.c.b16 %v3905, %v3897
    %v6682 = vpack.c.b16 %v3906, %v3898
    %v6683 = vpack.c.b16 %v3907, %v3899
    %v6684 = vpack.c.b16 %v3908, %v3900
    %v6685 = vpack.c.b16 %v3909, %v3901
    %v6686 = vpack.c.b16 %v3910, %v3902
    %v6687 = vpack.c.b16 %v3911, %v3903
    %v6688 = vpack.c.b16 %v3920, %v3912
    %v6689 = vpack.c.b16 %v3921, %v3913
    %v6690 = vpack.c.b16 %v3922, %v3914
    %v6691 = vpack.c.b16 %v3923, %v3915
    %v6692 = vpack.c.b16 %v3924, %v3916
    %v6693 = vpack.c.b16 %v3925, %v3917
    %v6694 = vpack.c.b16 %v3926, %v3918
    %v6695 = vpack.c.b16 %v3927, %v3919
    %v6696 = vpack.c.b16 %v3936, %v3928
    %v6697 = vpack.c.b16 %v3937, %v3929
    %v6698 = vpack.c.b16 %v3938, %v3930
    %v6699 = vpack.c.b16 %v3939, %v3931
    %v6700 = vpack.c.b16 %v3940, %v3932
    %v6701 = vpack.c.b16 %v3941, %v3933
    %v6702 = vpack.c.b16 %v3942, %v3934
    %v6703 = vpack.c.b16 %v3943, %v3935
    %v6704 = vpack.c.b16 %v3952, %v3944
    %v6705 = vpack.c.b16 %v3953, %v3945
    %v6706 = vpack.c.b16 %v3954, %v3946
    %v6707 = vpack.c.b16 %v3955, %v3947
    %v6708 = vpack.c.b16 %v3956, %v3948
    %v6709 = vpack.c.b16 %v3957, %v3949
    %v6710 = vpack.c.b16 %v3958, %v3950
    %v6711 = vpack.c.b16 %v3959, %v3951
    %v6712 = vpack.c.b16 %v3968, %v3960
    %v6713 = vpack.c.b16 %v3969, %v3961
    %v6714 = vpack.c.b16 %v3970, %v3962
    %v6715 = vpack.c.b16 %v3971, %v3963
    %v6716 = vpack.c.b16 %v3972, %v3964
    %v6717 = vpack.c.b16 %v3973, %v3965
    %v6718 = vpack.c.b16 %v3974, %v3966
    %v6719 = vpack.c.b16 %v3975, %v3967
    %v6720 = vpack.c.b16 %v3984, %v3976
    %v6721 = vpack.c.b16 %v3985, %v3977
    %v6722 = vpack.c.b16 %v3986, %v3978
    %v6723 = vpack.c.b16 %v3987, %v3979
    %v6724 = vpack.c.b16 %v3988, %v3980
    %v6725 = vpack.c.b16 %v3989, %v3981
    %v6726 = vpack.c.b16 %v3990, %v3982
    %v6727 = vpack.c.b16 %v3991, %v3983
    %v6728 = vpack.c.b16 %v4000, %v3992
    %v6729 = vpack.c.b16 %v4001, %v3993
    %v6730 = vpack.c.b16 %v4002, %v3994
    %v6731 = vpack.c.b16 %v4003, %v3995
    %v6732 = vpack.c.b16 %v4004, %v3996
    %v6733 = vpack.c.b16 %v4005, %v3997
    %v6734 = vpack.c.b16 %v4006, %v3998
    %v6735 = vpack.c.b16 %v4007, %v3999
    %v6736 = vpack.c.b16 %v4016, %v4008
    %v6737 = vpack.c.b16 %v4017, %v4009
    %v6738 = vpack.c.b16 %v4018, %v4010
    %v6739 = vpack.c.b16 %v4019, %v4011
    %v6740 = vpack.c.b16 %v4020, %v4012
    %v6741 = vpack.c.b16 %v4021, %v4013
    %v6742 = vpack.c.b16 %v4022, %v4014
    %v6743 = vpack.c.b16 %v4023, %v4015
    %v6744 = vpack.c.b16 %v4032, %v4024
    %v6745 = vpack.c.b16 %v4033, %v4025
    %v6746 = vpack.c.b16 %v4034, %v4026
    %v6747 = vpack.c.b16 %v4035, %v4027
    %v6748 = vpack.c.b16 %v4036, %v4028
    %v6749 = vpack.c.b16 %v4037, %v4029
    %v6750 = vpack.c.b16 %v4038, %v4030
    %v6751 = vpack.c.b16 %v4039, %v4031
    %v6752 = vpack.c.b16 %v4048, %v4040
    %v6753 = vpack.c.b16 %v4049, %v4041
    %v6754 = vpack.c.b16 %v4050, %v4042
    %v6755 = vpack.c.b16 %v4051, %v4043
    %v6756 = vpack.c.b16 %v4052, %v4044
    %v6757 = vpack.c.b16 %v4053, %v4045
    %v6758 = vpack.c.b16 %v4054, %v4046
    %v6759 = vpack.c.b16 %v4055, %v4047
    %v6760 = vpack.c.b16 %v4064, %v4056
    %v6761 = vpack.c.b16 %v4065, %v4057
    %v6762 = vpack.c.b16 %v4066, %v4058
    %v6763 = vpack.c.b16 %v4067, %v4059
    %v6764 = vpack.c.b16 %v4068, %v4060
    %v6765 = vpack.c.b16 %v4069, %v4061
    %v6766 = vpack.c.b16 %v4070, %v4062
    %v6767 = vpack.c.b16 %v4071, %v4063
    %v6768 = vpack.c.b16 %v4080, %v4072
    %v6769 = vpack.c.b16 %v4081, %v4073
    %v6770 = vpack.c.b16 %v4082, %v4074
    %v6771 = vpack.c.b16 %v4083, %v4075
    %v6772 = vpack.c.b16 %v4084, %v4076
    %v6773 = vpack.c.b16 %v4085, %v4077
    %v6774 = vpack.c.b16 %v4086, %v4078
    %v6775 = vpack.c.b16 %v4087, %v4079
    %v6776 = vpack.c.b16 %v4096, %v4088
    %v6777 = vpack.c.b16 %v4097, %v4089
    %v6778 = vpack.c.b16 %v4098, %v4090
    %v6779 = vpack.c.b16 %v4099, %v4091
    %v6780 = vpack.c.b16 %v4100, %v4092
    %v6781 = vpack.c.b16 %v4101, %v4093
    %v6782 = vpack.c.b16 %v4102, %v4094
    %v6783 = vpack.c.b16 %v4103, %v4095
    %v6784 = vpack.c.b16 %v4112, %v4104
    %v6785 = vpack.c.b16 %v4113, %v4105
    %v6786 = vpack.c.b16 %v4114, %v4106
    %v6787 = vpack.c.b16 %v4115, %v4107
    %v6788 = vpack.c.b16 %v4116, %v4108
    %v6789 = vpack.c.b16 %v4117, %v4109
    %v6790 = vpack.c.b16 %v4118, %v4110
    %v6791 = vpack.c.b16 %v4119, %v4111
    %v6792 = vpack.c.b16 %v4128, %v4120
    %v6793 = vpack.c.b16 %v4129, %v4121
    %v6794 = vpack.c.b16 %v4130, %v4122
    %v6795 = vpack.c.b16 %v4131, %v4123
    %v6796 = vpack.c.b16 %v4132, %v4124
    %v6797 = vpack.c.b16 %v4133, %v4125
    %v6798 = vpack.c.b16 %v4134, %v4126
    %v6799 = vpack.c.b16 %v4135, %v4127
    %v6800 = vpack.c.b16 %v4144, %v4136
    %v6801 = vpack.c.b16 %v4145, %v4137
    %v6802 = vpack.c.b16 %v4146, %v4138
    %v6803 = vpack.c.b16 %v4147, %v4139
    %v6804 = vpack.c.b16 %v4148, %v4140
    %v6805 = vpack.c.b16 %v4149, %v4141
    %v6806 = vpack.c.b16 %v4150, %v4142
    %v6807 = vpack.c.b16 %v4151, %v4143
    %v6808 = vpack.c.b16 %v4160, %v4152
    %v6809 = vpack.c.b16 %v4161, %v4153
    %v6810 = vpack.c.b16 %v4162, %v4154
    %v6811 = vpack.c.b16 %v4163, %v4155
    %v6812 = vpack.c.b16 %v4164, %v4156
    %v6813 = vpack.c.b16 %v4165, %v4157
    %v6814 = vpack.c.b16 %v4166, %v4158
    %v6815 = vpack.c.b16 %v4167, %v4159
    %v6816 = vpack.c.b16 %v4176, %v4168
    %v6817 = vpack.c.b16 %v4177, %v4169
    %v6818 = vpack.c.b16 %v4178, %v4170
    %v6819 = vpack.c.b16 %v4179, %v4171
    %v6820 = vpack.c.b16 %v4180, %v4172
    %v6821 = vpack.c.b16 %v4181, %v4173
    %v6822 = vpack.c.b16 %v4182, %v4174
    %v6823 = vpack.c.b16 %v4183, %v4175
    %v6824 = vpack.c.b16 %v4192, %v4184
    %v6825 = vpack.c.b16 %v4193, %v4185
    %v6826 = vpack.c.b16 %v4194, %v4186
    %v6827 = vpack.c.b16 %v4195, %v4187
    %v6828 = vpack.c.b16 %v4196, %v4188
    %v6829 = vpack.c.b16 %v4197, %v4189
    %v6830 = vpack.c.b16 %v4198, %v4190
    %v6831 = vpack.c.b16 %v4199, %v4191
    %v6832 = vpack.c.b16 %v4208, %v4200
    %v6833 = vpack.c.b16 %v4209, %v4201
    %v6834 = vpack.c.b16 %v4210, %v4202
    %v6835 = vpack.c.b16 %v4211, %v4203
    %v6836 = vpack.c.b16 %v4212, %v4204
    %v6837 = vpack.c.b16 %v4213, %v4205
    %v6838 = vpack.c.b16 %v4214, %v4206
    %v6839 = vpack.c.b16 %v4215, %v4207
    %v6840 = vpack.c.b16 %v4224, %v4216
    %v6841 = vpack.c.b16 %v4225, %v4217
    %v6842 = vpack.c.b16 %v4226, %v4218
    %v6843 = vpack.c.b16 %v4227, %v4219
    %v6844 = vpack.c.b16 %v4228, %v4220
    %v6845 = vpack.c.b16 %v4229, %v4221
    %v6846 = vpack.c.b16 %v4230, %v4222
    %v6847 = vpack.c.b16 %v4231, %v4223
    %v6848 = vpack.c.b16 %v4240, %v4232
    %v6849 = vpack.c.b16 %v4241, %v4233
    %v6850 = vpack.c.b16 %v4242, %v4234
    %v6851 = vpack.c.b16 %v4243, %v4235
    %v6852 = vpack.c.b16 %v4244, %v4236
    %v6853 = vpack.c.b16 %v4245, %v4237
    %v6854 = vpack.c.b16 %v4246, %v4238
    %v6855 = vpack.c.b16 %v4247, %v4239
    %v6856 = vpack.c.b16 %v4256, %v4248
    %v6857 = vpack.c.b16 %v4257, %v4249
    %v6858 = vpack.c.b16 %v4258, %v4250
    %v6859 = vpack.c.b16 %v4259, %v4251
    %v6860 = vpack.c.b16 %v4260, %v4252
    %v6861 = vpack.c.b16 %v4261, %v4253
    %v6862 = vpack.c.b16 %v4262, %v4254
    %v6863 = vpack.c.b16 %v4263, %v4255
    %v6864 = vpack.c.b16 %v4272, %v4264
    %v6865 = vpack.c.b16 %v4273, %v4265
    %v6866 = vpack.c.b16 %v4274, %v4266
    %v6867 = vpack.c.b16 %v4275, %v4267
    %v6868 = vpack.c.b16 %v4276, %v4268
    %v6869 = vpack.c.b16 %v4277, %v4269
    %v6870 = vpack.c.b16 %v4278, %v4270
    %v6871 = vpack.c.b16 %v4279, %v4271
    %v6872 = vpack.c.b16 %v4288, %v4280
    %v6873 = vpack.c.b16 %v4289, %v4281
    %v6874 = vpack.c.b16 %v4290, %v4282
    %v6875 = vpack.c.b16 %v4291, %v4283
    %v6876 = vpack.c.b16 %v4292, %v4284
    %v6877 = vpack.c.b16 %v4293, %v4285
    %v6878 = vpack.c.b16 %v4294, %v4286
    %v6879 = vpack.c.b16 %v4295, %v4287
    %v6880 = vpack.c.b16 %v4304, %v4296
    %v6881 = vpack.c.b16 %v4305, %v4297
    %v6882 = vpack.c.b16 %v4306, %v4298
    %v6883 = vpack.c.b16 %v4307, %v4299
    %v6884 = vpack.c.b16 %v4308, %v4300
    %v6885 = vpack.c.b16 %v4309, %v4301
    %v6886 = vpack.c.b16 %v4310, %v4302
    %v6887 = vpack.c.b16 %v4311, %v4303
    %v6888 = vpack.c.b16 %v4320, %v4312
    %v6889 = vpack.c.b16 %v4321, %v4313
    %v6890 = vpack.c.b16 %v4322, %v4314
    %v6891 = vpack.c.b16 %v4323, %v4315
    %v6892 = vpack.c.b16 %v4324, %v4316
    %v6893 = vpack.c.b16 %v4325, %v4317
    %v6894 = vpack.c.b16 %v4326, %v4318
    %v6895 = vpack.c.b16 %v4327, %v4319
    %v6896 = vpack.c.b16 %v4336, %v4328
    %v6897 = vpack.c.b16 %v4337, %v4329
    %v6898 = vpack.c.b16 %v4338, %v4330
    %v6899 = vpack.c.b16 %v4339, %v4331
    %v6900 = vpack.c.b16 %v4340, %v4332
    %v6901 = vpack.c.b16 %v4341, %v4333
    %v6902 = vpack.c.b16 %v4342, %v4334
    %v6903 = vpack.c.b16 %v4343, %v4335
    %v6904 = vpack.c.b16 %v4352, %v4344
    %v6905 = vpack.c.b16 %v4353, %v4345
    %v6906 = vpack.c.b16 %v4354, %v4346
    %v6907 = vpack.c.b16 %v4355, %v4347
    %v6908 = vpack.c.b16 %v4356, %v4348
    %v6909 = vpack.c.b16 %v4357, %v4349
    %v6910 = vpack.c.b16 %v4358, %v4350
    %v6911 = vpack.c.b16 %v4359, %v4351
    %v6912 = vpack.c.b16 %v4368, %v4360
    %v6913 = vpack.c.b16 %v4369, %v4361
    %v6914 = vpack.c.b16 %v4370, %v4362
    %v6915 = vpack.c.b16 %v4371, %v4363
    %v6916 = vpack.c.b16 %v4372, %v4364
    %v6917 = vpack.c.b16 %v4373, %v4365
    %v6918 = vpack.c.b16 %v4374, %v4366
    %v6919 = vpack.c.b16 %v4375, %v4367
    %v6920 = vpack.c.b16 %v4384, %v4376
    %v6921 = vpack.c.b16 %v4385, %v4377
    %v6922 = vpack.c.b16 %v4386, %v4378
    %v6923 = vpack.c.b16 %v4387, %v4379
    %v6924 = vpack.c.b16 %v4388, %v4380
    %v6925 = vpack.c.b16 %v4389, %v4381
    %v6926 = vpack.c.b16 %v4390, %v4382
    %v6927 = vpack.c.b16 %v4391, %v4383
    %v6928 = vpack.c.b16 %v4400, %v4392
    %v6929 = vpack.c.b16 %v4401, %v4393
    %v6930 = vpack.c.b16 %v4402, %v4394
    %v6931 = vpack.c.b16 %v4403, %v4395
    %v6932 = vpack.c.b16 %v4404, %v4396
    %v6933 = vpack.c.b16 %v4405, %v4397
    %v6934 = vpack.c.b16 %v4406, %v4398
    %v6935 = vpack.c.b16 %v4407, %v4399
    %v6936 = vpack.c.b16 %v4416, %v4408
    %v6937 = vpack.c.b16 %v4417, %v4409
    %v6938 = vpack.c.b16 %v4418, %v4410
    %v6939 = vpack.c.b16 %v4419, %v4411
    %v6940 = vpack.c.b16 %v4420, %v4412
    %v6941 = vpack.c.b16 %v4421, %v4413
    %v6942 = vpack.c.b16 %v4422, %v4414
    %v6943 = vpack.c.b16 %v4423, %v4415
    %v6944 = vpack.c.b16 %v4432, %v4424
    %v6945 = vpack.c.b16 %v4433, %v4425
    %v6946 = vpack.c.b16 %v4434, %v4426
    %v6947 = vpack.c.b16 %v4435, %v4427
    %v6948 = vpack.c.b16 %v4436, %v4428
    %v6949 = vpack.c.b16 %v4437, %v4429
    %v6950 = vpack.c.b16 %v4438, %v4430
    %v6951 = vpack.c.b16 %v4439, %v4431
    %v6952 = vpack.c.b16 %v4448, %v4440
    %v6953 = vpack.c.b16 %v4449, %v4441
    %v6954 = vpack.c.b16 %v4450, %v4442
    %v6955 = vpack.c.b16 %v4451, %v4443
    %v6956 = vpack.c.b16 %v4452, %v4444
    %v6957 = vpack.c.b16 %v4453, %v4445
    %v6958 = vpack.c.b16 %v4454, %v4446
    %v6959 = vpack.c.b16 %v4455, %v4447
    %v6960 = vpack.c.b16 %v4464, %v4456
    %v6961 = vpack.c.b16 %v4465, %v4457
    %v6962 = vpack.c.b16 %v4466, %v4458
    %v6963 = vpack.c.b16 %v4467, %v4459
    %v6964 = vpack.c.b16 %v4468, %v4460
    %v6965 = vpack.c.b16 %v4469, %v4461
    %v6966 = vpack.c.b16 %v4470, %v4462
    %v6967 = vpack.c.b16 %v4471, %v4463
    %v6968 = vpack.c.b16 %v4480, %v4472
    %v6969 = vpack.c.b16 %v4481, %v4473
    %v6970 = vpack.c.b16 %v4482, %v4474
    %v6971 = vpack.c.b16 %v4483, %v4475
    %v6972 = vpack.c.b16 %v4484, %v4476
    %v6973 = vpack.c.b16 %v4485, %v4477
    %v6974 = vpack.c.b16 %v4486, %v4478
    %v6975 = vpack.c.b16 %v4487, %v4479
    %v6976 = vpack.c.b16 %v4496, %v4488
    %v6977 = vpack.c.b16 %v4497, %v4489
    %v6978 = vpack.c.b16 %v4498, %v4490
    %v6979 = vpack.c.b16 %v4499, %v4491
    %v6980 = vpack.c.b16 %v4500, %v4492
    %v6981 = vpack.c.b16 %v4501, %v4493
    %v6982 = vpack.c.b16 %v4502, %v4494
    %v6983 = vpack.c.b16 %v4503, %v4495
    %v6984 = vpack.c.b16 %v4512, %v4504
    %v6985 = vpack.c.b16 %v4513, %v4505
    %v6986 = vpack.c.b16 %v4514, %v4506
    %v6987 = vpack.c.b16 %v4515, %v4507
    %v6988 = vpack.c.b16 %v4516, %v4508
    %v6989 = vpack.c.b16 %v4517, %v4509
    %v6990 = vpack.c.b16 %v4518, %v4510
    %v6991 = vpack.c.b16 %v4519, %v4511
    %v6992 = vpack.c.b16 %v4528, %v4520
    %v6993 = vpack.c.b16 %v4529, %v4521
    %v6994 = vpack.c.b16 %v4530, %v4522
    %v6995 = vpack.c.b16 %v4531, %v4523
    %v6996 = vpack.c.b16 %v4532, %v4524
    %v6997 = vpack.c.b16 %v4533, %v4525
    %v6998 = vpack.c.b16 %v4534, %v4526
    %v6999 = vpack.c.b16 %v4535, %v4527
    %v7000 = vpack.c.b16 %v4544, %v4536
    %v7001 = vpack.c.b16 %v4545, %v4537
    %v7002 = vpack.c.b16 %v4546, %v4538
    %v7003 = vpack.c.b16 %v4547, %v4539
    %v7004 = vpack.c.b16 %v4548, %v4540
    %v7005 = vpack.c.b16 %v4549, %v4541
    %v7006 = vpack.c.b16 %v4550, %v4542
    %v7007 = vpack.c.b16 %v4551, %v4543
    %v7008 = vpack.c.b16 %v4560, %v4552
    %v7009 = vpack.c.b16 %v4561, %v4553
    %v7010 = vpack.c.b16 %v4562, %v4554
    %v7011 = vpack.c.b16 %v4563, %v4555
    %v7012 = vpack.c.b16 %v4564, %v4556
    %v7013 = vpack.c.b16 %v4565, %v4557
    %v7014 = vpack.c.b16 %v4566, %v4558
    %v7015 = vpack.c.b16 %v4567, %v4559
    %v7016 = vpack.c.b16 %v4576, %v4568
    %v7017 = vpack.c.b16 %v4577, %v4569
    %v7018 = vpack.c.b16 %v4578, %v4570
    %v7019 = vpack.c.b16 %v4579, %v4571
    %v7020 = vpack.c.b16 %v4580, %v4572
    %v7021 = vpack.c.b16 %v4581, %v4573
    %v7022 = vpack.c.b16 %v4582, %v4574
    %v7023 = vpack.c.b16 %v4583, %v4575
    %v7024 = vpack.c.b16 %v4592, %v4584
    %v7025 = vpack.c.b16 %v4593, %v4585
    %v7026 = vpack.c.b16 %v4594, %v4586
    %v7027 = vpack.c.b16 %v4595, %v4587
    %v7028 = vpack.c.b16 %v4596, %v4588
    %v7029 = vpack.c.b16 %v4597, %v4589
    %v7030 = vpack.c.b16 %v4598, %v4590
    %v7031 = vpack.c.b16 %v4599, %v4591
    %v7032 = vpack.c.b16 %v4608, %v4600
    %v7033 = vpack.c.b16 %v4609, %v4601
    %v7034 = vpack.c.b16 %v4610, %v4602
    %v7035 = vpack.c.b16 %v4611, %v4603
    %v7036 = vpack.c.b16 %v4612, %v4604
    %v7037 = vpack.c.b16 %v4613, %v4605
    %v7038 = vpack.c.b16 %v4614, %v4606
    %v7039 = vpack.c.b16 %v4615, %v4607
    %v7040 = vpack.c.b16 %v4624, %v4616
    %v7041 = vpack.c.b16 %v4625, %v4617
    %v7042 = vpack.c.b16 %v4626, %v4618
    %v7043 = vpack.c.b16 %v4627, %v4619
    %v7044 = vpack.c.b16 %v4628, %v4620
    %v7045 = vpack.c.b16 %v4629, %v4621
    %v7046 = vpack.c.b16 %v4630, %v4622
    %v7047 = vpack.c.b16 %v4631, %v4623
    %v7048 = vpack.c.b16 %v4640, %v4632
    %v7049 = vpack.c.b16 %v4641, %v4633
    %v7050 = vpack.c.b16 %v4642, %v4634
    %v7051 = vpack.c.b16 %v4643, %v4635
    %v7052 = vpack.c.b16 %v4644, %v4636
    %v7053 = vpack.c.b16 %v4645, %v4637
    %v7054 = vpack.c.b16 %v4646, %v4638
    %v7055 = vpack.c.b16 %v4647, %v4639
    %v7056 = vpack.c.b16 %v4656, %v4648
    %v7057 = vpack.c.b16 %v4657, %v4649
    %v7058 = vpack.c.b16 %v4658, %v4650
    %v7059 = vpack.c.b16 %v4659, %v4651
    %v7060 = vpack.c.b16 %v4660, %v4652
    %v7061 = vpack.c.b16 %v4661, %v4653
    %v7062 = vpack.c.b16 %v4662, %v4654
    %v7063 = vpack.c.b16 %v4663, %v4655
    %v7064 = vpack.c.b16 %v4672, %v4664
    %v7065 = vpack.c.b16 %v4673, %v4665
    %v7066 = vpack.c.b16 %v4674, %v4666
    %v7067 = vpack.c.b16 %v4675, %v4667
    %v7068 = vpack.c.b16 %v4676, %v4668
    %v7069 = vpack.c.b16 %v4677, %v4669
    %v7070 = vpack.c.b16 %v4678, %v4670
    %v7071 = vpack.c.b16 %v4679, %v4671
    %v7072 = vpack.c.b16 %v4688, %v4680
    %v7073 = vpack.c.b16 %v4689, %v4681
    %v7074 = vpack.c.b16 %v4690, %v4682
    %v7075 = vpack.c.b16 %v4691, %v4683
    %v7076 = vpack.c.b16 %v4692, %v4684
    %v7077 = vpack.c.b16 %v4693, %v4685
    %v7078 = vpack.c.b16 %v4694, %v4686
    %v7079 = vpack.c.b16 %v4695, %v4687
    %v7080 = vpack.c.b16 %v4704, %v4696
    %v7081 = vpack.c.b16 %v4705, %v4697
    %v7082 = vpack.c.b16 %v4706, %v4698
    %v7083 = vpack.c.b16 %v4707, %v4699
    %v7084 = vpack.c.b16 %v4708, %v4700
    %v7085 = vpack.c.b16 %v4709, %v4701
    %v7086 = vpack.c.b16 %v4710, %v4702
    %v7087 = vpack.c.b16 %v4711, %v4703
    %v7088 = vpack.c.b16 %v4720, %v4712
    %v7089 = vpack.c.b16 %v4721, %v4713
    %v7090 = vpack.c.b16 %v4722, %v4714
    %v7091 = vpack.c.b16 %v4723, %v4715
    %v7092 = vpack.c.b16 %v4724, %v4716
    %v7093 = vpack.c.b16 %v4725, %v4717
    %v7094 = vpack.c.b16 %v4726, %v4718
    %v7095 = vpack.c.b16 %v4727, %v4719
    %v7096 = vpack.c.b16 %v4736, %v4728
    %v7097 = vpack.c.b16 %v4737, %v4729
    %v7098 = vpack.c.b16 %v4738, %v4730
    %v7099 = vpack.c.b16 %v4739, %v4731
    %v7100 = vpack.c.b16 %v4740, %v4732
    %v7101 = vpack.c.b16 %v4741, %v4733
    %v7102 = vpack.c.b16 %v4742, %v4734
    %v7103 = vpack.c.b16 %v4743, %v4735
    %v7104 = vpack.c.b16 %v4752, %v4744
    %v7105 = vpack.c.b16 %v4753, %v4745
    %v7106 = vpack.c.b16 %v4754, %v4746
    %v7107 = vpack.c.b16 %v4755, %v4747
    %v7108 = vpack.c.b16 %v4756, %v4748
    %v7109 = vpack.c.b16 %v4757, %v4749
    %v7110 = vpack.c.b16 %v4758, %v4750
    %v7111 = vpack.c.b16 %v4759, %v4751
    %v7112 = vpack.c.b16 %v4768, %v4760
    %v7113 = vpack.c.b16 %v4769, %v4761
    %v7114 = vpack.c.b16 %v4770, %v4762
    %v7115 = vpack.c.b16 %v4771, %v4763
    %v7116 = vpack.c.b16 %v4772, %v4764
    %v7117 = vpack.c.b16 %v4773, %v4765
    %v7118 = vpack.c.b16 %v4774, %v4766
    %v7119 = vpack.c.b16 %v4775, %v4767
    %v7120 = vpack.c.b16 %v4784, %v4776
    %v7121 = vpack.c.b16 %v4785, %v4777
    %v7122 = vpack.c.b16 %v4786, %v4778
    %v7123 = vpack.c.b16 %v4787, %v4779
    %v7124 = vpack.c.b16 %v4788, %v4780
    %v7125 = vpack.c.b16 %v4789, %v4781
    %v7126 = vpack.c.b16 %v4790, %v4782
    %v7127 = vpack.c.b16 %v4791, %v4783
    %v7128 = vpack.c.b16 %v4800, %v4792
    %v7129 = vpack.c.b16 %v4801, %v4793
    %v7130 = vpack.c.b16 %v4802, %v4794
    %v7131 = vpack.c.b16 %v4803, %v4795
    %v7132 = vpack.c.b16 %v4804, %v4796
    %v7133 = vpack.c.b16 %v4805, %v4797
    %v7134 = vpack.c.b16 %v4806, %v4798
    %v7135 = vpack.c.b16 %v4807, %v4799
    %v7136 = vpack.c.b16 %v4816, %v4808
    %v7137 = vpack.c.b16 %v4817, %v4809
    %v7138 = vpack.c.b16 %v4818, %v4810
    %v7139 = vpack.c.b16 %v4819, %v4811
    %v7140 = vpack.c.b16 %v4820, %v4812
    %v7141 = vpack.c.b16 %v4821, %v4813
    %v7142 = vpack.c.b16 %v4822, %v4814
    %v7143 = vpack.c.b16 %v4823, %v4815
    %v7144 = vpack.c.b16 %v4832, %v4824
    %v7145 = vpack.c.b16 %v4833, %v4825
    %v7146 = vpack.c.b16 %v4834, %v4826
    %v7147 = vpack.c.b16 %v4835, %v4827
    %v7148 = vpack.c.b16 %v4836, %v4828
    %v7149 = vpack.c.b16 %v4837, %v4829
    %v7150 = vpack.c.b16 %v4838, %v4830
    %v7151 = vpack.c.b16 %v4839, %v4831
    %v7152 = vpack.c.b16 %v4848, %v4840
    %v7153 = vpack.c.b16 %v4849, %v4841
    %v7154 = vpack.c.b16 %v4850, %v4842
    %v7155 = vpack.c.b16 %v4851, %v4843
    %v7156 = vpack.c.b16 %v4852, %v4844
    %v7157 = vpack.c.b16 %v4853, %v4845
    %v7158 = vpack.c.b16 %v4854, %v4846
    %v7159 = vpack.c.b16 %v4855, %v4847
    %v7160 = vpack.c.b16 %v4864, %v4856
    %v7161 = vpack.c.b16 %v4865, %v4857
    %v7162 = vpack.c.b16 %v4866, %v4858
    %v7163 = vpack.c.b16 %v4867, %v4859
    %v7164 = vpack.c.b16 %v4868, %v4860
    %v7165 = vpack.c.b16 %v4869, %v4861
    %v7166 = vpack.c.b16 %v4870, %v4862
    %v7167 = vpack.c.b16 %v4871, %v4863
    %v7168 = vpack.c.b16 %v4880, %v4872
    %v7169 = vpack.c.b16 %v4881, %v4873
    %v7170 = vpack.c.b16 %v4882, %v4874
    %v7171 = vpack.c.b16 %v4883, %v4875
    %v7172 = vpack.c.b16 %v4884, %v4876
    %v7173 = vpack.c.b16 %v4885, %v4877
    %v7174 = vpack.c.b16 %v4886, %v4878
    %v7175 = vpack.c.b16 %v4887, %v4879
    %v7176 = vpack.c.b16 %v4896, %v4888
    %v7177 = vpack.c.b16 %v4897, %v4889
    %v7178 = vpack.c.b16 %v4898, %v4890
    %v7179 = vpack.c.b16 %v4899, %v4891
    %v7180 = vpack.c.b16 %v4900, %v4892
    %v7181 = vpack.c.b16 %v4901, %v4893
    %v7182 = vpack.c.b16 %v4902, %v4894
    %v7183 = vpack.c.b16 %v4903, %v4895
    %v7184 = vpack.c.b16 %v4912, %v4904
    %v7185 = vpack.c.b16 %v4913, %v4905
    %v7186 = vpack.c.b16 %v4914, %v4906
    %v7187 = vpack.c.b16 %v4915, %v4907
    %v7188 = vpack.c.b16 %v4916, %v4908
    %v7189 = vpack.c.b16 %v4917, %v4909
    %v7190 = vpack.c.b16 %v4918, %v4910
    %v7191 = vpack.c.b16 %v4919, %v4911
    %v7192 = vpack.c.b16 %v4928, %v4920
    %v7193 = vpack.c.b16 %v4929, %v4921
    %v7194 = vpack.c.b16 %v4930, %v4922
    %v7195 = vpack.c.b16 %v4931, %v4923
    %v7196 = vpack.c.b16 %v4932, %v4924
    %v7197 = vpack.c.b16 %v4933, %v4925
    %v7198 = vpack.c.b16 %v4934, %v4926
    %v7199 = vpack.c.b16 %v4935, %v4927
    %v7200 = vpack.c.b16 %v4944, %v4936
    %v7201 = vpack.c.b16 %v4945, %v4937
    %v7202 = vpack.c.b16 %v4946, %v4938
    %v7203 = vpack.c.b16 %v4947, %v4939
    %v7204 = vpack.c.b16 %v4948, %v4940
    %v7205 = vpack.c.b16 %v4949, %v4941
    %v7206 = vpack.c.b16 %v4950, %v4942
    %v7207 = vpack.c.b16 %v4951, %v4943
    %v7208 = vpack.c.b16 %v4960, %v4952
    %v7209 = vpack.c.b16 %v4961, %v4953
    %v7210 = vpack.c.b16 %v4962, %v4954
    %v7211 = vpack.c.b16 %v4963, %v4955
    %v7212 = vpack.c.b16 %v4964, %v4956
    %v7213 = vpack.c.b16 %v4965, %v4957
    %v7214 = vpack.c.b16 %v4966, %v4958
    %v7215 = vpack.c.b16 %v4967, %v4959
    %v7216 = vpack.c.b16 %v4976, %v4968
    %v7217 = vpack.c.b16 %v4977, %v4969
    %v7218 = vpack.c.b16 %v4978, %v4970
    %v7219 = vpack.c.b16 %v4979, %v4971
    %v7220 = vpack.c.b16 %v4980, %v4972
    %v7221 = vpack.c.b16 %v4981, %v4973
    %v7222 = vpack.c.b16 %v4982, %v4974
    %v7223 = vpack.c.b16 %v4983, %v4975
    %v7224 = vpack.c.b16 %v4992, %v4984
    %v7225 = vpack.c.b16 %v4993, %v4985
    %v7226 = vpack.c.b16 %v4994, %v4986
    %v7227 = vpack.c.b16 %v4995, %v4987
    %v7228 = vpack.c.b16 %v4996, %v4988
    %v7229 = vpack.c.b16 %v4997, %v4989
    %v7230 = vpack.c.b16 %v4998, %v4990
    %v7231 = vpack.c.b16 %v4999, %v4991
    %v7232 = vpack.c.b16 %v5008, %v5000
    %v7233 = vpack.c.b16 %v5009, %v5001
    %v7234 = vpack.c.b16 %v5010, %v5002
    %v7235 = vpack.c.b16 %v5011, %v5003
    %v7236 = vpack.c.b16 %v5012, %v5004
    %v7237 = vpack.c.b16 %v5013, %v5005
    %v7238 = vpack.c.b16 %v5014, %v5006
    %v7239 = vpack.c.b16 %v5015, %v5007
    %v7240 = vpack.c.b16 %v5024, %v5016
    %v7241 = vpack.c.b16 %v5025, %v5017
    %v7242 = vpack.c.b16 %v5026, %v5018
    %v7243 = vpack.c.b16 %v5027, %v5019
    %v7244 = vpack.c.b16 %v5028, %v5020
    %v7245 = vpack.c.b16 %v5029, %v5021
    %v7246 = vpack.c.b16 %v5030, %v5022
    %v7247 = vpack.c.b16 %v5031, %v5023
    %v7248 = vpack.c.b16 %v5040, %v5032
    %v7249 = vpack.c.b16 %v5041, %v5033
    %v7250 = vpack.c.b16 %v5042, %v5034
    %v7251 = vpack.c.b16 %v5043, %v5035
    %v7252 = vpack.c.b16 %v5044, %v5036
    %v7253 = vpack.c.b16 %v5045, %v5037
    %v7254 = vpack.c.b16 %v5046, %v5038
    %v7255 = vpack.c.b16 %v5047, %v5039
    %v7256 = vpack.c.b16 %v5056, %v5048
    %v7257 = vpack.c.b16 %v5057, %v5049
    %v7258 = vpack.c.b16 %v5058, %v5050
    %v7259 = vpack.c.b16 %v5059, %v5051
    %v7260 = vpack.c.b16 %v5060, %v5052
    %v7261 = vpack.c.b16 %v5061, %v5053
    %v7262 = vpack.c.b16 %v5062, %v5054
    %v7263 = vpack.c.b16 %v5063, %v5055
    %v7264 = vpack.c.b16 %v5072, %v5064
    %v7265 = vpack.c.b16 %v5073, %v5065
    %v7266 = vpack.c.b16 %v5074, %v5066
    %v7267 = vpack.c.b16 %v5075, %v5067
    %v7268 = vpack.c.b16 %v5076, %v5068
    %v7269 = vpack.c.b16 %v5077, %v5069
    %v7270 = vpack.c.b16 %v5078, %v5070
    %v7271 = vpack.c.b16 %v5079, %v5071
    %v7272 = vpack.c.b16 %v5088, %v5080
    %v7273 = vpack.c.b16 %v5089, %v5081
    %v7274 = vpack.c.b16 %v5090, %v5082
    %v7275 = vpack.c.b16 %v5091, %v5083
    %v7276 = vpack.c.b16 %v5092, %v5084
    %v7277 = vpack.c.b16 %v5093, %v5085
    %v7278 = vpack.c.b16 %v5094, %v5086
    %v7279 = vpack.c.b16 %v5095, %v5087
    %v7280 = vpack.c.b16 %v5104, %v5096
    %v7281 = vpack.c.b16 %v5105, %v5097
    %v7282 = vpack.c.b16 %v5106, %v5098
    %v7283 = vpack.c.b16 %v5107, %v5099
    %v7284 = vpack.c.b16 %v5108, %v5100
    %v7285 = vpack.c.b16 %v5109, %v5101
    %v7286 = vpack.c.b16 %v5110, %v5102
    %v7287 = vpack.c.b16 %v5111, %v5103
    %v7288 = vpack.c.b16 %v5120, %v5112
    %v7289 = vpack.c.b16 %v5121, %v5113
    %v7290 = vpack.c.b16 %v5122, %v5114
    %v7291 = vpack.c.b16 %v5123, %v5115
    %v7292 = vpack.c.b16 %v5124, %v5116
    %v7293 = vpack.c.b16 %v5125, %v5117
    %v7294 = vpack.c.b16 %v5126, %v5118
    %v7295 = vpack.c.b16 %v5127, %v5119
    %v7296 = vpack.c.b16 %v5136, %v5128
    %v7297 = vpack.c.b16 %v5137, %v5129
    %v7298 = vpack.c.b16 %v5138, %v5130
    %v7299 = vpack.c.b16 %v5139, %v5131
    %v7300 = vpack.c.b16 %v5140, %v5132
    %v7301 = vpack.c.b16 %v5141, %v5133
    %v7302 = vpack.c.b16 %v5142, %v5134
    %v7303 = vpack.c.b16 %v5143, %v5135
    %v7304 = vpack.c.b16 %v5152, %v5144
    %v7305 = vpack.c.b16 %v5153, %v5145
    %v7306 = vpack.c.b16 %v5154, %v5146
    %v7307 = vpack.c.b16 %v5155, %v5147
    %v7308 = vpack.c.b16 %v5156, %v5148
    %v7309 = vpack.c.b16 %v5157, %v5149
    %v7310 = vpack.c.b16 %v5158, %v5150
    %v7311 = vpack.c.b16 %v5159, %v5151
    %v7312 = vpack.c.b16 %v5168, %v5160
    %v7313 = vpack.c.b16 %v5169, %v5161
    %v7314 = vpack.c.b16 %v5170, %v5162
    %v7315 = vpack.c.b16 %v5171, %v5163
    %v7316 = vpack.c.b16 %v5172, %v5164
    %v7317 = vpack.c.b16 %v5173, %v5165
    %v7318 = vpack.c.b16 %v5174, %v5166
    %v7319 = vpack.c.b16 %v5175, %v5167
    %v7320 = vpack.c.b16 %v5184, %v5176
    %v7321 = vpack.c.b16 %v5185, %v5177
    %v7322 = vpack.c.b16 %v5186, %v5178
    %v7323 = vpack.c.b16 %v5187, %v5179
    %v7324 = vpack.c.b16 %v5188, %v5180
    %v7325 = vpack.c.b16 %v5189, %v5181
    %v7326 = vpack.c.b16 %v5190, %v5182
    %v7327 = vpack.c.b16 %v5191, %v5183
    %v7328 = vpack.c.b16 %v5200, %v5192
    %v7329 = vpack.c.b16 %v5201, %v5193
    %v7330 = vpack.c.b16 %v5202, %v5194
    %v7331 = vpack.c.b16 %v5203, %v5195
    %v7332 = vpack.c.b16 %v5204, %v5196
    %v7333 = vpack.c.b16 %v5205, %v5197
    %v7334 = vpack.c.b16 %v5206, %v5198
    %v7335 = vpack.c.b16 %v5207, %v5199
    %v7336 = vpack.c.b16 %v5216, %v5208
    %v7337 = vpack.c.b16 %v5217, %v5209
    %v7338 = vpack.c.b16 %v5218, %v5210
    %v7339 = vpack.c.b16 %v5219, %v5211
    %v7340 = vpack.c.b16 %v5220, %v5212
    %v7341 = vpack.c.b16 %v5221, %v5213
    %v7342 = vpack.c.b16 %v5222, %v5214
    %v7343 = vpack.c.b16 %v5223, %v5215
    %v7344 = vpack.c.b16 %v5232, %v5224
    %v7345 = vpack.c.b16 %v5233, %v5225
    %v7346 = vpack.c.b16 %v5234, %v5226
    %v7347 = vpack.c.b16 %v5235, %v5227
    %v7348 = vpack.c.b16 %v5236, %v5228
    %v7349 = vpack.c.b16 %v5237, %v5229
    %v7350 = vpack.c.b16 %v5238, %v5230
    %v7351 = vpack.c.b16 %v5239, %v5231
    %v7352 = vpack.c.b16 %v5248, %v5240
    %v7353 = vpack.c.b16 %v5249, %v5241
    %v7354 = vpack.c.b16 %v5250, %v5242
    %v7355 = vpack.c.b16 %v5251, %v5243
    %v7356 = vpack.c.b16 %v5252, %v5244
    %v7357 = vpack.c.b16 %v5253, %v5245
    %v7358 = vpack.c.b16 %v5254, %v5246
    %v7359 = vpack.c.b16 %v5255, %v5247
    %v7360 = vpack.c.b16 %v5264, %v5256
    %v7361 = vpack.c.b16 %v5265, %v5257
    %v7362 = vpack.c.b16 %v5266, %v5258
    %v7363 = vpack.c.b16 %v5267, %v5259
    %v7364 = vpack.c.b16 %v5268, %v5260
    %v7365 = vpack.c.b16 %v5269, %v5261
    %v7366 = vpack.c.b16 %v5270, %v5262
    %v7367 = vpack.c.b16 %v5271, %v5263
    %v7368 = vpack.c.b16 %v5280, %v5272
    %v7369 = vpack.c.b16 %v5281, %v5273
    %v7370 = vpack.c.b16 %v5282, %v5274
    %v7371 = vpack.c.b16 %v5283, %v5275
    %v7372 = vpack.c.b16 %v5284, %v5276
    %v7373 = vpack.c.b16 %v5285, %v5277
    %v7374 = vpack.c.b16 %v5286, %v5278
    %v7375 = vpack.c.b16 %v5287, %v5279
    %v7376 = vpack.c.b16 %v5296, %v5288
    %v7377 = vpack.c.b16 %v5297, %v5289
    %v7378 = vpack.c.b16 %v5298, %v5290
    %v7379 = vpack.c.b16 %v5299, %v5291
    %v7380 = vpack.c.b16 %v5300, %v5292
    %v7381 = vpack.c.b16 %v5301, %v5293
    %v7382 = vpack.c.b16 %v5302, %v5294
    %v7383 = vpack.c.b16 %v5303, %v5295
    %v7384 = vpack.c.b16 %v5312, %v5304
    %v7385 = vpack.c.b16 %v5313, %v5305
    %v7386 = vpack.c.b16 %v5314, %v5306
    %v7387 = vpack.c.b16 %v5315, %v5307
    %v7388 = vpack.c.b16 %v5316, %v5308
    %v7389 = vpack.c.b16 %v5317, %v5309
    %v7390 = vpack.c.b16 %v5318, %v5310
    %v7391 = vpack.c.b16 %v5319, %v5311
    %v7392 = vpack.c.b16 %v5328, %v5320
    %v7393 = vpack.c.b16 %v5329, %v5321
    %v7394 = vpack.c.b16 %v5330, %v5322
    %v7395 = vpack.c.b16 %v5331, %v5323
    %v7396 = vpack.c.b16 %v5332, %v5324
    %v7397 = vpack.c.b16 %v5333, %v5325
    %v7398 = vpack.c.b16 %v5334, %v5326
    %v7399 = vpack.c.b16 %v5335, %v5327
    %v7400 = vpack.c.b16 %v5344, %v5336
    %v7401 = vpack.c.b16 %v5345, %v5337
    %v7402 = vpack.c.b16 %v5346, %v5338
    %v7403 = vpack.c.b16 %v5347, %v5339
    %v7404 = vpack.c.b16 %v5348, %v5340
    %v7405 = vpack.c.b16 %v5349, %v5341
    %v7406 = vpack.c.b16 %v5350, %v5342
    %v7407 = vpack.c.b16 %v5351, %v5343
    %v7408 = vpack.c.b16 %v5360, %v5352
    %v7409 = vpack.c.b16 %v5361, %v5353
    %v7410 = vpack.c.b16 %v5362, %v5354
    %v7411 = vpack.c.b16 %v5363, %v5355
    %v7412 = vpack.c.b16 %v5364, %v5356
    %v7413 = vpack.c.b16 %v5365, %v5357
    %v7414 = vpack.c.b16 %v5366, %v5358
    %v7415 = vpack.c.b16 %v5367, %v5359
    %v7416 = vpack.c.b16 %v5376, %v5368
    %v7417 = vpack.c.b16 %v5377, %v5369
    %v7418 = vpack.c.b16 %v5378, %v5370
    %v7419 = vpack.c.b16 %v5379, %v5371
    %v7420 = vpack.c.b16 %v5380, %v5372
    %v7421 = vpack.c.b16 %v5381, %v5373
    %v7422 = vpack.c.b16 %v5382, %v5374
    %v7423 = vpack.c.b16 %v5383, %v5375
    %v7424 = vpack.c.b16 %v5392, %v5384
    %v7425 = vpack.c.b16 %v5393, %v5385
    %v7426 = vpack.c.b16 %v5394, %v5386
    %v7427 = vpack.c.b16 %v5395, %v5387
    %v7428 = vpack.c.b16 %v5396, %v5388
    %v7429 = vpack.c.b16 %v5397, %v5389
    %v7430 = vpack.c.b16 %v5398, %v5390
    %v7431 = vpack.c.b16 %v5399, %v5391
    %v7432 = vpack.c.b16 %v5408, %v5400
    %v7433 = vpack.c.b16 %v5409, %v5401
    %v7434 = vpack.c.b16 %v5410, %v5402
    %v7435 = vpack.c.b16 %v5411, %v5403
    %v7436 = vpack.c.b16 %v5412, %v5404
    %v7437 = vpack.c.b16 %v5413, %v5405
    %v7438 = vpack.c.b16 %v5414, %v5406
    %v7439 = vpack.c.b16 %v5415, %v5407
    %v7440 = vpack.c.b16 %v5424, %v5416
    %v7441 = vpack.c.b16 %v5425, %v5417
    %v7442 = vpack.c.b16 %v5426, %v5418
    %v7443 = vpack.c.b16 %v5427, %v5419
    %v7444 = vpack.c.b16 %v5428, %v5420
    %v7445 = vpack.c.b16 %v5429, %v5421
    %v7446 = vpack.c.b16 %v5430, %v5422
    %v7447 = vpack.c.b16 %v5431, %v5423
    %v7448 = vpack.c.b16 %v5440, %v5432
    %v7449 = vpack.c.b16 %v5441, %v5433
    %v7450 = vpack.c.b16 %v5442, %v5434
    %v7451 = vpack.c.b16 %v5443, %v5435
    %v7452 = vpack.c.b16 %v5444, %v5436
    %v7453 = vpack.c.b16 %v5445, %v5437
    %v7454 = vpack.c.b16 %v5446, %v5438
    %v7455 = vpack.c.b16 %v5447, %v5439
    %v7456 = vpack.c.b16 %v5456, %v5448
    %v7457 = vpack.c.b16 %v5457, %v5449
    %v7458 = vpack.c.b16 %v5458, %v5450
    %v7459 = vpack.c.b16 %v5459, %v5451
    %v7460 = vpack.c.b16 %v5460, %v5452
    %v7461 = vpack.c.b16 %v5461, %v5453
    %v7462 = vpack.c.b16 %v5462, %v5454
    %v7463 = vpack.c.b16 %v5463, %v5455
    %v7464 = vpack.c.b16 %v5472, %v5464
    %v7465 = vpack.c.b16 %v5473, %v5465
    %v7466 = vpack.c.b16 %v5474, %v5466
    %v7467 = vpack.c.b16 %v5475, %v5467
    %v7468 = vpack.c.b16 %v5476, %v5468
    %v7469 = vpack.c.b16 %v5477, %v5469
    %v7470 = vpack.c.b16 %v5478, %v5470
    %v7471 = vpack.c.b16 %v5479, %v5471
    %v7472 = vpack.c.b16 %v5488, %v5480
    %v7473 = vpack.c.b16 %v5489, %v5481
    %v7474 = vpack.c.b16 %v5490, %v5482
    %v7475 = vpack.c.b16 %v5491, %v5483
    %v7476 = vpack.c.b16 %v5492, %v5484
    %v7477 = vpack.c.b16 %v5493, %v5485
    %v7478 = vpack.c.b16 %v5494, %v5486
    %v7479 = vpack.c.b16 %v5495, %v5487
    %v7480 = vpack.c.b16 %v5504, %v5496
    %v7481 = vpack.c.b16 %v5505, %v5497
    %v7482 = vpack.c.b16 %v5506, %v5498
    %v7483 = vpack.c.b16 %v5507, %v5499
    %v7484 = vpack.c.b16 %v5508, %v5500
    %v7485 = vpack.c.b16 %v5509, %v5501
    %v7486 = vpack.c.b16 %v5510, %v5502
    %v7487 = vpack.c.b16 %v5511, %v5503
    %v7488 = vpack.c.b16 %v5520, %v5512
    %v7489 = vpack.c.b16 %v5521, %v5513
    %v7490 = vpack.c.b16 %v5522, %v5514
    %v7491 = vpack.c.b16 %v5523, %v5515
    %v7492 = vpack.c.b16 %v5524, %v5516
    %v7493 = vpack.c.b16 %v5525, %v5517
    %v7494 = vpack.c.b16 %v5526, %v5518
    %v7495 = vpack.c.b16 %v5527, %v5519
    %v7496 = vpack.c.b16 %v5536, %v5528
    %v7497 = vpack.c.b16 %v5537, %v5529
    %v7498 = vpack.c.b16 %v5538, %v5530
    %v7499 = vpack.c.b16 %v5539, %v5531
    %v7500 = vpack.c.b16 %v5540, %v5532
    %v7501 = vpack.c.b16 %v5541, %v5533
    %v7502 = vpack.c.b16 %v5542, %v5534
    %v7503 = vpack.c.b16 %v5543, %v5535
    %v7504 = vpack.c.b16 %v5552, %v5544
    %v7505 = vpack.c.b16 %v5553, %v5545
    %v7506 = vpack.c.b16 %v5554, %v5546
    %v7507 = vpack.c.b16 %v5555, %v5547
    %v7508 = vpack.c.b16 %v5556, %v5548
    %v7509 = vpack.c.b16 %v5557, %v5549
    %v7510 = vpack.c.b16 %v5558, %v5550
    %v7511 = vpack.c.b16 %v5559, %v5551
    %v7512 = vpack.c.b16 %v5568, %v5560
    %v7513 = vpack.c.b16 %v5569, %v5561
    %v7514 = vpack.c.b16 %v5570, %v5562
    %v7515 = vpack.c.b16 %v5571, %v5563
    %v7516 = vpack.c.b16 %v5572, %v5564
    %v7517 = vpack.c.b16 %v5573, %v5565
    %v7518 = vpack.c.b16 %v5574, %v5566
    %v7519 = vpack.c.b16 %v5575, %v5567
    %v7520 = vpack.c.b16 %v5584, %v5576
    %v7521 = vpack.c.b16 %v5585, %v5577
    %v7522 = vpack.c.b16 %v5586, %v5578
    %v7523 = vpack.c.b16 %v5587, %v5579
    %v7524 = vpack.c.b16 %v5588, %v5580
    %v7525 = vpack.c.b16 %v5589, %v5581
    %v7526 = vpack.c.b16 %v5590, %v5582
    %v7527 = vpack.c.b16 %v5591, %v5583
    %v7528 = vpack.c.b16 %v5600, %v5592
    %v7529 = vpack.c.b16 %v5601, %v5593
    %v7530 = vpack.c.b16 %v5602, %v5594
    %v7531 = vpack.c.b16 %v5603, %v5595
    %v7532 = vpack.c.b16 %v5604, %v5596
    %v7533 = vpack.c.b16 %v5605, %v5597
    %v7534 = vpack.c.b16 %v5606, %v5598
    %v7535 = vpack.c.b16 %v5607, %v5599
    %v7536 = vpack.c.b16 %v5616, %v5608
    %v7537 = vpack.c.b16 %v5617, %v5609
    %v7538 = vpack.c.b16 %v5618, %v5610
    %v7539 = vpack.c.b16 %v5619, %v5611
    %v7540 = vpack.c.b16 %v5620, %v5612
    %v7541 = vpack.c.b16 %v5621, %v5613
    %v7542 = vpack.c.b16 %v5622, %v5614
    %v7543 = vpack.c.b16 %v5623, %v5615
    %v7544 = vpack.c.b16 %v5632, %v5624
    %v7545 = vpack.c.b16 %v5633, %v5625
    %v7546 = vpack.c.b16 %v5634, %v5626
    %v7547 = vpack.c.b16 %v5635, %v5627
    %v7548 = vpack.c.b16 %v5636, %v5628
    %v7549 = vpack.c.b16 %v5637, %v5629
    %v7550 = vpack.c.b16 %v5638, %v5630
    %v7551 = vpack.c.b16 %v5639, %v5631
    %v7552 = vpack.c.b16 %v5648, %v5640
    %v7553 = vpack.c.b16 %v5649, %v5641
    %v7554 = vpack.c.b16 %v5650, %v5642
    %v7555 = vpack.c.b16 %v5651, %v5643
    %v7556 = vpack.c.b16 %v5652, %v5644
    %v7557 = vpack.c.b16 %v5653, %v5645
    %v7558 = vpack.c.b16 %v5654, %v5646
    %v7559 = vpack.c.b16 %v5655, %v5647
    %v7560 = vpack.c.b16 %v5664, %v5656
    %v7561 = vpack.c.b16 %v5665, %v5657
    %v7562 = vpack.c.b16 %v5666, %v5658
    %v7563 = vpack.c.b16 %v5667, %v5659
    %v7564 = vpack.c.b16 %v5668, %v5660
    %v7565 = vpack.c.b16 %v5669, %v5661
    %v7566 = vpack.c.b16 %v5670, %v5662
    %v7567 = vpack.c.b16 %v5671, %v5663
    %v7568 = vpack.c.b16 %v5680, %v5672
    %v7569 = vpack.c.b16 %v5681, %v5673
    %v7570 = vpack.c.b16 %v5682, %v5674
    %v7571 = vpack.c.b16 %v5683, %v5675
    %v7572 = vpack.c.b16 %v5684, %v5676
    %v7573 = vpack.c.b16 %v5685, %v5677
    %v7574 = vpack.c.b16 %v5686, %v5678
    %v7575 = vpack.c.b16 %v5687, %v5679
    %v7576 = vpack.c.b16 %v5696, %v5688
    %v7577 = vpack.c.b16 %v5697, %v5689
    %v7578 = vpack.c.b16 %v5698, %v5690
    %v7579 = vpack.c.b16 %v5699, %v5691
    %v7580 = vpack.c.b16 %v5700, %v5692
    %v7581 = vpack.c.b16 %v5701, %v5693
    %v7582 = vpack.c.b16 %v5702, %v5694
    %v7583 = vpack.c.b16 %v5703, %v5695
    %v7584 = vpack.c.b16 %v5712, %v5704
    %v7585 = vpack.c.b16 %v5713, %v5705
    %v7586 = vpack.c.b16 %v5714, %v5706
    %v7587 = vpack.c.b16 %v5715, %v5707
    %v7588 = vpack.c.b16 %v5716, %v5708
    %v7589 = vpack.c.b16 %v5717, %v5709
    %v7590 = vpack.c.b16 %v5718, %v5710
    %v7591 = vpack.c.b16 %v5719, %v5711
    %v7592 = vpack.c.b16 %v5728, %v5720
    %v7593 = vpack.c.b16 %v5729, %v5721
    %v7594 = vpack.c.b16 %v5730, %v5722
    %v7595 = vpack.c.b16 %v5731, %v5723
    %v7596 = vpack.c.b16 %v5732, %v5724
    %v7597 = vpack.c.b16 %v5733, %v5725
    %v7598 = vpack.c.b16 %v5734, %v5726
    %v7599 = vpack.c.b16 %v5735, %v5727
    %v7600 = vpack.c.b16 %v5744, %v5736
    %v7601 = vpack.c.b16 %v5745, %v5737
    %v7602 = vpack.c.b16 %v5746, %v5738
    %v7603 = vpack.c.b16 %v5747, %v5739
    %v7604 = vpack.c.b16 %v5748, %v5740
    %v7605 = vpack.c.b16 %v5749, %v5741
    %v7606 = vpack.c.b16 %v5750, %v5742
    %v7607 = vpack.c.b16 %v5751, %v5743
    %v7608 = vpack.c.b16 %v5760, %v5752
    %v7609 = vpack.c.b16 %v5761, %v5753
    %v7610 = vpack.c.b16 %v5762, %v5754
    %v7611 = vpack.c.b16 %v5763, %v5755
    %v7612 = vpack.c.b16 %v5764, %v5756
    %v7613 = vpack.c.b16 %v5765, %v5757
    %v7614 = vpack.c.b16 %v5766, %v5758
    %v7615 = vpack.c.b16 %v5767, %v5759
    %v7616 = vpack.c.b16 %v5776, %v5768
    %v7617 = vpack.c.b16 %v5777, %v5769
    %v7618 = vpack.c.b16 %v5778, %v5770
    %v7619 = vpack.c.b16 %v5779, %v5771
    %v7620 = vpack.c.b16 %v5780, %v5772
    %v7621 = vpack.c.b16 %v5781, %v5773
    %v7622 = vpack.c.b16 %v5782, %v5774
    %v7623 = vpack.c.b16 %v5783, %v5775
    %v7624 = vpack.c.b16 %v5792, %v5784
    %v7625 = vpack.c.b16 %v5793, %v5785
    %v7626 = vpack.c.b16 %v5794, %v5786
    %v7627 = vpack.c.b16 %v5795, %v5787
    %v7628 = vpack.c.b16 %v5796, %v5788
    %v7629 = vpack.c.b16 %v5797, %v5789
    %v7630 = vpack.c.b16 %v5798, %v5790
    %v7631 = vpack.c.b16 %v5799, %v5791
    %v7632 = vpack.c.b16 %v5808, %v5800
    %v7633 = vpack.c.b16 %v5809, %v5801
    %v7634 = vpack.c.b16 %v5810, %v5802
    %v7635 = vpack.c.b16 %v5811, %v5803
    %v7636 = vpack.c.b16 %v5812, %v5804
    %v7637 = vpack.c.b16 %v5813, %v5805
    %v7638 = vpack.c.b16 %v5814, %v5806
    %v7639 = vpack.c.b16 %v5815, %v5807
    %v7640 = vpack.c.b16 %v5824, %v5816
    %v7641 = vpack.c.b16 %v5825, %v5817
    %v7642 = vpack.c.b16 %v5826, %v5818
    %v7643 = vpack.c.b16 %v5827, %v5819
    %v7644 = vpack.c.b16 %v5828, %v5820
    %v7645 = vpack.c.b16 %v5829, %v5821
    %v7646 = vpack.c.b16 %v5830, %v5822
    %v7647 = vpack.c.b16 %v5831, %v5823
    %v7648 = vpack.c.b16 %v5840, %v5832
    %v7649 = vpack.c.b16 %v5841, %v5833
    %v7650 = vpack.c.b16 %v5842, %v5834
    %v7651 = vpack.c.b16 %v5843, %v5835
    %v7652 = vpack.c.b16 %v5844, %v5836
    %v7653 = vpack.c.b16 %v5845, %v5837
    %v7654 = vpack.c.b16 %v5846, %v5838
    %v7655 = vpack.c.b16 %v5847, %v5839
    %v7656 = vpack.c.b16 %v5856, %v5848
    %v7657 = vpack.c.b16 %v5857, %v5849
    %v7658 = vpack.c.b16 %v5858, %v5850
    %v7659 = vpack.c.b16 %v5859, %v5851
    %v7660 = vpack.c.b16 %v5860, %v5852
    %v7661 = vpack.c.b16 %v5861, %v5853
    %v7662 = vpack.c.b16 %v5862, %v5854
    %v7663 = vpack.c.b16 %v5863, %v5855
    %v7664 = vpack.c.b16 %v5872, %v5864
    %v7665 = vpack.c.b16 %v5873, %v5865
    %v7666 = vpack.c.b16 %v5874, %v5866
    %v7667 = vpack.c.b16 %v5875, %v5867
    %v7668 = vpack.c.b16 %v5876, %v5868
    %v7669 = vpack.c.b16 %v5877, %v5869
    %v7670 = vpack.c.b16 %v5878, %v5870
    %v7671 = vpack.c.b16 %v5879, %v5871
    %v7672 = vpack.c.b16 %v5888, %v5880
    %v7673 = vpack.c.b16 %v5889, %v5881
    %v7674 = vpack.c.b16 %v5890, %v5882
    %v7675 = vpack.c.b16 %v5891, %v5883
    %v7676 = vpack.c.b16 %v5892, %v5884
    %v7677 = vpack.c.b16 %v5893, %v5885
    %v7678 = vpack.c.b16 %v5894, %v5886
    %v7679 = vpack.c.b16 %v5895, %v5887
    %v7680 = vpack.c.b16 %v5904, %v5896
    %v7681 = vpack.c.b16 %v5905, %v5897
    %v7682 = vpack.c.b16 %v5906, %v5898
    %v7683 = vpack.c.b16 %v5907, %v5899
    %v7684 = vpack.c.b16 %v5908, %v5900
    %v7685 = vpack.c.b16 %v5909, %v5901
    %v7686 = vpack.c.b16 %v5910, %v5902
    %v7687 = vpack.c.b16 %v5911, %v5903
    %v7688 = vpack.c.b16 %v5920, %v5912
    %v7689 = vpack.c.b16 %v5921, %v5913
    %v7690 = vpack.c.b16 %v5922, %v5914
    %v7691 = vpack.c.b16 %v5923, %v5915
    %v7692 = vpack.c.b16 %v5924, %v5916
    %v7693 = vpack.c.b16 %v5925, %v5917
    %v7694 = vpack.c.b16 %v5926, %v5918
    %v7695 = vpack.c.b16 %v5927, %v5919
    %v7696 = vpack.c.b16 %v5936, %v5928
    %v7697 = vpack.c.b16 %v5937, %v5929
    %v7698 = vpack.c.b16 %v5938, %v5930
    %v7699 = vpack.c.b16 %v5939, %v5931
    %v7700 = vpack.c.b16 %v5940, %v5932
    %v7701 = vpack.c.b16 %v5941, %v5933
    %v7702 = vpack.c.b16 %v5942, %v5934
    %v7703 = vpack.c.b16 %v5943, %v5935
    %v7704 = vpack.c.b16 %v5952, %v5944
    %v7705 = vpack.c.b16 %v5953, %v5945
    %v7706 = vpack.c.b16 %v5954, %v5946
    %v7707 = vpack.c.b16 %v5955, %v5947
    %v7708 = vpack.c.b16 %v5956, %v5948
    %v7709 = vpack.c.b16 %v5957, %v5949
    %v7710 = vpack.c.b16 %v5958, %v5950
    %v7711 = vpack.c.b16 %v5959, %v5951
    %v7712 = vpack.c.b16 %v5968, %v5960
    %v7713 = vpack.c.b16 %v5969, %v5961
    %v7714 = vpack.c.b16 %v5970, %v5962
    %v7715 = vpack.c.b16 %v5971, %v5963
    %v7716 = vpack.c.b16 %v5972, %v5964
    %v7717 = vpack.c.b16 %v5973, %v5965
    %v7718 = vpack.c.b16 %v5974, %v5966
    %v7719 = vpack.c.b16 %v5975, %v5967
    %v7720 = vpack.c.b16 %v5984, %v5976
    %v7721 = vpack.c.b16 %v5985, %v5977
    %v7722 = vpack.c.b16 %v5986, %v5978
    %v7723 = vpack.c.b16 %v5987, %v5979
    %v7724 = vpack.c.b16 %v5988, %v5980
    %v7725 = vpack.c.b16 %v5989, %v5981
    %v7726 = vpack.c.b16 %v5990, %v5982
    %v7727 = vpack.c.b16 %v5991, %v5983
    %v7728 = vpack.c.b16 %v6000, %v5992
    %v7729 = vpack.c.b16 %v6001, %v5993
    %v7730 = vpack.c.b16 %v6002, %v5994
    %v7731 = vpack.c.b16 %v6003, %v5995
    %v7732 = vpack.c.b16 %v6004, %v5996
    %v7733 = vpack.c.b16 %v6005, %v5997
    %v7734 = vpack.c.b16 %v6006, %v5998
    %v7735 = vpack.c.b16 %v6007, %v5999
    %v7736 = vpack.c.b16 %v6016, %v6008
    %v7737 = vpack.c.b16 %v6017, %v6009
    %v7738 = vpack.c.b16 %v6018, %v6010
    %v7739 = vpack.c.b16 %v6019, %v6011
    %v7740 = vpack.c.b16 %v6020, %v6012
    %v7741 = vpack.c.b16 %v6021, %v6013
    %v7742 = vpack.c.b16 %v6022, %v6014
    %v7743 = vpack.c.b16 %v6023, %v6015
    %v7744 = vpack.c.b16 %v6032, %v6024
    %v7745 = vpack.c.b16 %v6033, %v6025
    %v7746 = vpack.c.b16 %v6034, %v6026
    %v7747 = vpack.c.b16 %v6035, %v6027
    %v7748 = vpack.c.b16 %v6036, %v6028
    %v7749 = vpack.c.b16 %v6037, %v6029
    %v7750 = vpack.c.b16 %v6038, %v6030
    %v7751 = vpack.c.b16 %v6039, %v6031
    %v7752 = vpack.c.b16 %v6048, %v6040
    %v7753 = vpack.c.b16 %v6049, %v6041
    %v7754 = vpack.c.b16 %v6050, %v6042
    %v7755 = vpack.c.b16 %v6051, %v6043
    %v7756 = vpack.c.b16 %v6052, %v6044
    %v7757 = vpack.c.b16 %v6053, %v6045
    %v7758 = vpack.c.b16 %v6054, %v6046
    %v7759 = vpack.c.b16 %v6055, %v6047
    %v7760 = vpack.c.b16 %v6064, %v6056
    %v7761 = vpack.c.b16 %v6065, %v6057
    %v7762 = vpack.c.b16 %v6066, %v6058
    %v7763 = vpack.c.b16 %v6067, %v6059
    %v7764 = vpack.c.b16 %v6068, %v6060
    %v7765 = vpack.c.b16 %v6069, %v6061
    %v7766 = vpack.c.b16 %v6070, %v6062
    %v7767 = vpack.c.b16 %v6071, %v6063
    %v7768 = vpack.c.b16 %v6080, %v6072
    %v7769 = vpack.c.b16 %v6081, %v6073
    %v7770 = vpack.c.b16 %v6082, %v6074
    %v7771 = vpack.c.b16 %v6083, %v6075
    %v7772 = vpack.c.b16 %v6084, %v6076
    %v7773 = vpack.c.b16 %v6085, %v6077
    %v7774 = vpack.c.b16 %v6086, %v6078
    %v7775 = vpack.c.b16 %v6087, %v6079
    %v7776 = vpack.c.b16 %v6096, %v6088
    %v7777 = vpack.c.b16 %v6097, %v6089
    %v7778 = vpack.c.b16 %v6098, %v6090
    %v7779 = vpack.c.b16 %v6099, %v6091
    %v7780 = vpack.c.b16 %v6100, %v6092
    %v7781 = vpack.c.b16 %v6101, %v6093
    %v7782 = vpack.c.b16 %v6102, %v6094
    %v7783 = vpack.c.b16 %v6103, %v6095
    %v7784 = vpack.c.b16 %v6112, %v6104
    %v7785 = vpack.c.b16 %v6113, %v6105
    %v7786 = vpack.c.b16 %v6114, %v6106
    %v7787 = vpack.c.b16 %v6115, %v6107
    %v7788 = vpack.c.b16 %v6116, %v6108
    %v7789 = vpack.c.b16 %v6117, %v6109
    %v7790 = vpack.c.b16 %v6118, %v6110
    %v7791 = vpack.c.b16 %v6119, %v6111
    %v7792 = vpack.c.b16 %v6128, %v6120
    %v7793 = vpack.c.b16 %v6129, %v6121
    %v7794 = vpack.c.b16 %v6130, %v6122
    %v7795 = vpack.c.b16 %v6131, %v6123
    %v7796 = vpack.c.b16 %v6132, %v6124
    %v7797 = vpack.c.b16 %v6133, %v6125
    %v7798 = vpack.c.b16 %v6134, %v6126
    %v7799 = vpack.c.b16 %v6135, %v6127
    %v7800 = vpack.c.b16 %v6144, %v6136
    %v7801 = vpack.c.b16 %v6145, %v6137
    %v7802 = vpack.c.b16 %v6146, %v6138
    %v7803 = vpack.c.b16 %v6147, %v6139
    %v7804 = vpack.c.b16 %v6148, %v6140
    %v7805 = vpack.c.b16 %v6149, %v6141
    %v7806 = vpack.c.b16 %v6150, %v6142
    %v7807 = vpack.c.b16 %v6151, %v6143
    %v7808 = vpack.c.b16 %v6160, %v6152
    %v7809 = vpack.c.b16 %v6161, %v6153
    %v7810 = vpack.c.b16 %v6162, %v6154
    %v7811 = vpack.c.b16 %v6163, %v6155
    %v7812 = vpack.c.b16 %v6164, %v6156
    %v7813 = vpack.c.b16 %v6165, %v6157
    %v7814 = vpack.c.b16 %v6166, %v6158
    %v7815 = vpack.c.b16 %v6167, %v6159
    %v7816 = vpack.c.b16 %v6176, %v6168
    %v7817 = vpack.c.b16 %v6177, %v6169
    %v7818 = vpack.c.b16 %v6178, %v6170
    %v7819 = vpack.c.b16 %v6179, %v6171
    %v7820 = vpack.c.b16 %v6180, %v6172
    %v7821 = vpack.c.b16 %v6181, %v6173
    %v7822 = vpack.c.b16 %v6182, %v6174
    %v7823 = vpack.c.b16 %v6183, %v6175
    %v7824 = vpack.c.b16 %v6192, %v6184
    %v7825 = vpack.c.b16 %v6193, %v6185
    %v7826 = vpack.c.b16 %v6194, %v6186
    %v7827 = vpack.c.b16 %v6195, %v6187
    %v7828 = vpack.c.b16 %v6196, %v6188
    %v7829 = vpack.c.b16 %v6197, %v6189
    %v7830 = vpack.c.b16 %v6198, %v6190
    %v7831 = vpack.c.b16 %v6199, %v6191
    %v7832 = vpack.c.b16 %v6208, %v6200
    %v7833 = vpack.c.b16 %v6209, %v6201
    %v7834 = vpack.c.b16 %v6210, %v6202
    %v7835 = vpack.c.b16 %v6211, %v6203
    %v7836 = vpack.c.b16 %v6212, %v6204
    %v7837 = vpack.c.b16 %v6213, %v6205
    %v7838 = vpack.c.b16 %v6214, %v6206
    %v7839 = vpack.c.b16 %v6215, %v6207
    %v7840 = vpack.c.b16 %v6224, %v6216
    %v7841 = vpack.c.b16 %v6225, %v6217
    %v7842 = vpack.c.b16 %v6226, %v6218
    %v7843 = vpack.c.b16 %v6227, %v6219
    %v7844 = vpack.c.b16 %v6228, %v6220
    %v7845 = vpack.c.b16 %v6229, %v6221
    %v7846 = vpack.c.b16 %v6230, %v6222
    %v7847 = vpack.c.b16 %v6231, %v6223
    %v7848 = vpack.c.b16 %v6240, %v6232
    %v7849 = vpack.c.b16 %v6241, %v6233
    %v7850 = vpack.c.b16 %v6242, %v6234
    %v7851 = vpack.c.b16 %v6243, %v6235
    %v7852 = vpack.c.b16 %v6244, %v6236
    %v7853 = vpack.c.b16 %v6245, %v6237
    %v7854 = vpack.c.b16 %v6246, %v6238
    %v7855 = vpack.c.b16 %v6247, %v6239
    %v7856 = vpack.c.b16 %v6256, %v6248
    %v7857 = vpack.c.b16 %v6257, %v6249
    %v7858 = vpack.c.b16 %v6258, %v6250
    %v7859 = vpack.c.b16 %v6259, %v6251
    %v7860 = vpack.c.b16 %v6260, %v6252
    %v7861 = vpack.c.b16 %v6261, %v6253
    %v7862 = vpack.c.b16 %v6262, %v6254
    %v7863 = vpack.c.b16 %v6263, %v6255
    %v7864 = vpack.c.b16 %v6272, %v6264
    %v7865 = vpack.c.b16 %v6273, %v6265
    %v7866 = vpack.c.b16 %v6274, %v6266
    %v7867 = vpack.c.b16 %v6275, %v6267
    %v7868 = vpack.c.b16 %v6276, %v6268
    %v7869 = vpack.c.b16 %v6277, %v6269
    %v7870 = vpack.c.b16 %v6278, %v6270
    %v7871 = vpack.c.b16 %v6279, %v6271
    %v7872 = vpack.c.b16 %v6288, %v6280
    %v7873 = vpack.c.b16 %v6289, %v6281
    %v7874 = vpack.c.b16 %v6290, %v6282
    %v7875 = vpack.c.b16 %v6291, %v6283
    %v7876 = vpack.c.b16 %v6292, %v6284
    %v7877 = vpack.c.b16 %v6293, %v6285
    %v7878 = vpack.c.b16 %v6294, %v6286
    %v7879 = vpack.c.b16 %v6295, %v6287
    %v7880 = vpack.c.b16 %v6304, %v6296
    %v7881 = vpack.c.b16 %v6305, %v6297
    %v7882 = vpack.c.b16 %v6306, %v6298
    %v7883 = vpack.c.b16 %v6307, %v6299
    %v7884 = vpack.c.b16 %v6308, %v6300
    %v7885 = vpack.c.b16 %v6309, %v6301
    %v7886 = vpack.c.b16 %v6310, %v6302
    %v7887 = vpack.c.b16 %v6311, %v6303
    %v7888 = vpack.c.b16 %v6320, %v6312
    %v7889 = vpack.c.b16 %v6321, %v6313
    %v7890 = vpack.c.b16 %v6322, %v6314
    %v7891 = vpack.c.b16 %v6323, %v6315
    %v7892 = vpack.c.b16 %v6324, %v6316
    %v7893 = vpack.c.b16 %v6325, %v6317
    %v7894 = vpack.c.b16 %v6326, %v6318
    %v7895 = vpack.c.b16 %v6327, %v6319
    %v7896 = vpack.c.b16 %v6336, %v6328
    %v7897 = vpack.c.b16 %v6337, %v6329
    %v7898 = vpack.c.b16 %v6338, %v6330
    %v7899 = vpack.c.b16 %v6339, %v6331
    %v7900 = vpack.c.b16 %v6340, %v6332
    %v7901 = vpack.c.b16 %v6341, %v6333
    %v7902 = vpack.c.b16 %v6342, %v6334
    %v7903 = vpack.c.b16 %v6343, %v6335
    %v7904 = vpack.c.b16 %v6352, %v6344
    %v7905 = vpack.c.b16 %v6353, %v6345
    %v7906 = vpack.c.b16 %v6354, %v6346
    %v7907 = vpack.c.b16 %v6355, %v6347
    %v7908 = vpack.c.b16 %v6356, %v6348
    %v7909 = vpack.c.b16 %v6357, %v6349
    %v7910 = vpack.c.b16 %v6358, %v6350
    %v7911 = vpack.c.b16 %v6359, %v6351
    %v7912 = vpack.c.b16 %v6368, %v6360
    %v7913 = vpack.c.b16 %v6369, %v6361
    %v7914 = vpack.c.b16 %v6370, %v6362
    %v7915 = vpack.c.b16 %v6371, %v6363
    %v7916 = vpack.c.b16 %v6372, %v6364
    %v7917 = vpack.c.b16 %v6373, %v6365
    %v7918 = vpack.c.b16 %v6374, %v6366
    %v7919 = vpack.c.b16 %v6375, %v6367
    %v7920 = vpack.c.b16 %v6384, %v6376
    %v7921 = vpack.c.b16 %v6385, %v6377
    %v7922 = vpack.c.b16 %v6386, %v6378
    %v7923 = vpack.c.b16 %v6387, %v6379
    %v7924 = vpack.c.b16 %v6388, %v6380
    %v7925 = vpack.c.b16 %v6389, %v6381
    %v7926 = vpack.c.b16 %v6390, %v6382
    %v7927 = vpack.c.b16 %v6391, %v6383
    %9464 = vmatprep.subr.bf16.mxu0 %v6393
    %9465 = vmatpush1.bf16.msra.mxu0 %v6392
    %9466 = vmatprep.subr.bf16.mxu0 %v6401
    %9467 = vmatpush1.bf16.msra.mxu0 %v6400
    %9468 = vmatprep.subr.bf16.mxu0 %v6409
    %9469 = vmatpush1.bf16.msra.mxu0 %v6408
    %9470 = vmatprep.subr.bf16.mxu0 %v6417
    %9471 = vmatpush1.bf16.msra.mxu0 %v6416
    %9472 = vmatprep.subr.bf16.mxu0 %v6425
    %9473 = vmatpush1.bf16.msra.mxu0 %v6424
    %9474 = vmatprep.subr.bf16.mxu0 %v6433
    %9475 = vmatpush1.bf16.msra.mxu0 %v6432
    %9476 = vmatprep.subr.bf16.mxu0 %v6441
    %9477 = vmatpush1.bf16.msra.mxu0 %v6440
    %9478 = vmatprep.subr.bf16.mxu0 %v6449
    %9479 = vmatpush1.bf16.msra.mxu0 %v6448
    %9480 = vmatprep.subr.bf16.mxu0 %v6457
    %9481 = vmatpush1.bf16.msra.mxu0 %v6456
    %9482 = vmatprep.subr.bf16.mxu0 %v6465
    %9483 = vmatpush1.bf16.msra.mxu0 %v6464
    %9484 = vmatprep.subr.bf16.mxu0 %v6473
    %9485 = vmatpush1.bf16.msra.mxu0 %v6472
    %9486 = vmatprep.subr.bf16.mxu0 %v6481
    %9487 = vmatpush1.bf16.msra.mxu0 %v6480
    %9488 = vmatprep.subr.bf16.mxu0 %v6489
    %9489 = vmatpush1.bf16.msra.mxu0 %v6488
    %9490 = vmatprep.subr.bf16.mxu0 %v6497
    %9491 = vmatpush1.bf16.msra.mxu0 %v6496
    %9492 = vmatprep.subr.bf16.mxu0 %v6505
    %9493 = vmatpush1.bf16.msra.mxu0 %v6504
    %9494 = vmatprep.subr.bf16.mxu0 %v6513
    %9495 = vmatpush1.bf16.msra.mxu0 %v6512
    %9496 = vmatprep.mubr.bf16.mxu0 %v183
    %9497 = vmatmul.mubr.bf16.gmra.mrb[0].mxu0 %v182
    %v9498 = vpop.f32.mrb[0].mxu0
    %v9499 = vadd.f32 %v1747, %v9498
    %v9500 = vpop.f32.mrb[0].mxu0
    %v9501 = vadd.f32 %v1751, %v9500
    %v9502 = vpop.f32.mrb[0].mxu0
    %v9503 = vadd.f32 %v1747, %v9502
    %v9504 = vpop.f32.mrb[0].mxu0
    %v9505 = vadd.f32 %v1751, %v9504
    %9506 = vdwg.mxu0
    %9507 = vmatprep.subr.bf16.mxu0 %v6521
    %9508 = vmatpush1.bf16.msra.mxu0 %v6520
    %9509 = vmatprep.subr.bf16.mxu0 %v6529
    %9510 = vmatpush1.bf16.msra.mxu0 %v6528
    %9511 = vmatprep.subr.bf16.mxu0 %v6537
    %9512 = vmatpush1.bf16.msra.mxu0 %v6536
    %9513 = vmatprep.subr.bf16.mxu0 %v6545
    %9514 = vmatpush1.bf16.msra.mxu0 %v6544
    %9515 = vmatprep.subr.bf16.mxu0 %v6553
    %9516 = vmatpush1.bf16.msra.mxu0 %v6552
    %9517 = vmatprep.subr.bf16.mxu0 %v6561
    %9518 = vmatpush1.bf16.msra.mxu0 %v6560
    %9519 = vmatprep.subr.bf16.mxu0 %v6569
    %9520 = vmatpush1.bf16.msra.mxu0 %v6568
    %9521 = vmatprep.subr.bf16.mxu0 %v6577
    %9522 = vmatpush1.bf16.msra.mxu0 %v6576
    %9523 = vmatprep.subr.bf16.mxu0 %v6585
    %9524 = vmatpush1.bf16.msra.mxu0 %v6584
    %9525 = vmatprep.subr.bf16.mxu0 %v6593
    %9526 = vmatpush1.bf16.msra.mxu0 %v6592
    %9527 = vmatprep.subr.bf16.mxu0 %v6601
    %9528 = vmatpush1.bf16.msra.mxu0 %v6600
    %9529 = vmatprep.subr.bf16.mxu0 %v6609
    %9530 = vmatpush1.bf16.msra.mxu0 %v6608
    %9531 = vmatprep.subr.bf16.mxu0 %v6617
    %9532 = vmatpush1.bf16.msra.mxu0 %v6616
    %9533 = vmatprep.subr.bf16.mxu0 %v6625
    %9534 = vmatpush1.bf16.msra.mxu0 %v6624
    %9535 = vmatprep.subr.bf16.mxu0 %v6633
    %9536 = vmatpush1.bf16.msra.mxu0 %v6632
    %9537 = vmatprep.subr.bf16.mxu0 %v6641
    %9538 = vmatpush1.bf16.msra.mxu0 %v6640
    %9539 = vmatprep.mubr.bf16.mxu0 %v185
    %9540 = vmatmul.mubr.bf16.gmra.mrb[0].mxu0 %v184
    %v9541 = vpop.f32.mrb[0].mxu0
    %v9542 = vadd.f32 %v9499, %v9541
    %v9543 = vpop.f32.mrb[0].mxu0
    %v9544 = vadd.f32 %v9501, %v9543
    %v9545 = vpop.f32.mrb[0].mxu0
    %v9546 = vadd.f32 %v9503, %v9545
    %v9547 = vpop.f32.mrb[0].mxu0
    %v9548 = vadd.f32 %v9505, %v9547
    %9549 = vdwg.mxu0
    %9550 = vmatprep.subr.bf16.mxu0 %v6649
    %9551 = vmatpush1.bf16.msra.mxu0 %v6648
    %9552 = vmatprep.subr.bf16.mxu0 %v6657
    %9553 = vmatpush1.bf16.msra.mxu0 %v6656
    %9554 = vmatprep.subr.bf16.mxu0 %v6665
    %9555 = vmatpush1.bf16.msra.mxu0 %v6664
    %9556 = vmatprep.subr.bf16.mxu0 %v6673
    %9557 = vmatpush1.bf16.msra.mxu0 %v6672
    %9558 = vmatprep.subr.bf16.mxu0 %v6681
    %9559 = vmatpush1.bf16.msra.mxu0 %v6680
    %9560 = vmatprep.subr.bf16.mxu0 %v6689
    %9561 = vmatpush1.bf16.msra.mxu0 %v6688
    %9562 = vmatprep.subr.bf16.mxu0 %v6697
    %9563 = vmatpush1.bf16.msra.mxu0 %v6696
    %9564 = vmatprep.subr.bf16.mxu0 %v6705
    %9565 = vmatpush1.bf16.msra.mxu0 %v6704
    %9566 = vmatprep.subr.bf16.mxu0 %v6713
    %9567 = vmatpush1.bf16.msra.mxu0 %v6712
    %9568 = vmatprep.subr.bf16.mxu0 %v6721
    %9569 = vmatpush1.bf16.msra.mxu0 %v6720
    %9570 = vmatprep.subr.bf16.mxu0 %v6729
    %9571 = vmatpush1.bf16.msra.mxu0 %v6728
    %9572 = vmatprep.subr.bf16.mxu0 %v6737
    %9573 = vmatpush1.bf16.msra.mxu0 %v6736
    %9574 = vmatprep.subr.bf16.mxu0 %v6745
    %9575 = vmatpush1.bf16.msra.mxu0 %v6744
    %9576 = vmatprep.subr.bf16.mxu0 %v6753
    %9577 = vmatpush1.bf16.msra.mxu0 %v6752
    %9578 = vmatprep.subr.bf16.mxu0 %v6761
    %9579 = vmatpush1.bf16.msra.mxu0 %v6760
    %9580 = vmatprep.subr.bf16.mxu0 %v6769
    %9581 = vmatpush1.bf16.msra.mxu0 %v6768
    %9582 = vmatprep.mubr.bf16.mxu0 %v187
    %9583 = vmatmul.mubr.bf16.gmra.mrb[0].mxu0 %v186
    %v9584 = vpop.f32.mrb[0].mxu0
    %v9585 = vadd.f32 %v9542, %v9584
    %v9586 = vpop.f32.mrb[0].mxu0
    %v9587 = vadd.f32 %v9544, %v9586
    %v9588 = vpop.f32.mrb[0].mxu0
    %v9589 = vadd.f32 %v9546, %v9588
    %v9590 = vpop.f32.mrb[0].mxu0
    %v9591 = vadd.f32 %v9548, %v9590
    %9592 = vdwg.mxu0
    %9593 = vmatprep.subr.bf16.mxu0 %v6777
    %9594 = vmatpush1.bf16.msra.mxu0 %v6776
    %9595 = vmatprep.subr.bf16.mxu0 %v6785
    %9596 = vmatpush1.bf16.msra.mxu0 %v6784
    %9597 = vmatprep.subr.bf16.mxu0 %v6793
    %9598 = vmatpush1.bf16.msra.mxu0 %v6792
    %9599 = vmatprep.subr.bf16.mxu0 %v6801
    %9600 = vmatpush1.bf16.msra.mxu0 %v6800
    %9601 = vmatprep.subr.bf16.mxu0 %v6809
    %9602 = vmatpush1.bf16.msra.mxu0 %v6808
    %9603 = vmatprep.subr.bf16.mxu0 %v6817
    %9604 = vmatpush1.bf16.msra.mxu0 %v6816
    %9605 = vmatprep.subr.bf16.mxu0 %v6825
    %9606 = vmatpush1.bf16.msra.mxu0 %v6824
    %9607 = vmatprep.subr.bf16.mxu0 %v6833
    %9608 = vmatpush1.bf16.msra.mxu0 %v6832
    %9609 = vmatprep.subr.bf16.mxu0 %v6841
    %9610 = vmatpush1.bf16.msra.mxu0 %v6840
    %9611 = vmatprep.subr.bf16.mxu0 %v6849
    %9612 = vmatpush1.bf16.msra.mxu0 %v6848
    %9613 = vmatprep.subr.bf16.mxu0 %v6857
    %9614 = vmatpush1.bf16.msra.mxu0 %v6856
    %9615 = vmatprep.subr.bf16.mxu0 %v6865
    %9616 = vmatpush1.bf16.msra.mxu0 %v6864
    %9617 = vmatprep.subr.bf16.mxu0 %v6873
    %9618 = vmatpush1.bf16.msra.mxu0 %v6872
    %9619 = vmatprep.subr.bf16.mxu0 %v6881
    %9620 = vmatpush1.bf16.msra.mxu0 %v6880
    %9621 = vmatprep.subr.bf16.mxu0 %v6889
    %9622 = vmatpush1.bf16.msra.mxu0 %v6888
    %9623 = vmatprep.subr.bf16.mxu0 %v6897
    %9624 = vmatpush1.bf16.msra.mxu0 %v6896
    %9625 = vmatprep.mubr.bf16.mxu0 %v189
    %9626 = vmatmul.mubr.bf16.gmra.mrb[0].mxu0 %v188
    %v9627 = vpop.f32.mrb[0].mxu0
    %v9628 = vadd.f32 %v9585, %v9627
    %v9629 = vpop.f32.mrb[0].mxu0
    %v9630 = vadd.f32 %v9587, %v9629
    %v9631 = vpop.f32.mrb[0].mxu0
    %v9632 = vadd.f32 %v9589, %v9631
    %v9633 = vpop.f32.mrb[0].mxu0
    %v9634 = vadd.f32 %v9591, %v9633
    %9635 = vdwg.mxu0
    %9636 = vmatprep.subr.bf16.mxu0 %v6905
    %9637 = vmatpush1.bf16.msra.mxu0 %v6904
    %9638 = vmatprep.subr.bf16.mxu0 %v6913
    %9639 = vmatpush1.bf16.msra.mxu0 %v6912
    %9640 = vmatprep.subr.bf16.mxu0 %v6921
    %9641 = vmatpush1.bf16.msra.mxu0 %v6920
    %9642 = vmatprep.subr.bf16.mxu0 %v6929
    %9643 = vmatpush1.bf16.msra.mxu0 %v6928
    %9644 = vmatprep.subr.bf16.mxu0 %v6937
    %9645 = vmatpush1.bf16.msra.mxu0 %v6936
    %9646 = vmatprep.subr.bf16.mxu0 %v6945
    %9647 = vmatpush1.bf16.msra.mxu0 %v6944
    %9648 = vmatprep.subr.bf16.mxu0 %v6953
    %9649 = vmatpush1.bf16.msra.mxu0 %v6952
    %9650 = vmatprep.subr.bf16.mxu0 %v6961
    %9651 = vmatpush1.bf16.msra.mxu0 %v6960
    %9652 = vmatprep.subr.bf16.mxu0 %v6969
    %9653 = vmatpush1.bf16.msra.mxu0 %v6968
    %9654 = vmatprep.subr.bf16.mxu0 %v6977
    %9655 = vmatpush1.bf16.msra.mxu0 %v6976
    %9656 = vmatprep.subr.bf16.mxu0 %v6985
    %9657 = vmatpush1.bf16.msra.mxu0 %v6984
    %9658 = vmatprep.subr.bf16.mxu0 %v6993
    %9659 = vmatpush1.bf16.msra.mxu0 %v6992
    %9660 = vmatprep.subr.bf16.mxu0 %v7001
    %9661 = vmatpush1.bf16.msra.mxu0 %v7000
    %9662 = vmatprep.subr.bf16.mxu0 %v7009
    %9663 = vmatpush1.bf16.msra.mxu0 %v7008
    %9664 = vmatprep.subr.bf16.mxu0 %v7017
    %9665 = vmatpush1.bf16.msra.mxu0 %v7016
    %9666 = vmatprep.subr.bf16.mxu0 %v7025
    %9667 = vmatpush1.bf16.msra.mxu0 %v7024
    %9668 = vmatprep.mubr.bf16.mxu0 %v191
    %9669 = vmatmul.mubr.bf16.gmra.mrb[0].mxu0 %v190
    %v9670 = vpop.f32.mrb[0].mxu0
    %v9671 = vadd.f32 %v9628, %v9670
    %v9672 = vpop.f32.mrb[0].mxu0
    %v9673 = vadd.f32 %v9630, %v9672
    %v9674 = vpop.f32.mrb[0].mxu0
    %v9675 = vadd.f32 %v9632, %v9674
    %v9676 = vpop.f32.mrb[0].mxu0
    %v9677 = vadd.f32 %v9634, %v9676
    %9678 = vdwg.mxu0
    %9679 = vmatprep.subr.bf16.mxu0 %v7033
    %9680 = vmatpush1.bf16.msra.mxu0 %v7032
    %9681 = vmatprep.subr.bf16.mxu0 %v7041
    %9682 = vmatpush1.bf16.msra.mxu0 %v7040
    %9683 = vmatprep.subr.bf16.mxu0 %v7049
    %9684 = vmatpush1.bf16.msra.mxu0 %v7048
    %9685 = vmatprep.subr.bf16.mxu0 %v7057
    %9686 = vmatpush1.bf16.msra.mxu0 %v7056
    %9687 = vmatprep.subr.bf16.mxu0 %v7065
    %9688 = vmatpush1.bf16.msra.mxu0 %v7064
    %9689 = vmatprep.subr.bf16.mxu0 %v7073
    %9690 = vmatpush1.bf16.msra.mxu0 %v7072
    %9691 = vmatprep.subr.bf16.mxu0 %v7081
    %9692 = vmatpush1.bf16.msra.mxu0 %v7080
    %9693 = vmatprep.subr.bf16.mxu0 %v7089
    %9694 = vmatpush1.bf16.msra.mxu0 %v7088
    %9695 = vmatprep.subr.bf16.mxu0 %v7097
    %9696 = vmatpush1.bf16.msra.mxu0 %v7096
    %9697 = vmatprep.subr.bf16.mxu0 %v7105
    %9698 = vmatpush1.bf16.msra.mxu0 %v7104
    %9699 = vmatprep.subr.bf16.mxu0 %v7113
    %9700 = vmatpush1.bf16.msra.mxu0 %v7112
    %9701 = vmatprep.subr.bf16.mxu0 %v7121
    %9702 = vmatpush1.bf16.msra.mxu0 %v7120
    %9703 = vmatprep.subr.bf16.mxu0 %v7129
    %9704 = vmatpush1.bf16.msra.mxu0 %v7128
    %9705 = vmatprep.subr.bf16.mxu0 %v7137
    %9706 = vmatpush1.bf16.msra.mxu0 %v7136
    %9707 = vmatprep.subr.bf16.mxu0 %v7145
    %9708 = vmatpush1.bf16.msra.mxu0 %v7144
    %9709 = vmatprep.subr.bf16.mxu0 %v7153
    %9710 = vmatpush1.bf16.msra.mxu0 %v7152
    %9711 = vmatprep.mubr.bf16.mxu0 %v193
    %9712 = vmatmul.mubr.bf16.gmra.mrb[0].mxu0 %v192
    %v9713 = vpop.f32.mrb[0].mxu0
    %v9714 = vadd.f32 %v9671, %v9713
    %v9715 = vpop.f32.mrb[0].mxu0
    %v9716 = vadd.f32 %v9673, %v9715
    %v9717 = vpop.f32.mrb[0].mxu0
    %v9718 = vadd.f32 %v9675, %v9717
    %v9719 = vpop.f32.mrb[0].mxu0
    %v9720 = vadd.f32 %v9677, %v9719
    %9721 = vdwg.mxu0
    %9722 = vmatprep.subr.bf16.mxu0 %v7161
    %9723 = vmatpush1.bf16.msra.mxu0 %v7160
    %9724 = vmatprep.subr.bf16.mxu0 %v7169
    %9725 = vmatpush1.bf16.msra.mxu0 %v7168
    %9726 = vmatprep.subr.bf16.mxu0 %v7177
    %9727 = vmatpush1.bf16.msra.mxu0 %v7176
    %9728 = vmatprep.subr.bf16.mxu0 %v7185
    %9729 = vmatpush1.bf16.msra.mxu0 %v7184
    %9730 = vmatprep.subr.bf16.mxu0 %v7193
    %9731 = vmatpush1.bf16.msra.mxu0 %v7192
    %9732 = vmatprep.subr.bf16.mxu0 %v7201
    %9733 = vmatpush1.bf16.msra.mxu0 %v7200
    %9734 = vmatprep.subr.bf16.mxu0 %v7209
    %9735 = vmatpush1.bf16.msra.mxu0 %v7208
    %9736 = vmatprep.subr.bf16.mxu0 %v7217
    %9737 = vmatpush1.bf16.msra.mxu0 %v7216
    %9738 = vmatprep.subr.bf16.mxu0 %v7225
    %9739 = vmatpush1.bf16.msra.mxu0 %v7224
    %9740 = vmatprep.subr.bf16.mxu0 %v7233
    %9741 = vmatpush1.bf16.msra.mxu0 %v7232
    %9742 = vmatprep.subr.bf16.mxu0 %v7241
    %9743 = vmatpush1.bf16.msra.mxu0 %v7240
    %9744 = vmatprep.subr.bf16.mxu0 %v7249
    %9745 = vmatpush1.bf16.msra.mxu0 %v7248
    %9746 = vmatprep.subr.bf16.mxu0 %v7257
    %9747 = vmatpush1.bf16.msra.mxu0 %v7256
    %9748 = vmatprep.subr.bf16.mxu0 %v7265
    %9749 = vmatpush1.bf16.msra.mxu0 %v7264
    %9750 = vmatprep.subr.bf16.mxu0 %v7273
    %9751 = vmatpush1.bf16.msra.mxu0 %v7272
    %9752 = vmatprep.subr.bf16.mxu0 %v7281
    %9753 = vmatpush1.bf16.msra.mxu0 %v7280
    %9754 = vmatprep.mubr.bf16.mxu0 %v195
    %9755 = vmatmul.mubr.bf16.gmra.mrb[0].mxu0 %v194
    %v9756 = vpop.f32.mrb[0].mxu0
    %v9757 = vadd.f32 %v9714, %v9756
    %v9758 = vpop.f32.mrb[0].mxu0
    %v9759 = vadd.f32 %v9716, %v9758
    %v9760 = vpop.f32.mrb[0].mxu0
    %v9761 = vadd.f32 %v9718, %v9760
    %v9762 = vpop.f32.mrb[0].mxu0
    %v9763 = vadd.f32 %v9720, %v9762
    %9764 = vdwg.mxu0
    %9765 = vmatprep.subr.bf16.mxu0 %v7289
    %9766 = vmatpush1.bf16.msra.mxu0 %v7288
    %9767 = vmatprep.subr.bf16.mxu0 %v7297
    %9768 = vmatpush1.bf16.msra.mxu0 %v7296
    %9769 = vmatprep.subr.bf16.mxu0 %v7305
    %9770 = vmatpush1.bf16.msra.mxu0 %v7304
    %9771 = vmatprep.subr.bf16.mxu0 %v7313
    %9772 = vmatpush1.bf16.msra.mxu0 %v7312
    %9773 = vmatprep.subr.bf16.mxu0 %v7321
    %9774 = vmatpush1.bf16.msra.mxu0 %v7320
    %9775 = vmatprep.subr.bf16.mxu0 %v7329
    %9776 = vmatpush1.bf16.msra.mxu0 %v7328
    %9777 = vmatprep.subr.bf16.mxu0 %v7337
    %9778 = vmatpush1.bf16.msra.mxu0 %v7336
    %9779 = vmatprep.subr.bf16.mxu0 %v7345
    %9780 = vmatpush1.bf16.msra.mxu0 %v7344
    %9781 = vmatprep.subr.bf16.mxu0 %v7353
    %9782 = vmatpush1.bf16.msra.mxu0 %v7352
    %9783 = vmatprep.subr.bf16.mxu0 %v7361
    %9784 = vmatpush1.bf16.msra.mxu0 %v7360
    %9785 = vmatprep.subr.bf16.mxu0 %v7369
    %9786 = vmatpush1.bf16.msra.mxu0 %v7368
    %9787 = vmatprep.subr.bf16.mxu0 %v7377
    %9788 = vmatpush1.bf16.msra.mxu0 %v7376
    %9789 = vmatprep.subr.bf16.mxu0 %v7385
    %9790 = vmatpush1.bf16.msra.mxu0 %v7384
    %9791 = vmatprep.subr.bf16.mxu0 %v7393
    %9792 = vmatpush1.bf16.msra.mxu0 %v7392
    %9793 = vmatprep.subr.bf16.mxu0 %v7401
    %9794 = vmatpush1.bf16.msra.mxu0 %v7400
    %9795 = vmatprep.subr.bf16.mxu0 %v7409
    %9796 = vmatpush1.bf16.msra.mxu0 %v7408
    %9797 = vmatprep.mubr.bf16.mxu0 %v197
    %9798 = vmatmul.mubr.bf16.gmra.mrb[0].mxu0 %v196
    %v9799 = vpop.f32.mrb[0].mxu0
    %v9800 = vadd.f32 %v9757, %v9799
    %v9801 = vpop.f32.mrb[0].mxu0
    %v9802 = vadd.f32 %v9759, %v9801
    %v9803 = vpop.f32.mrb[0].mxu0
    %v9804 = vadd.f32 %v9761, %v9803
    %v9805 = vpop.f32.mrb[0].mxu0
    %v9806 = vadd.f32 %v9763, %v9805
    %9807 = vdwg.mxu0
    %9808 = vmatprep.subr.bf16.mxu0 %v7417
    %9809 = vmatpush1.bf16.msra.mxu0 %v7416
    %9810 = vmatprep.subr.bf16.mxu0 %v7425
    %9811 = vmatpush1.bf16.msra.mxu0 %v7424
    %9812 = vmatprep.subr.bf16.mxu0 %v7433
    %9813 = vmatpush1.bf16.msra.mxu0 %v7432
    %9814 = vmatprep.subr.bf16.mxu0 %v7441
    %9815 = vmatpush1.bf16.msra.mxu0 %v7440
    %9816 = vmatprep.subr.bf16.mxu0 %v7449
    %9817 = vmatpush1.bf16.msra.mxu0 %v7448
    %9818 = vmatprep.subr.bf16.mxu0 %v7457
    %9819 = vmatpush1.bf16.msra.mxu0 %v7456
    %9820 = vmatprep.subr.bf16.mxu0 %v7465
    %9821 = vmatpush1.bf16.msra.mxu0 %v7464
    %9822 = vmatprep.subr.bf16.mxu0 %v7473
    %9823 = vmatpush1.bf16.msra.mxu0 %v7472
    %9824 = vmatprep.subr.bf16.mxu0 %v7481
    %9825 = vmatpush1.bf16.msra.mxu0 %v7480
    %9826 = vmatprep.subr.bf16.mxu0 %v7489
    %9827 = vmatpush1.bf16.msra.mxu0 %v7488
    %9828 = vmatprep.subr.bf16.mxu0 %v7497
    %9829 = vmatpush1.bf16.msra.mxu0 %v7496
    %9830 = vmatprep.subr.bf16.mxu0 %v7505
    %9831 = vmatpush1.bf16.msra.mxu0 %v7504
    %9832 = vmatprep.subr.bf16.mxu0 %v7513
    %9833 = vmatpush1.bf16.msra.mxu0 %v7512
    %9834 = vmatprep.subr.bf16.mxu0 %v7521
    %9835 = vmatpush1.bf16.msra.mxu0 %v7520
    %9836 = vmatprep.subr.bf16.mxu0 %v7529
    %9837 = vmatpush1.bf16.msra.mxu0 %v7528
    %9838 = vmatprep.subr.bf16.mxu0 %v7537
    %9839 = vmatpush1.bf16.msra.mxu0 %v7536
    %9840 = vmatprep.mubr.bf16.mxu0 %v199
    %9841 = vmatmul.mubr.bf16.gmra.mrb[0].mxu0 %v198
    %v9842 = vpop.f32.mrb[0].mxu0
    %v9843 = vadd.f32 %v9800, %v9842
    %v9844 = vpop.f32.mrb[0].mxu0
    %v9845 = vadd.f32 %v9802, %v9844
    %v9846 = vpop.f32.mrb[0].mxu0
    %v9847 = vadd.f32 %v9804, %v9846
    %v9848 = vpop.f32.mrb[0].mxu0
    %v9849 = vadd.f32 %v9806, %v9848
    %9850 = vdwg.mxu0
    %9851 = vmatprep.subr.bf16.mxu0 %v7545
    %9852 = vmatpush1.bf16.msra.mxu0 %v7544
    %9853 = vmatprep.subr.bf16.mxu0 %v7553
    %9854 = vmatpush1.bf16.msra.mxu0 %v7552
    %9855 = vmatprep.subr.bf16.mxu0 %v7561
    %9856 = vmatpush1.bf16.msra.mxu0 %v7560
    %9857 = vmatprep.subr.bf16.mxu0 %v7569
    %9858 = vmatpush1.bf16.msra.mxu0 %v7568
    %9859 = vmatprep.subr.bf16.mxu0 %v7577
    %9860 = vmatpush1.bf16.msra.mxu0 %v7576
    %9861 = vmatprep.subr.bf16.mxu0 %v7585
    %9862 = vmatpush1.bf16.msra.mxu0 %v7584
    %9863 = vmatprep.subr.bf16.mxu0 %v7593
    %9864 = vmatpush1.bf16.msra.mxu0 %v7592
    %9865 = vmatprep.subr.bf16.mxu0 %v7601
    %9866 = vmatpush1.bf16.msra.mxu0 %v7600
    %9867 = vmatprep.subr.bf16.mxu0 %v7609
    %9868 = vmatpush1.bf16.msra.mxu0 %v7608
    %9869 = vmatprep.subr.bf16.mxu0 %v7617
    %9870 = vmatpush1.bf16.msra.mxu0 %v7616
    %9871 = vmatprep.subr.bf16.mxu0 %v7625
    %9872 = vmatpush1.bf16.msra.mxu0 %v7624
    %9873 = vmatprep.subr.bf16.mxu0 %v7633
    %9874 = vmatpush1.bf16.msra.mxu0 %v7632
    %9875 = vmatprep.subr.bf16.mxu0 %v7641
    %9876 = vmatpush1.bf16.msra.mxu0 %v7640
    %9877 = vmatprep.subr.bf16.mxu0 %v7649
    %9878 = vmatpush1.bf16.msra.mxu0 %v7648
    %9879 = vmatprep.subr.bf16.mxu0 %v7657
    %9880 = vmatpush1.bf16.msra.mxu0 %v7656
    %9881 = vmatprep.subr.bf16.mxu0 %v7665
    %9882 = vmatpush1.bf16.msra.mxu0 %v7664
    %9883 = vmatprep.mubr.bf16.mxu0 %v201
    %9884 = vmatmul.mubr.bf16.gmra.mrb[0].mxu0 %v200
    %v9885 = vpop.f32.mrb[0].mxu0
    %v9886 = vadd.f32 %v9843, %v9885
    %v9887 = vpop.f32.mrb[0].mxu0
    %v9888 = vadd.f32 %v9845, %v9887
    %v9889 = vpop.f32.mrb[0].mxu0
    %v9890 = vadd.f32 %v9847, %v9889
    %v9891 = vpop.f32.mrb[0].mxu0
    %v9892 = vadd.f32 %v9849, %v9891
    %9893 = vdwg.mxu0
    %9894 = vmatprep.subr.bf16.mxu0 %v7673
    %9895 = vmatpush1.bf16.msra.mxu0 %v7672
    %9896 = vmatprep.subr.bf16.mxu0 %v7681
    %9897 = vmatpush1.bf16.msra.mxu0 %v7680
    %9898 = vmatprep.subr.bf16.mxu0 %v7689
    %9899 = vmatpush1.bf16.msra.mxu0 %v7688
    %9900 = vmatprep.subr.bf16.mxu0 %v7697
    %9901 = vmatpush1.bf16.msra.mxu0 %v7696
    %9902 = vmatprep.subr.bf16.mxu0 %v7705
    %9903 = vmatpush1.bf16.msra.mxu0 %v7704
    %9904 = vmatprep.subr.bf16.mxu0 %v7713
    %9905 = vmatpush1.bf16.msra.mxu0 %v7712
    %9906 = vmatprep.subr.bf16.mxu0 %v7721
    %9907 = vmatpush1.bf16.msra.mxu0 %v7720
    %9908 = vmatprep.subr.bf16.mxu0 %v7729
    %9909 = vmatpush1.bf16.msra.mxu0 %v7728
    %9910 = vmatprep.subr.bf16.mxu0 %v7737
    %9911 = vmatpush1.bf16.msra.mxu0 %v7736
    %9912 = vmatprep.subr.bf16.mxu0 %v7745
    %9913 = vmatpush1.bf16.msra.mxu0 %v7744
    %9914 = vmatprep.subr.bf16.mxu0 %v7753
    %9915 = vmatpush1.bf16.msra.mxu0 %v7752
    %9916 = vmatprep.subr.bf16.mxu0 %v7761
    %9917 = vmatpush1.bf16.msra.mxu0 %v7760
    %9918 = vmatprep.subr.bf16.mxu0 %v7769
    %9919 = vmatpush1.bf16.msra.mxu0 %v7768
    %9920 = vmatprep.subr.bf16.mxu0 %v7777
    %9921 = vmatpush1.bf16.msra.mxu0 %v7776
    %9922 = vmatprep.subr.bf16.mxu0 %v7785
    %9923 = vmatpush1.bf16.msra.mxu0 %v7784
    %9924 = vmatprep.subr.bf16.mxu0 %v7793
    %9925 = vmatpush1.bf16.msra.mxu0 %v7792
    %9926 = vmatprep.mubr.bf16.mxu0 %v203
    %9927 = vmatmul.mubr.bf16.gmra.mrb[0].mxu0 %v202
    %v9928 = vpop.f32.mrb[0].mxu0
    %v9929 = vadd.f32 %v9886, %v9928
    %v9930 = vpop.f32.mrb[0].mxu0
    %v9931 = vadd.f32 %v9888, %v9930
    %v9932 = vpop.f32.mrb[0].mxu0
    %v9933 = vadd.f32 %v9890, %v9932
    %v9934 = vpop.f32.mrb[0].mxu0
    %v9935 = vadd.f32 %v9892, %v9934
    %9936 = vdwg.mxu0
    %9937 = vmatprep.subr.bf16.mxu0 %v7801
    %9938 = vmatpush1.bf16.msra.mxu0 %v7800
    %9939 = vmatprep.subr.bf16.mxu0 %v7809
    %9940 = vmatpush1.bf16.msra.mxu0 %v7808
    %9941 = vmatprep.subr.bf16.mxu0 %v7817
    %9942 = vmatpush1.bf16.msra.mxu0 %v7816
    %9943 = vmatprep.subr.bf16.mxu0 %v7825
    %9944 = vmatpush1.bf16.msra.mxu0 %v7824
    %9945 = vmatprep.subr.bf16.mxu0 %v7833
    %9946 = vmatpush1.bf16.msra.mxu0 %v7832
    %9947 = vmatprep.subr.bf16.mxu0 %v7841
    %9948 = vmatpush1.bf16.msra.mxu0 %v7840
    %9949 = vmatprep.subr.bf16.mxu0 %v7849
    %9950 = vmatpush1.bf16.msra.mxu0 %v7848
    %9951 = vmatprep.subr.bf16.mxu0 %v7857
    %9952 = vmatpush1.bf16.msra.mxu0 %v7856
    %9953 = vmatprep.subr.bf16.mxu0 %v7865
    %9954 = vmatpush1.bf16.msra.mxu0 %v7864
    %9955 = vmatprep.subr.bf16.mxu0 %v7873
    %9956 = vmatpush1.bf16.msra.mxu0 %v7872
    %9957 = vmatprep.subr.bf16.mxu0 %v7881
    %9958 = vmatpush1.bf16.msra.mxu0 %v7880
    %9959 = vmatprep.subr.bf16.mxu0 %v7889
    %9960 = vmatpush1.bf16.msra.mxu0 %v7888
    %9961 = vmatprep.subr.bf16.mxu0 %v7897
    %9962 = vmatpush1.bf16.msra.mxu0 %v7896
    %9963 = vmatprep.subr.bf16.mxu0 %v7905
    %9964 = vmatpush1.bf16.msra.mxu0 %v7904
    %9965 = vmatprep.subr.bf16.mxu0 %v7913
    %9966 = vmatpush1.bf16.msra.mxu0 %v7912
    %9967 = vmatprep.subr.bf16.mxu0 %v7921
    %9968 = vmatpush1.bf16.msra.mxu0 %v7920
    %9969 = vmatprep.mubr.bf16.mxu0 %v205
    %9970 = vmatmul.mubr.bf16.gmra.mrb[0].mxu0 %v204
    %v9971 = vpop.f32.mrb[0].mxu0
    %v9972 = vadd.f32 %v9929, %v9971
    %v9973 = vpop.f32.mrb[0].mxu0
    %v9974 = vadd.f32 %v9931, %v9973
    %v9975 = vpop.f32.mrb[0].mxu0
    %v9976 = vadd.f32 %v9933, %v9975
    %v9977 = vpop.f32.mrb[0].mxu0
    %v9978 = vadd.f32 %v9935, %v9977
    %9979 = vdwg.mxu0
    %9980 = vmatprep.subr.bf16.mxu0 %v6395
    %9981 = vmatpush1.bf16.msra.mxu0 %v6394
    %9982 = vmatprep.subr.bf16.mxu0 %v6403
    %9983 = vmatpush1.bf16.msra.mxu0 %v6402
    %9984 = vmatprep.subr.bf16.mxu0 %v6411
    %9985 = vmatpush1.bf16.msra.mxu0 %v6410
    %9986 = vmatprep.subr.bf16.mxu0 %v6419
    %9987 = vmatpush1.bf16.msra.mxu0 %v6418
    %9988 = vmatprep.subr.bf16.mxu0 %v6427
    %9989 = vmatpush1.bf16.msra.mxu0 %v6426
    %9990 = vmatprep.subr.bf16.mxu0 %v6435
    %9991 = vmatpush1.bf16.msra.mxu0 %v6434
    %9992 = vmatprep.subr.bf16.mxu0 %v6443
    %9993 = vmatpush1.bf16.msra.mxu0 %v6442
    %9994 = vmatprep.subr.bf16.mxu0 %v6451
    %9995 = vmatpush1.bf16.msra.mxu0 %v6450
    %9996 = vmatprep.subr.bf16.mxu0 %v6459
    %9997 = vmatpush1.bf16.msra.mxu0 %v6458
    %9998 = vmatprep.subr.bf16.mxu0 %v6467
    %9999 = vmatpush1.bf16.msra.mxu0 %v6466
    %10000 = vmatprep.subr.bf16.mxu0 %v6475
    %10001 = vmatpush1.bf16.msra.mxu0 %v6474
    %10002 = vmatprep.subr.bf16.mxu0 %v6483
    %10003 = vmatpush1.bf16.msra.mxu0 %v6482
    %10004 = vmatprep.subr.bf16.mxu0 %v6491
    %10005 = vmatpush1.bf16.msra.mxu0 %v6490
    %10006 = vmatprep.subr.bf16.mxu0 %v6499
    %10007 = vmatpush1.bf16.msra.mxu0 %v6498
    %10008 = vmatprep.subr.bf16.mxu0 %v6507
    %10009 = vmatpush1.bf16.msra.mxu0 %v6506
    %10010 = vmatprep.subr.bf16.mxu0 %v6515
    %10011 = vmatpush1.bf16.msra.mxu0 %v6514
    %10012 = vmatprep.mubr.bf16.mxu0 %v183
    %10013 = vmatmul.mubr.bf16.gmra.mrb[0].mxu0 %v182
    %v10014 = vpop.f32.mrb[0].mxu0
    %v10015 = vadd.f32 %v1755, %v10014
    %v10016 = vpop.f32.mrb[0].mxu0
    %v10017 = vadd.f32 %v1759, %v10016
    %v10018 = vpop.f32.mrb[0].mxu0
    %v10019 = vadd.f32 %v1755, %v10018
    %v10020 = vpop.f32.mrb[0].mxu0
    %v10021 = vadd.f32 %v1759, %v10020
    %10022 = vdwg.mxu0
    %10023 = vmatprep.subr.bf16.mxu0 %v6523
    %10024 = vmatpush1.bf16.msra.mxu0 %v6522
    %10025 = vmatprep.subr.bf16.mxu0 %v6531
    %10026 = vmatpush1.bf16.msra.mxu0 %v6530
    %10027 = vmatprep.subr.bf16.mxu0 %v6539
    %10028 = vmatpush1.bf16.msra.mxu0 %v6538
    %10029 = vmatprep.subr.bf16.mxu0 %v6547
    %10030 = vmatpush1.bf16.msra.mxu0 %v6546
    %10031 = vmatprep.subr.bf16.mxu0 %v6555
    %10032 = vmatpush1.bf16.msra.mxu0 %v6554
    %10033 = vmatprep.subr.bf16.mxu0 %v6563
    %10034 = vmatpush1.bf16.msra.mxu0 %v6562
    %10035 = vmatprep.subr.bf16.mxu0 %v6571
    %10036 = vmatpush1.bf16.msra.mxu0 %v6570
    %10037 = vmatprep.subr.bf16.mxu0 %v6579
    %10038 = vmatpush1.bf16.msra.mxu0 %v6578
    %10039 = vmatprep.subr.bf16.mxu0 %v6587
    %10040 = vmatpush1.bf16.msra.mxu0 %v6586
    %10041 = vmatprep.subr.bf16.mxu0 %v6595
    %10042 = vmatpush1.bf16.msra.mxu0 %v6594
    %10043 = vmatprep.subr.bf16.mxu0 %v6603
    %10044 = vmatpush1.bf16.msra.mxu0 %v6602
    %10045 = vmatprep.subr.bf16.mxu0 %v6611
    %10046 = vmatpush1.bf16.msra.mxu0 %v6610
    %10047 = vmatprep.subr.bf16.mxu0 %v6619
    %10048 = vmatpush1.bf16.msra.mxu0 %v6618
    %10049 = vmatprep.subr.bf16.mxu0 %v6627
    %10050 = vmatpush1.bf16.msra.mxu0 %v6626
    %10051 = vmatprep.subr.bf16.mxu0 %v6635
    %10052 = vmatpush1.bf16.msra.mxu0 %v6634
    %10053 = vmatprep.subr.bf16.mxu0 %v6643
    %10054 = vmatpush1.bf16.msra.mxu0 %v6642
    %10055 = vmatprep.mubr.bf16.mxu0 %v185
    %10056 = vmatmul.mubr.bf16.gmra.mrb[0].mxu0 %v184
    %v10057 = vpop.f32.mrb[0].mxu0
    %v10058 = vadd.f32 %v10015, %v10057
    %v10059 = vpop.f32.mrb[0].mxu0
    %v10060 = vadd.f32 %v10017, %v10059
    %v10061 = vpop.f32.mrb[0].mxu0
    %v10062 = vadd.f32 %v10019, %v10061
    %v10063 = vpop.f32.mrb[0].mxu0
    %v10064 = vadd.f32 %v10021, %v10063
    %10065 = vdwg.mxu0
    %10066 = vmatprep.subr.bf16.mxu0 %v6651
    %10067 = vmatpush1.bf16.msra.mxu0 %v6650
    %10068 = vmatprep.subr.bf16.mxu0 %v6659
    %10069 = vmatpush1.bf16.msra.mxu0 %v6658
    %10070 = vmatprep.subr.bf16.mxu0 %v6667
    %10071 = vmatpush1.bf16.msra.mxu0 %v6666
    %10072 = vmatprep.subr.bf16.mxu0 %v6675
    %10073 = vmatpush1.bf16.msra.mxu0 %v6674
    %10074 = vmatprep.subr.bf16.mxu0 %v6683
    %10075 = vmatpush1.bf16.msra.mxu0 %v6682
    %10076 = vmatprep.subr.bf16.mxu0 %v6691
    %10077 = vmatpush1.bf16.msra.mxu0 %v6690
    %10078 = vmatprep.subr.bf16.mxu0 %v6699
    %10079 = vmatpush1.bf16.msra.mxu0 %v6698
    %10080 = vmatprep.subr.bf16.mxu0 %v6707
    %10081 = vmatpush1.bf16.msra.mxu0 %v6706
    %10082 = vmatprep.subr.bf16.mxu0 %v6715
    %10083 = vmatpush1.bf16.msra.mxu0 %v6714
    %10084 = vmatprep.subr.bf16.mxu0 %v6723
    %10085 = vmatpush1.bf16.msra.mxu0 %v6722
    %10086 = vmatprep.subr.bf16.mxu0 %v6731
    %10087 = vmatpush1.bf16.msra.mxu0 %v6730
    %10088 = vmatprep.subr.bf16.mxu0 %v6739
    %10089 = vmatpush1.bf16.msra.mxu0 %v6738
    %10090 = vmatprep.subr.bf16.mxu0 %v6747
    %10091 = vmatpush1.bf16.msra.mxu0 %v6746
    %10092 = vmatprep.subr.bf16.mxu0 %v6755
    %10093 = vmatpush1.bf16.msra.mxu0 %v6754
    %10094 = vmatprep.subr.bf16.mxu0 %v6763
    %10095 = vmatpush1.bf16.msra.mxu0 %v6762
    %10096 = vmatprep.subr.bf16.mxu0 %v6771
    %10097 = vmatpush1.bf16.msra.mxu0 %v6770
    %10098 = vmatprep.mubr.bf16.mxu0 %v187
    %10099 = vmatmul.mubr.bf16.gmra.mrb[0].mxu0 %v186
    %v10100 = vpop.f32.mrb[0].mxu0
    %v10101 = vadd.f32 %v10058, %v10100
    %v10102 = vpop.f32.mrb[0].mxu0
    %v10103 = vadd.f32 %v10060, %v10102
    %v10104 = vpop.f32.mrb[0].mxu0
    %v10105 = vadd.f32 %v10062, %v10104
    %v10106 = vpop.f32.mrb[0].mxu0
    %v10107 = vadd.f32 %v10064, %v10106
    %10108 = vdwg.mxu0
    %10109 = vmatprep.subr.bf16.mxu0 %v6779
    %10110 = vmatpush1.bf16.msra.mxu0 %v6778
    %10111 = vmatprep.subr.bf16.mxu0 %v6787
    %10112 = vmatpush1.bf16.msra.mxu0 %v6786
    %10113 = vmatprep.subr.bf16.mxu0 %v6795
    %10114 = vmatpush1.bf16.msra.mxu0 %v6794
    %10115 = vmatprep.subr.bf16.mxu0 %v6803
    %10116 = vmatpush1.bf16.msra.mxu0 %v6802
    %10117 = vmatprep.subr.bf16.mxu0 %v6811
    %10118 = vmatpush1.bf16.msra.mxu0 %v6810
    %10119 = vmatprep.subr.bf16.mxu0 %v6819
    %10120 = vmatpush1.bf16.msra.mxu0 %v6818
    %10121 = vmatprep.subr.bf16.mxu0 %v6827
    %10122 = vmatpush1.bf16.msra.mxu0 %v6826
    %10123 = vmatprep.subr.bf16.mxu0 %v6835
    %10124 = vmatpush1.bf16.msra.mxu0 %v6834
    %10125 = vmatprep.subr.bf16.mxu0 %v6843
    %10126 = vmatpush1.bf16.msra.mxu0 %v6842
    %10127 = vmatprep.subr.bf16.mxu0 %v6851
    %10128 = vmatpush1.bf16.msra.mxu0 %v6850
    %10129 = vmatprep.subr.bf16.mxu0 %v6859
    %10130 = vmatpush1.bf16.msra.mxu0 %v6858
    %10131 = vmatprep.subr.bf16.mxu0 %v6867
    %10132 = vmatpush1.bf16.msra.mxu0 %v6866
    %10133 = vmatprep.subr.bf16.mxu0 %v6875
    %10134 = vmatpush1.bf16.msra.mxu0 %v6874
    %10135 = vmatprep.subr.bf16.mxu0 %v6883
    %10136 = vmatpush1.bf16.msra.mxu0 %v6882
    %10137 = vmatprep.subr.bf16.mxu0 %v6891
    %10138 = vmatpush1.bf16.msra.mxu0 %v6890
    %10139 = vmatprep.subr.bf16.mxu0 %v6899
    %10140 = vmatpush1.bf16.msra.mxu0 %v6898
    %10141 = vmatprep.mubr.bf16.mxu0 %v189
    %10142 = vmatmul.mubr.bf16.gmra.mrb[0].mxu0 %v188
    %v10143 = vpop.f32.mrb[0].mxu0
    %v10144 = vadd.f32 %v10101, %v10143
    %v10145 = vpop.f32.mrb[0].mxu0
    %v10146 = vadd.f32 %v10103, %v10145
    %v10147 = vpop.f32.mrb[0].mxu0
    %v10148 = vadd.f32 %v10105, %v10147
    %v10149 = vpop.f32.mrb[0].mxu0
    %v10150 = vadd.f32 %v10107, %v10149
    %10151 = vdwg.mxu0
    %10152 = vmatprep.subr.bf16.mxu0 %v6907
    %10153 = vmatpush1.bf16.msra.mxu0 %v6906
    %10154 = vmatprep.subr.bf16.mxu0 %v6915
    %10155 = vmatpush1.bf16.msra.mxu0 %v6914
    %10156 = vmatprep.subr.bf16.mxu0 %v6923
    %10157 = vmatpush1.bf16.msra.mxu0 %v6922
    %10158 = vmatprep.subr.bf16.mxu0 %v6931
    %10159 = vmatpush1.bf16.msra.mxu0 %v6930
    %10160 = vmatprep.subr.bf16.mxu0 %v6939
    %10161 = vmatpush1.bf16.msra.mxu0 %v6938
    %10162 = vmatprep.subr.bf16.mxu0 %v6947
    %10163 = vmatpush1.bf16.msra.mxu0 %v6946
    %10164 = vmatprep.subr.bf16.mxu0 %v6955
    %10165 = vmatpush1.bf16.msra.mxu0 %v6954
    %10166 = vmatprep.subr.bf16.mxu0 %v6963
    %10167 = vmatpush1.bf16.msra.mxu0 %v6962
    %10168 = vmatprep.subr.bf16.mxu0 %v6971
    %10169 = vmatpush1.bf16.msra.mxu0 %v6970
    %10170 = vmatprep.subr.bf16.mxu0 %v6979
    %10171 = vmatpush1.bf16.msra.mxu0 %v6978
    %10172 = vmatprep.subr.bf16.mxu0 %v6987
    %10173 = vmatpush1.bf16.msra.mxu0 %v6986
    %10174 = vmatprep.subr.bf16.mxu0 %v6995
    %10175 = vmatpush1.bf16.msra.mxu0 %v6994
    %10176 = vmatprep.subr.bf16.mxu0 %v7003
    %10177 = vmatpush1.bf16.msra.mxu0 %v7002
    %10178 = vmatprep.subr.bf16.mxu0 %v7011
    %10179 = vmatpush1.bf16.msra.mxu0 %v7010
    %10180 = vmatprep.subr.bf16.mxu0 %v7019
    %10181 = vmatpush1.bf16.msra.mxu0 %v7018
    %10182 = vmatprep.subr.bf16.mxu0 %v7027
    %10183 = vmatpush1.bf16.msra.mxu0 %v7026
    %10184 = vmatprep.mubr.bf16.mxu0 %v191
    %10185 = vmatmul.mubr.bf16.gmra.mrb[0].mxu0 %v190
    %v10186 = vpop.f32.mrb[0].mxu0
    %v10187 = vadd.f32 %v10144, %v10186
    %v10188 = vpop.f32.mrb[0].mxu0
    %v10189 = vadd.f32 %v10146, %v10188
    %v10190 = vpop.f32.mrb[0].mxu0
    %v10191 = vadd.f32 %v10148, %v10190
    %v10192 = vpop.f32.mrb[0].mxu0
    %v10193 = vadd.f32 %v10150, %v10192
    %10194 = vdwg.mxu0
    %10195 = vmatprep.subr.bf16.mxu0 %v7035
    %10196 = vmatpush1.bf16.msra.mxu0 %v7034
    %10197 = vmatprep.subr.bf16.mxu0 %v7043
    %10198 = vmatpush1.bf16.msra.mxu0 %v7042
    %10199 = vmatprep.subr.bf16.mxu0 %v7051
    %10200 = vmatpush1.bf16.msra.mxu0 %v7050
    %10201 = vmatprep.subr.bf16.mxu0 %v7059
    %10202 = vmatpush1.bf16.msra.mxu0 %v7058
    %10203 = vmatprep.subr.bf16.mxu0 %v7067
    %10204 = vmatpush1.bf16.msra.mxu0 %v7066
    %10205 = vmatprep.subr.bf16.mxu0 %v7075
    %10206 = vmatpush1.bf16.msra.mxu0 %v7074
    %10207 = vmatprep.subr.bf16.mxu0 %v7083
    %10208 = vmatpush1.bf16.msra.mxu0 %v7082
    %10209 = vmatprep.subr.bf16.mxu0 %v7091
    %10210 = vmatpush1.bf16.msra.mxu0 %v7090
    %10211 = vmatprep.subr.bf16.mxu0 %v7099
    %10212 = vmatpush1.bf16.msra.mxu0 %v7098
    %10213 = vmatprep.subr.bf16.mxu0 %v7107
    %10214 = vmatpush1.bf16.msra.mxu0 %v7106
    %10215 = vmatprep.subr.bf16.mxu0 %v7115
    %10216 = vmatpush1.bf16.msra.mxu0 %v7114
    %10217 = vmatprep.subr.bf16.mxu0 %v7123
    %10218 = vmatpush1.bf16.msra.mxu0 %v7122
    %10219 = vmatprep.subr.bf16.mxu0 %v7131
    %10220 = vmatpush1.bf16.msra.mxu0 %v7130
    %10221 = vmatprep.subr.bf16.mxu0 %v7139
    %10222 = vmatpush1.bf16.msra.mxu0 %v7138
    %10223 = vmatprep.subr.bf16.mxu0 %v7147
    %10224 = vmatpush1.bf16.msra.mxu0 %v7146
    %10225 = vmatprep.subr.bf16.mxu0 %v7155
    %10226 = vmatpush1.bf16.msra.mxu0 %v7154
    %10227 = vmatprep.mubr.bf16.mxu0 %v193
    %10228 = vmatmul.mubr.bf16.gmra.mrb[0].mxu0 %v192
    %v10229 = vpop.f32.mrb[0].mxu0
    %v10230 = vadd.f32 %v10187, %v10229
    %v10231 = vpop.f32.mrb[0].mxu0
    %v10232 = vadd.f32 %v10189, %v10231
    %v10233 = vpop.f32.mrb[0].mxu0
    %v10234 = vadd.f32 %v10191, %v10233
    %v10235 = vpop.f32.mrb[0].mxu0
    %v10236 = vadd.f32 %v10193, %v10235
    %10237 = vdwg.mxu0
    %10238 = vmatprep.subr.bf16.mxu0 %v7163
    %10239 = vmatpush1.bf16.msra.mxu0 %v7162
    %10240 = vmatprep.subr.bf16.mxu0 %v7171
    %10241 = vmatpush1.bf16.msra.mxu0 %v7170
    %10242 = vmatprep.subr.bf16.mxu0 %v7179
    %10243 = vmatpush1.bf16.msra.mxu0 %v7178
    %10244 = vmatprep.subr.bf16.mxu0 %v7187
    %10245 = vmatpush1.bf16.msra.mxu0 %v7186
    %10246 = vmatprep.subr.bf16.mxu0 %v7195
    %10247 = vmatpush1.bf16.msra.mxu0 %v7194
    %10248 = vmatprep.subr.bf16.mxu0 %v7203
    %10249 = vmatpush1.bf16.msra.mxu0 %v7202
    %10250 = vmatprep.subr.bf16.mxu0 %v7211
    %10251 = vmatpush1.bf16.msra.mxu0 %v7210
    %10252 = vmatprep.subr.bf16.mxu0 %v7219
    %10253 = vmatpush1.bf16.msra.mxu0 %v7218
    %10254 = vmatprep.subr.bf16.mxu0 %v7227
    %10255 = vmatpush1.bf16.msra.mxu0 %v7226
    %10256 = vmatprep.subr.bf16.mxu0 %v7235
    %10257 = vmatpush1.bf16.msra.mxu0 %v7234
    %10258 = vmatprep.subr.bf16.mxu0 %v7243
    %10259 = vmatpush1.bf16.msra.mxu0 %v7242
    %10260 = vmatprep.subr.bf16.mxu0 %v7251
    %10261 = vmatpush1.bf16.msra.mxu0 %v7250
    %10262 = vmatprep.subr.bf16.mxu0 %v7259
    %10263 = vmatpush1.bf16.msra.mxu0 %v7258
    %10264 = vmatprep.subr.bf16.mxu0 %v7267
    %10265 = vmatpush1.bf16.msra.mxu0 %v7266
    %10266 = vmatprep.subr.bf16.mxu0 %v7275
    %10267 = vmatpush1.bf16.msra.mxu0 %v7274
    %10268 = vmatprep.subr.bf16.mxu0 %v7283
    %10269 = vmatpush1.bf16.msra.mxu0 %v7282
    %10270 = vmatprep.mubr.bf16.mxu0 %v195
    %10271 = vmatmul.mubr.bf16.gmra.mrb[0].mxu0 %v194
    %v10272 = vpop.f32.mrb[0].mxu0
    %v10273 = vadd.f32 %v10230, %v10272
    %v10274 = vpop.f32.mrb[0].mxu0
    %v10275 = vadd.f32 %v10232, %v10274
    %v10276 = vpop.f32.mrb[0].mxu0
    %v10277 = vadd.f32 %v10234, %v10276
    %v10278 = vpop.f32.mrb[0].mxu0
    %v10279 = vadd.f32 %v10236, %v10278
    %10280 = vdwg.mxu0
    %10281 = vmatprep.subr.bf16.mxu0 %v7291
    %10282 = vmatpush1.bf16.msra.mxu0 %v7290
    %10283 = vmatprep.subr.bf16.mxu0 %v7299
    %10284 = vmatpush1.bf16.msra.mxu0 %v7298
    %10285 = vmatprep.subr.bf16.mxu0 %v7307
    %10286 = vmatpush1.bf16.msra.mxu0 %v7306
    %10287 = vmatprep.subr.bf16.mxu0 %v7315
    %10288 = vmatpush1.bf16.msra.mxu0 %v7314
    %10289 = vmatprep.subr.bf16.mxu0 %v7323
    %10290 = vmatpush1.bf16.msra.mxu0 %v7322
    %10291 = vmatprep.subr.bf16.mxu0 %v7331
    %10292 = vmatpush1.bf16.msra.mxu0 %v7330
    %10293 = vmatprep.subr.bf16.mxu0 %v7339
    %10294 = vmatpush1.bf16.msra.mxu0 %v7338
    %10295 = vmatprep.subr.bf16.mxu0 %v7347
    %10296 = vmatpush1.bf16.msra.mxu0 %v7346
    %10297 = vmatprep.subr.bf16.mxu0 %v7355
    %10298 = vmatpush1.bf16.msra.mxu0 %v7354
    %10299 = vmatprep.subr.bf16.mxu0 %v7363
    %10300 = vmatpush1.bf16.msra.mxu0 %v7362
    %10301 = vmatprep.subr.bf16.mxu0 %v7371
    %10302 = vmatpush1.bf16.msra.mxu0 %v7370
    %10303 = vmatprep.subr.bf16.mxu0 %v7379
    %10304 = vmatpush1.bf16.msra.mxu0 %v7378
    %10305 = vmatprep.subr.bf16.mxu0 %v7387
    %10306 = vmatpush1.bf16.msra.mxu0 %v7386
    %10307 = vmatprep.subr.bf16.mxu0 %v7395
    %10308 = vmatpush1.bf16.msra.mxu0 %v7394
    %10309 = vmatprep.subr.bf16.mxu0 %v7403
    %10310 = vmatpush1.bf16.msra.mxu0 %v7402
    %10311 = vmatprep.subr.bf16.mxu0 %v7411
    %10312 = vmatpush1.bf16.msra.mxu0 %v7410
    %10313 = vmatprep.mubr.bf16.mxu0 %v197
    %10314 = vmatmul.mubr.bf16.gmra.mrb[0].mxu0 %v196
    %v10315 = vpop.f32.mrb[0].mxu0
    %v10316 = vadd.f32 %v10273, %v10315
    %v10317 = vpop.f32.mrb[0].mxu0
    %v10318 = vadd.f32 %v10275, %v10317
    %v10319 = vpop.f32.mrb[0].mxu0
    %v10320 = vadd.f32 %v10277, %v10319
    %v10321 = vpop.f32.mrb[0].mxu0
    %v10322 = vadd.f32 %v10279, %v10321
    %10323 = vdwg.mxu0
    %10324 = vmatprep.subr.bf16.mxu0 %v7419
    %10325 = vmatpush1.bf16.msra.mxu0 %v7418
    %10326 = vmatprep.subr.bf16.mxu0 %v7427
    %10327 = vmatpush1.bf16.msra.mxu0 %v7426
    %10328 = vmatprep.subr.bf16.mxu0 %v7435
    %10329 = vmatpush1.bf16.msra.mxu0 %v7434
    %10330 = vmatprep.subr.bf16.mxu0 %v7443
    %10331 = vmatpush1.bf16.msra.mxu0 %v7442
    %10332 = vmatprep.subr.bf16.mxu0 %v7451
    %10333 = vmatpush1.bf16.msra.mxu0 %v7450
    %10334 = vmatprep.subr.bf16.mxu0 %v7459
    %10335 = vmatpush1.bf16.msra.mxu0 %v7458
    %10336 = vmatprep.subr.bf16.mxu0 %v7467
    %10337 = vmatpush1.bf16.msra.mxu0 %v7466
    %10338 = vmatprep.subr.bf16.mxu0 %v7475
    %10339 = vmatpush1.bf16.msra.mxu0 %v7474
    %10340 = vmatprep.subr.bf16.mxu0 %v7483
    %10341 = vmatpush1.bf16.msra.mxu0 %v7482
    %10342 = vmatprep.subr.bf16.mxu0 %v7491
    %10343 = vmatpush1.bf16.msra.mxu0 %v7490
    %10344 = vmatprep.subr.bf16.mxu0 %v7499
    %10345 = vmatpush1.bf16.msra.mxu0 %v7498
    %10346 = vmatprep.subr.bf16.mxu0 %v7507
    %10347 = vmatpush1.bf16.msra.mxu0 %v7506
    %10348 = vmatprep.subr.bf16.mxu0 %v7515
    %10349 = vmatpush1.bf16.msra.mxu0 %v7514
    %10350 = vmatprep.subr.bf16.mxu0 %v7523
    %10351 = vmatpush1.bf16.msra.mxu0 %v7522
    %10352 = vmatprep.subr.bf16.mxu0 %v7531
    %10353 = vmatpush1.bf16.msra.mxu0 %v7530
    %10354 = vmatprep.subr.bf16.mxu0 %v7539
    %10355 = vmatpush1.bf16.msra.mxu0 %v7538
    %10356 = vmatprep.mubr.bf16.mxu0 %v199
    %10357 = vmatmul.mubr.bf16.gmra.mrb[0].mxu0 %v198
    %v10358 = vpop.f32.mrb[0].mxu0
    %v10359 = vadd.f32 %v10316, %v10358
    %v10360 = vpop.f32.mrb[0].mxu0
    %v10361 = vadd.f32 %v10318, %v10360
    %v10362 = vpop.f32.mrb[0].mxu0
    %v10363 = vadd.f32 %v10320, %v10362
    %v10364 = vpop.f32.mrb[0].mxu0
    %v10365 = vadd.f32 %v10322, %v10364
    %10366 = vdwg.mxu0
    %10367 = vmatprep.subr.bf16.mxu0 %v7547
    %10368 = vmatpush1.bf16.msra.mxu0 %v7546
    %10369 = vmatprep.subr.bf16.mxu0 %v7555
    %10370 = vmatpush1.bf16.msra.mxu0 %v7554
    %10371 = vmatprep.subr.bf16.mxu0 %v7563
    %10372 = vmatpush1.bf16.msra.mxu0 %v7562
    %10373 = vmatprep.subr.bf16.mxu0 %v7571
    %10374 = vmatpush1.bf16.msra.mxu0 %v7570
    %10375 = vmatprep.subr.bf16.mxu0 %v7579
    %10376 = vmatpush1.bf16.msra.mxu0 %v7578
    %10377 = vmatprep.subr.bf16.mxu0 %v7587
    %10378 = vmatpush1.bf16.msra.mxu0 %v7586
    %10379 = vmatprep.subr.bf16.mxu0 %v7595
    %10380 = vmatpush1.bf16.msra.mxu0 %v7594
    %10381 = vmatprep.subr.bf16.mxu0 %v7603
    %10382 = vmatpush1.bf16.msra.mxu0 %v7602
    %10383 = vmatprep.subr.bf16.mxu0 %v7611
    %10384 = vmatpush1.bf16.msra.mxu0 %v7610
    %10385 = vmatprep.subr.bf16.mxu0 %v7619
    %10386 = vmatpush1.bf16.msra.mxu0 %v7618
    %10387 = vmatprep.subr.bf16.mxu0 %v7627
    %10388 = vmatpush1.bf16.msra.mxu0 %v7626
    %10389 = vmatprep.subr.bf16.mxu0 %v7635
    %10390 = vmatpush1.bf16.msra.mxu0 %v7634
    %10391 = vmatprep.subr.bf16.mxu0 %v7643
    %10392 = vmatpush1.bf16.msra.mxu0 %v7642
    %10393 = vmatprep.subr.bf16.mxu0 %v7651
    %10394 = vmatpush1.bf16.msra.mxu0 %v7650
    %10395 = vmatprep.subr.bf16.mxu0 %v7659
    %10396 = vmatpush1.bf16.msra.mxu0 %v7658
    %10397 = vmatprep.subr.bf16.mxu0 %v7667
    %10398 = vmatpush1.bf16.msra.mxu0 %v7666
    %10399 = vmatprep.mubr.bf16.mxu0 %v201
    %10400 = vmatmul.mubr.bf16.gmra.mrb[0].mxu0 %v200
    %v10401 = vpop.f32.mrb[0].mxu0
    %v10402 = vadd.f32 %v10359, %v10401
    %v10403 = vpop.f32.mrb[0].mxu0
    %v10404 = vadd.f32 %v10361, %v10403
    %v10405 = vpop.f32.mrb[0].mxu0
    %v10406 = vadd.f32 %v10363, %v10405
    %v10407 = vpop.f32.mrb[0].mxu0
    %v10408 = vadd.f32 %v10365, %v10407
    %10409 = vdwg.mxu0
    %10410 = vmatprep.subr.bf16.mxu0 %v7675
    %10411 = vmatpush1.bf16.msra.mxu0 %v7674
    %10412 = vmatprep.subr.bf16.mxu0 %v7683
    %10413 = vmatpush1.bf16.msra.mxu0 %v7682
    %10414 = vmatprep.subr.bf16.mxu0 %v7691
    %10415 = vmatpush1.bf16.msra.mxu0 %v7690
    %10416 = vmatprep.subr.bf16.mxu0 %v7699
    %10417 = vmatpush1.bf16.msra.mxu0 %v7698
    %10418 = vmatprep.subr.bf16.mxu0 %v7707
    %10419 = vmatpush1.bf16.msra.mxu0 %v7706
    %10420 = vmatprep.subr.bf16.mxu0 %v7715
    %10421 = vmatpush1.bf16.msra.mxu0 %v7714
    %10422 = vmatprep.subr.bf16.mxu0 %v7723
    %10423 = vmatpush1.bf16.msra.mxu0 %v7722
    %10424 = vmatprep.subr.bf16.mxu0 %v7731
    %10425 = vmatpush1.bf16.msra.mxu0 %v7730
    %10426 = vmatprep.subr.bf16.mxu0 %v7739
    %10427 = vmatpush1.bf16.msra.mxu0 %v7738
    %10428 = vmatprep.subr.bf16.mxu0 %v7747
    %10429 = vmatpush1.bf16.msra.mxu0 %v7746
    %10430 = vmatprep.subr.bf16.mxu0 %v7755
    %10431 = vmatpush1.bf16.msra.mxu0 %v7754
    %10432 = vmatprep.subr.bf16.mxu0 %v7763
    %10433 = vmatpush1.bf16.msra.mxu0 %v7762
    %10434 = vmatprep.subr.bf16.mxu0 %v7771
    %10435 = vmatpush1.bf16.msra.mxu0 %v7770
    %10436 = vmatprep.subr.bf16.mxu0 %v7779
    %10437 = vmatpush1.bf16.msra.mxu0 %v7778
    %10438 = vmatprep.subr.bf16.mxu0 %v7787
    %10439 = vmatpush1.bf16.msra.mxu0 %v7786
    %10440 = vmatprep.subr.bf16.mxu0 %v7795
    %10441 = vmatpush1.bf16.msra.mxu0 %v7794
    %10442 = vmatprep.mubr.bf16.mxu0 %v203
    %10443 = vmatmul.mubr.bf16.gmra.mrb[0].mxu0 %v202
    %v10444 = vpop.f32.mrb[0].mxu0
    %v10445 = vadd.f32 %v10402, %v10444
    %v10446 = vpop.f32.mrb[0].mxu0
    %v10447 = vadd.f32 %v10404, %v10446
    %v10448 = vpop.f32.mrb[0].mxu0
    %v10449 = vadd.f32 %v10406, %v10448
    %v10450 = vpop.f32.mrb[0].mxu0
    %v10451 = vadd.f32 %v10408, %v10450
    %10452 = vdwg.mxu0
    %10453 = vmatprep.subr.bf16.mxu0 %v7803
    %10454 = vmatpush1.bf16.msra.mxu0 %v7802
    %10455 = vmatprep.subr.bf16.mxu0 %v7811
    %10456 = vmatpush1.bf16.msra.mxu0 %v7810
    %10457 = vmatprep.subr.bf16.mxu0 %v7819
    %10458 = vmatpush1.bf16.msra.mxu0 %v7818
    %10459 = vmatprep.subr.bf16.mxu0 %v7827
    %10460 = vmatpush1.bf16.msra.mxu0 %v7826
    %10461 = vmatprep.subr.bf16.mxu0 %v7835
    %10462 = vmatpush1.bf16.msra.mxu0 %v7834
    %10463 = vmatprep.subr.bf16.mxu0 %v7843
    %10464 = vmatpush1.bf16.msra.mxu0 %v7842
    %10465 = vmatprep.subr.bf16.mxu0 %v7851
    %10466 = vmatpush1.bf16.msra.mxu0 %v7850
    %10467 = vmatprep.subr.bf16.mxu0 %v7859
    %10468 = vmatpush1.bf16.msra.mxu0 %v7858
    %10469 = vmatprep.subr.bf16.mxu0 %v7867
    %10470 = vmatpush1.bf16.msra.mxu0 %v7866
    %10471 = vmatprep.subr.bf16.mxu0 %v7875
    %10472 = vmatpush1.bf16.msra.mxu0 %v7874
    %10473 = vmatprep.subr.bf16.mxu0 %v7883
    %10474 = vmatpush1.bf16.msra.mxu0 %v7882
    %10475 = vmatprep.subr.bf16.mxu0 %v7891
    %10476 = vmatpush1.bf16.msra.mxu0 %v7890
    %10477 = vmatprep.subr.bf16.mxu0 %v7899
    %10478 = vmatpush1.bf16.msra.mxu0 %v7898
    %10479 = vmatprep.subr.bf16.mxu0 %v7907
    %10480 = vmatpush1.bf16.msra.mxu0 %v7906
    %10481 = vmatprep.subr.bf16.mxu0 %v7915
    %10482 = vmatpush1.bf16.msra.mxu0 %v7914
    %10483 = vmatprep.subr.bf16.mxu0 %v7923
    %10484 = vmatpush1.bf16.msra.mxu0 %v7922
    %10485 = vmatprep.mubr.bf16.mxu0 %v205
    %10486 = vmatmul.mubr.bf16.gmra.mrb[0].mxu0 %v204
    %v10487 = vpop.f32.mrb[0].mxu0
    %v10488 = vadd.f32 %v10445, %v10487
    %v10489 = vpop.f32.mrb[0].mxu0
    %v10490 = vadd.f32 %v10447, %v10489
    %v10491 = vpop.f32.mrb[0].mxu0
    %v10492 = vadd.f32 %v10449, %v10491
    %v10493 = vpop.f32.mrb[0].mxu0
    %v10494 = vadd.f32 %v10451, %v10493
    %10495 = vdwg.mxu0
    %10496 = vmatprep.subr.bf16.mxu0 %v6397
    %10497 = vmatpush1.bf16.msra.mxu0 %v6396
    %10498 = vmatprep.subr.bf16.mxu0 %v6405
    %10499 = vmatpush1.bf16.msra.mxu0 %v6404
    %10500 = vmatprep.subr.bf16.mxu0 %v6413
    %10501 = vmatpush1.bf16.msra.mxu0 %v6412
    %10502 = vmatprep.subr.bf16.mxu0 %v6421
    %10503 = vmatpush1.bf16.msra.mxu0 %v6420
    %10504 = vmatprep.subr.bf16.mxu0 %v6429
    %10505 = vmatpush1.bf16.msra.mxu0 %v6428
    %10506 = vmatprep.subr.bf16.mxu0 %v6437
    %10507 = vmatpush1.bf16.msra.mxu0 %v6436
    %10508 = vmatprep.subr.bf16.mxu0 %v6445
    %10509 = vmatpush1.bf16.msra.mxu0 %v6444
    %10510 = vmatprep.subr.bf16.mxu0 %v6453
    %10511 = vmatpush1.bf16.msra.mxu0 %v6452
    %10512 = vmatprep.subr.bf16.mxu0 %v6461
    %10513 = vmatpush1.bf16.msra.mxu0 %v6460
    %10514 = vmatprep.subr.bf16.mxu0 %v6469
    %10515 = vmatpush1.bf16.msra.mxu0 %v6468
    %10516 = vmatprep.subr.bf16.mxu0 %v6477
    %10517 = vmatpush1.bf16.msra.mxu0 %v6476
    %10518 = vmatprep.subr.bf16.mxu0 %v6485
    %10519 = vmatpush1.bf16.msra.mxu0 %v6484
    %10520 = vmatprep.subr.bf16.mxu0 %v6493
    %10521 = vmatpush1.bf16.msra.mxu0 %v6492
    %10522 = vmatprep.subr.bf16.mxu0 %v6501
    %10523 = vmatpush1.bf16.msra.mxu0 %v6500
    %10524 = vmatprep.subr.bf16.mxu0 %v6509
    %10525 = vmatpush1.bf16.msra.mxu0 %v6508
    %10526 = vmatprep.subr.bf16.mxu0 %v6517
    %10527 = vmatpush1.bf16.msra.mxu0 %v6516
    %10528 = vmatprep.mubr.bf16.mxu0 %v183
    %10529 = vmatmul.mubr.bf16.gmra.mrb[0].mxu0 %v182
    %v10530 = vpop.f32.mrb[0].mxu0
    %v10531 = vadd.f32 %v1763, %v10530
    %v10532 = vpop.f32.mrb[0].mxu0
    %v10533 = vadd.f32 %v1767, %v10532
    %v10534 = vpop.f32.mrb[0].mxu0
    %v10535 = vadd.f32 %v1763, %v10534
    %v10536 = vpop.f32.mrb[0].mxu0
    %v10537 = vadd.f32 %v1767, %v10536
    %10538 = vdwg.mxu0
    %10539 = vmatprep.subr.bf16.mxu0 %v6525
    %10540 = vmatpush1.bf16.msra.mxu0 %v6524
    %10541 = vmatprep.subr.bf16.mxu0 %v6533
    %10542 = vmatpush1.bf16.msra.mxu0 %v6532
    %10543 = vmatprep.subr.bf16.mxu0 %v6541
    %10544 = vmatpush1.bf16.msra.mxu0 %v6540
    %10545 = vmatprep.subr.bf16.mxu0 %v6549
    %10546 = vmatpush1.bf16.msra.mxu0 %v6548
    %10547 = vmatprep.subr.bf16.mxu0 %v6557
    %10548 = vmatpush1.bf16.msra.mxu0 %v6556
    %10549 = vmatprep.subr.bf16.mxu0 %v6565
    %10550 = vmatpush1.bf16.msra.mxu0 %v6564
    %10551 = vmatprep.subr.bf16.mxu0 %v6573
    %10552 = vmatpush1.bf16.msra.mxu0 %v6572
    %10553 = vmatprep.subr.bf16.mxu0 %v6581
    %10554 = vmatpush1.bf16.msra.mxu0 %v6580
    %10555 = vmatprep.subr.bf16.mxu0 %v6589
    %10556 = vmatpush1.bf16.msra.mxu0 %v6588
    %10557 = vmatprep.subr.bf16.mxu0 %v6597
    %10558 = vmatpush1.bf16.msra.mxu0 %v6596
    %10559 = vmatprep.subr.bf16.mxu0 %v6605
    %10560 = vmatpush1.bf16.msra.mxu0 %v6604
    %10561 = vmatprep.subr.bf16.mxu0 %v6613
    %10562 = vmatpush1.bf16.msra.mxu0 %v6612
    %10563 = vmatprep.subr.bf16.mxu0 %v6621
    %10564 = vmatpush1.bf16.msra.mxu0 %v6620
    %10565 = vmatprep.subr.bf16.mxu0 %v6629
    %10566 = vmatpush1.bf16.msra.mxu0 %v6628
    %10567 = vmatprep.subr.bf16.mxu0 %v6637
    %10568 = vmatpush1.bf16.msra.mxu0 %v6636
    %10569 = vmatprep.subr.bf16.mxu0 %v6645
    %10570 = vmatpush1.bf16.msra.mxu0 %v6644
    %10571 = vmatprep.mubr.bf16.mxu0 %v185
    %10572 = vmatmul.mubr.bf16.gmra.mrb[0].mxu0 %v184
    %v10573 = vpop.f32.mrb[0].mxu0
    %v10574 = vadd.f32 %v10531, %v10573
    %v10575 = vpop.f32.mrb[0].mxu0
    %v10576 = vadd.f32 %v10533, %v10575
    %v10577 = vpop.f32.mrb[0].mxu0
    %v10578 = vadd.f32 %v10535, %v10577
    %v10579 = vpop.f32.mrb[0].mxu0
    %v10580 = vadd.f32 %v10537, %v10579
    %10581 = vdwg.mxu0
    %10582 = vmatprep.subr.bf16.mxu0 %v6653
    %10583 = vmatpush1.bf16.msra.mxu0 %v6652
    %10584 = vmatprep.subr.bf16.mxu0 %v6661
    %10585 = vmatpush1.bf16.msra.mxu0 %v6660
    %10586 = vmatprep.subr.bf16.mxu0 %v6669
    %10587 = vmatpush1.bf16.msra.mxu0 %v6668
    %10588 = vmatprep.subr.bf16.mxu0 %v6677
    %10589 = vmatpush1.bf16.msra.mxu0 %v6676
    %10590 = vmatprep.subr.bf16.mxu0 %v6685
    %10591 = vmatpush1.bf16.msra.mxu0 %v6684
    %10592 = vmatprep.subr.bf16.mxu0 %v6693
    %10593 = vmatpush1.bf16.msra.mxu0 %v6692
    %10594 = vmatprep.subr.bf16.mxu0 %v6701
    %10595 = vmatpush1.bf16.msra.mxu0 %v6700
    %10596 = vmatprep.subr.bf16.mxu0 %v6709
    %10597 = vmatpush1.bf16.msra.mxu0 %v6708
    %10598 = vmatprep.subr.bf16.mxu0 %v6717
    %10599 = vmatpush1.bf16.msra.mxu0 %v6716
    %10600 = vmatprep.subr.bf16.mxu0 %v6725
    %10601 = vmatpush1.bf16.msra.mxu0 %v6724
    %10602 = vmatprep.subr.bf16.mxu0 %v6733
    %10603 = vmatpush1.bf16.msra.mxu0 %v6732
    %10604 = vmatprep.subr.bf16.mxu0 %v6741
    %10605 = vmatpush1.bf16.msra.mxu0 %v6740
    %10606 = vmatprep.subr.bf16.mxu0 %v6749
    %10607 = vmatpush1.bf16.msra.mxu0 %v6748
    %10608 = vmatprep.subr.bf16.mxu0 %v6757
    %10609 = vmatpush1.bf16.msra.mxu0 %v6756
    %10610 = vmatprep.subr.bf16.mxu0 %v6765
    %10611 = vmatpush1.bf16.msra.mxu0 %v6764
    %10612 = vmatprep.subr.bf16.mxu0 %v6773
    %10613 = vmatpush1.bf16.msra.mxu0 %v6772
    %10614 = vmatprep.mubr.bf16.mxu0 %v187
    %10615 = vmatmul.mubr.bf16.gmra.mrb[0].mxu0 %v186
    %v10616 = vpop.f32.mrb[0].mxu0
    %v10617 = vadd.f32 %v10574, %v10616
    %v10618 = vpop.f32.mrb[0].mxu0
    %v10619 = vadd.f32 %v10576, %v10618
    %v10620 = vpop.f32.mrb[0].mxu0
    %v10621 = vadd.f32 %v10578, %v10620
    %v10622 = vpop.f32.mrb[0].mxu0
    %v10623 = vadd.f32 %v10580, %v10622
    %10624 = vdwg.mxu0
    %10625 = vmatprep.subr.bf16.mxu0 %v6781
    %10626 = vmatpush1.bf16.msra.mxu0 %v6780
    %10627 = vmatprep.subr.bf16.mxu0 %v6789
    %10628 = vmatpush1.bf16.msra.mxu0 %v6788
    %10629 = vmatprep.subr.bf16.mxu0 %v6797
    %10630 = vmatpush1.bf16.msra.mxu0 %v6796
    %10631 = vmatprep.subr.bf16.mxu0 %v6805
    %10632 = vmatpush1.bf16.msra.mxu0 %v6804
    %10633 = vmatprep.subr.bf16.mxu0 %v6813
    %10634 = vmatpush1.bf16.msra.mxu0 %v6812
    %10635 = vmatprep.subr.bf16.mxu0 %v6821
    %10636 = vmatpush1.bf16.msra.mxu0 %v6820
    %10637 = vmatprep.subr.bf16.mxu0 %v6829
    %10638 = vmatpush1.bf16.msra.mxu0 %v6828
    %10639 = vmatprep.subr.bf16.mxu0 %v6837
    %10640 = vmatpush1.bf16.msra.mxu0 %v6836
    %10641 = vmatprep.subr.bf16.mxu0 %v6845
    %10642 = vmatpush1.bf16.msra.mxu0 %v6844
    %10643 = vmatprep.subr.bf16.mxu0 %v6853
    %10644 = vmatpush1.bf16.msra.mxu0 %v6852
    %10645 = vmatprep.subr.bf16.mxu0 %v6861
    %10646 = vmatpush1.bf16.msra.mxu0 %v6860
    %10647 = vmatprep.subr.bf16.mxu0 %v6869
    %10648 = vmatpush1.bf16.msra.mxu0 %v6868
    %10649 = vmatprep.subr.bf16.mxu0 %v6877
    %10650 = vmatpush1.bf16.msra.mxu0 %v6876
    %10651 = vmatprep.subr.bf16.mxu0 %v6885
    %10652 = vmatpush1.bf16.msra.mxu0 %v6884
    %10653 = vmatprep.subr.bf16.mxu0 %v6893
    %10654 = vmatpush1.bf16.msra.mxu0 %v6892
    %10655 = vmatprep.subr.bf16.mxu0 %v6901
    %10656 = vmatpush1.bf16.msra.mxu0 %v6900
    %10657 = vmatprep.mubr.bf16.mxu0 %v189
    %10658 = vmatmul.mubr.bf16.gmra.mrb[0].mxu0 %v188
    %v10659 = vpop.f32.mrb[0].mxu0
    %v10660 = vadd.f32 %v10617, %v10659
    %v10661 = vpop.f32.mrb[0].mxu0
    %v10662 = vadd.f32 %v10619, %v10661
    %v10663 = vpop.f32.mrb[0].mxu0
    %v10664 = vadd.f32 %v10621, %v10663
    %v10665 = vpop.f32.mrb[0].mxu0
    %v10666 = vadd.f32 %v10623, %v10665
    %10667 = vdwg.mxu0
    %10668 = vmatprep.subr.bf16.mxu0 %v6909
    %10669 = vmatpush1.bf16.msra.mxu0 %v6908
    %10670 = vmatprep.subr.bf16.mxu0 %v6917
    %10671 = vmatpush1.bf16.msra.mxu0 %v6916
    %10672 = vmatprep.subr.bf16.mxu0 %v6925
    %10673 = vmatpush1.bf16.msra.mxu0 %v6924
    %10674 = vmatprep.subr.bf16.mxu0 %v6933
    %10675 = vmatpush1.bf16.msra.mxu0 %v6932
    %10676 = vmatprep.subr.bf16.mxu0 %v6941
    %10677 = vmatpush1.bf16.msra.mxu0 %v6940
    %10678 = vmatprep.subr.bf16.mxu0 %v6949
    %10679 = vmatpush1.bf16.msra.mxu0 %v6948
    %10680 = vmatprep.subr.bf16.mxu0 %v6957
    %10681 = vmatpush1.bf16.msra.mxu0 %v6956
    %10682 = vmatprep.subr.bf16.mxu0 %v6965
    %10683 = vmatpush1.bf16.msra.mxu0 %v6964
    %10684 = vmatprep.subr.bf16.mxu0 %v6973
    %10685 = vmatpush1.bf16.msra.mxu0 %v6972
    %10686 = vmatprep.subr.bf16.mxu0 %v6981
    %10687 = vmatpush1.bf16.msra.mxu0 %v6980
    %10688 = vmatprep.subr.bf16.mxu0 %v6989
    %10689 = vmatpush1.bf16.msra.mxu0 %v6988
    %10690 = vmatprep.subr.bf16.mxu0 %v6997
    %10691 = vmatpush1.bf16.msra.mxu0 %v6996
    %10692 = vmatprep.subr.bf16.mxu0 %v7005
    %10693 = vmatpush1.bf16.msra.mxu0 %v7004
    %10694 = vmatprep.subr.bf16.mxu0 %v7013
    %10695 = vmatpush1.bf16.msra.mxu0 %v7012
    %10696 = vmatprep.subr.bf16.mxu0 %v7021
    %10697 = vmatpush1.bf16.msra.mxu0 %v7020
    %10698 = vmatprep.subr.bf16.mxu0 %v7029
    %10699 = vmatpush1.bf16.msra.mxu0 %v7028
    %10700 = vmatprep.mubr.bf16.mxu0 %v191
    %10701 = vmatmul.mubr.bf16.gmra.mrb[0].mxu0 %v190
    %v10702 = vpop.f32.mrb[0].mxu0
    %v10703 = vadd.f32 %v10660, %v10702
    %v10704 = vpop.f32.mrb[0].mxu0
    %v10705 = vadd.f32 %v10662, %v10704
    %v10706 = vpop.f32.mrb[0].mxu0
    %v10707 = vadd.f32 %v10664, %v10706
    %v10708 = vpop.f32.mrb[0].mxu0
    %v10709 = vadd.f32 %v10666, %v10708
    %10710 = vdwg.mxu0
    %10711 = vmatprep.subr.bf16.mxu0 %v7037
    %10712 = vmatpush1.bf16.msra.mxu0 %v7036
    %10713 = vmatprep.subr.bf16.mxu0 %v7045
    %10714 = vmatpush1.bf16.msra.mxu0 %v7044
    %10715 = vmatprep.subr.bf16.mxu0 %v7053
    %10716 = vmatpush1.bf16.msra.mxu0 %v7052
    %10717 = vmatprep.subr.bf16.mxu0 %v7061
    %10718 = vmatpush1.bf16.msra.mxu0 %v7060
    %10719 = vmatprep.subr.bf16.mxu0 %v7069
    %10720 = vmatpush1.bf16.msra.mxu0 %v7068
    %10721 = vmatprep.subr.bf16.mxu0 %v7077
    %10722 = vmatpush1.bf16.msra.mxu0 %v7076
    %10723 = vmatprep.subr.bf16.mxu0 %v7085
    %10724 = vmatpush1.bf16.msra.mxu0 %v7084
    %10725 = vmatprep.subr.bf16.mxu0 %v7093
    %10726 = vmatpush1.bf16.msra.mxu0 %v7092
    %10727 = vmatprep.subr.bf16.mxu0 %v7101
    %10728 = vmatpush1.bf16.msra.mxu0 %v7100
    %10729 = vmatprep.subr.bf16.mxu0 %v7109
    %10730 = vmatpush1.bf16.msra.mxu0 %v7108
    %10731 = vmatprep.subr.bf16.mxu0 %v7117
    %10732 = vmatpush1.bf16.msra.mxu0 %v7116
    %10733 = vmatprep.subr.bf16.mxu0 %v7125
    %10734 = vmatpush1.bf16.msra.mxu0 %v7124
    %10735 = vmatprep.subr.bf16.mxu0 %v7133
    %10736 = vmatpush1.bf16.msra.mxu0 %v7132
    %10737 = vmatprep.subr.bf16.mxu0 %v7141
    %10738 = vmatpush1.bf16.msra.mxu0 %v7140
    %10739 = vmatprep.subr.bf16.mxu0 %v7149
    %10740 = vmatpush1.bf16.msra.mxu0 %v7148
    %10741 = vmatprep.subr.bf16.mxu0 %v7157
    %10742 = vmatpush1.bf16.msra.mxu0 %v7156
    %10743 = vmatprep.mubr.bf16.mxu0 %v193
    %10744 = vmatmul.mubr.bf16.gmra.mrb[0].mxu0 %v192
    %v10745 = vpop.f32.mrb[0].mxu0
    %v10746 = vadd.f32 %v10703, %v10745
    %v10747 = vpop.f32.mrb[0].mxu0
    %v10748 = vadd.f32 %v10705, %v10747
    %v10749 = vpop.f32.mrb[0].mxu0
    %v10750 = vadd.f32 %v10707, %v10749
    %v10751 = vpop.f32.mrb[0].mxu0
    %v10752 = vadd.f32 %v10709, %v10751
    %10753 = vdwg.mxu0
    %10754 = vmatprep.subr.bf16.mxu0 %v7165
    %10755 = vmatpush1.bf16.msra.mxu0 %v7164
    %10756 = vmatprep.subr.bf16.mxu0 %v7173
    %10757 = vmatpush1.bf16.msra.mxu0 %v7172
    %10758 = vmatprep.subr.bf16.mxu0 %v7181
    %10759 = vmatpush1.bf16.msra.mxu0 %v7180
    %10760 = vmatprep.subr.bf16.mxu0 %v7189
    %10761 = vmatpush1.bf16.msra.mxu0 %v7188
    %10762 = vmatprep.subr.bf16.mxu0 %v7197
    %10763 = vmatpush1.bf16.msra.mxu0 %v7196
    %10764 = vmatprep.subr.bf16.mxu0 %v7205
    %10765 = vmatpush1.bf16.msra.mxu0 %v7204
    %10766 = vmatprep.subr.bf16.mxu0 %v7213
    %10767 = vmatpush1.bf16.msra.mxu0 %v7212
    %10768 = vmatprep.subr.bf16.mxu0 %v7221
    %10769 = vmatpush1.bf16.msra.mxu0 %v7220
    %10770 = vmatprep.subr.bf16.mxu0 %v7229
    %10771 = vmatpush1.bf16.msra.mxu0 %v7228
    %10772 = vmatprep.subr.bf16.mxu0 %v7237
    %10773 = vmatpush1.bf16.msra.mxu0 %v7236
    %10774 = vmatprep.subr.bf16.mxu0 %v7245
    %10775 = vmatpush1.bf16.msra.mxu0 %v7244
    %10776 = vmatprep.subr.bf16.mxu0 %v7253
    %10777 = vmatpush1.bf16.msra.mxu0 %v7252
    %10778 = vmatprep.subr.bf16.mxu0 %v7261
    %10779 = vmatpush1.bf16.msra.mxu0 %v7260
    %10780 = vmatprep.subr.bf16.mxu0 %v7269
    %10781 = vmatpush1.bf16.msra.mxu0 %v7268
    %10782 = vmatprep.subr.bf16.mxu0 %v7277
    %10783 = vmatpush1.bf16.msra.mxu0 %v7276
    %10784 = vmatprep.subr.bf16.mxu0 %v7285
    %10785 = vmatpush1.bf16.msra.mxu0 %v7284
    %10786 = vmatprep.mubr.bf16.mxu0 %v195
    %10787 = vmatmul.mubr.bf16.gmra.mrb[0].mxu0 %v194
    %v10788 = vpop.f32.mrb[0].mxu0
    %v10789 = vadd.f32 %v10746, %v10788
    %v10790 = vpop.f32.mrb[0].mxu0
    %v10791 = vadd.f32 %v10748, %v10790
    %v10792 = vpop.f32.mrb[0].mxu0
    %v10793 = vadd.f32 %v10750, %v10792
    %v10794 = vpop.f32.mrb[0].mxu0
    %v10795 = vadd.f32 %v10752, %v10794
    %10796 = vdwg.mxu0
    %10797 = vmatprep.subr.bf16.mxu0 %v7293
    %10798 = vmatpush1.bf16.msra.mxu0 %v7292
    %10799 = vmatprep.subr.bf16.mxu0 %v7301
    %10800 = vmatpush1.bf16.msra.mxu0 %v7300
    %10801 = vmatprep.subr.bf16.mxu0 %v7309
    %10802 = vmatpush1.bf16.msra.mxu0 %v7308
    %10803 = vmatprep.subr.bf16.mxu0 %v7317
    %10804 = vmatpush1.bf16.msra.mxu0 %v7316
    %10805 = vmatprep.subr.bf16.mxu0 %v7325
    %10806 = vmatpush1.bf16.msra.mxu0 %v7324
    %10807 = vmatprep.subr.bf16.mxu0 %v7333
    %10808 = vmatpush1.bf16.msra.mxu0 %v7332
    %10809 = vmatprep.subr.bf16.mxu0 %v7341
    %10810 = vmatpush1.bf16.msra.mxu0 %v7340
    %10811 = vmatprep.subr.bf16.mxu0 %v7349
    %10812 = vmatpush1.bf16.msra.mxu0 %v7348
    %10813 = vmatprep.subr.bf16.mxu0 %v7357
    %10814 = vmatpush1.bf16.msra.mxu0 %v7356
    %10815 = vmatprep.subr.bf16.mxu0 %v7365
    %10816 = vmatpush1.bf16.msra.mxu0 %v7364
    %10817 = vmatprep.subr.bf16.mxu0 %v7373
    %10818 = vmatpush1.bf16.msra.mxu0 %v7372
    %10819 = vmatprep.subr.bf16.mxu0 %v7381
    %10820 = vmatpush1.bf16.msra.mxu0 %v7380
    %10821 = vmatprep.subr.bf16.mxu0 %v7389
    %10822 = vmatpush1.bf16.msra.mxu0 %v7388
    %10823 = vmatprep.subr.bf16.mxu0 %v7397
    %10824 = vmatpush1.bf16.msra.mxu0 %v7396
    %10825 = vmatprep.subr.bf16.mxu0 %v7405
    %10826 = vmatpush1.bf16.msra.mxu0 %v7404
    %10827 = vmatprep.subr.bf16.mxu0 %v7413
    %10828 = vmatpush1.bf16.msra.mxu0 %v7412
    %10829 = vmatprep.mubr.bf16.mxu0 %v197
    %10830 = vmatmul.mubr.bf16.gmra.mrb[0].mxu0 %v196
    %v10831 = vpop.f32.mrb[0].mxu0
    %v10832 = vadd.f32 %v10789, %v10831
    %v10833 = vpop.f32.mrb[0].mxu0
    %v10834 = vadd.f32 %v10791, %v10833
    %v10835 = vpop.f32.mrb[0].mxu0
    %v10836 = vadd.f32 %v10793, %v10835
    %v10837 = vpop.f32.mrb[0].mxu0
    %v10838 = vadd.f32 %v10795, %v10837
    %10839 = vdwg.mxu0
    %10840 = vmatprep.subr.bf16.mxu0 %v7421
    %10841 = vmatpush1.bf16.msra.mxu0 %v7420
    %10842 = vmatprep.subr.bf16.mxu0 %v7429
    %10843 = vmatpush1.bf16.msra.mxu0 %v7428
    %10844 = vmatprep.subr.bf16.mxu0 %v7437
    %10845 = vmatpush1.bf16.msra.mxu0 %v7436
    %10846 = vmatprep.subr.bf16.mxu0 %v7445
    %10847 = vmatpush1.bf16.msra.mxu0 %v7444
    %10848 = vmatprep.subr.bf16.mxu0 %v7453
    %10849 = vmatpush1.bf16.msra.mxu0 %v7452
    %10850 = vmatprep.subr.bf16.mxu0 %v7461
    %10851 = vmatpush1.bf16.msra.mxu0 %v7460
    %10852 = vmatprep.subr.bf16.mxu0 %v7469
    %10853 = vmatpush1.bf16.msra.mxu0 %v7468
    %10854 = vmatprep.subr.bf16.mxu0 %v7477
    %10855 = vmatpush1.bf16.msra.mxu0 %v7476
    %10856 = vmatprep.subr.bf16.mxu0 %v7485
    %10857 = vmatpush1.bf16.msra.mxu0 %v7484
    %10858 = vmatprep.subr.bf16.mxu0 %v7493
    %10859 = vmatpush1.bf16.msra.mxu0 %v7492
    %10860 = vmatprep.subr.bf16.mxu0 %v7501
    %10861 = vmatpush1.bf16.msra.mxu0 %v7500
    %10862 = vmatprep.subr.bf16.mxu0 %v7509
    %10863 = vmatpush1.bf16.msra.mxu0 %v7508
    %10864 = vmatprep.subr.bf16.mxu0 %v7517
    %10865 = vmatpush1.bf16.msra.mxu0 %v7516
    %10866 = vmatprep.subr.bf16.mxu0 %v7525
    %10867 = vmatpush1.bf16.msra.mxu0 %v7524
    %10868 = vmatprep.subr.bf16.mxu0 %v7533
    %10869 = vmatpush1.bf16.msra.mxu0 %v7532
    %10870 = vmatprep.subr.bf16.mxu0 %v7541
    %10871 = vmatpush1.bf16.msra.mxu0 %v7540
    %10872 = vmatprep.mubr.bf16.mxu0 %v199
    %10873 = vmatmul.mubr.bf16.gmra.mrb[0].mxu0 %v198
    %v10874 = vpop.f32.mrb[0].mxu0
    %v10875 = vadd.f32 %v10832, %v10874
    %v10876 = vpop.f32.mrb[0].mxu0
    %v10877 = vadd.f32 %v10834, %v10876
    %v10878 = vpop.f32.mrb[0].mxu0
    %v10879 = vadd.f32 %v10836, %v10878
    %v10880 = vpop.f32.mrb[0].mxu0
    %v10881 = vadd.f32 %v10838, %v10880
    %10882 = vdwg.mxu0
    %10883 = vmatprep.subr.bf16.mxu0 %v7549
    %10884 = vmatpush1.bf16.msra.mxu0 %v7548
    %10885 = vmatprep.subr.bf16.mxu0 %v7557
    %10886 = vmatpush1.bf16.msra.mxu0 %v7556
    %10887 = vmatprep.subr.bf16.mxu0 %v7565
    %10888 = vmatpush1.bf16.msra.mxu0 %v7564
    %10889 = vmatprep.subr.bf16.mxu0 %v7573
    %10890 = vmatpush1.bf16.msra.mxu0 %v7572
    %10891 = vmatprep.subr.bf16.mxu0 %v7581
    %10892 = vmatpush1.bf16.msra.mxu0 %v7580
    %10893 = vmatprep.subr.bf16.mxu0 %v7589
    %10894 = vmatpush1.bf16.msra.mxu0 %v7588
    %10895 = vmatprep.subr.bf16.mxu0 %v7597
    %10896 = vmatpush1.bf16.msra.mxu0 %v7596
    %10897 = vmatprep.subr.bf16.mxu0 %v7605
    %10898 = vmatpush1.bf16.msra.mxu0 %v7604
    %10899 = vmatprep.subr.bf16.mxu0 %v7613
    %10900 = vmatpush1.bf16.msra.mxu0 %v7612
    %10901 = vmatprep.subr.bf16.mxu0 %v7621
    %10902 = vmatpush1.bf16.msra.mxu0 %v7620
    %10903 = vmatprep.subr.bf16.mxu0 %v7629
    %10904 = vmatpush1.bf16.msra.mxu0 %v7628
    %10905 = vmatprep.subr.bf16.mxu0 %v7637
    %10906 = vmatpush1.bf16.msra.mxu0 %v7636
    %10907 = vmatprep.subr.bf16.mxu0 %v7645
    %10908 = vmatpush1.bf16.msra.mxu0 %v7644
    %10909 = vmatprep.subr.bf16.mxu0 %v7653
    %10910 = vmatpush1.bf16.msra.mxu0 %v7652
    %10911 = vmatprep.subr.bf16.mxu0 %v7661
    %10912 = vmatpush1.bf16.msra.mxu0 %v7660
    %10913 = vmatprep.subr.bf16.mxu0 %v7669
    %10914 = vmatpush1.bf16.msra.mxu0 %v7668
    %10915 = vmatprep.mubr.bf16.mxu0 %v201
    %10916 = vmatmul.mubr.bf16.gmra.mrb[0].mxu0 %v200
    %v10917 = vpop.f32.mrb[0].mxu0
    %v10918 = vadd.f32 %v10875, %v10917
    %v10919 = vpop.f32.mrb[0].mxu0
    %v10920 = vadd.f32 %v10877, %v10919
    %v10921 = vpop.f32.mrb[0].mxu0
    %v10922 = vadd.f32 %v10879, %v10921
    %v10923 = vpop.f32.mrb[0].mxu0
    %v10924 = vadd.f32 %v10881, %v10923
    %10925 = vdwg.mxu0
    %10926 = vmatprep.subr.bf16.mxu0 %v7677
    %10927 = vmatpush1.bf16.msra.mxu0 %v7676
    %10928 = vmatprep.subr.bf16.mxu0 %v7685
    %10929 = vmatpush1.bf16.msra.mxu0 %v7684
    %10930 = vmatprep.subr.bf16.mxu0 %v7693
    %10931 = vmatpush1.bf16.msra.mxu0 %v7692
    %10932 = vmatprep.subr.bf16.mxu0 %v7701
    %10933 = vmatpush1.bf16.msra.mxu0 %v7700
    %10934 = vmatprep.subr.bf16.mxu0 %v7709
    %10935 = vmatpush1.bf16.msra.mxu0 %v7708
    %10936 = vmatprep.subr.bf16.mxu0 %v7717
    %10937 = vmatpush1.bf16.msra.mxu0 %v7716
    %10938 = vmatprep.subr.bf16.mxu0 %v7725
    %10939 = vmatpush1.bf16.msra.mxu0 %v7724
    %10940 = vmatprep.subr.bf16.mxu0 %v7733
    %10941 = vmatpush1.bf16.msra.mxu0 %v7732
    %10942 = vmatprep.subr.bf16.mxu0 %v7741
    %10943 = vmatpush1.bf16.msra.mxu0 %v7740
    %10944 = vmatprep.subr.bf16.mxu0 %v7749
    %10945 = vmatpush1.bf16.msra.mxu0 %v7748
    %10946 = vmatprep.subr.bf16.mxu0 %v7757
    %10947 = vmatpush1.bf16.msra.mxu0 %v7756
    %10948 = vmatprep.subr.bf16.mxu0 %v7765
    %10949 = vmatpush1.bf16.msra.mxu0 %v7764
    %10950 = vmatprep.subr.bf16.mxu0 %v7773
    %10951 = vmatpush1.bf16.msra.mxu0 %v7772
    %10952 = vmatprep.subr.bf16.mxu0 %v7781
    %10953 = vmatpush1.bf16.msra.mxu0 %v7780
    %10954 = vmatprep.subr.bf16.mxu0 %v7789
    %10955 = vmatpush1.bf16.msra.mxu0 %v7788
    %10956 = vmatprep.subr.bf16.mxu0 %v7797
    %10957 = vmatpush1.bf16.msra.mxu0 %v7796
    %10958 = vmatprep.mubr.bf16.mxu0 %v203
    %10959 = vmatmul.mubr.bf16.gmra.mrb[0].mxu0 %v202
    %v10960 = vpop.f32.mrb[0].mxu0
    %v10961 = vadd.f32 %v10918, %v10960
    %v10962 = vpop.f32.mrb[0].mxu0
    %v10963 = vadd.f32 %v10920, %v10962
    %v10964 = vpop.f32.mrb[0].mxu0
    %v10965 = vadd.f32 %v10922, %v10964
    %v10966 = vpop.f32.mrb[0].mxu0
    %v10967 = vadd.f32 %v10924, %v10966
    %10968 = vdwg.mxu0
    %10969 = vmatprep.subr.bf16.mxu0 %v7805
    %10970 = vmatpush1.bf16.msra.mxu0 %v7804
    %10971 = vmatprep.subr.bf16.mxu0 %v7813
    %10972 = vmatpush1.bf16.msra.mxu0 %v7812
    %10973 = vmatprep.subr.bf16.mxu0 %v7821
    %10974 = vmatpush1.bf16.msra.mxu0 %v7820
    %10975 = vmatprep.subr.bf16.mxu0 %v7829
    %10976 = vmatpush1.bf16.msra.mxu0 %v7828
    %10977 = vmatprep.subr.bf16.mxu0 %v7837
    %10978 = vmatpush1.bf16.msra.mxu0 %v7836
    %10979 = vmatprep.subr.bf16.mxu0 %v7845
    %10980 = vmatpush1.bf16.msra.mxu0 %v7844
    %10981 = vmatprep.subr.bf16.mxu0 %v7853
    %10982 = vmatpush1.bf16.msra.mxu0 %v7852
    %10983 = vmatprep.subr.bf16.mxu0 %v7861
    %10984 = vmatpush1.bf16.msra.mxu0 %v7860
    %10985 = vmatprep.subr.bf16.mxu0 %v7869
    %10986 = vmatpush1.bf16.msra.mxu0 %v7868
    %10987 = vmatprep.subr.bf16.mxu0 %v7877
    %10988 = vmatpush1.bf16.msra.mxu0 %v7876
    %10989 = vmatprep.subr.bf16.mxu0 %v7885
    %10990 = vmatpush1.bf16.msra.mxu0 %v7884
    %10991 = vmatprep.subr.bf16.mxu0 %v7893
    %10992 = vmatpush1.bf16.msra.mxu0 %v7892
    %10993 = vmatprep.subr.bf16.mxu0 %v7901
    %10994 = vmatpush1.bf16.msra.mxu0 %v7900
    %10995 = vmatprep.subr.bf16.mxu0 %v7909
    %10996 = vmatpush1.bf16.msra.mxu0 %v7908
    %10997 = vmatprep.subr.bf16.mxu0 %v7917
    %10998 = vmatpush1.bf16.msra.mxu0 %v7916
    %10999 = vmatprep.subr.bf16.mxu0 %v7925
    %11000 = vmatpush1.bf16.msra.mxu0 %v7924
    %11001 = vmatprep.mubr.bf16.mxu0 %v205
    %11002 = vmatmul.mubr.bf16.gmra.mrb[0].mxu0 %v204
    %v11003 = vpop.f32.mrb[0].mxu0
    %v11004 = vadd.f32 %v10961, %v11003
    %v11005 = vpop.f32.mrb[0].mxu0
    %v11006 = vadd.f32 %v10963, %v11005
    %v11007 = vpop.f32.mrb[0].mxu0
    %v11008 = vadd.f32 %v10965, %v11007
    %v11009 = vpop.f32.mrb[0].mxu0
    %v11010 = vadd.f32 %v10967, %v11009
    %11011 = vdwg.mxu0
    %11012 = vmatprep.subr.bf16.mxu0 %v6399
    %11013 = vmatpush1.bf16.msra.mxu0 %v6398
    %11014 = vmatprep.subr.bf16.mxu0 %v6407
    %11015 = vmatpush1.bf16.msra.mxu0 %v6406
    %11016 = vmatprep.subr.bf16.mxu0 %v6415
    %11017 = vmatpush1.bf16.msra.mxu0 %v6414
    %11018 = vmatprep.subr.bf16.mxu0 %v6423
    %11019 = vmatpush1.bf16.msra.mxu0 %v6422
    %11020 = vmatprep.subr.bf16.mxu0 %v6431
    %11021 = vmatpush1.bf16.msra.mxu0 %v6430
    %11022 = vmatprep.subr.bf16.mxu0 %v6439
    %11023 = vmatpush1.bf16.msra.mxu0 %v6438
    %11024 = vmatprep.subr.bf16.mxu0 %v6447
    %11025 = vmatpush1.bf16.msra.mxu0 %v6446
    %11026 = vmatprep.subr.bf16.mxu0 %v6455
    %11027 = vmatpush1.bf16.msra.mxu0 %v6454
    %11028 = vmatprep.subr.bf16.mxu0 %v6463
    %11029 = vmatpush1.bf16.msra.mxu0 %v6462
    %11030 = vmatprep.subr.bf16.mxu0 %v6471
    %11031 = vmatpush1.bf16.msra.mxu0 %v6470
    %11032 = vmatprep.subr.bf16.mxu0 %v6479
    %11033 = vmatpush1.bf16.msra.mxu0 %v6478
    %11034 = vmatprep.subr.bf16.mxu0 %v6487
    %11035 = vmatpush1.bf16.msra.mxu0 %v6486
    %11036 = vmatprep.subr.bf16.mxu0 %v6495
    %11037 = vmatpush1.bf16.msra.mxu0 %v6494
    %11038 = vmatprep.subr.bf16.mxu0 %v6503
    %11039 = vmatpush1.bf16.msra.mxu0 %v6502
    %11040 = vmatprep.subr.bf16.mxu0 %v6511
    %11041 = vmatpush1.bf16.msra.mxu0 %v6510
    %11042 = vmatprep.subr.bf16.mxu0 %v6519
    %11043 = vmatpush1.bf16.msra.mxu0 %v6518
    %11044 = vmatprep.mubr.bf16.mxu0 %v183
    %11045 = vmatmul.mubr.bf16.gmra.mrb[0].mxu0 %v182
    %v11046 = vpop.f32.mrb[0].mxu0
    %v11047 = vadd.f32 %v1771, %v11046
    %v11048 = vpop.f32.mrb[0].mxu0
    %v11049 = vadd.f32 %v1775, %v11048
    %v11050 = vpop.f32.mrb[0].mxu0
    %v11051 = vadd.f32 %v1771, %v11050
    %v11052 = vpop.f32.mrb[0].mxu0
    %v11053 = vadd.f32 %v1775, %v11052
    %11054 = vdwg.mxu0
    %11055 = vmatprep.subr.bf16.mxu0 %v6527
    %11056 = vmatpush1.bf16.msra.mxu0 %v6526
    %11057 = vmatprep.subr.bf16.mxu0 %v6535
    %11058 = vmatpush1.bf16.msra.mxu0 %v6534
    %11059 = vmatprep.subr.bf16.mxu0 %v6543
    %11060 = vmatpush1.bf16.msra.mxu0 %v6542
    %11061 = vmatprep.subr.bf16.mxu0 %v6551
    %11062 = vmatpush1.bf16.msra.mxu0 %v6550
    %11063 = vmatprep.subr.bf16.mxu0 %v6559
    %11064 = vmatpush1.bf16.msra.mxu0 %v6558
    %11065 = vmatprep.subr.bf16.mxu0 %v6567
    %11066 = vmatpush1.bf16.msra.mxu0 %v6566
    %11067 = vmatprep.subr.bf16.mxu0 %v6575
    %11068 = vmatpush1.bf16.msra.mxu0 %v6574
    %11069 = vmatprep.subr.bf16.mxu0 %v6583
    %11070 = vmatpush1.bf16.msra.mxu0 %v6582
    %11071 = vmatprep.subr.bf16.mxu0 %v6591
    %11072 = vmatpush1.bf16.msra.mxu0 %v6590
    %11073 = vmatprep.subr.bf16.mxu0 %v6599
    %11074 = vmatpush1.bf16.msra.mxu0 %v6598
    %11075 = vmatprep.subr.bf16.mxu0 %v6607
    %11076 = vmatpush1.bf16.msra.mxu0 %v6606
    %11077 = vmatprep.subr.bf16.mxu0 %v6615
    %11078 = vmatpush1.bf16.msra.mxu0 %v6614
    %11079 = vmatprep.subr.bf16.mxu0 %v6623
    %11080 = vmatpush1.bf16.msra.mxu0 %v6622
    %11081 = vmatprep.subr.bf16.mxu0 %v6631
    %11082 = vmatpush1.bf16.msra.mxu0 %v6630
    %11083 = vmatprep.subr.bf16.mxu0 %v6639
    %11084 = vmatpush1.bf16.msra.mxu0 %v6638
    %11085 = vmatprep.subr.bf16.mxu0 %v6647
    %11086 = vmatpush1.bf16.msra.mxu0 %v6646
    %11087 = vmatprep.mubr.bf16.mxu0 %v185
    %11088 = vmatmul.mubr.bf16.gmra.mrb[0].mxu0 %v184
    %v11089 = vpop.f32.mrb[0].mxu0
    %v11090 = vadd.f32 %v11047, %v11089
    %v11091 = vpop.f32.mrb[0].mxu0
    %v11092 = vadd.f32 %v11049, %v11091
    %v11093 = vpop.f32.mrb[0].mxu0
    %v11094 = vadd.f32 %v11051, %v11093
    %v11095 = vpop.f32.mrb[0].mxu0
    %v11096 = vadd.f32 %v11053, %v11095
    %11097 = vdwg.mxu0
    %11098 = vmatprep.subr.bf16.mxu0 %v6655
    %11099 = vmatpush1.bf16.msra.mxu0 %v6654
    %11100 = vmatprep.subr.bf16.mxu0 %v6663
    %11101 = vmatpush1.bf16.msra.mxu0 %v6662
    %11102 = vmatprep.subr.bf16.mxu0 %v6671
    %11103 = vmatpush1.bf16.msra.mxu0 %v6670
    %11104 = vmatprep.subr.bf16.mxu0 %v6679
    %11105 = vmatpush1.bf16.msra.mxu0 %v6678
    %11106 = vmatprep.subr.bf16.mxu0 %v6687
    %11107 = vmatpush1.bf16.msra.mxu0 %v6686
    %11108 = vmatprep.subr.bf16.mxu0 %v6695
    %11109 = vmatpush1.bf16.msra.mxu0 %v6694
    %11110 = vmatprep.subr.bf16.mxu0 %v6703
    %11111 = vmatpush1.bf16.msra.mxu0 %v6702
    %11112 = vmatprep.subr.bf16.mxu0 %v6711
    %11113 = vmatpush1.bf16.msra.mxu0 %v6710
    %11114 = vmatprep.subr.bf16.mxu0 %v6719
    %11115 = vmatpush1.bf16.msra.mxu0 %v6718
    %11116 = vmatprep.subr.bf16.mxu0 %v6727
    %11117 = vmatpush1.bf16.msra.mxu0 %v6726
    %11118 = vmatprep.subr.bf16.mxu0 %v6735
    %11119 = vmatpush1.bf16.msra.mxu0 %v6734
    %11120 = vmatprep.subr.bf16.mxu0 %v6743
    %11121 = vmatpush1.bf16.msra.mxu0 %v6742
    %11122 = vmatprep.subr.bf16.mxu0 %v6751
    %11123 = vmatpush1.bf16.msra.mxu0 %v6750
    %11124 = vmatprep.subr.bf16.mxu0 %v6759
    %11125 = vmatpush1.bf16.msra.mxu0 %v6758
    %11126 = vmatprep.subr.bf16.mxu0 %v6767
    %11127 = vmatpush1.bf16.msra.mxu0 %v6766
    %11128 = vmatprep.subr.bf16.mxu0 %v6775
    %11129 = vmatpush1.bf16.msra.mxu0 %v6774
    %11130 = vmatprep.mubr.bf16.mxu0 %v187
    %11131 = vmatmul.mubr.bf16.gmra.mrb[0].mxu0 %v186
    %v11132 = vpop.f32.mrb[0].mxu0
    %v11133 = vadd.f32 %v11090, %v11132
    %v11134 = vpop.f32.mrb[0].mxu0
    %v11135 = vadd.f32 %v11092, %v11134
    %v11136 = vpop.f32.mrb[0].mxu0
    %v11137 = vadd.f32 %v11094, %v11136
    %v11138 = vpop.f32.mrb[0].mxu0
    %v11139 = vadd.f32 %v11096, %v11138
    %11140 = vdwg.mxu0
    %11141 = vmatprep.subr.bf16.mxu0 %v6783
    %11142 = vmatpush1.bf16.msra.mxu0 %v6782
    %11143 = vmatprep.subr.bf16.mxu0 %v6791
    %11144 = vmatpush1.bf16.msra.mxu0 %v6790
    %11145 = vmatprep.subr.bf16.mxu0 %v6799
    %11146 = vmatpush1.bf16.msra.mxu0 %v6798
    %11147 = vmatprep.subr.bf16.mxu0 %v6807
    %11148 = vmatpush1.bf16.msra.mxu0 %v6806
    %11149 = vmatprep.subr.bf16.mxu0 %v6815
    %11150 = vmatpush1.bf16.msra.mxu0 %v6814
    %11151 = vmatprep.subr.bf16.mxu0 %v6823
    %11152 = vmatpush1.bf16.msra.mxu0 %v6822
    %11153 = vmatprep.subr.bf16.mxu0 %v6831
    %11154 = vmatpush1.bf16.msra.mxu0 %v6830
    %11155 = vmatprep.subr.bf16.mxu0 %v6839
    %11156 = vmatpush1.bf16.msra.mxu0 %v6838
    %11157 = vmatprep.subr.bf16.mxu0 %v6847
    %11158 = vmatpush1.bf16.msra.mxu0 %v6846
    %11159 = vmatprep.subr.bf16.mxu0 %v6855
    %11160 = vmatpush1.bf16.msra.mxu0 %v6854
    %11161 = vmatprep.subr.bf16.mxu0 %v6863
    %11162 = vmatpush1.bf16.msra.mxu0 %v6862
    %11163 = vmatprep.subr.bf16.mxu0 %v6871
    %11164 = vmatpush1.bf16.msra.mxu0 %v6870
    %11165 = vmatprep.subr.bf16.mxu0 %v6879
    %11166 = vmatpush1.bf16.msra.mxu0 %v6878
    %11167 = vmatprep.subr.bf16.mxu0 %v6887
    %11168 = vmatpush1.bf16.msra.mxu0 %v6886
    %11169 = vmatprep.subr.bf16.mxu0 %v6895
    %11170 = vmatpush1.bf16.msra.mxu0 %v6894
    %11171 = vmatprep.subr.bf16.mxu0 %v6903
    %11172 = vmatpush1.bf16.msra.mxu0 %v6902
    %11173 = vmatprep.mubr.bf16.mxu0 %v189
    %11174 = vmatmul.mubr.bf16.gmra.mrb[0].mxu0 %v188
    %v11175 = vpop.f32.mrb[0].mxu0
    %v11176 = vadd.f32 %v11133, %v11175
    %v11177 = vpop.f32.mrb[0].mxu0
    %v11178 = vadd.f32 %v11135, %v11177
    %v11179 = vpop.f32.mrb[0].mxu0
    %v11180 = vadd.f32 %v11137, %v11179
    %v11181 = vpop.f32.mrb[0].mxu0
    %v11182 = vadd.f32 %v11139, %v11181
    %11183 = vdwg.mxu0
    %11184 = vmatprep.subr.bf16.mxu0 %v6911
    %11185 = vmatpush1.bf16.msra.mxu0 %v6910
    %11186 = vmatprep.subr.bf16.mxu0 %v6919
    %11187 = vmatpush1.bf16.msra.mxu0 %v6918
    %11188 = vmatprep.subr.bf16.mxu0 %v6927
    %11189 = vmatpush1.bf16.msra.mxu0 %v6926
    %11190 = vmatprep.subr.bf16.mxu0 %v6935
    %11191 = vmatpush1.bf16.msra.mxu0 %v6934
    %11192 = vmatprep.subr.bf16.mxu0 %v6943
    %11193 = vmatpush1.bf16.msra.mxu0 %v6942
    %11194 = vmatprep.subr.bf16.mxu0 %v6951
    %11195 = vmatpush1.bf16.msra.mxu0 %v6950
    %11196 = vmatprep.subr.bf16.mxu0 %v6959
    %11197 = vmatpush1.bf16.msra.mxu0 %v6958
    %11198 = vmatprep.subr.bf16.mxu0 %v6967
    %11199 = vmatpush1.bf16.msra.mxu0 %v6966
    %11200 = vmatprep.subr.bf16.mxu0 %v6975
    %11201 = vmatpush1.bf16.msra.mxu0 %v6974
    %11202 = vmatprep.subr.bf16.mxu0 %v6983
    %11203 = vmatpush1.bf16.msra.mxu0 %v6982
    %11204 = vmatprep.subr.bf16.mxu0 %v6991
    %11205 = vmatpush1.bf16.msra.mxu0 %v6990
    %11206 = vmatprep.subr.bf16.mxu0 %v6999
    %11207 = vmatpush1.bf16.msra.mxu0 %v6998
    %11208 = vmatprep.subr.bf16.mxu0 %v7007
    %11209 = vmatpush1.bf16.msra.mxu0 %v7006
    %11210 = vmatprep.subr.bf16.mxu0 %v7015
    %11211 = vmatpush1.bf16.msra.mxu0 %v7014
    %11212 = vmatprep.subr.bf16.mxu0 %v7023
    %11213 = vmatpush1.bf16.msra.mxu0 %v7022
    %11214 = vmatprep.subr.bf16.mxu0 %v7031
    %11215 = vmatpush1.bf16.msra.mxu0 %v7030
    %11216 = vmatprep.mubr.bf16.mxu0 %v191
    %11217 = vmatmul.mubr.bf16.gmra.mrb[0].mxu0 %v190
    %v11218 = vpop.f32.mrb[0].mxu0
    %v11219 = vadd.f32 %v11176, %v11218
    %v11220 = vpop.f32.mrb[0].mxu0
    %v11221 = vadd.f32 %v11178, %v11220
    %v11222 = vpop.f32.mrb[0].mxu0
    %v11223 = vadd.f32 %v11180, %v11222
    %v11224 = vpop.f32.mrb[0].mxu0
    %v11225 = vadd.f32 %v11182, %v11224
    %11226 = vdwg.mxu0
    %11227 = vmatprep.subr.bf16.mxu0 %v7039
    %11228 = vmatpush1.bf16.msra.mxu0 %v7038
    %11229 = vmatprep.subr.bf16.mxu0 %v7047
    %11230 = vmatpush1.bf16.msra.mxu0 %v7046
    %11231 = vmatprep.subr.bf16.mxu0 %v7055
    %11232 = vmatpush1.bf16.msra.mxu0 %v7054
    %11233 = vmatprep.subr.bf16.mxu0 %v7063
    %11234 = vmatpush1.bf16.msra.mxu0 %v7062
    %11235 = vmatprep.subr.bf16.mxu0 %v7071
    %11236 = vmatpush1.bf16.msra.mxu0 %v7070
    %11237 = vmatprep.subr.bf16.mxu0 %v7079
    %11238 = vmatpush1.bf16.msra.mxu0 %v7078
    %11239 = vmatprep.subr.bf16.mxu0 %v7087
    %11240 = vmatpush1.bf16.msra.mxu0 %v7086
    %11241 = vmatprep.subr.bf16.mxu0 %v7095
    %11242 = vmatpush1.bf16.msra.mxu0 %v7094
    %11243 = vmatprep.subr.bf16.mxu0 %v7103
    %11244 = vmatpush1.bf16.msra.mxu0 %v7102
    %11245 = vmatprep.subr.bf16.mxu0 %v7111
    %11246 = vmatpush1.bf16.msra.mxu0 %v7110
    %11247 = vmatprep.subr.bf16.mxu0 %v7119
    %11248 = vmatpush1.bf16.msra.mxu0 %v7118
    %11249 = vmatprep.subr.bf16.mxu0 %v7127
    %11250 = vmatpush1.bf16.msra.mxu0 %v7126
    %11251 = vmatprep.subr.bf16.mxu0 %v7135
    %11252 = vmatpush1.bf16.msra.mxu0 %v7134
    %11253 = vmatprep.subr.bf16.mxu0 %v7143
    %11254 = vmatpush1.bf16.msra.mxu0 %v7142
    %11255 = vmatprep.subr.bf16.mxu0 %v7151
    %11256 = vmatpush1.bf16.msra.mxu0 %v7150
    %11257 = vmatprep.subr.bf16.mxu0 %v7159
    %11258 = vmatpush1.bf16.msra.mxu0 %v7158
    %11259 = vmatprep.mubr.bf16.mxu0 %v193
    %11260 = vmatmul.mubr.bf16.gmra.mrb[0].mxu0 %v192
    %v11261 = vpop.f32.mrb[0].mxu0
    %v11262 = vadd.f32 %v11219, %v11261
    %v11263 = vpop.f32.mrb[0].mxu0
    %v11264 = vadd.f32 %v11221, %v11263
    %v11265 = vpop.f32.mrb[0].mxu0
    %v11266 = vadd.f32 %v11223, %v11265
    %v11267 = vpop.f32.mrb[0].mxu0
    %v11268 = vadd.f32 %v11225, %v11267
    %11269 = vdwg.mxu0
    %11270 = vmatprep.subr.bf16.mxu0 %v7167
    %11271 = vmatpush1.bf16.msra.mxu0 %v7166
    %11272 = vmatprep.subr.bf16.mxu0 %v7175
    %11273 = vmatpush1.bf16.msra.mxu0 %v7174
    %11274 = vmatprep.subr.bf16.mxu0 %v7183
    %11275 = vmatpush1.bf16.msra.mxu0 %v7182
    %11276 = vmatprep.subr.bf16.mxu0 %v7191
    %11277 = vmatpush1.bf16.msra.mxu0 %v7190
    %11278 = vmatprep.subr.bf16.mxu0 %v7199
    %11279 = vmatpush1.bf16.msra.mxu0 %v7198
    %11280 = vmatprep.subr.bf16.mxu0 %v7207
    %11281 = vmatpush1.bf16.msra.mxu0 %v7206
    %11282 = vmatprep.subr.bf16.mxu0 %v7215
    %11283 = vmatpush1.bf16.msra.mxu0 %v7214
    %11284 = vmatprep.subr.bf16.mxu0 %v7223
    %11285 = vmatpush1.bf16.msra.mxu0 %v7222
    %11286 = vmatprep.subr.bf16.mxu0 %v7231
    %11287 = vmatpush1.bf16.msra.mxu0 %v7230
    %11288 = vmatprep.subr.bf16.mxu0 %v7239
    %11289 = vmatpush1.bf16.msra.mxu0 %v7238
    %11290 = vmatprep.subr.bf16.mxu0 %v7247
    %11291 = vmatpush1.bf16.msra.mxu0 %v7246
    %11292 = vmatprep.subr.bf16.mxu0 %v7255
    %11293 = vmatpush1.bf16.msra.mxu0 %v7254
    %11294 = vmatprep.subr.bf16.mxu0 %v7263
    %11295 = vmatpush1.bf16.msra.mxu0 %v7262
    %11296 = vmatprep.subr.bf16.mxu0 %v7271
    %11297 = vmatpush1.bf16.msra.mxu0 %v7270
    %11298 = vmatprep.subr.bf16.mxu0 %v7279
    %11299 = vmatpush1.bf16.msra.mxu0 %v7278
    %11300 = vmatprep.subr.bf16.mxu0 %v7287
    %11301 = vmatpush1.bf16.msra.mxu0 %v7286
    %11302 = vmatprep.mubr.bf16.mxu0 %v195
    %11303 = vmatmul.mubr.bf16.gmra.mrb[0].mxu0 %v194
    %v11304 = vpop.f32.mrb[0].mxu0
    %v11305 = vadd.f32 %v11262, %v11304
    %v11306 = vpop.f32.mrb[0].mxu0
    %v11307 = vadd.f32 %v11264, %v11306
    %v11308 = vpop.f32.mrb[0].mxu0
    %v11309 = vadd.f32 %v11266, %v11308
    %v11310 = vpop.f32.mrb[0].mxu0
    %v11311 = vadd.f32 %v11268, %v11310
    %11312 = vdwg.mxu0
    %11313 = vmatprep.subr.bf16.mxu0 %v7295
    %11314 = vmatpush1.bf16.msra.mxu0 %v7294
    %11315 = vmatprep.subr.bf16.mxu0 %v7303
    %11316 = vmatpush1.bf16.msra.mxu0 %v7302
    %11317 = vmatprep.subr.bf16.mxu0 %v7311
    %11318 = vmatpush1.bf16.msra.mxu0 %v7310
    %11319 = vmatprep.subr.bf16.mxu0 %v7319
    %11320 = vmatpush1.bf16.msra.mxu0 %v7318
    %11321 = vmatprep.subr.bf16.mxu0 %v7327
    %11322 = vmatpush1.bf16.msra.mxu0 %v7326
    %11323 = vmatprep.subr.bf16.mxu0 %v7335
    %11324 = vmatpush1.bf16.msra.mxu0 %v7334
    %11325 = vmatprep.subr.bf16.mxu0 %v7343
    %11326 = vmatpush1.bf16.msra.mxu0 %v7342
    %11327 = vmatprep.subr.bf16.mxu0 %v7351
    %11328 = vmatpush1.bf16.msra.mxu0 %v7350
    %11329 = vmatprep.subr.bf16.mxu0 %v7359
    %11330 = vmatpush1.bf16.msra.mxu0 %v7358
    %11331 = vmatprep.subr.bf16.mxu0 %v7367
    %11332 = vmatpush1.bf16.msra.mxu0 %v7366
    %11333 = vmatprep.subr.bf16.mxu0 %v7375
    %11334 = vmatpush1.bf16.msra.mxu0 %v7374
    %11335 = vmatprep.subr.bf16.mxu0 %v7383
    %11336 = vmatpush1.bf16.msra.mxu0 %v7382
    %11337 = vmatprep.subr.bf16.mxu0 %v7391
    %11338 = vmatpush1.bf16.msra.mxu0 %v7390
    %11339 = vmatprep.subr.bf16.mxu0 %v7399
    %11340 = vmatpush1.bf16.msra.mxu0 %v7398
    %11341 = vmatprep.subr.bf16.mxu0 %v7407
    %11342 = vmatpush1.bf16.msra.mxu0 %v7406
    %11343 = vmatprep.subr.bf16.mxu0 %v7415
    %11344 = vmatpush1.bf16.msra.mxu0 %v7414
    %11345 = vmatprep.mubr.bf16.mxu0 %v197
    %11346 = vmatmul.mubr.bf16.gmra.mrb[0].mxu0 %v196
    %v11347 = vpop.f32.mrb[0].mxu0
    %v11348 = vadd.f32 %v11305, %v11347
    %v11349 = vpop.f32.mrb[0].mxu0
    %v11350 = vadd.f32 %v11307, %v11349
    %v11351 = vpop.f32.mrb[0].mxu0
    %v11352 = vadd.f32 %v11309, %v11351
    %v11353 = vpop.f32.mrb[0].mxu0
    %v11354 = vadd.f32 %v11311, %v11353
    %11355 = vdwg.mxu0
    %11356 = vmatprep.subr.bf16.mxu0 %v7423
    %11357 = vmatpush1.bf16.msra.mxu0 %v7422
    %11358 = vmatprep.subr.bf16.mxu0 %v7431
    %11359 = vmatpush1.bf16.msra.mxu0 %v7430
    %11360 = vmatprep.subr.bf16.mxu0 %v7439
    %11361 = vmatpush1.bf16.msra.mxu0 %v7438
    %11362 = vmatprep.subr.bf16.mxu0 %v7447
    %11363 = vmatpush1.bf16.msra.mxu0 %v7446
    %11364 = vmatprep.subr.bf16.mxu0 %v7455
    %11365 = vmatpush1.bf16.msra.mxu0 %v7454
    %11366 = vmatprep.subr.bf16.mxu0 %v7463
    %11367 = vmatpush1.bf16.msra.mxu0 %v7462
    %11368 = vmatprep.subr.bf16.mxu0 %v7471
    %11369 = vmatpush1.bf16.msra.mxu0 %v7470
    %11370 = vmatprep.subr.bf16.mxu0 %v7479
    %11371 = vmatpush1.bf16.msra.mxu0 %v7478
    %11372 = vmatprep.subr.bf16.mxu0 %v7487
    %11373 = vmatpush1.bf16.msra.mxu0 %v7486
    %11374 = vmatprep.subr.bf16.mxu0 %v7495
    %11375 = vmatpush1.bf16.msra.mxu0 %v7494
    %11376 = vmatprep.subr.bf16.mxu0 %v7503
    %11377 = vmatpush1.bf16.msra.mxu0 %v7502
    %11378 = vmatprep.subr.bf16.mxu0 %v7511
    %11379 = vmatpush1.bf16.msra.mxu0 %v7510
    %11380 = vmatprep.subr.bf16.mxu0 %v7519
    %11381 = vmatpush1.bf16.msra.mxu0 %v7518
    %11382 = vmatprep.subr.bf16.mxu0 %v7527
    %11383 = vmatpush1.bf16.msra.mxu0 %v7526
    %11384 = vmatprep.subr.bf16.mxu0 %v7535
    %11385 = vmatpush1.bf16.msra.mxu0 %v7534
    %11386 = vmatprep.subr.bf16.mxu0 %v7543
    %11387 = vmatpush1.bf16.msra.mxu0 %v7542
    %11388 = vmatprep.mubr.bf16.mxu0 %v199
    %11389 = vmatmul.mubr.bf16.gmra.mrb[0].mxu0 %v198
    %v11390 = vpop.f32.mrb[0].mxu0
    %v11391 = vadd.f32 %v11348, %v11390
    %v11392 = vpop.f32.mrb[0].mxu0
    %v11393 = vadd.f32 %v11350, %v11392
    %v11394 = vpop.f32.mrb[0].mxu0
    %v11395 = vadd.f32 %v11352, %v11394
    %v11396 = vpop.f32.mrb[0].mxu0
    %v11397 = vadd.f32 %v11354, %v11396
    %11398 = vdwg.mxu0
    %11399 = vmatprep.subr.bf16.mxu0 %v7551
    %11400 = vmatpush1.bf16.msra.mxu0 %v7550
    %11401 = vmatprep.subr.bf16.mxu0 %v7559
    %11402 = vmatpush1.bf16.msra.mxu0 %v7558
    %11403 = vmatprep.subr.bf16.mxu0 %v7567
    %11404 = vmatpush1.bf16.msra.mxu0 %v7566
    %11405 = vmatprep.subr.bf16.mxu0 %v7575
    %11406 = vmatpush1.bf16.msra.mxu0 %v7574
    %11407 = vmatprep.subr.bf16.mxu0 %v7583
    %11408 = vmatpush1.bf16.msra.mxu0 %v7582
    %11409 = vmatprep.subr.bf16.mxu0 %v7591
    %11410 = vmatpush1.bf16.msra.mxu0 %v7590
    %11411 = vmatprep.subr.bf16.mxu0 %v7599
    %11412 = vmatpush1.bf16.msra.mxu0 %v7598
    %11413 = vmatprep.subr.bf16.mxu0 %v7607
    %11414 = vmatpush1.bf16.msra.mxu0 %v7606
    %11415 = vmatprep.subr.bf16.mxu0 %v7615
    %11416 = vmatpush1.bf16.msra.mxu0 %v7614
    %11417 = vmatprep.subr.bf16.mxu0 %v7623
    %11418 = vmatpush1.bf16.msra.mxu0 %v7622
    %11419 = vmatprep.subr.bf16.mxu0 %v7631
    %11420 = vmatpush1.bf16.msra.mxu0 %v7630
    %11421 = vmatprep.subr.bf16.mxu0 %v7639
    %11422 = vmatpush1.bf16.msra.mxu0 %v7638
    %11423 = vmatprep.subr.bf16.mxu0 %v7647
    %11424 = vmatpush1.bf16.msra.mxu0 %v7646
    %11425 = vmatprep.subr.bf16.mxu0 %v7655
    %11426 = vmatpush1.bf16.msra.mxu0 %v7654
    %11427 = vmatprep.subr.bf16.mxu0 %v7663
    %11428 = vmatpush1.bf16.msra.mxu0 %v7662
    %11429 = vmatprep.subr.bf16.mxu0 %v7671
    %11430 = vmatpush1.bf16.msra.mxu0 %v7670
    %11431 = vmatprep.mubr.bf16.mxu0 %v201
    %11432 = vmatmul.mubr.bf16.gmra.mrb[0].mxu0 %v200
    %v11433 = vpop.f32.mrb[0].mxu0
    %v11434 = vadd.f32 %v11391, %v11433
    %v11435 = vpop.f32.mrb[0].mxu0
    %v11436 = vadd.f32 %v11393, %v11435
    %v11437 = vpop.f32.mrb[0].mxu0
    %v11438 = vadd.f32 %v11395, %v11437
    %v11439 = vpop.f32.mrb[0].mxu0
    %v11440 = vadd.f32 %v11397, %v11439
    %11441 = vdwg.mxu0
    %11442 = vmatprep.subr.bf16.mxu0 %v7679
    %11443 = vmatpush1.bf16.msra.mxu0 %v7678
    %11444 = vmatprep.subr.bf16.mxu0 %v7687
    %11445 = vmatpush1.bf16.msra.mxu0 %v7686
    %11446 = vmatprep.subr.bf16.mxu0 %v7695
    %11447 = vmatpush1.bf16.msra.mxu0 %v7694
    %11448 = vmatprep.subr.bf16.mxu0 %v7703
    %11449 = vmatpush1.bf16.msra.mxu0 %v7702
    %11450 = vmatprep.subr.bf16.mxu0 %v7711
    %11451 = vmatpush1.bf16.msra.mxu0 %v7710
    %11452 = vmatprep.subr.bf16.mxu0 %v7719
    %11453 = vmatpush1.bf16.msra.mxu0 %v7718
    %11454 = vmatprep.subr.bf16.mxu0 %v7727
    %11455 = vmatpush1.bf16.msra.mxu0 %v7726
    %11456 = vmatprep.subr.bf16.mxu0 %v7735
    %11457 = vmatpush1.bf16.msra.mxu0 %v7734
    %11458 = vmatprep.subr.bf16.mxu0 %v7743
    %11459 = vmatpush1.bf16.msra.mxu0 %v7742
    %11460 = vmatprep.subr.bf16.mxu0 %v7751
    %11461 = vmatpush1.bf16.msra.mxu0 %v7750
    %11462 = vmatprep.subr.bf16.mxu0 %v7759
    %11463 = vmatpush1.bf16.msra.mxu0 %v7758
    %11464 = vmatprep.subr.bf16.mxu0 %v7767
    %11465 = vmatpush1.bf16.msra.mxu0 %v7766
    %11466 = vmatprep.subr.bf16.mxu0 %v7775
    %11467 = vmatpush1.bf16.msra.mxu0 %v7774
    %11468 = vmatprep.subr.bf16.mxu0 %v7783
    %11469 = vmatpush1.bf16.msra.mxu0 %v7782
    %11470 = vmatprep.subr.bf16.mxu0 %v7791
    %11471 = vmatpush1.bf16.msra.mxu0 %v7790
    %11472 = vmatprep.subr.bf16.mxu0 %v7799
    %11473 = vmatpush1.bf16.msra.mxu0 %v7798
    %11474 = vmatprep.mubr.bf16.mxu0 %v203
    %11475 = vmatmul.mubr.bf16.gmra.mrb[0].mxu0 %v202
    %v11476 = vpop.f32.mrb[0].mxu0
    %v11477 = vadd.f32 %v11434, %v11476
    %v11478 = vpop.f32.mrb[0].mxu0
    %v11479 = vadd.f32 %v11436, %v11478
    %v11480 = vpop.f32.mrb[0].mxu0
    %v11481 = vadd.f32 %v11438, %v11480
    %v11482 = vpop.f32.mrb[0].mxu0
    %v11483 = vadd.f32 %v11440, %v11482
    %11484 = vdwg.mxu0
    %11485 = vmatprep.subr.bf16.mxu0 %v7807
    %11486 = vmatpush1.bf16.msra.mxu0 %v7806
    %11487 = vmatprep.subr.bf16.mxu0 %v7815
    %11488 = vmatpush1.bf16.msra.mxu0 %v7814
    %11489 = vmatprep.subr.bf16.mxu0 %v7823
    %11490 = vmatpush1.bf16.msra.mxu0 %v7822
    %11491 = vmatprep.subr.bf16.mxu0 %v7831
    %11492 = vmatpush1.bf16.msra.mxu0 %v7830
    %11493 = vmatprep.subr.bf16.mxu0 %v7839
    %11494 = vmatpush1.bf16.msra.mxu0 %v7838
    %11495 = vmatprep.subr.bf16.mxu0 %v7847
    %11496 = vmatpush1.bf16.msra.mxu0 %v7846
    %11497 = vmatprep.subr.bf16.mxu0 %v7855
    %11498 = vmatpush1.bf16.msra.mxu0 %v7854
    %11499 = vmatprep.subr.bf16.mxu0 %v7863
    %11500 = vmatpush1.bf16.msra.mxu0 %v7862
    %11501 = vmatprep.subr.bf16.mxu0 %v7871
    %11502 = vmatpush1.bf16.msra.mxu0 %v7870
    %11503 = vmatprep.subr.bf16.mxu0 %v7879
    %11504 = vmatpush1.bf16.msra.mxu0 %v7878
    %11505 = vmatprep.subr.bf16.mxu0 %v7887
    %11506 = vmatpush1.bf16.msra.mxu0 %v7886
    %11507 = vmatprep.subr.bf16.mxu0 %v7895
    %11508 = vmatpush1.bf16.msra.mxu0 %v7894
    %11509 = vmatprep.subr.bf16.mxu0 %v7903
    %11510 = vmatpush1.bf16.msra.mxu0 %v7902
    %11511 = vmatprep.subr.bf16.mxu0 %v7911
    %11512 = vmatpush1.bf16.msra.mxu0 %v7910
    %11513 = vmatprep.subr.bf16.mxu0 %v7919
    %11514 = vmatpush1.bf16.msra.mxu0 %v7918
    %11515 = vmatprep.subr.bf16.mxu0 %v7927
    %11516 = vmatpush1.bf16.msra.mxu0 %v7926
    %11517 = vmatprep.mubr.bf16.mxu0 %v205
    %11518 = vmatmul.mubr.bf16.gmra.mrb[0].mxu0 %v204
    %v11519 = vpop.f32.mrb[0].mxu0
    %v11520 = vadd.f32 %v11477, %v11519
    %v11521 = vpop.f32.mrb[0].mxu0
    %v11522 = vadd.f32 %v11479, %v11521
    %v11523 = vpop.f32.mrb[0].mxu0
    %v11524 = vadd.f32 %v11481, %v11523
    %v11525 = vpop.f32.mrb[0].mxu0
    %v11526 = vadd.f32 %v11483, %v11525
    %11527 = vdwg.mxu0
    %v11528 = vmax.f32 %v9972, 0.0
    %v11529 = vmax.f32 %v9974, 0.0
    %v11530 = vmax.f32 %v10488, 0.0
    %v11531 = vmax.f32 %v10490, 0.0
    %v11532 = vmax.f32 %v11004, 0.0
    %v11533 = vmax.f32 %v11006, 0.0
    %v11534 = vmax.f32 %v11520, 0.0
    %v11535 = vmax.f32 %v11522, 0.0
    %v11536 = vmax.f32 %v9976, 0.0
    %v11537 = vmax.f32 %v9978, 0.0
    %v11538 = vmax.f32 %v10492, 0.0
    %v11539 = vmax.f32 %v10494, 0.0
    %v11540 = vmax.f32 %v11008, 0.0
    %v11541 = vmax.f32 %v11010, 0.0
    %v11542 = vmax.f32 %v11524, 0.0
    %v11543 = vmax.f32 %v11526, 0.0
    %v11544 = vpack.c.bf16 %v11536, %v11528
    %v11545 = vpack.c.bf16 %v11537, %v11529
    %v11546 = vpack.c.bf16 %v11538, %v11530
    %v11547 = vpack.c.bf16 %v11539, %v11531
    %v11548 = vpack.c.bf16 %v11540, %v11532
    %v11549 = vpack.c.bf16 %v11541, %v11533
    %v11550 = vpack.c.bf16 %v11542, %v11534
    %v11551 = vpack.c.bf16 %v11543, %v11535
    %v11552 = vld [vmem:[#allocation6] sm:$0xff]
    %v11553 = vld [vmem:[#allocation6 + $0x8] sm:$0xff]
    %v11554 = vld [vmem:[#allocation6 + $0x10] sm:$0xff]
    %v11555 = vld [vmem:[#allocation6 + $0x18] sm:$0xff]
    %v11556 = vld [vmem:[#allocation6 + $0x20] sm:$0xff]
    %v11557 = vld [vmem:[#allocation6 + $0x28] sm:$0xff]
    %v11558 = vld [vmem:[#allocation6 + $0x30] sm:$0xff]
    %v11559 = vld [vmem:[#allocation6 + $0x38] sm:$0xff]
    %v11560 = vld [vmem:[#allocation6 + $0x40] sm:$0xff]
    %v11561 = vld [vmem:[#allocation6 + $0x48] sm:$0xff]
    %v11562 = vld [vmem:[#allocation6 + $0x50] sm:$0xff]
    %v11563 = vld [vmem:[#allocation6 + $0x58] sm:$0xff]
    %v11564 = vld [vmem:[#allocation6 + $0x60] sm:$0xff]
    %v11565 = vld [vmem:[#allocation6 + $0x68] sm:$0xff]
    %v11566 = vld [vmem:[#allocation6 + $0x70] sm:$0xff]
    %v11567 = vld [vmem:[#allocation6 + $0x78] sm:$0xff]
    %v11568 = vld [vmem:[#allocation6 + $0x80] sm:$0xff]
    %v11569 = vld [vmem:[#allocation6 + $0x88] sm:$0xff]
    %v11570 = vld [vmem:[#allocation6 + $0x90] sm:$0xff]
    %v11571 = vld [vmem:[#allocation6 + $0x98] sm:$0xff]
    %v11572 = vld [vmem:[#allocation6 + $0xa0] sm:$0xff]
    %v11573 = vld [vmem:[#allocation6 + $0xa8] sm:$0xff]
    %v11574 = vld [vmem:[#allocation6 + $0xb0] sm:$0xff]
    %v11575 = vld [vmem:[#allocation6 + $0xb8] sm:$0xff]
    %v11576 = vld [vmem:[#allocation6 + $0xc0] sm:$0xff]
    %v11577 = vld [vmem:[#allocation6 + $0xc8] sm:$0xff]
    %v11578 = vld [vmem:[#allocation6 + $0xd0] sm:$0xff]
    %v11579 = vld [vmem:[#allocation6 + $0xd8] sm:$0xff]
    %v11580 = vld [vmem:[#allocation6 + $0xe0] sm:$0xff]
    %v11581 = vld [vmem:[#allocation6 + $0xe8] sm:$0xff]
    %v11582 = vld [vmem:[#allocation6 + $0xf0] sm:$0xff]
    %v11583 = vld [vmem:[#allocation6 + $0xf8] sm:$0xff]
    %v11584 = vld [vmem:[#allocation6 + $0x100] sm:$0xff]
    %v11585 = vld [vmem:[#allocation6 + $0x108] sm:$0xff]
    %v11586 = vld [vmem:[#allocation6 + $0x110] sm:$0xff]
    %v11587 = vld [vmem:[#allocation6 + $0x118] sm:$0xff]
    %v11588 = vld [vmem:[#allocation6 + $0x120] sm:$0xff]
    %v11589 = vld [vmem:[#allocation6 + $0x128] sm:$0xff]
    %v11590 = vld [vmem:[#allocation6 + $0x130] sm:$0xff]
    %v11591 = vld [vmem:[#allocation6 + $0x138] sm:$0xff]
    %v11592 = vld [vmem:[#allocation6 + $0x140] sm:$0xff]
    %v11593 = vld [vmem:[#allocation6 + $0x148] sm:$0xff]
    %v11594 = vld [vmem:[#allocation6 + $0x150] sm:$0xff]
    %v11595 = vld [vmem:[#allocation6 + $0x158] sm:$0xff]
    %v11596 = vld [vmem:[#allocation6 + $0x160] sm:$0xff]
    %v11597 = vld [vmem:[#allocation6 + $0x168] sm:$0xff]
    %v11598 = vld [vmem:[#allocation6 + $0x170] sm:$0xff]
    %v11599 = vld [vmem:[#allocation6 + $0x178] sm:$0xff]
    %v11600 = vld [vmem:[#allocation6 + $0x180] sm:$0xff]
    %v11601 = vld [vmem:[#allocation6 + $0x188] sm:$0xff]
    %v11602 = vld [vmem:[#allocation6 + $0x190] sm:$0xff]
    %v11603 = vld [vmem:[#allocation6 + $0x198] sm:$0xff]
    %v11604 = vld [vmem:[#allocation6 + $0x1a0] sm:$0xff]
    %v11605 = vld [vmem:[#allocation6 + $0x1a8] sm:$0xff]
    %v11606 = vld [vmem:[#allocation6 + $0x1b0] sm:$0xff]
    %v11607 = vld [vmem:[#allocation6 + $0x1b8] sm:$0xff]
    %v11608 = vld [vmem:[#allocation6 + $0x1c0] sm:$0xff]
    %v11609 = vld [vmem:[#allocation6 + $0x1c8] sm:$0xff]
    %v11610 = vld [vmem:[#allocation6 + $0x1d0] sm:$0xff]
    %v11611 = vld [vmem:[#allocation6 + $0x1d8] sm:$0xff]
    %v11612 = vld [vmem:[#allocation6 + $0x1e0] sm:$0xff]
    %v11613 = vld [vmem:[#allocation6 + $0x1e8] sm:$0xff]
    %v11614 = vld [vmem:[#allocation6 + $0x1f0] sm:$0xff]
    %v11615 = vld [vmem:[#allocation6 + $0x1f8] sm:$0xff]
    %v11616 = vld [vmem:[#allocation6 + $0x200] sm:$0xff]
    %v11617 = vld [vmem:[#allocation6 + $0x208] sm:$0xff]
    %v11618 = vld [vmem:[#allocation6 + $0x210] sm:$0xff]
    %v11619 = vld [vmem:[#allocation6 + $0x218] sm:$0xff]
    %v11620 = vld [vmem:[#allocation6 + $0x220] sm:$0xff]
    %v11621 = vld [vmem:[#allocation6 + $0x228] sm:$0xff]
    %v11622 = vld [vmem:[#allocation6 + $0x230] sm:$0xff]
    %v11623 = vld [vmem:[#allocation6 + $0x238] sm:$0xff]
    %v11624 = vld [vmem:[#allocation6 + $0x240] sm:$0xff]
    %v11625 = vld [vmem:[#allocation6 + $0x248] sm:$0xff]
    %v11626 = vld [vmem:[#allocation6 + $0x250] sm:$0xff]
    %v11627 = vld [vmem:[#allocation6 + $0x258] sm:$0xff]
    %v11628 = vld [vmem:[#allocation6 + $0x260] sm:$0xff]
    %v11629 = vld [vmem:[#allocation6 + $0x268] sm:$0xff]
    %v11630 = vld [vmem:[#allocation6 + $0x270] sm:$0xff]
    %v11631 = vld [vmem:[#allocation6 + $0x278] sm:$0xff]
    %v11632 = vld [vmem:[#allocation6 + $0x280] sm:$0xff]
    %v11633 = vld [vmem:[#allocation6 + $0x288] sm:$0xff]
    %v11634 = vld [vmem:[#allocation6 + $0x290] sm:$0xff]
    %v11635 = vld [vmem:[#allocation6 + $0x298] sm:$0xff]
    %v11636 = vld [vmem:[#allocation6 + $0x2a0] sm:$0xff]
    %v11637 = vld [vmem:[#allocation6 + $0x2a8] sm:$0xff]
    %v11638 = vld [vmem:[#allocation6 + $0x2b0] sm:$0xff]
    %v11639 = vld [vmem:[#allocation6 + $0x2b8] sm:$0xff]
    %v11640 = vld [vmem:[#allocation6 + $0x2c0] sm:$0xff]
    %v11641 = vld [vmem:[#allocation6 + $0x2c8] sm:$0xff]
    %v11642 = vld [vmem:[#allocation6 + $0x2d0] sm:$0xff]
    %v11643 = vld [vmem:[#allocation6 + $0x2d8] sm:$0xff]
    %v11644 = vld [vmem:[#allocation6 + $0x2e0] sm:$0xff]
    %v11645 = vld [vmem:[#allocation6 + $0x2e8] sm:$0xff]
    %v11646 = vld [vmem:[#allocation6 + $0x2f0] sm:$0xff]
    %v11647 = vld [vmem:[#allocation6 + $0x2f8] sm:$0xff]
    %v11648 = vld [vmem:[#allocation6 + $0x300] sm:$0xff]
    %v11649 = vld [vmem:[#allocation6 + $0x308] sm:$0xff]
    %v11650 = vld [vmem:[#allocation6 + $0x310] sm:$0xff]
    %v11651 = vld [vmem:[#allocation6 + $0x318] sm:$0xff]
    %v11652 = vld [vmem:[#allocation6 + $0x320] sm:$0xff]
    %v11653 = vld [vmem:[#allocation6 + $0x328] sm:$0xff]
    %v11654 = vld [vmem:[#allocation6 + $0x330] sm:$0xff]
    %v11655 = vld [vmem:[#allocation6 + $0x338] sm:$0xff]
    %v11656 = vld [vmem:[#allocation6 + $0x340] sm:$0xff]
    %v11657 = vld [vmem:[#allocation6 + $0x348] sm:$0xff]
    %v11658 = vld [vmem:[#allocation6 + $0x350] sm:$0xff]
    %v11659 = vld [vmem:[#allocation6 + $0x358] sm:$0xff]
    %v11660 = vld [vmem:[#allocation6 + $0x360] sm:$0xff]
    %v11661 = vld [vmem:[#allocation6 + $0x368] sm:$0xff]
    %v11662 = vld [vmem:[#allocation6 + $0x370] sm:$0xff]
    %v11663 = vld [vmem:[#allocation6 + $0x378] sm:$0xff]
    %v11664 = vld [vmem:[#allocation6 + $0x380] sm:$0xff]
    %v11665 = vld [vmem:[#allocation6 + $0x388] sm:$0xff]
    %v11666 = vld [vmem:[#allocation6 + $0x390] sm:$0xff]
    %v11667 = vld [vmem:[#allocation6 + $0x398] sm:$0xff]
    %v11668 = vld [vmem:[#allocation6 + $0x3a0] sm:$0xff]
    %v11669 = vld [vmem:[#allocation6 + $0x3a8] sm:$0xff]
    %v11670 = vld [vmem:[#allocation6 + $0x3b0] sm:$0xff]
    %v11671 = vld [vmem:[#allocation6 + $0x3b8] sm:$0xff]
    %v11672 = vld [vmem:[#allocation6 + $0x3c0] sm:$0xff]
    %v11673 = vld [vmem:[#allocation6 + $0x3c8] sm:$0xff]
    %v11674 = vld [vmem:[#allocation6 + $0x3d0] sm:$0xff]
    %v11675 = vld [vmem:[#allocation6 + $0x3d8] sm:$0xff]
    %v11676 = vld [vmem:[#allocation6 + $0x3e0] sm:$0xff]
    %v11677 = vld [vmem:[#allocation6 + $0x3e8] sm:$0xff]
    %v11678 = vld [vmem:[#allocation6 + $0x3f0] sm:$0xff]
    %v11679 = vld [vmem:[#allocation6 + $0x3f8] sm:$0xff]
    %v11680 = vld [vmem:[#allocation6 + $0x400] sm:$0xff]
    %v11681 = vld [vmem:[#allocation6 + $0x408] sm:$0xff]
    %v11682 = vld [vmem:[#allocation6 + $0x410] sm:$0xff]
    %v11683 = vld [vmem:[#allocation6 + $0x418] sm:$0xff]
    %v11684 = vld [vmem:[#allocation6 + $0x420] sm:$0xff]
    %v11685 = vld [vmem:[#allocation6 + $0x428] sm:$0xff]
    %v11686 = vld [vmem:[#allocation6 + $0x430] sm:$0xff]
    %v11687 = vld [vmem:[#allocation6 + $0x438] sm:$0xff]
    %v11688 = vld [vmem:[#allocation6 + $0x440] sm:$0xff]
    %v11689 = vld [vmem:[#allocation6 + $0x448] sm:$0xff]
    %v11690 = vld [vmem:[#allocation6 + $0x450] sm:$0xff]
    %v11691 = vld [vmem:[#allocation6 + $0x458] sm:$0xff]
    %v11692 = vld [vmem:[#allocation6 + $0x460] sm:$0xff]
    %v11693 = vld [vmem:[#allocation6 + $0x468] sm:$0xff]
    %v11694 = vld [vmem:[#allocation6 + $0x470] sm:$0xff]
    %v11695 = vld [vmem:[#allocation6 + $0x478] sm:$0xff]
    %v11696 = vld [vmem:[#allocation6 + $0x480] sm:$0xff]
    %v11697 = vld [vmem:[#allocation6 + $0x488] sm:$0xff]
    %v11698 = vld [vmem:[#allocation6 + $0x490] sm:$0xff]
    %v11699 = vld [vmem:[#allocation6 + $0x498] sm:$0xff]
    %v11700 = vld [vmem:[#allocation6 + $0x4a0] sm:$0xff]
    %v11701 = vld [vmem:[#allocation6 + $0x4a8] sm:$0xff]
    %v11702 = vld [vmem:[#allocation6 + $0x4b0] sm:$0xff]
    %v11703 = vld [vmem:[#allocation6 + $0x4b8] sm:$0xff]
    %v11704 = vld [vmem:[#allocation6 + $0x4c0] sm:$0xff]
    %v11705 = vld [vmem:[#allocation6 + $0x4c8] sm:$0xff]
    %v11706 = vld [vmem:[#allocation6 + $0x4d0] sm:$0xff]
    %v11707 = vld [vmem:[#allocation6 + $0x4d8] sm:$0xff]
    %v11708 = vld [vmem:[#allocation6 + $0x4e0] sm:$0xff]
    %v11709 = vld [vmem:[#allocation6 + $0x4e8] sm:$0xff]
    %v11710 = vld [vmem:[#allocation6 + $0x4f0] sm:$0xff]
    %v11711 = vld [vmem:[#allocation6 + $0x4f8] sm:$0xff]
    %v11712 = vld [vmem:[#allocation6 + $0x500] sm:$0xff]
    %v11713 = vld [vmem:[#allocation6 + $0x508] sm:$0xff]
    %v11714 = vld [vmem:[#allocation6 + $0x510] sm:$0xff]
    %v11715 = vld [vmem:[#allocation6 + $0x518] sm:$0xff]
    %v11716 = vld [vmem:[#allocation6 + $0x520] sm:$0xff]
    %v11717 = vld [vmem:[#allocation6 + $0x528] sm:$0xff]
    %v11718 = vld [vmem:[#allocation6 + $0x530] sm:$0xff]
    %v11719 = vld [vmem:[#allocation6 + $0x538] sm:$0xff]
    %v11720 = vld [vmem:[#allocation6 + $0x540] sm:$0xff]
    %v11721 = vld [vmem:[#allocation6 + $0x548] sm:$0xff]
    %v11722 = vld [vmem:[#allocation6 + $0x550] sm:$0xff]
    %v11723 = vld [vmem:[#allocation6 + $0x558] sm:$0xff]
    %v11724 = vld [vmem:[#allocation6 + $0x560] sm:$0xff]
    %v11725 = vld [vmem:[#allocation6 + $0x568] sm:$0xff]
    %v11726 = vld [vmem:[#allocation6 + $0x570] sm:$0xff]
    %v11727 = vld [vmem:[#allocation6 + $0x578] sm:$0xff]
    %v11728 = vld [vmem:[#allocation6 + $0x580] sm:$0xff]
    %v11729 = vld [vmem:[#allocation6 + $0x588] sm:$0xff]
    %v11730 = vld [vmem:[#allocation6 + $0x590] sm:$0xff]
    %v11731 = vld [vmem:[#allocation6 + $0x598] sm:$0xff]
    %v11732 = vld [vmem:[#allocation6 + $0x5a0] sm:$0xff]
    %v11733 = vld [vmem:[#allocation6 + $0x5a8] sm:$0xff]
    %v11734 = vld [vmem:[#allocation6 + $0x5b0] sm:$0xff]
    %v11735 = vld [vmem:[#allocation6 + $0x5b8] sm:$0xff]
    %v11736 = vld [vmem:[#allocation6 + $0x5c0] sm:$0xff]
    %v11737 = vld [vmem:[#allocation6 + $0x5c8] sm:$0xff]
    %v11738 = vld [vmem:[#allocation6 + $0x5d0] sm:$0xff]
    %v11739 = vld [vmem:[#allocation6 + $0x5d8] sm:$0xff]
    %v11740 = vld [vmem:[#allocation6 + $0x5e0] sm:$0xff]
    %v11741 = vld [vmem:[#allocation6 + $0x5e8] sm:$0xff]
    %v11742 = vld [vmem:[#allocation6 + $0x5f0] sm:$0xff]
    %v11743 = vld [vmem:[#allocation6 + $0x5f8] sm:$0xff]
    %v11744 = vld [vmem:[#allocation6 + $0x600] sm:$0xff]
    %v11745 = vld [vmem:[#allocation6 + $0x608] sm:$0xff]
    %v11746 = vld [vmem:[#allocation6 + $0x610] sm:$0xff]
    %v11747 = vld [vmem:[#allocation6 + $0x618] sm:$0xff]
    %v11748 = vld [vmem:[#allocation6 + $0x620] sm:$0xff]
    %v11749 = vld [vmem:[#allocation6 + $0x628] sm:$0xff]
    %v11750 = vld [vmem:[#allocation6 + $0x630] sm:$0xff]
    %v11751 = vld [vmem:[#allocation6 + $0x638] sm:$0xff]
    %v11752 = vld [vmem:[#allocation6 + $0x640] sm:$0xff]
    %v11753 = vld [vmem:[#allocation6 + $0x648] sm:$0xff]
    %v11754 = vld [vmem:[#allocation6 + $0x650] sm:$0xff]
    %v11755 = vld [vmem:[#allocation6 + $0x658] sm:$0xff]
    %v11756 = vld [vmem:[#allocation6 + $0x660] sm:$0xff]
    %v11757 = vld [vmem:[#allocation6 + $0x668] sm:$0xff]
    %v11758 = vld [vmem:[#allocation6 + $0x670] sm:$0xff]
    %v11759 = vld [vmem:[#allocation6 + $0x678] sm:$0xff]
    %v11760 = vld [vmem:[#allocation6 + $0x680] sm:$0xff]
    %v11761 = vld [vmem:[#allocation6 + $0x688] sm:$0xff]
    %v11762 = vld [vmem:[#allocation6 + $0x690] sm:$0xff]
    %v11763 = vld [vmem:[#allocation6 + $0x698] sm:$0xff]
    %v11764 = vld [vmem:[#allocation6 + $0x6a0] sm:$0xff]
    %v11765 = vld [vmem:[#allocation6 + $0x6a8] sm:$0xff]
    %v11766 = vld [vmem:[#allocation6 + $0x6b0] sm:$0xff]
    %v11767 = vld [vmem:[#allocation6 + $0x6b8] sm:$0xff]
    %v11768 = vld [vmem:[#allocation6 + $0x6c0] sm:$0xff]
    %v11769 = vld [vmem:[#allocation6 + $0x6c8] sm:$0xff]
    %v11770 = vld [vmem:[#allocation6 + $0x6d0] sm:$0xff]
    %v11771 = vld [vmem:[#allocation6 + $0x6d8] sm:$0xff]
    %v11772 = vld [vmem:[#allocation6 + $0x6e0] sm:$0xff]
    %v11773 = vld [vmem:[#allocation6 + $0x6e8] sm:$0xff]
    %v11774 = vld [vmem:[#allocation6 + $0x6f0] sm:$0xff]
    %v11775 = vld [vmem:[#allocation6 + $0x6f8] sm:$0xff]
    %v11776 = vld [vmem:[#allocation6 + $0x700] sm:$0xff]
    %v11777 = vld [vmem:[#allocation6 + $0x708] sm:$0xff]
    %v11778 = vld [vmem:[#allocation6 + $0x710] sm:$0xff]
    %v11779 = vld [vmem:[#allocation6 + $0x718] sm:$0xff]
    %v11780 = vld [vmem:[#allocation6 + $0x720] sm:$0xff]
    %v11781 = vld [vmem:[#allocation6 + $0x728] sm:$0xff]
    %v11782 = vld [vmem:[#allocation6 + $0x730] sm:$0xff]
    %v11783 = vld [vmem:[#allocation6 + $0x738] sm:$0xff]
    %v11784 = vld [vmem:[#allocation6 + $0x740] sm:$0xff]
    %v11785 = vld [vmem:[#allocation6 + $0x748] sm:$0xff]
    %v11786 = vld [vmem:[#allocation6 + $0x750] sm:$0xff]
    %v11787 = vld [vmem:[#allocation6 + $0x758] sm:$0xff]
    %v11788 = vld [vmem:[#allocation6 + $0x760] sm:$0xff]
    %v11789 = vld [vmem:[#allocation6 + $0x768] sm:$0xff]
    %v11790 = vld [vmem:[#allocation6 + $0x770] sm:$0xff]
    %v11791 = vld [vmem:[#allocation6 + $0x778] sm:$0xff]
    %v11792 = vld [vmem:[#allocation6 + $0x780] sm:$0xff]
    %v11793 = vld [vmem:[#allocation6 + $0x788] sm:$0xff]
    %v11794 = vld [vmem:[#allocation6 + $0x790] sm:$0xff]
    %v11795 = vld [vmem:[#allocation6 + $0x798] sm:$0xff]
    %v11796 = vld [vmem:[#allocation6 + $0x7a0] sm:$0xff]
    %v11797 = vld [vmem:[#allocation6 + $0x7a8] sm:$0xff]
    %v11798 = vld [vmem:[#allocation6 + $0x7b0] sm:$0xff]
    %v11799 = vld [vmem:[#allocation6 + $0x7b8] sm:$0xff]
    %v11800 = vld [vmem:[#allocation6 + $0x7c0] sm:$0xff]
    %v11801 = vld [vmem:[#allocation6 + $0x7c8] sm:$0xff]
    %v11802 = vld [vmem:[#allocation6 + $0x7d0] sm:$0xff]
    %v11803 = vld [vmem:[#allocation6 + $0x7d8] sm:$0xff]
    %v11804 = vld [vmem:[#allocation6 + $0x7e0] sm:$0xff]
    %v11805 = vld [vmem:[#allocation6 + $0x7e8] sm:$0xff]
    %v11806 = vld [vmem:[#allocation6 + $0x7f0] sm:$0xff]
    %v11807 = vld [vmem:[#allocation6 + $0x7f8] sm:$0xff]
    %v11808 = vld [vmem:[#allocation7] sm:$0xf]
    %v11810 = vlaneseq
    %v11811 = vshrl.u32 %v11810, 7
    %v11812 = vsub.s32 0, %v11811
    %v11813 = vrot.slane %v11808, %v11812
    %v11814 = vlaneseq
    %v11815 = vshrl.u32 %v11814, 7
    %v11816 = vsub.s32 1, %v11815
    %v11817 = vrot.slane %v11808, %v11816
    %v11818 = vlaneseq
    %v11819 = vshrl.u32 %v11818, 7
    %v11820 = vsub.s32 2, %v11819
    %v11821 = vrot.slane %v11808, %v11820
    %v11822 = vlaneseq
    %v11823 = vshrl.u32 %v11822, 7
    %v11824 = vsub.s32 3, %v11823
    %v11825 = vrot.slane %v11808, %v11824
    %v12086 = vunpack.c.l.b16 %v11552
    %v12087 = vunpack.c.h.b16 %v11552
    %v12088 = vunpack.c.l.b16 %v11553
    %v12089 = vunpack.c.h.b16 %v11553
    %v12090 = vunpack.c.l.b16 %v11554
    %v12091 = vunpack.c.h.b16 %v11554
    %v12092 = vunpack.c.l.b16 %v11555
    %v12093 = vunpack.c.h.b16 %v11555
    %v12094 = vunpack.c.l.b16 %v11556
    %v12095 = vunpack.c.h.b16 %v11556
    %v12096 = vunpack.c.l.b16 %v11557
    %v12097 = vunpack.c.h.b16 %v11557
    %v12098 = vunpack.c.l.b16 %v11558
    %v12099 = vunpack.c.h.b16 %v11558
    %v12100 = vunpack.c.l.b16 %v11559
    %v12101 = vunpack.c.h.b16 %v11559
    %v12102 = vunpack.c.l.b16 %v11560
    %v12103 = vunpack.c.h.b16 %v11560
    %v12104 = vunpack.c.l.b16 %v11561
    %v12105 = vunpack.c.h.b16 %v11561
    %v12106 = vunpack.c.l.b16 %v11562
    %v12107 = vunpack.c.h.b16 %v11562
    %v12108 = vunpack.c.l.b16 %v11563
    %v12109 = vunpack.c.h.b16 %v11563
    %v12110 = vunpack.c.l.b16 %v11564
    %v12111 = vunpack.c.h.b16 %v11564
    %v12112 = vunpack.c.l.b16 %v11565
    %v12113 = vunpack.c.h.b16 %v11565
    %v12114 = vunpack.c.l.b16 %v11566
    %v12115 = vunpack.c.h.b16 %v11566
    %v12116 = vunpack.c.l.b16 %v11567
    %v12117 = vunpack.c.h.b16 %v11567
    %v12118 = vunpack.c.l.b16 %v11568
    %v12119 = vunpack.c.h.b16 %v11568
    %v12120 = vunpack.c.l.b16 %v11569
    %v12121 = vunpack.c.h.b16 %v11569
    %v12122 = vunpack.c.l.b16 %v11570
    %v12123 = vunpack.c.h.b16 %v11570
    %v12124 = vunpack.c.l.b16 %v11571
    %v12125 = vunpack.c.h.b16 %v11571
    %v12126 = vunpack.c.l.b16 %v11572
    %v12127 = vunpack.c.h.b16 %v11572
    %v12128 = vunpack.c.l.b16 %v11573
    %v12129 = vunpack.c.h.b16 %v11573
    %v12130 = vunpack.c.l.b16 %v11574
    %v12131 = vunpack.c.h.b16 %v11574
    %v12132 = vunpack.c.l.b16 %v11575
    %v12133 = vunpack.c.h.b16 %v11575
    %v12134 = vunpack.c.l.b16 %v11576
    %v12135 = vunpack.c.h.b16 %v11576
    %v12136 = vunpack.c.l.b16 %v11577
    %v12137 = vunpack.c.h.b16 %v11577
    %v12138 = vunpack.c.l.b16 %v11578
    %v12139 = vunpack.c.h.b16 %v11578
    %v12140 = vunpack.c.l.b16 %v11579
    %v12141 = vunpack.c.h.b16 %v11579
    %v12142 = vunpack.c.l.b16 %v11580
    %v12143 = vunpack.c.h.b16 %v11580
    %v12144 = vunpack.c.l.b16 %v11581
    %v12145 = vunpack.c.h.b16 %v11581
    %v12146 = vunpack.c.l.b16 %v11582
    %v12147 = vunpack.c.h.b16 %v11582
    %v12148 = vunpack.c.l.b16 %v11583
    %v12149 = vunpack.c.h.b16 %v11583
    %v12150 = vunpack.c.l.b16 %v11584
    %v12151 = vunpack.c.h.b16 %v11584
    %v12152 = vunpack.c.l.b16 %v11585
    %v12153 = vunpack.c.h.b16 %v11585
    %v12154 = vunpack.c.l.b16 %v11586
    %v12155 = vunpack.c.h.b16 %v11586
    %v12156 = vunpack.c.l.b16 %v11587
    %v12157 = vunpack.c.h.b16 %v11587
    %v12158 = vunpack.c.l.b16 %v11588
    %v12159 = vunpack.c.h.b16 %v11588
    %v12160 = vunpack.c.l.b16 %v11589
    %v12161 = vunpack.c.h.b16 %v11589
    %v12162 = vunpack.c.l.b16 %v11590
    %v12163 = vunpack.c.h.b16 %v11590
    %v12164 = vunpack.c.l.b16 %v11591
    %v12165 = vunpack.c.h.b16 %v11591
    %v12166 = vunpack.c.l.b16 %v11592
    %v12167 = vunpack.c.h.b16 %v11592
    %v12168 = vunpack.c.l.b16 %v11593
    %v12169 = vunpack.c.h.b16 %v11593
    %v12170 = vunpack.c.l.b16 %v11594
    %v12171 = vunpack.c.h.b16 %v11594
    %v12172 = vunpack.c.l.b16 %v11595
    %v12173 = vunpack.c.h.b16 %v11595
    %v12174 = vunpack.c.l.b16 %v11596
    %v12175 = vunpack.c.h.b16 %v11596
    %v12176 = vunpack.c.l.b16 %v11597
    %v12177 = vunpack.c.h.b16 %v11597
    %v12178 = vunpack.c.l.b16 %v11598
    %v12179 = vunpack.c.h.b16 %v11598
    %v12180 = vunpack.c.l.b16 %v11599
    %v12181 = vunpack.c.h.b16 %v11599
    %v12182 = vunpack.c.l.b16 %v11600
    %v12183 = vunpack.c.h.b16 %v11600
    %v12184 = vunpack.c.l.b16 %v11601
    %v12185 = vunpack.c.h.b16 %v11601
    %v12186 = vunpack.c.l.b16 %v11602
    %v12187 = vunpack.c.h.b16 %v11602
    %v12188 = vunpack.c.l.b16 %v11603
    %v12189 = vunpack.c.h.b16 %v11603
    %v12190 = vunpack.c.l.b16 %v11604
    %v12191 = vunpack.c.h.b16 %v11604
    %v12192 = vunpack.c.l.b16 %v11605
    %v12193 = vunpack.c.h.b16 %v11605
    %v12194 = vunpack.c.l.b16 %v11606
    %v12195 = vunpack.c.h.b16 %v11606
    %v12196 = vunpack.c.l.b16 %v11607
    %v12197 = vunpack.c.h.b16 %v11607
    %v12198 = vunpack.c.l.b16 %v11608
    %v12199 = vunpack.c.h.b16 %v11608
    %v12200 = vunpack.c.l.b16 %v11609
    %v12201 = vunpack.c.h.b16 %v11609
    %v12202 = vunpack.c.l.b16 %v11610
    %v12203 = vunpack.c.h.b16 %v11610
    %v12204 = vunpack.c.l.b16 %v11611
    %v12205 = vunpack.c.h.b16 %v11611
    %v12206 = vunpack.c.l.b16 %v11612
    %v12207 = vunpack.c.h.b16 %v11612
    %v12208 = vunpack.c.l.b16 %v11613
    %v12209 = vunpack.c.h.b16 %v11613
    %v12210 = vunpack.c.l.b16 %v11614
    %v12211 = vunpack.c.h.b16 %v11614
    %v12212 = vunpack.c.l.b16 %v11615
    %v12213 = vunpack.c.h.b16 %v11615
    %v12214 = vunpack.c.l.b16 %v11616
    %v12215 = vunpack.c.h.b16 %v11616
    %v12216 = vunpack.c.l.b16 %v11617
    %v12217 = vunpack.c.h.b16 %v11617
    %v12218 = vunpack.c.l.b16 %v11618
    %v12219 = vunpack.c.h.b16 %v11618
    %v12220 = vunpack.c.l.b16 %v11619
    %v12221 = vunpack.c.h.b16 %v11619
    %v12222 = vunpack.c.l.b16 %v11620
    %v12223 = vunpack.c.h.b16 %v11620
    %v12224 = vunpack.c.l.b16 %v11621
    %v12225 = vunpack.c.h.b16 %v11621
    %v12226 = vunpack.c.l.b16 %v11622
    %v12227 = vunpack.c.h.b16 %v11622
    %v12228 = vunpack.c.l.b16 %v11623
    %v12229 = vunpack.c.h.b16 %v11623
    %v12230 = vunpack.c.l.b16 %v11624
    %v12231 = vunpack.c.h.b16 %v11624
    %v12232 = vunpack.c.l.b16 %v11625
    %v12233 = vunpack.c.h.b16 %v11625
    %v12234 = vunpack.c.l.b16 %v11626
    %v12235 = vunpack.c.h.b16 %v11626
    %v12236 = vunpack.c.l.b16 %v11627
    %v12237 = vunpack.c.h.b16 %v11627
    %v12238 = vunpack.c.l.b16 %v11628
    %v12239 = vunpack.c.h.b16 %v11628
    %v12240 = vunpack.c.l.b16 %v11629
    %v12241 = vunpack.c.h.b16 %v11629
    %v12242 = vunpack.c.l.b16 %v11630
    %v12243 = vunpack.c.h.b16 %v11630
    %v12244 = vunpack.c.l.b16 %v11631
    %v12245 = vunpack.c.h.b16 %v11631
    %v12246 = vunpack.c.l.b16 %v11632
    %v12247 = vunpack.c.h.b16 %v11632
    %v12248 = vunpack.c.l.b16 %v11633
    %v12249 = vunpack.c.h.b16 %v11633
    %v12250 = vunpack.c.l.b16 %v11634
    %v12251 = vunpack.c.h.b16 %v11634
    %v12252 = vunpack.c.l.b16 %v11635
    %v12253 = vunpack.c.h.b16 %v11635
    %v12254 = vunpack.c.l.b16 %v11636
    %v12255 = vunpack.c.h.b16 %v11636
    %v12256 = vunpack.c.l.b16 %v11637
    %v12257 = vunpack.c.h.b16 %v11637
    %v12258 = vunpack.c.l.b16 %v11638
    %v12259 = vunpack.c.h.b16 %v11638
    %v12260 = vunpack.c.l.b16 %v11639
    %v12261 = vunpack.c.h.b16 %v11639
    %v12262 = vunpack.c.l.b16 %v11640
    %v12263 = vunpack.c.h.b16 %v11640
    %v12264 = vunpack.c.l.b16 %v11641
    %v12265 = vunpack.c.h.b16 %v11641
    %v12266 = vunpack.c.l.b16 %v11642
    %v12267 = vunpack.c.h.b16 %v11642
    %v12268 = vunpack.c.l.b16 %v11643
    %v12269 = vunpack.c.h.b16 %v11643
    %v12270 = vunpack.c.l.b16 %v11644
    %v12271 = vunpack.c.h.b16 %v11644
    %v12272 = vunpack.c.l.b16 %v11645
    %v12273 = vunpack.c.h.b16 %v11645
    %v12274 = vunpack.c.l.b16 %v11646
    %v12275 = vunpack.c.h.b16 %v11646
    %v12276 = vunpack.c.l.b16 %v11647
    %v12277 = vunpack.c.h.b16 %v11647
    %v12278 = vunpack.c.l.b16 %v11648
    %v12279 = vunpack.c.h.b16 %v11648
    %v12280 = vunpack.c.l.b16 %v11649
    %v12281 = vunpack.c.h.b16 %v11649
    %v12282 = vunpack.c.l.b16 %v11650
    %v12283 = vunpack.c.h.b16 %v11650
    %v12284 = vunpack.c.l.b16 %v11651
    %v12285 = vunpack.c.h.b16 %v11651
    %v12286 = vunpack.c.l.b16 %v11652
    %v12287 = vunpack.c.h.b16 %v11652
    %v12288 = vunpack.c.l.b16 %v11653
    %v12289 = vunpack.c.h.b16 %v11653
    %v12290 = vunpack.c.l.b16 %v11654
    %v12291 = vunpack.c.h.b16 %v11654
    %v12292 = vunpack.c.l.b16 %v11655
    %v12293 = vunpack.c.h.b16 %v11655
    %v12294 = vunpack.c.l.b16 %v11656
    %v12295 = vunpack.c.h.b16 %v11656
    %v12296 = vunpack.c.l.b16 %v11657
    %v12297 = vunpack.c.h.b16 %v11657
    %v12298 = vunpack.c.l.b16 %v11658
    %v12299 = vunpack.c.h.b16 %v11658
    %v12300 = vunpack.c.l.b16 %v11659
    %v12301 = vunpack.c.h.b16 %v11659
    %v12302 = vunpack.c.l.b16 %v11660
    %v12303 = vunpack.c.h.b16 %v11660
    %v12304 = vunpack.c.l.b16 %v11661
    %v12305 = vunpack.c.h.b16 %v11661
    %v12306 = vunpack.c.l.b16 %v11662
    %v12307 = vunpack.c.h.b16 %v11662
    %v12308 = vunpack.c.l.b16 %v11663
    %v12309 = vunpack.c.h.b16 %v11663
    %v12310 = vunpack.c.l.b16 %v11664
    %v12311 = vunpack.c.h.b16 %v11664
    %v12312 = vunpack.c.l.b16 %v11665
    %v12313 = vunpack.c.h.b16 %v11665
    %v12314 = vunpack.c.l.b16 %v11666
    %v12315 = vunpack.c.h.b16 %v11666
    %v12316 = vunpack.c.l.b16 %v11667
    %v12317 = vunpack.c.h.b16 %v11667
    %v12318 = vunpack.c.l.b16 %v11668
    %v12319 = vunpack.c.h.b16 %v11668
    %v12320 = vunpack.c.l.b16 %v11669
    %v12321 = vunpack.c.h.b16 %v11669
    %v12322 = vunpack.c.l.b16 %v11670
    %v12323 = vunpack.c.h.b16 %v11670
    %v12324 = vunpack.c.l.b16 %v11671
    %v12325 = vunpack.c.h.b16 %v11671
    %v12326 = vunpack.c.l.b16 %v11672
    %v12327 = vunpack.c.h.b16 %v11672
    %v12328 = vunpack.c.l.b16 %v11673
    %v12329 = vunpack.c.h.b16 %v11673
    %v12330 = vunpack.c.l.b16 %v11674
    %v12331 = vunpack.c.h.b16 %v11674
    %v12332 = vunpack.c.l.b16 %v11675
    %v12333 = vunpack.c.h.b16 %v11675
    %v12334 = vunpack.c.l.b16 %v11676
    %v12335 = vunpack.c.h.b16 %v11676
    %v12336 = vunpack.c.l.b16 %v11677
    %v12337 = vunpack.c.h.b16 %v11677
    %v12338 = vunpack.c.l.b16 %v11678
    %v12339 = vunpack.c.h.b16 %v11678
    %v12340 = vunpack.c.l.b16 %v11679
    %v12341 = vunpack.c.h.b16 %v11679
    %v12342 = vunpack.c.l.b16 %v11680
    %v12343 = vunpack.c.h.b16 %v11680
    %v12344 = vunpack.c.l.b16 %v11681
    %v12345 = vunpack.c.h.b16 %v11681
    %v12346 = vunpack.c.l.b16 %v11682
    %v12347 = vunpack.c.h.b16 %v11682
    %v12348 = vunpack.c.l.b16 %v11683
    %v12349 = vunpack.c.h.b16 %v11683
    %v12350 = vunpack.c.l.b16 %v11684
    %v12351 = vunpack.c.h.b16 %v11684
    %v12352 = vunpack.c.l.b16 %v11685
    %v12353 = vunpack.c.h.b16 %v11685
    %v12354 = vunpack.c.l.b16 %v11686
    %v12355 = vunpack.c.h.b16 %v11686
    %v12356 = vunpack.c.l.b16 %v11687
    %v12357 = vunpack.c.h.b16 %v11687
    %v12358 = vunpack.c.l.b16 %v11688
    %v12359 = vunpack.c.h.b16 %v11688
    %v12360 = vunpack.c.l.b16 %v11689
    %v12361 = vunpack.c.h.b16 %v11689
    %v12362 = vunpack.c.l.b16 %v11690
    %v12363 = vunpack.c.h.b16 %v11690
    %v12364 = vunpack.c.l.b16 %v11691
    %v12365 = vunpack.c.h.b16 %v11691
    %v12366 = vunpack.c.l.b16 %v11692
    %v12367 = vunpack.c.h.b16 %v11692
    %v12368 = vunpack.c.l.b16 %v11693
    %v12369 = vunpack.c.h.b16 %v11693
    %v12370 = vunpack.c.l.b16 %v11694
    %v12371 = vunpack.c.h.b16 %v11694
    %v12372 = vunpack.c.l.b16 %v11695
    %v12373 = vunpack.c.h.b16 %v11695
    %v12374 = vunpack.c.l.b16 %v11696
    %v12375 = vunpack.c.h.b16 %v11696
    %v12376 = vunpack.c.l.b16 %v11697
    %v12377 = vunpack.c.h.b16 %v11697
    %v12378 = vunpack.c.l.b16 %v11698
    %v12379 = vunpack.c.h.b16 %v11698
    %v12380 = vunpack.c.l.b16 %v11699
    %v12381 = vunpack.c.h.b16 %v11699
    %v12382 = vunpack.c.l.b16 %v11700
    %v12383 = vunpack.c.h.b16 %v11700
    %v12384 = vunpack.c.l.b16 %v11701
    %v12385 = vunpack.c.h.b16 %v11701
    %v12386 = vunpack.c.l.b16 %v11702
    %v12387 = vunpack.c.h.b16 %v11702
    %v12388 = vunpack.c.l.b16 %v11703
    %v12389 = vunpack.c.h.b16 %v11703
    %v12390 = vunpack.c.l.b16 %v11704
    %v12391 = vunpack.c.h.b16 %v11704
    %v12392 = vunpack.c.l.b16 %v11705
    %v12393 = vunpack.c.h.b16 %v11705
    %v12394 = vunpack.c.l.b16 %v11706
    %v12395 = vunpack.c.h.b16 %v11706
    %v12396 = vunpack.c.l.b16 %v11707
    %v12397 = vunpack.c.h.b16 %v11707
    %v12398 = vunpack.c.l.b16 %v11708
    %v12399 = vunpack.c.h.b16 %v11708
    %v12400 = vunpack.c.l.b16 %v11709
    %v12401 = vunpack.c.h.b16 %v11709
    %v12402 = vunpack.c.l.b16 %v11710
    %v12403 = vunpack.c.h.b16 %v11710
    %v12404 = vunpack.c.l.b16 %v11711
    %v12405 = vunpack.c.h.b16 %v11711
    %v12406 = vunpack.c.l.b16 %v11712
    %v12407 = vunpack.c.h.b16 %v11712
    %v12408 = vunpack.c.l.b16 %v11713
    %v12409 = vunpack.c.h.b16 %v11713
    %v12410 = vunpack.c.l.b16 %v11714
    %v12411 = vunpack.c.h.b16 %v11714
    %v12412 = vunpack.c.l.b16 %v11715
    %v12413 = vunpack.c.h.b16 %v11715
    %v12414 = vunpack.c.l.b16 %v11716
    %v12415 = vunpack.c.h.b16 %v11716
    %v12416 = vunpack.c.l.b16 %v11717
    %v12417 = vunpack.c.h.b16 %v11717
    %v12418 = vunpack.c.l.b16 %v11718
    %v12419 = vunpack.c.h.b16 %v11718
    %v12420 = vunpack.c.l.b16 %v11719
    %v12421 = vunpack.c.h.b16 %v11719
    %v12422 = vunpack.c.l.b16 %v11720
    %v12423 = vunpack.c.h.b16 %v11720
    %v12424 = vunpack.c.l.b16 %v11721
    %v12425 = vunpack.c.h.b16 %v11721
    %v12426 = vunpack.c.l.b16 %v11722
    %v12427 = vunpack.c.h.b16 %v11722
    %v12428 = vunpack.c.l.b16 %v11723
    %v12429 = vunpack.c.h.b16 %v11723
    %v12430 = vunpack.c.l.b16 %v11724
    %v12431 = vunpack.c.h.b16 %v11724
    %v12432 = vunpack.c.l.b16 %v11725
    %v12433 = vunpack.c.h.b16 %v11725
    %v12434 = vunpack.c.l.b16 %v11726
    %v12435 = vunpack.c.h.b16 %v11726
    %v12436 = vunpack.c.l.b16 %v11727
    %v12437 = vunpack.c.h.b16 %v11727
    %v12438 = vunpack.c.l.b16 %v11728
    %v12439 = vunpack.c.h.b16 %v11728
    %v12440 = vunpack.c.l.b16 %v11729
    %v12441 = vunpack.c.h.b16 %v11729
    %v12442 = vunpack.c.l.b16 %v11730
    %v12443 = vunpack.c.h.b16 %v11730
    %v12444 = vunpack.c.l.b16 %v11731
    %v12445 = vunpack.c.h.b16 %v11731
    %v12446 = vunpack.c.l.b16 %v11732
    %v12447 = vunpack.c.h.b16 %v11732
    %v12448 = vunpack.c.l.b16 %v11733
    %v12449 = vunpack.c.h.b16 %v11733
    %v12450 = vunpack.c.l.b16 %v11734
    %v12451 = vunpack.c.h.b16 %v11734
    %v12452 = vunpack.c.l.b16 %v11735
    %v12453 = vunpack.c.h.b16 %v11735
    %v12454 = vunpack.c.l.b16 %v11736
    %v12455 = vunpack.c.h.b16 %v11736
    %v12456 = vunpack.c.l.b16 %v11737
    %v12457 = vunpack.c.h.b16 %v11737
    %v12458 = vunpack.c.l.b16 %v11738
    %v12459 = vunpack.c.h.b16 %v11738
    %v12460 = vunpack.c.l.b16 %v11739
    %v12461 = vunpack.c.h.b16 %v11739
    %v12462 = vunpack.c.l.b16 %v11740
    %v12463 = vunpack.c.h.b16 %v11740
    %v12464 = vunpack.c.l.b16 %v11741
    %v12465 = vunpack.c.h.b16 %v11741
    %v12466 = vunpack.c.l.b16 %v11742
    %v12467 = vunpack.c.h.b16 %v11742
    %v12468 = vunpack.c.l.b16 %v11743
    %v12469 = vunpack.c.h.b16 %v11743
    %v12470 = vunpack.c.l.b16 %v11744
    %v12471 = vunpack.c.h.b16 %v11744
    %v12472 = vunpack.c.l.b16 %v11745
    %v12473 = vunpack.c.h.b16 %v11745
    %v12474 = vunpack.c.l.b16 %v11746
    %v12475 = vunpack.c.h.b16 %v11746
    %v12476 = vunpack.c.l.b16 %v11747
    %v12477 = vunpack.c.h.b16 %v11747
    %v12478 = vunpack.c.l.b16 %v11748
    %v12479 = vunpack.c.h.b16 %v11748
    %v12480 = vunpack.c.l.b16 %v11749
    %v12481 = vunpack.c.h.b16 %v11749
    %v12482 = vunpack.c.l.b16 %v11750
    %v12483 = vunpack.c.h.b16 %v11750
    %v12484 = vunpack.c.l.b16 %v11751
    %v12485 = vunpack.c.h.b16 %v11751
    %v12486 = vunpack.c.l.b16 %v11752
    %v12487 = vunpack.c.h.b16 %v11752
    %v12488 = vunpack.c.l.b16 %v11753
    %v12489 = vunpack.c.h.b16 %v11753
    %v12490 = vunpack.c.l.b16 %v11754
    %v12491 = vunpack.c.h.b16 %v11754
    %v12492 = vunpack.c.l.b16 %v11755
    %v12493 = vunpack.c.h.b16 %v11755
    %v12494 = vunpack.c.l.b16 %v11756
    %v12495 = vunpack.c.h.b16 %v11756
    %v12496 = vunpack.c.l.b16 %v11757
    %v12497 = vunpack.c.h.b16 %v11757
    %v12498 = vunpack.c.l.b16 %v11758
    %v12499 = vunpack.c.h.b16 %v11758
    %v12500 = vunpack.c.l.b16 %v11759
    %v12501 = vunpack.c.h.b16 %v11759
    %v12502 = vunpack.c.l.b16 %v11760
    %v12503 = vunpack.c.h.b16 %v11760
    %v12504 = vunpack.c.l.b16 %v11761
    %v12505 = vunpack.c.h.b16 %v11761
    %v12506 = vunpack.c.l.b16 %v11762
    %v12507 = vunpack.c.h.b16 %v11762
    %v12508 = vunpack.c.l.b16 %v11763
    %v12509 = vunpack.c.h.b16 %v11763
    %v12510 = vunpack.c.l.b16 %v11764
    %v12511 = vunpack.c.h.b16 %v11764
    %v12512 = vunpack.c.l.b16 %v11765
    %v12513 = vunpack.c.h.b16 %v11765
    %v12514 = vunpack.c.l.b16 %v11766
    %v12515 = vunpack.c.h.b16 %v11766
    %v12516 = vunpack.c.l.b16 %v11767
    %v12517 = vunpack.c.h.b16 %v11767
    %v12518 = vunpack.c.l.b16 %v11768
    %v12519 = vunpack.c.h.b16 %v11768
    %v12520 = vunpack.c.l.b16 %v11769
    %v12521 = vunpack.c.h.b16 %v11769
    %v12522 = vunpack.c.l.b16 %v11770
    %v12523 = vunpack.c.h.b16 %v11770
    %v12524 = vunpack.c.l.b16 %v11771
    %v12525 = vunpack.c.h.b16 %v11771
    %v12526 = vunpack.c.l.b16 %v11772
    %v12527 = vunpack.c.h.b16 %v11772
    %v12528 = vunpack.c.l.b16 %v11773
    %v12529 = vunpack.c.h.b16 %v11773
    %v12530 = vunpack.c.l.b16 %v11774
    %v12531 = vunpack.c.h.b16 %v11774
    %v12532 = vunpack.c.l.b16 %v11775
    %v12533 = vunpack.c.h.b16 %v11775
    %v12534 = vunpack.c.l.b16 %v11776
    %v12535 = vunpack.c.h.b16 %v11776
    %v12536 = vunpack.c.l.b16 %v11777
    %v12537 = vunpack.c.h.b16 %v11777
    %v12538 = vunpack.c.l.b16 %v11778
    %v12539 = vunpack.c.h.b16 %v11778
    %v12540 = vunpack.c.l.b16 %v11779
    %v12541 = vunpack.c.h.b16 %v11779
    %v12542 = vunpack.c.l.b16 %v11780
    %v12543 = vunpack.c.h.b16 %v11780
    %v12544 = vunpack.c.l.b16 %v11781
    %v12545 = vunpack.c.h.b16 %v11781
    %v12546 = vunpack.c.l.b16 %v11782
    %v12547 = vunpack.c.h.b16 %v11782
    %v12548 = vunpack.c.l.b16 %v11783
    %v12549 = vunpack.c.h.b16 %v11783
    %v12550 = vunpack.c.l.b16 %v11784
    %v12551 = vunpack.c.h.b16 %v11784
    %v12552 = vunpack.c.l.b16 %v11785
    %v12553 = vunpack.c.h.b16 %v11785
    %v12554 = vunpack.c.l.b16 %v11786
    %v12555 = vunpack.c.h.b16 %v11786
    %v12556 = vunpack.c.l.b16 %v11787
    %v12557 = vunpack.c.h.b16 %v11787
    %v12558 = vunpack.c.l.b16 %v11788
    %v12559 = vunpack.c.h.b16 %v11788
    %v12560 = vunpack.c.l.b16 %v11789
    %v12561 = vunpack.c.h.b16 %v11789
    %v12562 = vunpack.c.l.b16 %v11790
    %v12563 = vunpack.c.h.b16 %v11790
    %v12564 = vunpack.c.l.b16 %v11791
    %v12565 = vunpack.c.h.b16 %v11791
    %v12566 = vunpack.c.l.b16 %v11792
    %v12567 = vunpack.c.h.b16 %v11792
    %v12568 = vunpack.c.l.b16 %v11793
    %v12569 = vunpack.c.h.b16 %v11793
    %v12570 = vunpack.c.l.b16 %v11794
    %v12571 = vunpack.c.h.b16 %v11794
    %v12572 = vunpack.c.l.b16 %v11795
    %v12573 = vunpack.c.h.b16 %v11795
    %v12574 = vunpack.c.l.b16 %v11796
    %v12575 = vunpack.c.h.b16 %v11796
    %v12576 = vunpack.c.l.b16 %v11797
    %v12577 = vunpack.c.h.b16 %v11797
    %v12578 = vunpack.c.l.b16 %v11798
    %v12579 = vunpack.c.h.b16 %v11798
    %v12580 = vunpack.c.l.b16 %v11799
    %v12581 = vunpack.c.h.b16 %v11799
    %v12582 = vunpack.c.l.b16 %v11800
    %v12583 = vunpack.c.h.b16 %v11800
    %v12584 = vunpack.c.l.b16 %v11801
    %v12585 = vunpack.c.h.b16 %v11801
    %v12586 = vunpack.c.l.b16 %v11802
    %v12587 = vunpack.c.h.b16 %v11802
    %v12588 = vunpack.c.l.b16 %v11803
    %v12589 = vunpack.c.h.b16 %v11803
    %v12590 = vunpack.c.l.b16 %v11804
    %v12591 = vunpack.c.h.b16 %v11804
    %v12592 = vunpack.c.l.b16 %v11805
    %v12593 = vunpack.c.h.b16 %v11805
    %v12594 = vunpack.c.l.b16 %v11806
    %v12595 = vunpack.c.h.b16 %v11806
    %v12596 = vunpack.c.l.b16 %v11807
    %v12597 = vunpack.c.h.b16 %v11807
    %v12598 = vpack.c.b16 %v12090, %v12086
    %v12599 = vpack.c.b16 %v12091, %v12087
    %v12600 = vpack.c.b16 %v12092, %v12088
    %v12601 = vpack.c.b16 %v12093, %v12089
    %v12602 = vpack.c.b16 %v12098, %v12094
    %v12603 = vpack.c.b16 %v12099, %v12095
    %v12604 = vpack.c.b16 %v12100, %v12096
    %v12605 = vpack.c.b16 %v12101, %v12097
    %v12606 = vpack.c.b16 %v12106, %v12102
    %v12607 = vpack.c.b16 %v12107, %v12103
    %v12608 = vpack.c.b16 %v12108, %v12104
    %v12609 = vpack.c.b16 %v12109, %v12105
    %v12610 = vpack.c.b16 %v12114, %v12110
    %v12611 = vpack.c.b16 %v12115, %v12111
    %v12612 = vpack.c.b16 %v12116, %v12112
    %v12613 = vpack.c.b16 %v12117, %v12113
    %v12614 = vpack.c.b16 %v12122, %v12118
    %v12615 = vpack.c.b16 %v12123, %v12119
    %v12616 = vpack.c.b16 %v12124, %v12120
    %v12617 = vpack.c.b16 %v12125, %v12121
    %v12618 = vpack.c.b16 %v12130, %v12126
    %v12619 = vpack.c.b16 %v12131, %v12127
    %v12620 = vpack.c.b16 %v12132, %v12128
    %v12621 = vpack.c.b16 %v12133, %v12129
    %v12622 = vpack.c.b16 %v12138, %v12134
    %v12623 = vpack.c.b16 %v12139, %v12135
    %v12624 = vpack.c.b16 %v12140, %v12136
    %v12625 = vpack.c.b16 %v12141, %v12137
    %v12626 = vpack.c.b16 %v12146, %v12142
    %v12627 = vpack.c.b16 %v12147, %v12143
    %v12628 = vpack.c.b16 %v12148, %v12144
    %v12629 = vpack.c.b16 %v12149, %v12145
    %v12630 = vpack.c.b16 %v12154, %v12150
    %v12631 = vpack.c.b16 %v12155, %v12151
    %v12632 = vpack.c.b16 %v12156, %v12152
    %v12633 = vpack.c.b16 %v12157, %v12153
    %v12634 = vpack.c.b16 %v12162, %v12158
    %v12635 = vpack.c.b16 %v12163, %v12159
    %v12636 = vpack.c.b16 %v12164, %v12160
    %v12637 = vpack.c.b16 %v12165, %v12161
    %v12638 = vpack.c.b16 %v12170, %v12166
    %v12639 = vpack.c.b16 %v12171, %v12167
    %v12640 = vpack.c.b16 %v12172, %v12168
    %v12641 = vpack.c.b16 %v12173, %v12169
    %v12642 = vpack.c.b16 %v12178, %v12174
    %v12643 = vpack.c.b16 %v12179, %v12175
    %v12644 = vpack.c.b16 %v12180, %v12176
    %v12645 = vpack.c.b16 %v12181, %v12177
    %v12646 = vpack.c.b16 %v12186, %v12182
    %v12647 = vpack.c.b16 %v12187, %v12183
    %v12648 = vpack.c.b16 %v12188, %v12184
    %v12649 = vpack.c.b16 %v12189, %v12185
    %v12650 = vpack.c.b16 %v12194, %v12190
    %v12651 = vpack.c.b16 %v12195, %v12191
    %v12652 = vpack.c.b16 %v12196, %v12192
    %v12653 = vpack.c.b16 %v12197, %v12193
    %v12654 = vpack.c.b16 %v12202, %v12198
    %v12655 = vpack.c.b16 %v12203, %v12199
    %v12656 = vpack.c.b16 %v12204, %v12200
    %v12657 = vpack.c.b16 %v12205, %v12201
    %v12658 = vpack.c.b16 %v12210, %v12206
    %v12659 = vpack.c.b16 %v12211, %v12207
    %v12660 = vpack.c.b16 %v12212, %v12208
    %v12661 = vpack.c.b16 %v12213, %v12209
    %v12662 = vpack.c.b16 %v12218, %v12214
    %v12663 = vpack.c.b16 %v12219, %v12215
    %v12664 = vpack.c.b16 %v12220, %v12216
    %v12665 = vpack.c.b16 %v12221, %v12217
    %v12666 = vpack.c.b16 %v12226, %v12222
    %v12667 = vpack.c.b16 %v12227, %v12223
    %v12668 = vpack.c.b16 %v12228, %v12224
    %v12669 = vpack.c.b16 %v12229, %v12225
    %v12670 = vpack.c.b16 %v12234, %v12230
    %v12671 = vpack.c.b16 %v12235, %v12231
    %v12672 = vpack.c.b16 %v12236, %v12232
    %v12673 = vpack.c.b16 %v12237, %v12233
    %v12674 = vpack.c.b16 %v12242, %v12238
    %v12675 = vpack.c.b16 %v12243, %v12239
    %v12676 = vpack.c.b16 %v12244, %v12240
    %v12677 = vpack.c.b16 %v12245, %v12241
    %v12678 = vpack.c.b16 %v12250, %v12246
    %v12679 = vpack.c.b16 %v12251, %v12247
    %v12680 = vpack.c.b16 %v12252, %v12248
    %v12681 = vpack.c.b16 %v12253, %v12249
    %v12682 = vpack.c.b16 %v12258, %v12254
    %v12683 = vpack.c.b16 %v12259, %v12255
    %v12684 = vpack.c.b16 %v12260, %v12256
    %v12685 = vpack.c.b16 %v12261, %v12257
    %v12686 = vpack.c.b16 %v12266, %v12262
    %v12687 = vpack.c.b16 %v12267, %v12263
    %v12688 = vpack.c.b16 %v12268, %v12264
    %v12689 = vpack.c.b16 %v12269, %v12265
    %v12690 = vpack.c.b16 %v12274, %v12270
    %v12691 = vpack.c.b16 %v12275, %v12271
    %v12692 = vpack.c.b16 %v12276, %v12272
    %v12693 = vpack.c.b16 %v12277, %v12273
    %v12694 = vpack.c.b16 %v12282, %v12278
    %v12695 = vpack.c.b16 %v12283, %v12279
    %v12696 = vpack.c.b16 %v12284, %v12280
    %v12697 = vpack.c.b16 %v12285, %v12281
    %v12698 = vpack.c.b16 %v12290, %v12286
    %v12699 = vpack.c.b16 %v12291, %v12287
    %v12700 = vpack.c.b16 %v12292, %v12288
    %v12701 = vpack.c.b16 %v12293, %v12289
    %v12702 = vpack.c.b16 %v12298, %v12294
    %v12703 = vpack.c.b16 %v12299, %v12295
    %v12704 = vpack.c.b16 %v12300, %v12296
    %v12705 = vpack.c.b16 %v12301, %v12297
    %v12706 = vpack.c.b16 %v12306, %v12302
    %v12707 = vpack.c.b16 %v12307, %v12303
    %v12708 = vpack.c.b16 %v12308, %v12304
    %v12709 = vpack.c.b16 %v12309, %v12305
    %v12710 = vpack.c.b16 %v12314, %v12310
    %v12711 = vpack.c.b16 %v12315, %v12311
    %v12712 = vpack.c.b16 %v12316, %v12312
    %v12713 = vpack.c.b16 %v12317, %v12313
    %v12714 = vpack.c.b16 %v12322, %v12318
    %v12715 = vpack.c.b16 %v12323, %v12319
    %v12716 = vpack.c.b16 %v12324, %v12320
    %v12717 = vpack.c.b16 %v12325, %v12321
    %v12718 = vpack.c.b16 %v12330, %v12326
    %v12719 = vpack.c.b16 %v12331, %v12327
    %v12720 = vpack.c.b16 %v12332, %v12328
    %v12721 = vpack.c.b16 %v12333, %v12329
    %v12722 = vpack.c.b16 %v12338, %v12334
    %v12723 = vpack.c.b16 %v12339, %v12335
    %v12724 = vpack.c.b16 %v12340, %v12336
    %v12725 = vpack.c.b16 %v12341, %v12337
    %v12726 = vpack.c.b16 %v12346, %v12342
    %v12727 = vpack.c.b16 %v12347, %v12343
    %v12728 = vpack.c.b16 %v12348, %v12344
    %v12729 = vpack.c.b16 %v12349, %v12345
    %v12730 = vpack.c.b16 %v12354, %v12350
    %v12731 = vpack.c.b16 %v12355, %v12351
    %v12732 = vpack.c.b16 %v12356, %v12352
    %v12733 = vpack.c.b16 %v12357, %v12353
    %v12734 = vpack.c.b16 %v12362, %v12358
    %v12735 = vpack.c.b16 %v12363, %v12359
    %v12736 = vpack.c.b16 %v12364, %v12360
    %v12737 = vpack.c.b16 %v12365, %v12361
    %v12738 = vpack.c.b16 %v12370, %v12366
    %v12739 = vpack.c.b16 %v12371, %v12367
    %v12740 = vpack.c.b16 %v12372, %v12368
    %v12741 = vpack.c.b16 %v12373, %v12369
    %v12742 = vpack.c.b16 %v12378, %v12374
    %v12743 = vpack.c.b16 %v12379, %v12375
    %v12744 = vpack.c.b16 %v12380, %v12376
    %v12745 = vpack.c.b16 %v12381, %v12377
    %v12746 = vpack.c.b16 %v12386, %v12382
    %v12747 = vpack.c.b16 %v12387, %v12383
    %v12748 = vpack.c.b16 %v12388, %v12384
    %v12749 = vpack.c.b16 %v12389, %v12385
    %v12750 = vpack.c.b16 %v12394, %v12390
    %v12751 = vpack.c.b16 %v12395, %v12391
    %v12752 = vpack.c.b16 %v12396, %v12392
    %v12753 = vpack.c.b16 %v12397, %v12393
    %v12754 = vpack.c.b16 %v12402, %v12398
    %v12755 = vpack.c.b16 %v12403, %v12399
    %v12756 = vpack.c.b16 %v12404, %v12400
    %v12757 = vpack.c.b16 %v12405, %v12401
    %v12758 = vpack.c.b16 %v12410, %v12406
    %v12759 = vpack.c.b16 %v12411, %v12407
    %v12760 = vpack.c.b16 %v12412, %v12408
    %v12761 = vpack.c.b16 %v12413, %v12409
    %v12762 = vpack.c.b16 %v12418, %v12414
    %v12763 = vpack.c.b16 %v12419, %v12415
    %v12764 = vpack.c.b16 %v12420, %v12416
    %v12765 = vpack.c.b16 %v12421, %v12417
    %v12766 = vpack.c.b16 %v12426, %v12422
    %v12767 = vpack.c.b16 %v12427, %v12423
    %v12768 = vpack.c.b16 %v12428, %v12424
    %v12769 = vpack.c.b16 %v12429, %v12425
    %v12770 = vpack.c.b16 %v12434, %v12430
    %v12771 = vpack.c.b16 %v12435, %v12431
    %v12772 = vpack.c.b16 %v12436, %v12432
    %v12773 = vpack.c.b16 %v12437, %v12433
    %v12774 = vpack.c.b16 %v12442, %v12438
    %v12775 = vpack.c.b16 %v12443, %v12439
    %v12776 = vpack.c.b16 %v12444, %v12440
    %v12777 = vpack.c.b16 %v12445, %v12441
    %v12778 = vpack.c.b16 %v12450, %v12446
    %v12779 = vpack.c.b16 %v12451, %v12447
    %v12780 = vpack.c.b16 %v12452, %v12448
    %v12781 = vpack.c.b16 %v12453, %v12449
    %v12782 = vpack.c.b16 %v12458, %v12454
    %v12783 = vpack.c.b16 %v12459, %v12455
    %v12784 = vpack.c.b16 %v12460, %v12456
    %v12785 = vpack.c.b16 %v12461, %v12457
    %v12786 = vpack.c.b16 %v12466, %v12462
    %v12787 = vpack.c.b16 %v12467, %v12463
    %v12788 = vpack.c.b16 %v12468, %v12464
    %v12789 = vpack.c.b16 %v12469, %v12465
    %v12790 = vpack.c.b16 %v12474, %v12470
    %v12791 = vpack.c.b16 %v12475, %v12471
    %v12792 = vpack.c.b16 %v12476, %v12472
    %v12793 = vpack.c.b16 %v12477, %v12473
    %v12794 = vpack.c.b16 %v12482, %v12478
    %v12795 = vpack.c.b16 %v12483, %v12479
    %v12796 = vpack.c.b16 %v12484, %v12480
    %v12797 = vpack.c.b16 %v12485, %v12481
    %v12798 = vpack.c.b16 %v12490, %v12486
    %v12799 = vpack.c.b16 %v12491, %v12487
    %v12800 = vpack.c.b16 %v12492, %v12488
    %v12801 = vpack.c.b16 %v12493, %v12489
    %v12802 = vpack.c.b16 %v12498, %v12494
    %v12803 = vpack.c.b16 %v12499, %v12495
    %v12804 = vpack.c.b16 %v12500, %v12496
    %v12805 = vpack.c.b16 %v12501, %v12497
    %v12806 = vpack.c.b16 %v12506, %v12502
    %v12807 = vpack.c.b16 %v12507, %v12503
    %v12808 = vpack.c.b16 %v12508, %v12504
    %v12809 = vpack.c.b16 %v12509, %v12505
    %v12810 = vpack.c.b16 %v12514, %v12510
    %v12811 = vpack.c.b16 %v12515, %v12511
    %v12812 = vpack.c.b16 %v12516, %v12512
    %v12813 = vpack.c.b16 %v12517, %v12513
    %v12814 = vpack.c.b16 %v12522, %v12518
    %v12815 = vpack.c.b16 %v12523, %v12519
    %v12816 = vpack.c.b16 %v12524, %v12520
    %v12817 = vpack.c.b16 %v12525, %v12521
    %v12818 = vpack.c.b16 %v12530, %v12526
    %v12819 = vpack.c.b16 %v12531, %v12527
    %v12820 = vpack.c.b16 %v12532, %v12528
    %v12821 = vpack.c.b16 %v12533, %v12529
    %v12822 = vpack.c.b16 %v12538, %v12534
    %v12823 = vpack.c.b16 %v12539, %v12535
    %v12824 = vpack.c.b16 %v12540, %v12536
    %v12825 = vpack.c.b16 %v12541, %v12537
    %v12826 = vpack.c.b16 %v12546, %v12542
    %v12827 = vpack.c.b16 %v12547, %v12543
    %v12828 = vpack.c.b16 %v12548, %v12544
    %v12829 = vpack.c.b16 %v12549, %v12545
    %v12830 = vpack.c.b16 %v12554, %v12550
    %v12831 = vpack.c.b16 %v12555, %v12551
    %v12832 = vpack.c.b16 %v12556, %v12552
    %v12833 = vpack.c.b16 %v12557, %v12553
    %v12834 = vpack.c.b16 %v12562, %v12558
    %v12835 = vpack.c.b16 %v12563, %v12559
    %v12836 = vpack.c.b16 %v12564, %v12560
    %v12837 = vpack.c.b16 %v12565, %v12561
    %v12838 = vpack.c.b16 %v12570, %v12566
    %v12839 = vpack.c.b16 %v12571, %v12567
    %v12840 = vpack.c.b16 %v12572, %v12568
    %v12841 = vpack.c.b16 %v12573, %v12569
    %v12842 = vpack.c.b16 %v12578, %v12574
    %v12843 = vpack.c.b16 %v12579, %v12575
    %v12844 = vpack.c.b16 %v12580, %v12576
    %v12845 = vpack.c.b16 %v12581, %v12577
    %v12846 = vpack.c.b16 %v12586, %v12582
    %v12847 = vpack.c.b16 %v12587, %v12583
    %v12848 = vpack.c.b16 %v12588, %v12584
    %v12849 = vpack.c.b16 %v12589, %v12585
    %v12850 = vpack.c.b16 %v12594, %v12590
    %v12851 = vpack.c.b16 %v12595, %v12591
    %v12852 = vpack.c.b16 %v12596, %v12592
    %v12853 = vpack.c.b16 %v12597, %v12593
    %13110 = vmatprep.subr.bf16.mxu0 %v12599
    %13111 = vmatpush1.bf16.msra.mxu0 %v12598
    %13112 = vmatprep.subr.bf16.mxu0 %v12603
    %13113 = vmatpush1.bf16.msra.mxu0 %v12602
    %13114 = vmatprep.subr.bf16.mxu0 %v12607
    %13115 = vmatpush1.bf16.msra.mxu0 %v12606
    %13116 = vmatprep.subr.bf16.mxu0 %v12611
    %13117 = vmatpush1.bf16.msra.mxu0 %v12610
    %13118 = vmatprep.subr.bf16.mxu0 %v12615
    %13119 = vmatpush1.bf16.msra.mxu0 %v12614
    %13120 = vmatprep.subr.bf16.mxu0 %v12619
    %13121 = vmatpush1.bf16.msra.mxu0 %v12618
    %13122 = vmatprep.subr.bf16.mxu0 %v12623
    %13123 = vmatpush1.bf16.msra.mxu0 %v12622
    %13124 = vmatprep.subr.bf16.mxu0 %v12627
    %13125 = vmatpush1.bf16.msra.mxu0 %v12626
    %13126 = vmatprep.subr.bf16.mxu0 %v12631
    %13127 = vmatpush1.bf16.msra.mxu0 %v12630
    %13128 = vmatprep.subr.bf16.mxu0 %v12635
    %13129 = vmatpush1.bf16.msra.mxu0 %v12634
    %13130 = vmatprep.subr.bf16.mxu0 %v12639
    %13131 = vmatpush1.bf16.msra.mxu0 %v12638
    %13132 = vmatprep.subr.bf16.mxu0 %v12643
    %13133 = vmatpush1.bf16.msra.mxu0 %v12642
    %13134 = vmatprep.subr.bf16.mxu0 %v12647
    %13135 = vmatpush1.bf16.msra.mxu0 %v12646
    %13136 = vmatprep.subr.bf16.mxu0 %v12651
    %13137 = vmatpush1.bf16.msra.mxu0 %v12650
    %13138 = vmatprep.subr.bf16.mxu0 %v12655
    %13139 = vmatpush1.bf16.msra.mxu0 %v12654
    %13140 = vmatprep.subr.bf16.mxu0 %v12659
    %13141 = vmatpush1.bf16.msra.mxu0 %v12658
    %13142 = vmatprep.mubr.bf16.mxu0 %v11545
    %13143 = vmatmul.mubr.bf16.gmra.mrb[0].mxu0 %v11544
    %v13144 = vpop.f32.mrb[0].mxu0
    %v13145 = vadd.f32 %v11813, %v13144
    %v13146 = vpop.f32.mrb[0].mxu0
    %v13147 = vadd.f32 %v11817, %v13146
    %v13148 = vpop.f32.mrb[0].mxu0
    %v13149 = vadd.f32 %v11813, %v13148
    %v13150 = vpop.f32.mrb[0].mxu0
    %v13151 = vadd.f32 %v11817, %v13150
    %13152 = vdwg.mxu0
    %13153 = vmatprep.subr.bf16.mxu0 %v12663
    %13154 = vmatpush1.bf16.msra.mxu0 %v12662
    %13155 = vmatprep.subr.bf16.mxu0 %v12667
    %13156 = vmatpush1.bf16.msra.mxu0 %v12666
    %13157 = vmatprep.subr.bf16.mxu0 %v12671
    %13158 = vmatpush1.bf16.msra.mxu0 %v12670
    %13159 = vmatprep.subr.bf16.mxu0 %v12675
    %13160 = vmatpush1.bf16.msra.mxu0 %v12674
    %13161 = vmatprep.subr.bf16.mxu0 %v12679
    %13162 = vmatpush1.bf16.msra.mxu0 %v12678
    %13163 = vmatprep.subr.bf16.mxu0 %v12683
    %13164 = vmatpush1.bf16.msra.mxu0 %v12682
    %13165 = vmatprep.subr.bf16.mxu0 %v12687
    %13166 = vmatpush1.bf16.msra.mxu0 %v12686
    %13167 = vmatprep.subr.bf16.mxu0 %v12691
    %13168 = vmatpush1.bf16.msra.mxu0 %v12690
    %13169 = vmatprep.subr.bf16.mxu0 %v12695
    %13170 = vmatpush1.bf16.msra.mxu0 %v12694
    %13171 = vmatprep.subr.bf16.mxu0 %v12699
    %13172 = vmatpush1.bf16.msra.mxu0 %v12698
    %13173 = vmatprep.subr.bf16.mxu0 %v12703
    %13174 = vmatpush1.bf16.msra.mxu0 %v12702
    %13175 = vmatprep.subr.bf16.mxu0 %v12707
    %13176 = vmatpush1.bf16.msra.mxu0 %v12706
    %13177 = vmatprep.subr.bf16.mxu0 %v12711
    %13178 = vmatpush1.bf16.msra.mxu0 %v12710
    %13179 = vmatprep.subr.bf16.mxu0 %v12715
    %13180 = vmatpush1.bf16.msra.mxu0 %v12714
    %13181 = vmatprep.subr.bf16.mxu0 %v12719
    %13182 = vmatpush1.bf16.msra.mxu0 %v12718
    %13183 = vmatprep.subr.bf16.mxu0 %v12723
    %13184 = vmatpush1.bf16.msra.mxu0 %v12722
    %13185 = vmatprep.mubr.bf16.mxu0 %v11547
    %13186 = vmatmul.mubr.bf16.gmra.mrb[0].mxu0 %v11546
    %v13187 = vpop.f32.mrb[0].mxu0
    %v13188 = vadd.f32 %v13145, %v13187
    %v13189 = vpop.f32.mrb[0].mxu0
    %v13190 = vadd.f32 %v13147, %v13189
    %v13191 = vpop.f32.mrb[0].mxu0
    %v13192 = vadd.f32 %v13149, %v13191
    %v13193 = vpop.f32.mrb[0].mxu0
    %v13194 = vadd.f32 %v13151, %v13193
    %13195 = vdwg.mxu0
    %13196 = vmatprep.subr.bf16.mxu0 %v12727
    %13197 = vmatpush1.bf16.msra.mxu0 %v12726
    %13198 = vmatprep.subr.bf16.mxu0 %v12731
    %13199 = vmatpush1.bf16.msra.mxu0 %v12730
    %13200 = vmatprep.subr.bf16.mxu0 %v12735
    %13201 = vmatpush1.bf16.msra.mxu0 %v12734
    %13202 = vmatprep.subr.bf16.mxu0 %v12739
    %13203 = vmatpush1.bf16.msra.mxu0 %v12738
    %13204 = vmatprep.subr.bf16.mxu0 %v12743
    %13205 = vmatpush1.bf16.msra.mxu0 %v12742
    %13206 = vmatprep.subr.bf16.mxu0 %v12747
    %13207 = vmatpush1.bf16.msra.mxu0 %v12746
    %13208 = vmatprep.subr.bf16.mxu0 %v12751
    %13209 = vmatpush1.bf16.msra.mxu0 %v12750
    %13210 = vmatprep.subr.bf16.mxu0 %v12755
    %13211 = vmatpush1.bf16.msra.mxu0 %v12754
    %13212 = vmatprep.subr.bf16.mxu0 %v12759
    %13213 = vmatpush1.bf16.msra.mxu0 %v12758
    %13214 = vmatprep.subr.bf16.mxu0 %v12763
    %13215 = vmatpush1.bf16.msra.mxu0 %v12762
    %13216 = vmatprep.subr.bf16.mxu0 %v12767
    %13217 = vmatpush1.bf16.msra.mxu0 %v12766
    %13218 = vmatprep.subr.bf16.mxu0 %v12771
    %13219 = vmatpush1.bf16.msra.mxu0 %v12770
    %13220 = vmatprep.subr.bf16.mxu0 %v12775
    %13221 = vmatpush1.bf16.msra.mxu0 %v12774
    %13222 = vmatprep.subr.bf16.mxu0 %v12779
    %13223 = vmatpush1.bf16.msra.mxu0 %v12778
    %13224 = vmatprep.subr.bf16.mxu0 %v12783
    %13225 = vmatpush1.bf16.msra.mxu0 %v12782
    %13226 = vmatprep.subr.bf16.mxu0 %v12787
    %13227 = vmatpush1.bf16.msra.mxu0 %v12786
    %13228 = vmatprep.mubr.bf16.mxu0 %v11549
    %13229 = vmatmul.mubr.bf16.gmra.mrb[0].mxu0 %v11548
    %v13230 = vpop.f32.mrb[0].mxu0
    %v13231 = vadd.f32 %v13188, %v13230
    %v13232 = vpop.f32.mrb[0].mxu0
    %v13233 = vadd.f32 %v13190, %v13232
    %v13234 = vpop.f32.mrb[0].mxu0
    %v13235 = vadd.f32 %v13192, %v13234
    %v13236 = vpop.f32.mrb[0].mxu0
    %v13237 = vadd.f32 %v13194, %v13236
    %13238 = vdwg.mxu0
    %13239 = vmatprep.subr.bf16.mxu0 %v12791
    %13240 = vmatpush1.bf16.msra.mxu0 %v12790
    %13241 = vmatprep.subr.bf16.mxu0 %v12795
    %13242 = vmatpush1.bf16.msra.mxu0 %v12794
    %13243 = vmatprep.subr.bf16.mxu0 %v12799
    %13244 = vmatpush1.bf16.msra.mxu0 %v12798
    %13245 = vmatprep.subr.bf16.mxu0 %v12803
    %13246 = vmatpush1.bf16.msra.mxu0 %v12802
    %13247 = vmatprep.subr.bf16.mxu0 %v12807
    %13248 = vmatpush1.bf16.msra.mxu0 %v12806
    %13249 = vmatprep.subr.bf16.mxu0 %v12811
    %13250 = vmatpush1.bf16.msra.mxu0 %v12810
    %13251 = vmatprep.subr.bf16.mxu0 %v12815
    %13252 = vmatpush1.bf16.msra.mxu0 %v12814
    %13253 = vmatprep.subr.bf16.mxu0 %v12819
    %13254 = vmatpush1.bf16.msra.mxu0 %v12818
    %13255 = vmatprep.subr.bf16.mxu0 %v12823
    %13256 = vmatpush1.bf16.msra.mxu0 %v12822
    %13257 = vmatprep.subr.bf16.mxu0 %v12827
    %13258 = vmatpush1.bf16.msra.mxu0 %v12826
    %13259 = vmatprep.subr.bf16.mxu0 %v12831
    %13260 = vmatpush1.bf16.msra.mxu0 %v12830
    %13261 = vmatprep.subr.bf16.mxu0 %v12835
    %13262 = vmatpush1.bf16.msra.mxu0 %v12834
    %13263 = vmatprep.subr.bf16.mxu0 %v12839
    %13264 = vmatpush1.bf16.msra.mxu0 %v12838
    %13265 = vmatprep.subr.bf16.mxu0 %v12843
    %13266 = vmatpush1.bf16.msra.mxu0 %v12842
    %13267 = vmatprep.subr.bf16.mxu0 %v12847
    %13268 = vmatpush1.bf16.msra.mxu0 %v12846
    %13269 = vmatprep.subr.bf16.mxu0 %v12851
    %13270 = vmatpush1.bf16.msra.mxu0 %v12850
    %13271 = vmatprep.mubr.bf16.mxu0 %v11551
    %13272 = vmatmul.mubr.bf16.gmra.mrb[0].mxu0 %v11550
    %v13273 = vpop.f32.mrb[0].mxu0
    %v13274 = vadd.f32 %v13231, %v13273
    %v13275 = vpop.f32.mrb[0].mxu0
    %v13276 = vadd.f32 %v13233, %v13275
    %v13277 = vpop.f32.mrb[0].mxu0
    %v13278 = vadd.f32 %v13235, %v13277
    %v13279 = vpop.f32.mrb[0].mxu0
    %v13280 = vadd.f32 %v13237, %v13279
    %13281 = vdwg.mxu0
    %13282 = vmatprep.subr.bf16.mxu0 %v12601
    %13283 = vmatpush1.bf16.msra.mxu0 %v12600
    %13284 = vmatprep.subr.bf16.mxu0 %v12605
    %13285 = vmatpush1.bf16.msra.mxu0 %v12604
    %13286 = vmatprep.subr.bf16.mxu0 %v12609
    %13287 = vmatpush1.bf16.msra.mxu0 %v12608
    %13288 = vmatprep.subr.bf16.mxu0 %v12613
    %13289 = vmatpush1.bf16.msra.mxu0 %v12612
    %13290 = vmatprep.subr.bf16.mxu0 %v12617
    %13291 = vmatpush1.bf16.msra.mxu0 %v12616
    %13292 = vmatprep.subr.bf16.mxu0 %v12621
    %13293 = vmatpush1.bf16.msra.mxu0 %v12620
    %13294 = vmatprep.subr.bf16.mxu0 %v12625
    %13295 = vmatpush1.bf16.msra.mxu0 %v12624
    %13296 = vmatprep.subr.bf16.mxu0 %v12629
    %13297 = vmatpush1.bf16.msra.mxu0 %v12628
    %13298 = vmatprep.subr.bf16.mxu0 %v12633
    %13299 = vmatpush1.bf16.msra.mxu0 %v12632
    %13300 = vmatprep.subr.bf16.mxu0 %v12637
    %13301 = vmatpush1.bf16.msra.mxu0 %v12636
    %13302 = vmatprep.subr.bf16.mxu0 %v12641
    %13303 = vmatpush1.bf16.msra.mxu0 %v12640
    %13304 = vmatprep.subr.bf16.mxu0 %v12645
    %13305 = vmatpush1.bf16.msra.mxu0 %v12644
    %13306 = vmatprep.subr.bf16.mxu0 %v12649
    %13307 = vmatpush1.bf16.msra.mxu0 %v12648
    %13308 = vmatprep.subr.bf16.mxu0 %v12653
    %13309 = vmatpush1.bf16.msra.mxu0 %v12652
    %13310 = vmatprep.subr.bf16.mxu0 %v12657
    %13311 = vmatpush1.bf16.msra.mxu0 %v12656
    %13312 = vmatprep.subr.bf16.mxu0 %v12661
    %13313 = vmatpush1.bf16.msra.mxu0 %v12660
    %13314 = vmatprep.mubr.bf16.mxu0 %v11545
    %13315 = vmatmul.mubr.bf16.gmra.mrb[0].mxu0 %v11544
    %v13316 = vpop.f32.mrb[0].mxu0
    %v13317 = vadd.f32 %v11821, %v13316
    %v13318 = vpop.f32.mrb[0].mxu0
    %v13319 = vadd.f32 %v11825, %v13318
    %v13320 = vpop.f32.mrb[0].mxu0
    %v13321 = vadd.f32 %v11821, %v13320
    %v13322 = vpop.f32.mrb[0].mxu0
    %v13323 = vadd.f32 %v11825, %v13322
    %13324 = vdwg.mxu0
    %13325 = vmatprep.subr.bf16.mxu0 %v12665
    %13326 = vmatpush1.bf16.msra.mxu0 %v12664
    %13327 = vmatprep.subr.bf16.mxu0 %v12669
    %13328 = vmatpush1.bf16.msra.mxu0 %v12668
    %13329 = vmatprep.subr.bf16.mxu0 %v12673
    %13330 = vmatpush1.bf16.msra.mxu0 %v12672
    %13331 = vmatprep.subr.bf16.mxu0 %v12677
    %13332 = vmatpush1.bf16.msra.mxu0 %v12676
    %13333 = vmatprep.subr.bf16.mxu0 %v12681
    %13334 = vmatpush1.bf16.msra.mxu0 %v12680
    %13335 = vmatprep.subr.bf16.mxu0 %v12685
    %13336 = vmatpush1.bf16.msra.mxu0 %v12684
    %13337 = vmatprep.subr.bf16.mxu0 %v12689
    %13338 = vmatpush1.bf16.msra.mxu0 %v12688
    %13339 = vmatprep.subr.bf16.mxu0 %v12693
    %13340 = vmatpush1.bf16.msra.mxu0 %v12692
    %13341 = vmatprep.subr.bf16.mxu0 %v12697
    %13342 = vmatpush1.bf16.msra.mxu0 %v12696
    %13343 = vmatprep.subr.bf16.mxu0 %v12701
    %13344 = vmatpush1.bf16.msra.mxu0 %v12700
    %13345 = vmatprep.subr.bf16.mxu0 %v12705
    %13346 = vmatpush1.bf16.msra.mxu0 %v12704
    %13347 = vmatprep.subr.bf16.mxu0 %v12709
    %13348 = vmatpush1.bf16.msra.mxu0 %v12708
    %13349 = vmatprep.subr.bf16.mxu0 %v12713
    %13350 = vmatpush1.bf16.msra.mxu0 %v12712
    %13351 = vmatprep.subr.bf16.mxu0 %v12717
    %13352 = vmatpush1.bf16.msra.mxu0 %v12716
    %13353 = vmatprep.subr.bf16.mxu0 %v12721
    %13354 = vmatpush1.bf16.msra.mxu0 %v12720
    %13355 = vmatprep.subr.bf16.mxu0 %v12725
    %13356 = vmatpush1.bf16.msra.mxu0 %v12724
    %13357 = vmatprep.mubr.bf16.mxu0 %v11547
    %13358 = vmatmul.mubr.bf16.gmra.mrb[0].mxu0 %v11546
    %v13359 = vpop.f32.mrb[0].mxu0
    %v13360 = vadd.f32 %v13317, %v13359
    %v13361 = vpop.f32.mrb[0].mxu0
    %v13362 = vadd.f32 %v13319, %v13361
    %v13363 = vpop.f32.mrb[0].mxu0
    %v13364 = vadd.f32 %v13321, %v13363
    %v13365 = vpop.f32.mrb[0].mxu0
    %v13366 = vadd.f32 %v13323, %v13365
    %13367 = vdwg.mxu0
    %13368 = vmatprep.subr.bf16.mxu0 %v12729
    %13369 = vmatpush1.bf16.msra.mxu0 %v12728
    %13370 = vmatprep.subr.bf16.mxu0 %v12733
    %13371 = vmatpush1.bf16.msra.mxu0 %v12732
    %13372 = vmatprep.subr.bf16.mxu0 %v12737
    %13373 = vmatpush1.bf16.msra.mxu0 %v12736
    %13374 = vmatprep.subr.bf16.mxu0 %v12741
    %13375 = vmatpush1.bf16.msra.mxu0 %v12740
    %13376 = vmatprep.subr.bf16.mxu0 %v12745
    %13377 = vmatpush1.bf16.msra.mxu0 %v12744
    %13378 = vmatprep.subr.bf16.mxu0 %v12749
    %13379 = vmatpush1.bf16.msra.mxu0 %v12748
    %13380 = vmatprep.subr.bf16.mxu0 %v12753
    %13381 = vmatpush1.bf16.msra.mxu0 %v12752
    %13382 = vmatprep.subr.bf16.mxu0 %v12757
    %13383 = vmatpush1.bf16.msra.mxu0 %v12756
    %13384 = vmatprep.subr.bf16.mxu0 %v12761
    %13385 = vmatpush1.bf16.msra.mxu0 %v12760
    %13386 = vmatprep.subr.bf16.mxu0 %v12765
    %13387 = vmatpush1.bf16.msra.mxu0 %v12764
    %13388 = vmatprep.subr.bf16.mxu0 %v12769
    %13389 = vmatpush1.bf16.msra.mxu0 %v12768
    %13390 = vmatprep.subr.bf16.mxu0 %v12773
    %13391 = vmatpush1.bf16.msra.mxu0 %v12772
    %13392 = vmatprep.subr.bf16.mxu0 %v12777
    %13393 = vmatpush1.bf16.msra.mxu0 %v12776
    %13394 = vmatprep.subr.bf16.mxu0 %v12781
    %13395 = vmatpush1.bf16.msra.mxu0 %v12780
    %13396 = vmatprep.subr.bf16.mxu0 %v12785
    %13397 = vmatpush1.bf16.msra.mxu0 %v12784
    %13398 = vmatprep.subr.bf16.mxu0 %v12789
    %13399 = vmatpush1.bf16.msra.mxu0 %v12788
    %13400 = vmatprep.mubr.bf16.mxu0 %v11549
    %13401 = vmatmul.mubr.bf16.gmra.mrb[0].mxu0 %v11548
    %v13402 = vpop.f32.mrb[0].mxu0
    %v13403 = vadd.f32 %v13360, %v13402
    %v13404 = vpop.f32.mrb[0].mxu0
    %v13405 = vadd.f32 %v13362, %v13404
    %v13406 = vpop.f32.mrb[0].mxu0
    %v13407 = vadd.f32 %v13364, %v13406
    %v13408 = vpop.f32.mrb[0].mxu0
    %v13409 = vadd.f32 %v13366, %v13408
    %13410 = vdwg.mxu0
    %13411 = vmatprep.subr.bf16.mxu0 %v12793
    %13412 = vmatpush1.bf16.msra.mxu0 %v12792
    %13413 = vmatprep.subr.bf16.mxu0 %v12797
    %13414 = vmatpush1.bf16.msra.mxu0 %v12796
    %13415 = vmatprep.subr.bf16.mxu0 %v12801
    %13416 = vmatpush1.bf16.msra.mxu0 %v12800
    %13417 = vmatprep.subr.bf16.mxu0 %v12805
    %13418 = vmatpush1.bf16.msra.mxu0 %v12804
    %13419 = vmatprep.subr.bf16.mxu0 %v12809
    %13420 = vmatpush1.bf16.msra.mxu0 %v12808
    %13421 = vmatprep.subr.bf16.mxu0 %v12813
    %13422 = vmatpush1.bf16.msra.mxu0 %v12812
    %13423 = vmatprep.subr.bf16.mxu0 %v12817
    %13424 = vmatpush1.bf16.msra.mxu0 %v12816
    %13425 = vmatprep.subr.bf16.mxu0 %v12821
    %13426 = vmatpush1.bf16.msra.mxu0 %v12820
    %13427 = vmatprep.subr.bf16.mxu0 %v12825
    %13428 = vmatpush1.bf16.msra.mxu0 %v12824
    %13429 = vmatprep.subr.bf16.mxu0 %v12829
    %13430 = vmatpush1.bf16.msra.mxu0 %v12828
    %13431 = vmatprep.subr.bf16.mxu0 %v12833
    %13432 = vmatpush1.bf16.msra.mxu0 %v12832
    %13433 = vmatprep.subr.bf16.mxu0 %v12837
    %13434 = vmatpush1.bf16.msra.mxu0 %v12836
    %13435 = vmatprep.subr.bf16.mxu0 %v12841
    %13436 = vmatpush1.bf16.msra.mxu0 %v12840
    %13437 = vmatprep.subr.bf16.mxu0 %v12845
    %13438 = vmatpush1.bf16.msra.mxu0 %v12844
    %13439 = vmatprep.subr.bf16.mxu0 %v12849
    %13440 = vmatpush1.bf16.msra.mxu0 %v12848
    %13441 = vmatprep.subr.bf16.mxu0 %v12853
    %13442 = vmatpush1.bf16.msra.mxu0 %v12852
    %13443 = vmatprep.mubr.bf16.mxu0 %v11551
    %13444 = vmatmul.mubr.bf16.gmra.mrb[0].mxu0 %v11550
    %v13445 = vpop.f32.mrb[0].mxu0
    %v13446 = vadd.f32 %v13403, %v13445
    %v13447 = vpop.f32.mrb[0].mxu0
    %v13448 = vadd.f32 %v13405, %v13447
    %v13449 = vpop.f32.mrb[0].mxu0
    %v13450 = vadd.f32 %v13407, %v13449
    %v13451 = vpop.f32.mrb[0].mxu0
    %v13452 = vadd.f32 %v13409, %v13451
    %13453 = vdwg.mxu0
    %v13454 = vmax.f32 %v13274, 0.0
    %v13455 = vmax.f32 %v13276, 0.0
    %v13456 = vmax.f32 %v13446, 0.0
    %v13457 = vmax.f32 %v13448, 0.0
    %v13458 = vmax.f32 %v13278, 0.0
    %v13459 = vmax.f32 %v13280, 0.0
    %v13460 = vmax.f32 %v13450, 0.0
    %v13461 = vmax.f32 %v13452, 0.0
    %v13462 = vpack.c.bf16 %v13458, %v13454
    %v13463 = vpack.c.bf16 %v13459, %v13455
    %v13464 = vpack.c.bf16 %v13460, %v13456
    %v13465 = vpack.c.bf16 %v13461, %v13457
    %v13466 = vld [vmem:[#allocation9] sm:$0xff]
    %v13467 = vld [vmem:[#allocation9 + $0x8] sm:$0xff]
    %v13468 = vld [vmem:[#allocation9 + $0x10] sm:$0xff]
    %v13469 = vld [vmem:[#allocation9 + $0x18] sm:$0xff]
    %v13470 = vld [vmem:[#allocation9 + $0x20] sm:$0xff]
    %v13471 = vld [vmem:[#allocation9 + $0x28] sm:$0xff]
    %v13472 = vld [vmem:[#allocation9 + $0x30] sm:$0xff]
    %v13473 = vld [vmem:[#allocation9 + $0x38] sm:$0xff]
    %v13474 = vld [vmem:[#allocation9 + $0x40] sm:$0xff]
    %v13475 = vld [vmem:[#allocation9 + $0x48] sm:$0xff]
    %v13476 = vld [vmem:[#allocation9 + $0x50] sm:$0xff]
    %v13477 = vld [vmem:[#allocation9 + $0x58] sm:$0xff]
    %v13478 = vld [vmem:[#allocation9 + $0x60] sm:$0xff]
    %v13479 = vld [vmem:[#allocation9 + $0x68] sm:$0xff]
    %v13480 = vld [vmem:[#allocation9 + $0x70] sm:$0xff]
    %v13481 = vld [vmem:[#allocation9 + $0x78] sm:$0xff]
    %v13482 = vld [vmem:[#allocation9 + $0x80] sm:$0xff]
    %v13483 = vld [vmem:[#allocation9 + $0x88] sm:$0xff]
    %v13484 = vld [vmem:[#allocation9 + $0x90] sm:$0xff]
    %v13485 = vld [vmem:[#allocation9 + $0x98] sm:$0xff]
    %v13486 = vld [vmem:[#allocation9 + $0xa0] sm:$0xff]
    %v13487 = vld [vmem:[#allocation9 + $0xa8] sm:$0xff]
    %v13488 = vld [vmem:[#allocation9 + $0xb0] sm:$0xff]
    %v13489 = vld [vmem:[#allocation9 + $0xb8] sm:$0xff]
    %v13490 = vld [vmem:[#allocation9 + $0xc0] sm:$0xff]
    %v13491 = vld [vmem:[#allocation9 + $0xc8] sm:$0xff]
    %v13492 = vld [vmem:[#allocation9 + $0xd0] sm:$0xff]
    %v13493 = vld [vmem:[#allocation9 + $0xd8] sm:$0xff]
    %v13494 = vld [vmem:[#allocation9 + $0xe0] sm:$0xff]
    %v13495 = vld [vmem:[#allocation9 + $0xe8] sm:$0xff]
    %v13496 = vld [vmem:[#allocation9 + $0xf0] sm:$0xff]
    %v13497 = vld [vmem:[#allocation9 + $0xf8] sm:$0xff]
    %v13498 = vld [vmem:[#allocation9 + $0x100] sm:$0xff]
    %v13499 = vld [vmem:[#allocation9 + $0x108] sm:$0xff]
    %v13500 = vld [vmem:[#allocation9 + $0x110] sm:$0xff]
    %v13501 = vld [vmem:[#allocation9 + $0x118] sm:$0xff]
    %v13502 = vld [vmem:[#allocation9 + $0x120] sm:$0xff]
    %v13503 = vld [vmem:[#allocation9 + $0x128] sm:$0xff]
    %v13504 = vld [vmem:[#allocation9 + $0x130] sm:$0xff]
    %v13505 = vld [vmem:[#allocation9 + $0x138] sm:$0xff]
    %v13506 = vld [vmem:[#allocation9 + $0x140] sm:$0xff]
    %v13507 = vld [vmem:[#allocation9 + $0x148] sm:$0xff]
    %v13508 = vld [vmem:[#allocation9 + $0x150] sm:$0xff]
    %v13509 = vld [vmem:[#allocation9 + $0x158] sm:$0xff]
    %v13510 = vld [vmem:[#allocation9 + $0x160] sm:$0xff]
    %v13511 = vld [vmem:[#allocation9 + $0x168] sm:$0xff]
    %v13512 = vld [vmem:[#allocation9 + $0x170] sm:$0xff]
    %v13513 = vld [vmem:[#allocation9 + $0x178] sm:$0xff]
    %v13514 = vld [vmem:[#allocation9 + $0x180] sm:$0xff]
    %v13515 = vld [vmem:[#allocation9 + $0x188] sm:$0xff]
    %v13516 = vld [vmem:[#allocation9 + $0x190] sm:$0xff]
    %v13517 = vld [vmem:[#allocation9 + $0x198] sm:$0xff]
    %v13518 = vld [vmem:[#allocation9 + $0x1a0] sm:$0xff]
    %v13519 = vld [vmem:[#allocation9 + $0x1a8] sm:$0xff]
    %v13520 = vld [vmem:[#allocation9 + $0x1b0] sm:$0xff]
    %v13521 = vld [vmem:[#allocation9 + $0x1b8] sm:$0xff]
    %v13522 = vld [vmem:[#allocation9 + $0x1c0] sm:$0xff]
    %v13523 = vld [vmem:[#allocation9 + $0x1c8] sm:$0xff]
    %v13524 = vld [vmem:[#allocation9 + $0x1d0] sm:$0xff]
    %v13525 = vld [vmem:[#allocation9 + $0x1d8] sm:$0xff]
    %v13526 = vld [vmem:[#allocation9 + $0x1e0] sm:$0xff]
    %v13527 = vld [vmem:[#allocation9 + $0x1e8] sm:$0xff]
    %v13528 = vld [vmem:[#allocation9 + $0x1f0] sm:$0xff]
    %v13529 = vld [vmem:[#allocation9 + $0x1f8] sm:$0xff]
    %v13530 = vld [vmem:[#allocation10] sm:$0x3]
    %v13532 = vlaneseq
    %v13533 = vshrl.u32 %v13532, 7
    %v13534 = vsub.s32 0, %v13533
    %v13535 = vrot.slane %v13530, %v13534
    %v13536 = vlaneseq
    %v13537 = vshrl.u32 %v13536, 7
    %v13538 = vsub.s32 1, %v13537
    %v13539 = vrot.slane %v13530, %v13538
    %v13606 = vunpack.c.l.b16 %v13466
    %v13607 = vunpack.c.h.b16 %v13466
    %v13608 = vunpack.c.l.b16 %v13467
    %v13609 = vunpack.c.h.b16 %v13467
    %v13610 = vunpack.c.l.b16 %v13468
    %v13611 = vunpack.c.h.b16 %v13468
    %v13612 = vunpack.c.l.b16 %v13469
    %v13613 = vunpack.c.h.b16 %v13469
    %v13614 = vunpack.c.l.b16 %v13470
    %v13615 = vunpack.c.h.b16 %v13470
    %v13616 = vunpack.c.l.b16 %v13471
    %v13617 = vunpack.c.h.b16 %v13471
    %v13618 = vunpack.c.l.b16 %v13472
    %v13619 = vunpack.c.h.b16 %v13472
    %v13620 = vunpack.c.l.b16 %v13473
    %v13621 = vunpack.c.h.b16 %v13473
    %v13622 = vunpack.c.l.b16 %v13474
    %v13623 = vunpack.c.h.b16 %v13474
    %v13624 = vunpack.c.l.b16 %v13475
    %v13625 = vunpack.c.h.b16 %v13475
    %v13626 = vunpack.c.l.b16 %v13476
    %v13627 = vunpack.c.h.b16 %v13476
    %v13628 = vunpack.c.l.b16 %v13477
    %v13629 = vunpack.c.h.b16 %v13477
    %v13630 = vunpack.c.l.b16 %v13478
    %v13631 = vunpack.c.h.b16 %v13478
    %v13632 = vunpack.c.l.b16 %v13479
    %v13633 = vunpack.c.h.b16 %v13479
    %v13634 = vunpack.c.l.b16 %v13480
    %v13635 = vunpack.c.h.b16 %v13480
    %v13636 = vunpack.c.l.b16 %v13481
    %v13637 = vunpack.c.h.b16 %v13481
    %v13638 = vunpack.c.l.b16 %v13482
    %v13639 = vunpack.c.h.b16 %v13482
    %v13640 = vunpack.c.l.b16 %v13483
    %v13641 = vunpack.c.h.b16 %v13483
    %v13642 = vunpack.c.l.b16 %v13484
    %v13643 = vunpack.c.h.b16 %v13484
    %v13644 = vunpack.c.l.b16 %v13485
    %v13645 = vunpack.c.h.b16 %v13485
    %v13646 = vunpack.c.l.b16 %v13486
    %v13647 = vunpack.c.h.b16 %v13486
    %v13648 = vunpack.c.l.b16 %v13487
    %v13649 = vunpack.c.h.b16 %v13487
    %v13650 = vunpack.c.l.b16 %v13488
    %v13651 = vunpack.c.h.b16 %v13488
    %v13652 = vunpack.c.l.b16 %v13489
    %v13653 = vunpack.c.h.b16 %v13489
    %v13654 = vunpack.c.l.b16 %v13490
    %v13655 = vunpack.c.h.b16 %v13490
    %v13656 = vunpack.c.l.b16 %v13491
    %v13657 = vunpack.c.h.b16 %v13491
    %v13658 = vunpack.c.l.b16 %v13492
    %v13659 = vunpack.c.h.b16 %v13492
    %v13660 = vunpack.c.l.b16 %v13493
    %v13661 = vunpack.c.h.b16 %v13493
    %v13662 = vunpack.c.l.b16 %v13494
    %v13663 = vunpack.c.h.b16 %v13494
    %v13664 = vunpack.c.l.b16 %v13495
    %v13665 = vunpack.c.h.b16 %v13495
    %v13666 = vunpack.c.l.b16 %v13496
    %v13667 = vunpack.c.h.b16 %v13496
    %v13668 = vunpack.c.l.b16 %v13497
    %v13669 = vunpack.c.h.b16 %v13497
    %v13670 = vunpack.c.l.b16 %v13498
    %v13671 = vunpack.c.h.b16 %v13498
    %v13672 = vunpack.c.l.b16 %v13499
    %v13673 = vunpack.c.h.b16 %v13499
    %v13674 = vunpack.c.l.b16 %v13500
    %v13675 = vunpack.c.h.b16 %v13500
    %v13676 = vunpack.c.l.b16 %v13501
    %v13677 = vunpack.c.h.b16 %v13501
    %v13678 = vunpack.c.l.b16 %v13502
    %v13679 = vunpack.c.h.b16 %v13502
    %v13680 = vunpack.c.l.b16 %v13503
    %v13681 = vunpack.c.h.b16 %v13503
    %v13682 = vunpack.c.l.b16 %v13504
    %v13683 = vunpack.c.h.b16 %v13504
    %v13684 = vunpack.c.l.b16 %v13505
    %v13685 = vunpack.c.h.b16 %v13505
    %v13686 = vunpack.c.l.b16 %v13506
    %v13687 = vunpack.c.h.b16 %v13506
    %v13688 = vunpack.c.l.b16 %v13507
    %v13689 = vunpack.c.h.b16 %v13507
    %v13690 = vunpack.c.l.b16 %v13508
    %v13691 = vunpack.c.h.b16 %v13508
    %v13692 = vunpack.c.l.b16 %v13509
    %v13693 = vunpack.c.h.b16 %v13509
    %v13694 = vunpack.c.l.b16 %v13510
    %v13695 = vunpack.c.h.b16 %v13510
    %v13696 = vunpack.c.l.b16 %v13511
    %v13697 = vunpack.c.h.b16 %v13511
    %v13698 = vunpack.c.l.b16 %v13512
    %v13699 = vunpack.c.h.b16 %v13512
    %v13700 = vunpack.c.l.b16 %v13513
    %v13701 = vunpack.c.h.b16 %v13513
    %v13702 = vunpack.c.l.b16 %v13514
    %v13703 = vunpack.c.h.b16 %v13514
    %v13704 = vunpack.c.l.b16 %v13515
    %v13705 = vunpack.c.h.b16 %v13515
    %v13706 = vunpack.c.l.b16 %v13516
    %v13707 = vunpack.c.h.b16 %v13516
    %v13708 = vunpack.c.l.b16 %v13517
    %v13709 = vunpack.c.h.b16 %v13517
    %v13710 = vunpack.c.l.b16 %v13518
    %v13711 = vunpack.c.h.b16 %v13518
    %v13712 = vunpack.c.l.b16 %v13519
    %v13713 = vunpack.c.h.b16 %v13519
    %v13714 = vunpack.c.l.b16 %v13520
    %v13715 = vunpack.c.h.b16 %v13520
    %v13716 = vunpack.c.l.b16 %v13521
    %v13717 = vunpack.c.h.b16 %v13521
    %v13718 = vunpack.c.l.b16 %v13522
    %v13719 = vunpack.c.h.b16 %v13522
    %v13720 = vunpack.c.l.b16 %v13523
    %v13721 = vunpack.c.h.b16 %v13523
    %v13722 = vunpack.c.l.b16 %v13524
    %v13723 = vunpack.c.h.b16 %v13524
    %v13724 = vunpack.c.l.b16 %v13525
    %v13725 = vunpack.c.h.b16 %v13525
    %v13726 = vunpack.c.l.b16 %v13526
    %v13727 = vunpack.c.h.b16 %v13526
    %v13728 = vunpack.c.l.b16 %v13527
    %v13729 = vunpack.c.h.b16 %v13527
    %v13730 = vunpack.c.l.b16 %v13528
    %v13731 = vunpack.c.h.b16 %v13528
    %v13732 = vunpack.c.l.b16 %v13529
    %v13733 = vunpack.c.h.b16 %v13529
    %v13734 = vpack.c.b16 %v13608, %v13606
    %v13735 = vpack.c.b16 %v13609, %v13607
    %v13736 = vpack.c.b16 %v13612, %v13610
    %v13737 = vpack.c.b16 %v13613, %v13611
    %v13738 = vpack.c.b16 %v13616, %v13614
    %v13739 = vpack.c.b16 %v13617, %v13615
    %v13740 = vpack.c.b16 %v13620, %v13618
    %v13741 = vpack.c.b16 %v13621, %v13619
    %v13742 = vpack.c.b16 %v13624, %v13622
    %v13743 = vpack.c.b16 %v13625, %v13623
    %v13744 = vpack.c.b16 %v13628, %v13626
    %v13745 = vpack.c.b16 %v13629, %v13627
    %v13746 = vpack.c.b16 %v13632, %v13630
    %v13747 = vpack.c.b16 %v13633, %v13631
    %v13748 = vpack.c.b16 %v13636, %v13634
    %v13749 = vpack.c.b16 %v13637, %v13635
    %v13750 = vpack.c.b16 %v13640, %v13638
    %v13751 = vpack.c.b16 %v13641, %v13639
    %v13752 = vpack.c.b16 %v13644, %v13642
    %v13753 = vpack.c.b16 %v13645, %v13643
    %v13754 = vpack.c.b16 %v13648, %v13646
    %v13755 = vpack.c.b16 %v13649, %v13647
    %v13756 = vpack.c.b16 %v13652, %v13650
    %v13757 = vpack.c.b16 %v13653, %v13651
    %v13758 = vpack.c.b16 %v13656, %v13654
    %v13759 = vpack.c.b16 %v13657, %v13655
    %v13760 = vpack.c.b16 %v13660, %v13658
    %v13761 = vpack.c.b16 %v13661, %v13659
    %v13762 = vpack.c.b16 %v13664, %v13662
    %v13763 = vpack.c.b16 %v13665, %v13663
    %v13764 = vpack.c.b16 %v13668, %v13666
    %v13765 = vpack.c.b16 %v13669, %v13667
    %v13766 = vpack.c.b16 %v13672, %v13670
    %v13767 = vpack.c.b16 %v13673, %v13671
    %v13768 = vpack.c.b16 %v13676, %v13674
    %v13769 = vpack.c.b16 %v13677, %v13675
    %v13770 = vpack.c.b16 %v13680, %v13678
    %v13771 = vpack.c.b16 %v13681, %v13679
    %v13772 = vpack.c.b16 %v13684, %v13682
    %v13773 = vpack.c.b16 %v13685, %v13683
    %v13774 = vpack.c.b16 %v13688, %v13686
    %v13775 = vpack.c.b16 %v13689, %v13687
    %v13776 = vpack.c.b16 %v13692, %v13690
    %v13777 = vpack.c.b16 %v13693, %v13691
    %v13778 = vpack.c.b16 %v13696, %v13694
    %v13779 = vpack.c.b16 %v13697, %v13695
    %v13780 = vpack.c.b16 %v13700, %v13698
    %v13781 = vpack.c.b16 %v13701, %v13699
    %v13782 = vpack.c.b16 %v13704, %v13702
    %v13783 = vpack.c.b16 %v13705, %v13703
    %v13784 = vpack.c.b16 %v13708, %v13706
    %v13785 = vpack.c.b16 %v13709, %v13707
    %v13786 = vpack.c.b16 %v13712, %v13710
    %v13787 = vpack.c.b16 %v13713, %v13711
    %v13788 = vpack.c.b16 %v13716, %v13714
    %v13789 = vpack.c.b16 %v13717, %v13715
    %v13790 = vpack.c.b16 %v13720, %v13718
    %v13791 = vpack.c.b16 %v13721, %v13719
    %v13792 = vpack.c.b16 %v13724, %v13722
    %v13793 = vpack.c.b16 %v13725, %v13723
    %v13794 = vpack.c.b16 %v13728, %v13726
    %v13795 = vpack.c.b16 %v13729, %v13727
    %v13796 = vpack.c.b16 %v13732, %v13730
    %v13797 = vpack.c.b16 %v13733, %v13731
    %13862 = vmatprep.subr.bf16.mxu0 %v13735
    %13863 = vmatpush1.bf16.msra.mxu0 %v13734
    %13864 = vmatprep.subr.bf16.mxu0 %v13737
    %13865 = vmatpush1.bf16.msra.mxu0 %v13736
    %13866 = vmatprep.subr.bf16.mxu0 %v13739
    %13867 = vmatpush1.bf16.msra.mxu0 %v13738
    %13868 = vmatprep.subr.bf16.mxu0 %v13741
    %13869 = vmatpush1.bf16.msra.mxu0 %v13740
    %13870 = vmatprep.subr.bf16.mxu0 %v13743
    %13871 = vmatpush1.bf16.msra.mxu0 %v13742
    %13872 = vmatprep.subr.bf16.mxu0 %v13745
    %13873 = vmatpush1.bf16.msra.mxu0 %v13744
    %13874 = vmatprep.subr.bf16.mxu0 %v13747
    %13875 = vmatpush1.bf16.msra.mxu0 %v13746
    %13876 = vmatprep.subr.bf16.mxu0 %v13749
    %13877 = vmatpush1.bf16.msra.mxu0 %v13748
    %13878 = vmatprep.subr.bf16.mxu0 %v13751
    %13879 = vmatpush1.bf16.msra.mxu0 %v13750
    %13880 = vmatprep.subr.bf16.mxu0 %v13753
    %13881 = vmatpush1.bf16.msra.mxu0 %v13752
    %13882 = vmatprep.subr.bf16.mxu0 %v13755
    %13883 = vmatpush1.bf16.msra.mxu0 %v13754
    %13884 = vmatprep.subr.bf16.mxu0 %v13757
    %13885 = vmatpush1.bf16.msra.mxu0 %v13756
    %13886 = vmatprep.subr.bf16.mxu0 %v13759
    %13887 = vmatpush1.bf16.msra.mxu0 %v13758
    %13888 = vmatprep.subr.bf16.mxu0 %v13761
    %13889 = vmatpush1.bf16.msra.mxu0 %v13760
    %13890 = vmatprep.subr.bf16.mxu0 %v13763
    %13891 = vmatpush1.bf16.msra.mxu0 %v13762
    %13892 = vmatprep.subr.bf16.mxu0 %v13765
    %13893 = vmatpush1.bf16.msra.mxu0 %v13764
    %13894 = vmatprep.mubr.bf16.mxu0 %v13463
    %13895 = vmatmul.mubr.bf16.gmra.mrb[0].mxu0 %v13462
    %v13896 = vpop.f32.mrb[0].mxu0
    %v13897 = vadd.f32 %v13535, %v13896
    %v13898 = vpop.f32.mrb[0].mxu0
    %v13899 = vadd.f32 %v13539, %v13898
    %v13900 = vpop.f32.mrb[0].mxu0
    %v13901 = vadd.f32 %v13535, %v13900
    %v13902 = vpop.f32.mrb[0].mxu0
    %v13903 = vadd.f32 %v13539, %v13902
    %13904 = vdwg.mxu0
    %13905 = vmatprep.subr.bf16.mxu0 %v13767
    %13906 = vmatpush1.bf16.msra.mxu0 %v13766
    %13907 = vmatprep.subr.bf16.mxu0 %v13769
    %13908 = vmatpush1.bf16.msra.mxu0 %v13768
    %13909 = vmatprep.subr.bf16.mxu0 %v13771
    %13910 = vmatpush1.bf16.msra.mxu0 %v13770
    %13911 = vmatprep.subr.bf16.mxu0 %v13773
    %13912 = vmatpush1.bf16.msra.mxu0 %v13772
    %13913 = vmatprep.subr.bf16.mxu0 %v13775
    %13914 = vmatpush1.bf16.msra.mxu0 %v13774
    %13915 = vmatprep.subr.bf16.mxu0 %v13777
    %13916 = vmatpush1.bf16.msra.mxu0 %v13776
    %13917 = vmatprep.subr.bf16.mxu0 %v13779
    %13918 = vmatpush1.bf16.msra.mxu0 %v13778
    %13919 = vmatprep.subr.bf16.mxu0 %v13781
    %13920 = vmatpush1.bf16.msra.mxu0 %v13780
    %13921 = vmatprep.subr.bf16.mxu0 %v13783
    %13922 = vmatpush1.bf16.msra.mxu0 %v13782
    %13923 = vmatprep.subr.bf16.mxu0 %v13785
    %13924 = vmatpush1.bf16.msra.mxu0 %v13784
    %13925 = vmatprep.subr.bf16.mxu0 %v13787
    %13926 = vmatpush1.bf16.msra.mxu0 %v13786
    %13927 = vmatprep.subr.bf16.mxu0 %v13789
    %13928 = vmatpush1.bf16.msra.mxu0 %v13788
    %13929 = vmatprep.subr.bf16.mxu0 %v13791
    %13930 = vmatpush1.bf16.msra.mxu0 %v13790
    %13931 = vmatprep.subr.bf16.mxu0 %v13793
    %13932 = vmatpush1.bf16.msra.mxu0 %v13792
    %13933 = vmatprep.subr.bf16.mxu0 %v13795
    %13934 = vmatpush1.bf16.msra.mxu0 %v13794
    %13935 = vmatprep.subr.bf16.mxu0 %v13797
    %13936 = vmatpush1.bf16.msra.mxu0 %v13796
    %13937 = vmatprep.mubr.bf16.mxu0 %v13465
    %13938 = vmatmul.mubr.bf16.gmra.mrb[0].mxu0 %v13464
    %v13939 = vpop.f32.mrb[0].mxu0
    %v13940 = vadd.f32 %v13897, %v13939
    %v13941 = vpop.f32.mrb[0].mxu0
    %v13942 = vadd.f32 %v13899, %v13941
    %v13943 = vpop.f32.mrb[0].mxu0
    %v13944 = vadd.f32 %v13901, %v13943
    %v13945 = vpop.f32.mrb[0].mxu0
    %v13946 = vadd.f32 %v13903, %v13945
    %13947 = vdwg.mxu0
    %v13948 = vmax.f32 %v13940, 0.0
    %v13949 = vmax.f32 %v13942, 0.0
    %v13950 = vmax.f32 %v13944, 0.0
    %v13951 = vmax.f32 %v13946, 0.0
    %v13952 = vpack.c.bf16 %v13950, %v13948
    %v13953 = vpack.c.bf16 %v13951, %v13949
    %v13954 = vld [vmem:[#allocation12] sm:$0xf]
    %v13955 = vld [vmem:[#allocation12 + $0x4] sm:$0xf]
    %v13956 = vld [vmem:[#allocation12 + $0x8] sm:$0xf]
    %v13957 = vld [vmem:[#allocation12 + $0xc] sm:$0xf]
    %v13958 = vld [vmem:[#allocation12 + $0x10] sm:$0xf]
    %v13959 = vld [vmem:[#allocation12 + $0x14] sm:$0xf]
    %v13960 = vld [vmem:[#allocation12 + $0x18] sm:$0xf]
    %v13961 = vld [vmem:[#allocation12 + $0x1c] sm:$0xf]
    %v13962 = vld [vmem:[#allocation12 + $0x20] sm:$0xf]
    %v13963 = vld [vmem:[#allocation12 + $0x24] sm:$0xf]
    %v13964 = vld [vmem:[#allocation12 + $0x28] sm:$0xf]
    %v13965 = vld [vmem:[#allocation12 + $0x2c] sm:$0xf]
    %v13966 = vld [vmem:[#allocation12 + $0x30] sm:$0xf]
    %v13967 = vld [vmem:[#allocation12 + $0x34] sm:$0xf]
    %v13968 = vld [vmem:[#allocation12 + $0x38] sm:$0xf]
    %v13969 = vld [vmem:[#allocation12 + $0x3c] sm:$0xf]
    %v13970 = vld [vmem:[#allocation12 + $0x40] sm:$0xf]
    %v13971 = vld [vmem:[#allocation12 + $0x44] sm:$0xf]
    %v13972 = vld [vmem:[#allocation12 + $0x48] sm:$0xf]
    %v13973 = vld [vmem:[#allocation12 + $0x4c] sm:$0xf]
    %v13974 = vld [vmem:[#allocation12 + $0x50] sm:$0xf]
    %v13975 = vld [vmem:[#allocation12 + $0x54] sm:$0xf]
    %v13976 = vld [vmem:[#allocation12 + $0x58] sm:$0xf]
    %v13977 = vld [vmem:[#allocation12 + $0x5c] sm:$0xf]
    %v13978 = vld [vmem:[#allocation12 + $0x60] sm:$0xf]
    %v13979 = vld [vmem:[#allocation12 + $0x64] sm:$0xf]
    %v13980 = vld [vmem:[#allocation12 + $0x68] sm:$0xf]
    %v13981 = vld [vmem:[#allocation12 + $0x6c] sm:$0xf]
    %v13982 = vld [vmem:[#allocation12 + $0x70] sm:$0xf]
    %v13983 = vld [vmem:[#allocation12 + $0x74] sm:$0xf]
    %v13984 = vld [vmem:[#allocation12 + $0x78] sm:$0xf]
    %v13985 = vld [vmem:[#allocation12 + $0x7c] sm:$0xf]
    %v13986 = vld [vmem:[#allocation13] sm:$0x1]
    %v13988 = vlaneseq
    %v13989 = vshrl.u32 %v13988, 7
    %v13990 = vsub.s32 0, %v13989
    %v13991 = vrot.slane %v13986, %v13990
    %v14025 = vunpack.c.l.b16 %v13954
    %v14026 = vunpack.c.l.b16 %v13955
    %v14027 = vunpack.c.l.b16 %v13956
    %v14028 = vunpack.c.l.b16 %v13957
    %v14029 = vunpack.c.l.b16 %v13958
    %v14030 = vunpack.c.l.b16 %v13959
    %v14031 = vunpack.c.l.b16 %v13960
    %v14032 = vunpack.c.l.b16 %v13961
    %v14033 = vunpack.c.l.b16 %v13962
    %v14034 = vunpack.c.l.b16 %v13963
    %v14035 = vunpack.c.l.b16 %v13964
    %v14036 = vunpack.c.l.b16 %v13965
    %v14037 = vunpack.c.l.b16 %v13966
    %v14038 = vunpack.c.l.b16 %v13967
    %v14039 = vunpack.c.l.b16 %v13968
    %v14040 = vunpack.c.l.b16 %v13969
    %v14041 = vunpack.c.l.b16 %v13970
    %v14042 = vunpack.c.l.b16 %v13971
    %v14043 = vunpack.c.l.b16 %v13972
    %v14044 = vunpack.c.l.b16 %v13973
    %v14045 = vunpack.c.l.b16 %v13974
    %v14046 = vunpack.c.l.b16 %v13975
    %v14047 = vunpack.c.l.b16 %v13976
    %v14048 = vunpack.c.l.b16 %v13977
    %v14049 = vunpack.c.l.b16 %v13978
    %v14050 = vunpack.c.l.b16 %v13979
    %v14051 = vunpack.c.l.b16 %v13980
    %v14052 = vunpack.c.l.b16 %v13981
    %v14053 = vunpack.c.l.b16 %v13982
    %v14054 = vunpack.c.l.b16 %v13983
    %v14055 = vunpack.c.l.b16 %v13984
    %v14056 = vunpack.c.l.b16 %v13985
    %v14057 = vpack.c.b16 %v14026, %v14025
    %v14058 = vpack.c.b16 %v14028, %v14027
    %v14059 = vpack.c.b16 %v14030, %v14029
    %v14060 = vpack.c.b16 %v14032, %v14031
    %v14061 = vpack.c.b16 %v14034, %v14033
    %v14062 = vpack.c.b16 %v14036, %v14035
    %v14063 = vpack.c.b16 %v14038, %v14037
    %v14064 = vpack.c.b16 %v14040, %v14039
    %v14065 = vpack.c.b16 %v14042, %v14041
    %v14066 = vpack.c.b16 %v14044, %v14043
    %v14067 = vpack.c.b16 %v14046, %v14045
    %v14068 = vpack.c.b16 %v14048, %v14047
    %v14069 = vpack.c.b16 %v14050, %v14049
    %v14070 = vpack.c.b16 %v14052, %v14051
    %v14071 = vpack.c.b16 %v14054, %v14053
    %v14072 = vpack.c.b16 %v14056, %v14055
    %14089 = vmatprep.subr.bf16.mxu0 0
    %14090 = vmatpush1.bf16.msra.mxu0 %v14057
    %14091 = vmatprep.subr.bf16.mxu0 0
    %14092 = vmatpush1.bf16.msra.mxu0 %v14058
    %14093 = vmatprep.subr.bf16.mxu0 0
    %14094 = vmatpush1.bf16.msra.mxu0 %v14059
    %14095 = vmatprep.subr.bf16.mxu0 0
    %14096 = vmatpush1.bf16.msra.mxu0 %v14060
    %14097 = vmatprep.subr.bf16.mxu0 0
    %14098 = vmatpush1.bf16.msra.mxu0 %v14061
    %14099 = vmatprep.subr.bf16.mxu0 0
    %14100 = vmatpush1.bf16.msra.mxu0 %v14062
    %14101 = vmatprep.subr.bf16.mxu0 0
    %14102 = vmatpush1.bf16.msra.mxu0 %v14063
    %14103 = vmatprep.subr.bf16.mxu0 0
    %14104 = vmatpush1.bf16.msra.mxu0 %v14064
    %14105 = vmatprep.subr.bf16.mxu0 0
    %14106 = vmatpush1.bf16.msra.mxu0 %v14065
    %14107 = vmatprep.subr.bf16.mxu0 0
    %14108 = vmatpush1.bf16.msra.mxu0 %v14066
    %14109 = vmatprep.subr.bf16.mxu0 0
    %14110 = vmatpush1.bf16.msra.mxu0 %v14067
    %14111 = vmatprep.subr.bf16.mxu0 0
    %14112 = vmatpush1.bf16.msra.mxu0 %v14068
    %14113 = vmatprep.subr.bf16.mxu0 0
    %14114 = vmatpush1.bf16.msra.mxu0 %v14069
    %14115 = vmatprep.subr.bf16.mxu0 0
    %14116 = vmatpush1.bf16.msra.mxu0 %v14070
    %14117 = vmatprep.subr.bf16.mxu0 0
    %14118 = vmatpush1.bf16.msra.mxu0 %v14071
    %14119 = vmatprep.subr.bf16.mxu0 0
    %14120 = vmatpush1.bf16.msra.mxu0 %v14072
    %14121 = vmatprep.mubr.bf16.mxu0 %v13953
    %14122 = vmatmul.mubr.bf16.gmra.mrb[0].mxu0 %v13952
    %v14123 = vpop.f32.mrb[0].mxu0
    %v14124 = vadd.f32 %v13991, %v14123
    %v14125 = vpop.f32.mrb[0].mxu0
    %v14126 = vpop.f32.mrb[0].mxu0
    %v14127 = vadd.f32 %v13991, %v14126
    %v14128 = vpop.f32.mrb[0].mxu0
    %14129 = vdwg.mxu0
    %14130 = vst [vmem:[%s9] sm:$0xff] %v14124
    %14131 = vst [vmem:[%s9 + $0x8] sm:$0xff] %v14127
    // Predicated region
    $region70: #{deep_fc_net_forward.1} parent=1 // pred_check
      _
    $region71: #{deep_fc_net_forward.1} parent=1 // pred_check_branch
      %14133 = sbr.rel (0) target = $region73
    $region72: #{deep_fc_net_forward.1} parent=1 // pred_region
      _
    $region73: #{deep_fc_net_forward.1} parent=1 // pred_fallthru
      _
    // Predicated region
    $region74: #{deep_fc_net_forward.1} parent=1 // pred_check
      _
    $region75: #{deep_fc_net_forward.1} parent=1 // pred_check_branch
      %14135 = sbr.rel (0) target = $region77
    $region76: #{deep_fc_net_forward.1} parent=1 // pred_region
      _
    $region77: #{deep_fc_net_forward.1} parent=1 // pred_fallthru
      _
    %14136 = vsyncpa [#allocation3], 1
    %14137 = vsyncpa [#allocation5], 1
    %14138 = vsyncpa [#allocation8], 1
    %14139 = vsyncpa [#allocation11], 1
    %14140 = vsyncpa [#allocation14], 1

</llo_original>
